<compile_context>
chip_gen: v5e
topology: v5e:2x2
jax: 0.10.0
libtpu: 0.0.40
codegen_flags: <defaults>
</compile_context>

<pallas_src>
import functools

import jax
import jax.numpy as jnp
from jax.experimental import pallas as pl
from jax.experimental.pallas import tpu as pltpu

_VMEM_LIMIT_BYTES = 64 * 1024 * 1024   # raise v5e's 16 MiB default scoped-VMEM limit


# ----------------------------- small helpers ---------------------------------

def bn_fold(bn, eps=1e-5):
    """Fold inference-mode BatchNorm into per-channel scale/shift, shape (1, C) f32."""
    scale = bn["weight"] / jnp.sqrt(bn["running_var"] + eps)
    shift = bn["bias"] - bn["running_mean"] * scale
    return scale[None, :].astype(jnp.float32), shift[None, :].astype(jnp.float32)


def pool_max_plus_avg(x):
    """MaxPool2d(2,2) + AvgPool2d(2,2) on NHWC input (floor mode, like PyTorch); f32 result."""
    B, H, W, C = x.shape
    H2, W2 = H // 2, W // 2
    xr = x[:, :H2 * 2, :W2 * 2, :].reshape(B, H2, 2, W2, 2, C).astype(jnp.float32)
    return jnp.max(xr, axis=(2, 4)) + jnp.mean(xr, axis=(2, 4))


def _row_tile(M, pref=1024):
    """Largest row tile <= pref (multiple of 8), or the full extent when it already fits."""
    if M <= pref:
        return M
    return max(8, (pref // 8) * 8)


# ------------------- fused 3x3 conv + BN (+PReLU) kernel ----------------------

def _make_conv3x3_kernel(th, Wo, stride, cin, cout, with_prelu, out_dtype):
    s = stride
    rows = th * Wo

    def stage_and_matmul(x_ref, w_ref, a_scr):
        # Stage the 9 shifted tap windows side by side into one (rows, 9*Cin) bf16 VMEM
        # buffer, then contract all taps with a single big-K MXU matmul (instead of nine
        # K=Cin matmuls re-accumulating a VMEM-resident f32 buffer).
        for dh in range(3):
            for dw in range(3):
                p_idx = (dh % s) * s + (dw % s)          # stride-phase of this tap
                oh, ow = dh // s, dw // s                # offset inside the phase
                win = x_ref[0, p_idx, oh:oh + th, ow:ow + Wo, :]        # (th, Wo, Cin) bf16
                tap = dh * 3 + dw
                a_scr[:, tap * cin:(tap + 1) * cin] = win.reshape(rows, cin)
        return jnp.dot(a_scr[...], w_ref[...], preferred_element_type=jnp.float32)

    if with_prelu:
        def kernel(x_ref, w_ref, scale_ref, shift_ref, alpha_ref, o_ref, a_scr):
            y = stage_and_matmul(x_ref, w_ref, a_scr) * scale_ref[...] + shift_ref[...]
            o_ref[0] = jnp.where(y >= 0.0, y, alpha_ref[...] * y).astype(out_dtype)
    else:
        def kernel(x_ref, w_ref, scale_ref, shift_ref, o_ref, a_scr):
            y = stage_and_matmul(x_ref, w_ref, a_scr) * scale_ref[...] + shift_ref[...]
            o_ref[0] = y.astype(out_dtype)
    return kernel


def _conv_row_tile(Ho, Wo, cin, budget_bytes=4 << 20):
    """Output-row tile so the staged (th*Wo, 9*Cin) bf16 matrix (+ f32 result) stays ~budget."""
    per_row = Wo * (9 * cin * 2 + 4 * 4 + cin * 2)
    th = max(1, min(Ho, budget_bytes // max(per_row, 1)))
    if th >= Ho:
        return Ho
    while th > 1 and (th * Wo) % 8 != 0:       # keep the output block (8,128)-legal
        th -= 1
    return th if (th * Wo) % 8 == 0 else Ho


def conv3x3_bn_act(x, w_oihw, scale, shift, alpha=None, stride=1,
                   out_dtype=jnp.bfloat16, row_tile=None):
    """3x3 conv (padding=1, given stride) fused with a folded-BN affine (and optional PReLU).

    x: (B, H, W, Cin) NHWC bf16.  w: (Cout, Cin, 3, 3).  Returns (B, Ho, Wo, Cout) out_dtype.
    No im2col: the zero-padded input is decomposed into stride phases and row-tiled with a
    small halo on the host; each grid step runs ONE (th*Wo, 9*Cin) @ (9*Cin, Cout) MXU matmul.
    """
    B, H, W, Cin = x.shape
    Cout = w_oihw.shape[0]
    s = stride
    Ho = (H - 1) // s + 1
    Wo = (W - 1) // s + 1
    P = s * s
    halo = 2 // s                       # extra within-phase rows/cols the taps reach into
    th = row_tile if row_tile is not None else _conv_row_tile(Ho, Wo, Cin)
    th = min(th, Ho)
    if th < Ho and (th * Wo) % 8 != 0:
        th = Ho
    T = pl.cdiv(Ho, th)
    tin = th + halo
    Hneed = (T - 1) * th + tin
    Wneed = Wo + halo

    # Zero-pad (padding=1) and decompose into stride phases.  For stride=1 this is just the
    # padded image (P=1, no duplication).
    xp = jnp.pad(x.astype(jnp.bfloat16), ((0, 0), (1, 1), (1, 1), (0, 0)))
    phases = []
    for p in range(s):
        for q in range(s):
            ph = xp[:, p::s, q::s, :]
            ph = jnp.pad(ph, ((0, 0),
                              (0, max(0, Hneed - ph.shape[1])),
                              (0, max(0, Wneed - ph.shape[2])),
                              (0, 0)))[:, :Hneed, :Wneed, :]
            phases.append(ph)
    phx = jnp.stack(phases, axis=1)                        # (B, P, Hneed, Wneed, Cin) bf16

    # Row tiles with halo (only `halo` rows of overlap per tile, built once on the host).
    # TODO(synk): doing the strided halo reads fully in-kernel would remove this prep pass.
    if T == 1:
        xt = phx[:, None]
    else:
        ridx = jnp.arange(T)[:, None] * th + jnp.arange(tin)[None, :]     # (T, tin)
        xt = jnp.transpose(phx[:, :, ridx], (0, 2, 1, 3, 4, 5))
    xt = xt.reshape(B * T, P, tin, Wneed, Cin)

    # (Cout, Cin, 3, 3) -> (9*Cin, Cout), tap-major rows ((dh*3+dw)*Cin + cin), bf16 for MXU.
    wk = jnp.transpose(w_oihw, (2, 3, 1, 0)).reshape(9 * Cin, Cout).astype(jnp.bfloat16)

    kern = _make_conv3x3_kernel(th, Wo, s, Cin, Cout, alpha is not None, out_dtype)
    inputs = [xt, wk, scale, shift]
    in_specs = [pl.BlockSpec((1, P, tin, Wneed, Cin), lambda b, t: (b * T + t, 0, 0, 0, 0)),
                pl.BlockSpec((9 * Cin, Cout), lambda b, t: (0, 0)),
                pl.BlockSpec((1, Cout), lambda b, t: (0, 0)),
                pl.BlockSpec((1, Cout), lambda b, t: (0, 0))]
    if alpha is not None:
        inputs.append(alpha.reshape(1, Cout).astype(jnp.float32))
        in_specs.append(pl.BlockSpec((1, Cout), lambda b, t: (0, 0)))

    out = pl.pallas_call(
        kern,
        out_shape=jax.ShapeDtypeStruct((B, Ho * Wo, Cout), out_dtype),
        grid=(B, T),
        in_specs=in_specs,
        out_specs=pl.BlockSpec((1, th * Wo, Cout), lambda b, t: (b, t, 0)),
        scratch_shapes=[pltpu.VMEM((th * Wo, 9 * Cin), jnp.bfloat16)],
        compiler_params=pltpu.CompilerParams(
            dimension_semantics=("parallel", "parallel"),
            vmem_limit_bytes=_VMEM_LIMIT_BYTES),
    )(*inputs)
    return out.reshape(B, Ho, Wo, Cout)


# -------------------- multi-output row-tiled 1x1-conv matmul ------------------

def _make_mm_multi_kernel(n_out):
    def kernel(*refs):
        x_ref = refs[0]
        w_refs = refs[1:1 + n_out]
        o_refs = refs[1 + n_out:]
        a = x_ref[...]
        if a.dtype != jnp.bfloat16:
            a = a.astype(jnp.bfloat16)
        for w_ref, o_ref in zip(w_refs, o_refs):
            o_ref[...] = jnp.dot(a, w_ref[...],
                                 preferred_element_type=jnp.float32).astype(o_ref.dtype)
    return kernel


def matmul_rows_multi(x, ws, out_dtype=jnp.bfloat16, tile_rows=1024):
    """(M, K) @ [(K, N0), (K, N1), ...] -> tuple of (M, Nk) out_dtype, row-tiled (cdiv grid).
    The LHS tile is loaded once per grid step and contracted with every weight; each result is
    written to its own lane-dense output (no host-side column slicing)."""
    M, K = x.shape
    ws = [w.astype(jnp.bfloat16) for w in ws]
    tr = _row_tile(M, tile_rows)
    grid = (pl.cdiv(M, tr),)
    in_specs = [pl.BlockSpec((tr, K), lambda i: (i, 0))]
    in_specs += [pl.BlockSpec((K, int(w.shape[1])), lambda i: (0, 0)) for w in ws]
    out_shape = tuple(jax.ShapeDtypeStruct((M, int(w.shape[1])), out_dtype) for w in ws)
    out_specs = tuple(pl.BlockSpec((tr, int(w.shape[1])), lambda i: (i, 0)) for w in ws)
    return pl.pallas_call(
        _make_mm_multi_kernel(len(ws)),
        out_shape=out_shape, grid=grid, in_specs=in_specs, out_specs=out_specs,
        compiler_params=pltpu.CompilerParams(dimension_semantics=("parallel",),
                                             vmem_limit_bytes=_VMEM_LIMIT_BYTES),
    )(x, *ws)


# ---------------------- Self Channel Attention kernels ------------------------

def _sca_scores_kernel(p1_ref, p2_ref, attn_ref):
    # st[j, i] = sum_p p2[p, j] * p1[p, i]  (== PyTorch scores[i, j]); the row softmax of the
    # reference becomes a softmax over axis 0 of st, so the kernel directly emits attention^T
    # and the apply kernel never transposes its (C, C) RHS per query tile.
    st = jax.lax.dot_general(p2_ref[0], p1_ref[0], (((0,), (0,)), ((), ())),
                             preferred_element_type=jnp.float32)            # (C, C)
    m = jnp.max(st, axis=0, keepdims=True)
    e = jnp.exp(st - m)
    attn_ref[0] = e * pl.reciprocal(jnp.sum(e, axis=0, keepdims=True), approx=True)


def sca_attention_scores_t(p1, p2):
    """attn_t[b, j, i] = softmax_j(scores[b])[i, j]  (transposed channel attention), f32."""
    B, HW4, C = p1.shape
    return pl.pallas_call(
        _sca_scores_kernel,
        out_shape=jax.ShapeDtypeStruct((B, C, C), jnp.float32),
        grid=(B,),
        in_specs=[pl.BlockSpec((1, HW4, C), lambda b: (b, 0, 0)),
                  pl.BlockSpec((1, HW4, C), lambda b: (b, 0, 0))],
        out_specs=pl.BlockSpec((1, C, C), lambda b: (b, 0, 0)),
        compiler_params=pltpu.CompilerParams(dimension_semantics=("parallel",),
                                             vmem_limit_bytes=_VMEM_LIMIT_BYTES),
    )(p1, p2)


def _sca_apply_kernel(c3_ref, attn_ref, res_ref, o_ref):
    # gamma is pre-folded into attn (= gamma * attention^T): plain MXU matmul + residual add.
    refined = jnp.dot(c3_ref[0], attn_ref[0], preferred_element_type=jnp.float32)
    o_ref[0] = refined + res_ref[0].astype(jnp.float32)


def sca_apply(c3, attn_t_scaled, res, tile_q=1024):
    B, HW, C = c3.shape
    tq = _row_tile(HW, tile_q)
    return pl.pallas_call(
        _sca_apply_kernel,
        out_shape=jax.ShapeDtypeStruct((B, HW, C), jnp.float32),
        grid=(B, pl.cdiv(HW, tq)),
        in_specs=[pl.BlockSpec((1, tq, C), lambda b, q: (b, q, 0)),
                  pl.BlockSpec((1, C, C), lambda b, q: (b, 0, 0)),
                  pl.BlockSpec((1, tq, C), lambda b, q: (b, q, 0))],
        out_specs=pl.BlockSpec((1, tq, C), lambda b, q: (b, q, 0)),
        compiler_params=pltpu.CompilerParams(dimension_semantics=("parallel", "parallel"),
                                             vmem_limit_bytes=_VMEM_LIMIT_BYTES),
    )(c3, attn_t_scaled, res)


# -------------- Self Spatial Attention + residual/shortcut combine ------------

def _ssa_softmax_refined(c2_ref, p1t_ref, p3_ref):
    # scores[q, p] = sum_c c2[q, c] * p1t[c, p]   (p1 pre-transposed once on the host, so
    # neither matmul needs an in-kernel RHS transpose).  gamma is pre-folded into p3.
    s = jnp.dot(c2_ref[0], p1t_ref[0], preferred_element_type=jnp.float32)   # (tq, HW4)
    m = jnp.max(s, axis=-1, keepdims=True)
    e = jnp.exp(s - m)
    attn = (e * pl.reciprocal(jnp.sum(e, axis=-1, keepdims=True), approx=True)
            ).astype(jnp.bfloat16)
    return jnp.dot(attn, p3_ref[0], preferred_element_type=jnp.float32)      # (tq, C)


def _ssa_combine_conv_sc_kernel(c2_ref, p1t_ref, p3_ref, res_ref,
                                xs_ref, wsc_ref, scs_ref, scb_ref, o_ref):
    refined = _ssa_softmax_refined(c2_ref, p1t_ref, p3_ref)
    shortcut = jnp.dot(xs_ref[0], wsc_ref[...], preferred_element_type=jnp.float32)
    shortcut = shortcut * scs_ref[...] + scb_ref[...]        # shortcut 1x1 conv + folded BN
    o_ref[0] = refined + res_ref[0].astype(jnp.float32) + shortcut


def _ssa_combine_identity_kernel(c2_ref, p1t_ref, p3_ref, res_ref, sc_ref, o_ref):
    refined = _ssa_softmax_refined(c2_ref, p1t_ref, p3_ref)
    o_ref[0] = refined + res_ref[0].astype(jnp.float32) + sc_ref[0].astype(jnp.float32)


def ssa_attention_combine(c2, p1t, p3_scaled, res, shortcut_args, tile_q=1024):
    """gamma*refined + SSA residual + block shortcut, all fused.  The shortcut 1x1 conv + BN
    (dim_match=False) is computed in-kernel so the shortcut tensor never round-trips HBM."""
    B, HW, Ch = c2.shape
    _, HW4, C = p3_scaled.shape
    # keep the (tq, HW4) f32 score tile comfortably inside v5e's scoped-VMEM budget
    cap = max(128, ((4 << 20) // max(HW4 * 4, 1)) // 8 * 8)
    tq = _row_tile(HW, min(tile_q, cap))
    grid = (B, pl.cdiv(HW, tq))
    in_specs = [pl.BlockSpec((1, tq, Ch), lambda b, q: (b, q, 0)),
                pl.BlockSpec((1, Ch, HW4), lambda b, q: (b, 0, 0)),
                pl.BlockSpec((1, HW4, C), lambda b, q: (b, 0, 0)),
                pl.BlockSpec((1, tq, C), lambda b, q: (b, q, 0))]
    if len(shortcut_args) == 4:
        xs, w_sc, scs, scb = shortcut_args
        Cin = xs.shape[-1]
        kern = _ssa_combine_conv_sc_kernel
        extra = [xs, w_sc.astype(jnp.bfloat16), scs, scb]
        in_specs += [pl.BlockSpec((1, tq, Cin), lambda b, q: (b, q, 0)),
                     pl.BlockSpec((Cin, C), lambda b, q: (0, 0)),
                     pl.BlockSpec((1, C), lambda b, q: (0, 0)),
                     pl.BlockSpec((1, C), lambda b, q: (0, 0))]
    else:
        (sc,) = shortcut_args
        kern = _ssa_combine_identity_kernel
        extra = [sc]
        in_specs += [pl.BlockSpec((1, tq, C), lambda b, q: (b, q, 0))]
    return pl.pallas_call(
        kern,
        out_shape=jax.ShapeDtypeStruct((B, HW, C), jnp.float32),
        grid=grid,
        in_specs=in_specs,
        out_specs=pl.BlockSpec((1, tq, C), lambda b, q: (b, q, 0)),
        compiler_params=pltpu.CompilerParams(dimension_semantics=("parallel", "parallel"),
                                             vmem_limit_bytes=_VMEM_LIMIT_BYTES),
    )(c2, p1t, p3_scaled, res, *extra)


# ------------------------------ full forward ----------------------------------

def bottleneck_ir_sram_forward(x_nchw, params, stride, dim_match):
    x = jnp.transpose(x_nchw, (0, 2, 3, 1)).astype(jnp.float32)           # NCHW -> NHWC
    B, H, W, Cin = x.shape
    Cout = params["conv1_w"].shape[0]

    # --- res_layer: BN1 -> conv3x3 -> BN2 -> PReLU -> conv3x3(stride) -> BN3 ---
    # BN1 is a pure per-channel affine; it is folded into the XLA pad/bf16-cast pass that
    # feeds conv1 (no standalone memory-bound Pallas kernel, no extra HBM round trip).
    s1, b1 = bn_fold(params["bn1"])
    x_bn = (x * s1[0] + b1[0]).astype(jnp.bfloat16)

    s2, b2 = bn_fold(params["bn2"])
    h1 = conv3x3_bn_act(x_bn, params["conv1_w"], s2, b2,
                        alpha=params["prelu_alpha"], stride=1)            # (B,H,W,Cout) bf16

    s3, b3 = bn_fold(params["bn3"])
    h3 = conv3x3_bn_act(h1, params["conv2_w"], s3, b3,
                        alpha=None, stride=stride)                        # (B,Ho,Wo,Cout) bf16
    _, Ho, Wo, _ = h3.shape
    HW = Ho * Wo
    HW4 = (Ho // 2) * (Wo // 2)
    h3f = h3.reshape(B, HW, Cout)

    # --- SelfChannelAttentionModule (input = BN3 output) ---
    c1, c2, c3 = matmul_rows_multi(
        h3f.reshape(B * HW, Cout),
        [params["sca_w1"][:, :, 0, 0].T,
         params["sca_w2"][:, :, 0, 0].T,
         params["sca_w3"][:, :, 0, 0].T])                                 # bf16, lane-dense
    p1 = pool_max_plus_avg(c1.reshape(B, Ho, Wo, Cout)
                           ).reshape(B, HW4, Cout).astype(jnp.bfloat16)
    p2 = pool_max_plus_avg(c2.reshape(B, Ho, Wo, Cout)
                           ).reshape(B, HW4, Cout).astype(jnp.bfloat16)
    attn_t = sca_attention_scores_t(p1, p2)                               # (B, Cout, Cout) f32
    # fold gamma into the tiny per-batch attention matrix (gamma*(c3@attn) == c3@(gamma*attn))
    attn_t = (params["sca_gamma"][0] * attn_t).astype(jnp.bfloat16)
    sca_out = sca_apply(c3.reshape(B, HW, Cout), attn_t, h3f)             # (B, HW, Cout) f32

    # --- SelfSpatialAttentionModule (input = SCA output) ---
    Ch = Cout // 2
    sc1, sc2, sc3 = matmul_rows_multi(
        sca_out.reshape(B * HW, Cout),
        [params["ssa_w1"][:, :, 0, 0].T,
         params["ssa_w2"][:, :, 0, 0].T,
         params["ssa_w3"][:, :, 0, 0].T])                                 # bf16
    p1t = jnp.transpose(pool_max_plus_avg(sc1.reshape(B, Ho, Wo, Ch)).reshape(B, HW4, Ch),
                        (0, 2, 1)).astype(jnp.bfloat16)                   # (B, Ch, HW4)
    # fold gamma into the pooled value tensor (gamma*refined == attn @ (gamma*pooled_c3))
    p3s = (params["ssa_gamma"][0] * pool_max_plus_avg(sc3.reshape(B, Ho, Wo, Cout))
           ).reshape(B, HW4, Cout).astype(jnp.bfloat16)

    # --- shortcut_layer, fused into the final SSA combine kernel ---
    if dim_match:
        # Identity shortcut is only shape-consistent (as in the PyTorch module) when
        # stride == 1 and in_channel == out_channel.
        assert stride == 1 and Cin == Cout
        shortcut_args = (x.reshape(B, HW, Cout),)
    else:
        xs = x[:, ::stride, ::stride, :].reshape(B, HW, Cin).astype(jnp.bfloat16)
        ssc, bsc = bn_fold(params["sc_bn"])
        shortcut_args = (xs, params["sc_conv_w"][:, :, 0, 0].T, ssc, bsc)

    # out = shortcut + (gamma_ssa * refined + sca_out), all fused in one kernel
    out = ssa_attention_combine(sc2.reshape(B, HW, Ch), p1t, p3s, sca_out, shortcut_args)
    return jnp.transpose(out.reshape(B, Ho, Wo, Cout), (0, 3, 1, 2))      # NHWC -> NCHW


# ------------------------------ param init ------------------------------------

def init_params(key, in_ch, out_ch):
    ks = jax.random.split(key, 13)

    def bn(k, c):
        k1, k2, k3, k4 = jax.random.split(k, 4)
        return {"weight": 1.0 + 0.1 * jax.random.normal(k1, (c,), jnp.float32),
                "bias": 0.1 * jax.random.normal(k2, (c,), jnp.float32),
                "running_mean": 0.1 * jax.random.normal(k3, (c,), jnp.float32),
                "running_var": 1.0 + 0.1 * jax.random.uniform(k4, (c,), jnp.float32)}

    return {
        "bn1": bn(ks[0], in_ch),
        "conv1_w": 0.1 * jax.random.normal(ks[1], (out_ch, in_ch, 3, 3), jnp.float32),
        "bn2": bn(ks[2], out_ch),
        "prelu_alpha": 0.25 * jnp.ones((out_ch,), jnp.float32),           # PyTorch PReLU default
        "conv2_w": 0.1 * jax.random.normal(ks[3], (out_ch, out_ch, 3, 3), jnp.float32),
        "bn3": bn(ks[4], out_ch),
        # SelfChannelAttentionModule
        "sca_w1": 0.1 * jax.random.normal(ks[5], (out_ch, out_ch, 1, 1), jnp.float32),
        "sca_w2": 0.1 * jax.random.normal(ks[6], (out_ch, out_ch, 1, 1), jnp.float32),
        "sca_w3": 0.1 * jax.random.normal(ks[7], (out_ch, out_ch, 1, 1), jnp.float32),
        # PyTorch initializes gamma to zeros(1); nonzero here so the smoke test exercises
        # the attention paths end-to-end.
        "sca_gamma": 0.1 * jnp.ones((1,), jnp.float32),
        # SelfSpatialAttentionModule
        "ssa_w1": 0.1 * jax.random.normal(ks[8], (out_ch // 2, out_ch, 1, 1), jnp.float32),
        "ssa_w2": 0.1 * jax.random.normal(ks[9], (out_ch // 2, out_ch, 1, 1), jnp.float32),
        "ssa_w3": 0.1 * jax.random.normal(ks[10], (out_ch, out_ch, 1, 1), jnp.float32),
        "ssa_gamma": 0.1 * jnp.ones((1,), jnp.float32),
        # shortcut (dim_match=False)
        "sc_conv_w": 0.1 * jax.random.normal(ks[11], (out_ch, in_ch, 1, 1), jnp.float32),
        "sc_bn": bn(ks[12], out_ch),
    }


if __name__ == "__main__":
    key = jax.random.PRNGKey(0)
    kx, kp = jax.random.split(key)

    B, Cin, H, W = 2, 4, 16, 16
    Cout, stride, dim_match = 8, 2, False

    x = jax.random.normal(kx, (B, Cin, H, W), jnp.float32)                # NCHW like PyTorch
    params = init_params(kp, Cin, Cout)

    fwd = jax.jit(functools.partial(bottleneck_ir_sram_forward,
                                    stride=stride, dim_match=dim_match))
    out = jax.block_until_ready(fwd(x, params))

    assert out.shape == (B, Cout, H // stride, W // stride), out.shape
    assert bool(jnp.all(jnp.isfinite(out)))

    # Also exercise the row-tiled (halo + ragged-tail) conv path and check it matches the
    # single-tile path on the same data.
    s2, b2 = bn_fold(params["bn2"])
    xh = jax.random.normal(kx, (B, H, W, Cin), jnp.float32).astype(jnp.bfloat16)
    full = conv3x3_bn_act(xh, params["conv1_w"], s2, b2,
                          alpha=params["prelu_alpha"], stride=1)
    tiled = conv3x3_bn_act(xh, params["conv1_w"], s2, b2,
                           alpha=params["prelu_alpha"], stride=1, row_tile=5)
    assert bool(jnp.allclose(full.astype(jnp.float32), tiled.astype(jnp.float32),
                             atol=1e-2, rtol=1e-2))

    print("KERNEL_OK")
</pallas_src>

<mosaic_0001>
module attributes {stable_mosaic.version = 11 : i64} {
  func.func @kernel(%arg0: i32, %arg1: i32, %arg2: memref<1x1x18x18x4xbf16, #tpu.memory_space<vmem>>, %arg3: memref<36x8xbf16, #tpu.memory_space<vmem>>, %arg4: memref<1x8xf32, #tpu.memory_space<vmem>>, %arg5: memref<1x8xf32, #tpu.memory_space<vmem>>, %arg6: memref<1x8xf32, #tpu.memory_space<vmem>>, %arg7: memref<1x256x8xbf16, #tpu.memory_space<vmem>>, %arg8: memref<256x36xbf16, #tpu.memory_space<vmem>>) attributes {dimension_semantics = [#tpu.dimension_semantics<parallel>, #tpu.dimension_semantics<parallel>], iteration_bounds = array<i64: 2, 1>, scalar_prefetch = 0 : i64, scratch_operands = 1 : i64, tpu.core_type = #tpu.core_type<tc>, window_params = [{transform_indices = @transform_0, window_bounds = array<i64: 1, 1, 18, 18, 4>}, {pipeline_mode = #tpu.pipeline_mode<synchronous>, transform_indices = @transform_1, window_bounds = array<i64: 36, 8>}, {pipeline_mode = #tpu.pipeline_mode<synchronous>, transform_indices = @transform_2, window_bounds = array<i64: 1, 8>}, {pipeline_mode = #tpu.pipeline_mode<synchronous>, transform_indices = @transform_3, window_bounds = array<i64: 1, 8>}, {pipeline_mode = #tpu.pipeline_mode<synchronous>, transform_indices = @transform_4, window_bounds = array<i64: 1, 8>}, {transform_indices = @transform_5, window_bounds = array<i64: 1, 256, 8>}]} {
    %c0 = arith.constant 0 : index
    %c0_0 = arith.constant 0 : index
    %c0_1 = arith.constant 0 : index
    %c0_2 = arith.constant 0 : index
    %c0_3 = arith.constant 0 : index
    %0 = vector.load %arg2[%c0, %c0_0, %c0_1, %c0_2, %c0_3] : memref<1x1x18x18x4xbf16, #tpu.memory_space<vmem>>, vector<1x1x16x16x4xbf16>
    %1 = vector.shape_cast %0 : vector<1x1x16x16x4xbf16> to vector<16x16x4xbf16>
    %2 = vector.shape_cast %1 : vector<16x16x4xbf16> to vector<256x4xbf16>
    %c0_4 = arith.constant 0 : index
    %c0_5 = arith.constant 0 : index
    %3 = vector.load %arg8[%c0_4, %c0_5] : memref<256x36xbf16, #tpu.memory_space<vmem>>, vector<256x4xbf16>
    tpu.vector_store %arg8[%c0_4, %c0_5], %2 {strides = array<i32>} : memref<256x36xbf16, #tpu.memory_space<vmem>>, vector<256x4xbf16>,
    %c0_6 = arith.constant 0 : index
    %c0_7 = arith.constant 0 : index
    %c0_8 = arith.constant 0 : index
    %c1 = arith.constant 1 : index
    %c0_9 = arith.constant 0 : index
    %4 = vector.load %arg2[%c0_6, %c0_7, %c0_8, %c1, %c0_9] : memref<1x1x18x18x4xbf16, #tpu.memory_space<vmem>>, vector<1x1x16x16x4xbf16>
    %5 = vector.shape_cast %4 : vector<1x1x16x16x4xbf16> to vector<16x16x4xbf16>
    %6 = vector.shape_cast %5 : vector<16x16x4xbf16> to vector<256x4xbf16>
    %c0_10 = arith.constant 0 : index
    %c4 = arith.constant 4 : index
    %7 = vector.load %arg8[%c0_10, %c4] : memref<256x36xbf16, #tpu.memory_space<vmem>>, vector<256x4xbf16>
    tpu.vector_store %arg8[%c0_10, %c4], %6 {strides = array<i32>} : memref<256x36xbf16, #tpu.memory_space<vmem>>, vector<256x4xbf16>,
    %c0_11 = arith.constant 0 : index
    %c0_12 = arith.constant 0 : index
    %c0_13 = arith.constant 0 : index
    %c2 = arith.constant 2 : index
    %c0_14 = arith.constant 0 : index
    %8 = vector.load %arg2[%c0_11, %c0_12, %c0_13, %c2, %c0_14] : memref<1x1x18x18x4xbf16, #tpu.memory_space<vmem>>, vector<1x1x16x16x4xbf16>
    %9 = vector.shape_cast %8 : vector<1x1x16x16x4xbf16> to vector<16x16x4xbf16>
    %10 = vector.shape_cast %9 : vector<16x16x4xbf16> to vector<256x4xbf16>
    %c0_15 = arith.constant 0 : index
    %c8 = arith.constant 8 : index
    %11 = vector.load %arg8[%c0_15, %c8] : memref<256x36xbf16, #tpu.memory_space<vmem>>, vector<256x4xbf16>
    tpu.vector_store %arg8[%c0_15, %c8], %10 {strides = array<i32>} : memref<256x36xbf16, #tpu.memory_space<vmem>>, vector<256x4xbf16>,
    %c0_16 = arith.constant 0 : index
    %c0_17 = arith.constant 0 : index
    %c1_18 = arith.constant 1 : index
    %c0_19 = arith.constant 0 : index
    %c0_20 = arith.constant 0 : index
    %12 = vector.load %arg2[%c0_16, %c0_17, %c1_18, %c0_19, %c0_20] : memref<1x1x18x18x4xbf16, #tpu.memory_space<vmem>>, vector<1x1x16x16x4xbf16>
    %13 = vector.shape_cast %12 : vector<1x1x16x16x4xbf16> to vector<16x16x4xbf16>
    %14 = vector.shape_cast %13 : vector<16x16x4xbf16> to vector<256x4xbf16>
    %c0_21 = arith.constant 0 : index
    %c12 = arith.constant 12 : index
    %15 = vector.load %arg8[%c0_21, %c12] : memref<256x36xbf16, #tpu.memory_space<vmem>>, vector<256x4xbf16>
    tpu.vector_store %arg8[%c0_21, %c12], %14 {strides = array<i32>} : memref<256x36xbf16, #tpu.memory_space<vmem>>, vector<256x4xbf16>,
    %c0_22 = arith.constant 0 : index
    %c0_23 = arith.constant 0 : index
    %c1_24 = arith.constant 1 : index
    %c1_25 = arith.constant 1 : index
    %c0_26 = arith.constant 0 : index
    %16 = vector.load %arg2[%c0_22, %c0_23, %c1_24, %c1_25, %c0_26] : memref<1x1x18x18x4xbf16, #tpu.memory_space<vmem>>, vector<1x1x16x16x4xbf16>
    %17 = vector.shape_cast %16 : vector<1x1x16x16x4xbf16> to vector<16x16x4xbf16>
    %18 = vector.shape_cast %17 : vector<16x16x4xbf16> to vector<256x4xbf16>
    %c0_27 = arith.constant 0 : index
    %c16 = arith.constant 16 : index
    %19 = vector.load %arg8[%c0_27, %c16] : memref<256x36xbf16, #tpu.memory_space<vmem>>, vector<256x4xbf16>
    tpu.vector_store %arg8[%c0_27, %c16], %18 {strides = array<i32>} : memref<256x36xbf16, #tpu.memory_space<vmem>>, vector<256x4xbf16>,
    %c0_28 = arith.constant 0 : index
    %c0_29 = arith.constant 0 : index
    %c1_30 = arith.constant 1 : index
    %c2_31 = arith.constant 2 : index
    %c0_32 = arith.constant 0 : index
    %20 = vector.load %arg2[%c0_28, %c0_29, %c1_30, %c2_31, %c0_32] : memref<1x1x18x18x4xbf16, #tpu.memory_space<vmem>>, vector<1x1x16x16x4xbf16>
    %21 = vector.shape_cast %20 : vector<1x1x16x16x4xbf16> to vector<16x16x4xbf16>
    %22 = vector.shape_cast %21 : vector<16x16x4xbf16> to vector<256x4xbf16>
    %c0_33 = arith.constant 0 : index
    %c20 = arith.constant 20 : index
    %23 = vector.load %arg8[%c0_33, %c20] : memref<256x36xbf16, #tpu.memory_space<vmem>>, vector<256x4xbf16>
    tpu.vector_store %arg8[%c0_33, %c20], %22 {strides = array<i32>} : memref<256x36xbf16, #tpu.memory_space<vmem>>, vector<256x4xbf16>,
    %c0_34 = arith.constant 0 : index
    %c0_35 = arith.constant 0 : index
    %c2_36 = arith.constant 2 : index
    %c0_37 = arith.constant 0 : index
    %c0_38 = arith.constant 0 : index
    %24 = vector.load %arg2[%c0_34, %c0_35, %c2_36, %c0_37, %c0_38] : memref<1x1x18x18x4xbf16, #tpu.memory_space<vmem>>, vector<1x1x16x16x4xbf16>
    %25 = vector.shape_cast %24 : vector<1x1x16x16x4xbf16> to vector<16x16x4xbf16>
    %26 = vector.shape_cast %25 : vector<16x16x4xbf16> to vector<256x4xbf16>
    %c0_39 = arith.constant 0 : index
    %c24 = arith.constant 24 : index
    %27 = vector.load %arg8[%c0_39, %c24] : memref<256x36xbf16, #tpu.memory_space<vmem>>, vector<256x4xbf16>
    tpu.vector_store %arg8[%c0_39, %c24], %26 {strides = array<i32>} : memref<256x36xbf16, #tpu.memory_space<vmem>>, vector<256x4xbf16>,
    %c0_40 = arith.constant 0 : index
    %c0_41 = arith.constant 0 : index
    %c2_42 = arith.constant 2 : index
    %c1_43 = arith.constant 1 : index
    %c0_44 = arith.constant 0 : index
    %28 = vector.load %arg2[%c0_40, %c0_41, %c2_42, %c1_43, %c0_44] : memref<1x1x18x18x4xbf16, #tpu.memory_space<vmem>>, vector<1x1x16x16x4xbf16>
    %29 = vector.shape_cast %28 : vector<1x1x16x16x4xbf16> to vector<16x16x4xbf16>
    %30 = vector.shape_cast %29 : vector<16x16x4xbf16> to vector<256x4xbf16>
    %c0_45 = arith.constant 0 : index
    %c28 = arith.constant 28 : index
    %31 = vector.load %arg8[%c0_45, %c28] : memref<256x36xbf16, #tpu.memory_space<vmem>>, vector<256x4xbf16>
    tpu.vector_store %arg8[%c0_45, %c28], %30 {strides = array<i32>} : memref<256x36xbf16, #tpu.memory_space<vmem>>, vector<256x4xbf16>,
    %c0_46 = arith.constant 0 : index
    %c0_47 = arith.constant 0 : index
    %c2_48 = arith.constant 2 : index
    %c2_49 = arith.constant 2 : index
    %c0_50 = arith.constant 0 : index
    %32 = vector.load %arg2[%c0_46, %c0_47, %c2_48, %c2_49, %c0_50] : memref<1x1x18x18x4xbf16, #tpu.memory_space<vmem>>, vector<1x1x16x16x4xbf16>
    %33 = vector.shape_cast %32 : vector<1x1x16x16x4xbf16> to vector<16x16x4xbf16>
    %34 = vector.shape_cast %33 : vector<16x16x4xbf16> to vector<256x4xbf16>
    %c0_51 = arith.constant 0 : index
    %c32 = arith.constant 32 : index
    %35 = vector.load %arg8[%c0_51, %c32] : memref<256x36xbf16, #tpu.memory_space<vmem>>, vector<256x4xbf16>
    tpu.vector_store %arg8[%c0_51, %c32], %34 {strides = array<i32>} : memref<256x36xbf16, #tpu.memory_space<vmem>>, vector<256x4xbf16>,
    %c0_52 = arith.constant 0 : index
    %c0_53 = arith.constant 0 : index
    %36 = vector.load %arg8[%c0_52, %c0_53] : memref<256x36xbf16, #tpu.memory_space<vmem>>, vector<256x36xbf16>
    %c0_54 = arith.constant 0 : index
    %c0_55 = arith.constant 0 : index
    %37 = vector.load %arg3[%c0_54, %c0_55] : memref<36x8xbf16, #tpu.memory_space<vmem>>, vector<36x8xbf16>
    %cst = arith.constant dense<0.000000e+00> : vector<256x8xf32>
    %38 = tpu.matmul %36, %37, %cst {dimension_numbers = #tpu.dot_dimension_numbers<[1], [0], [0], [1], [0, 0, 1, 1], [], []>} : vector<256x36xbf16>, vector<36x8xbf16>, vector<256x8xf32> -> vector<256x8xf32>
    %c0_56 = arith.constant 0 : index
    %c0_57 = arith.constant 0 : index
    %39 = vector.load %arg4[%c0_56, %c0_57] : memref<1x8xf32, #tpu.memory_space<vmem>>, vector<1x8xf32>
    %40 = vector.broadcast %39 : vector<1x8xf32> to vector<256x8xf32>
    %41 = arith.mulf %38, %40 : vector<256x8xf32>
    %c0_58 = arith.constant 0 : index
    %c0_59 = arith.constant 0 : index
    %42 = vector.load %arg5[%c0_58, %c0_59] : memref<1x8xf32, #tpu.memory_space<vmem>>, vector<1x8xf32>
    %43 = vector.broadcast %42 : vector<1x8xf32> to vector<256x8xf32>
    %44 = arith.addf %41, %43 : vector<256x8xf32>
    %cst_60 = arith.constant 0.000000e+00 : f32
    %45 = vector.broadcast %cst_60 : f32 to vector<256x8xf32>
    %46 = arith.cmpf oge, %44, %45 : vector<256x8xf32>
    %c0_61 = arith.constant 0 : index
    %c0_62 = arith.constant 0 : index
    %47 = vector.load %arg6[%c0_61, %c0_62] : memref<1x8xf32, #tpu.memory_space<vmem>>, vector<1x8xf32>
    %48 = vector.broadcast %47 : vector<1x8xf32> to vector<256x8xf32>
    %49 = arith.mulf %48, %44 : vector<256x8xf32>
    %50 = arith.select %46, %44, %49 : vector<256x8xi1>, vector<256x8xf32>
    %51 = arith.truncf %50 : vector<256x8xf32> to vector<256x8xbf16>
    %c0_63 = arith.constant 0 : index
    %c0_64 = arith.constant 0 : index
    %c0_65 = arith.constant 0 : index
    %52 = vector.load %arg7[%c0_63, %c0_64, %c0_65] : memref<1x256x8xbf16, #tpu.memory_space<vmem>>, vector<1x256x8xbf16>
    %53 = vector.shape_cast %52 : vector<1x256x8xbf16> to vector<256x8xbf16>
    %54 = vector.shape_cast %51 : vector<256x8xbf16> to vector<1x256x8xbf16>
    tpu.vector_store %arg7[%c0_63, %c0_64, %c0_65], %54 {strides = array<i32>} : memref<1x256x8xbf16, #tpu.memory_space<vmem>>, vector<1x256x8xbf16>,
    return
  }
  func.func @transform_0(%arg0: i32, %arg1: i32) -> (i32, i32, i32, i32, i32) {
    %c1_i32 = arith.constant 1 : i32
    %0 = arith.muli %arg0, %c1_i32 : i32
    %1 = arith.addi %0, %arg1 : i32
    %c0_i32 = arith.constant 0 : i32
    %c0_i32_0 = arith.constant 0 : i32
    %c0_i32_1 = arith.constant 0 : i32
    %c0_i32_2 = arith.constant 0 : i32
    %c0_i32_3 = arith.constant 0 : i32
    return %1, %c0_i32, %c0_i32_0, %c0_i32_1, %c0_i32_2 : i32, i32, i32, i32, i32
  }
  func.func @transform_1(%arg0: i32, %arg1: i32) -> (i32, i32) {
    %c0_i32 = arith.constant 0 : i32
    %c0_i32_0 = arith.constant 0 : i32
    %c0_i32_1 = arith.constant 0 : i32
    return %c0_i32, %c0_i32_0 : i32, i32
  }
  func.func @transform_2(%arg0: i32, %arg1: i32) -> (i32, i32) {
    %c0_i32 = arith.constant 0 : i32
    %c0_i32_0 = arith.constant 0 : i32
    %c0_i32_1 = arith.constant 0 : i32
    return %c0_i32, %c0_i32_0 : i32, i32
  }
  func.func @transform_3(%arg0: i32, %arg1: i32) -> (i32, i32) {
    %c0_i32 = arith.constant 0 : i32
    %c0_i32_0 = arith.constant 0 : i32
    %c0_i32_1 = arith.constant 0 : i32
    return %c0_i32, %c0_i32_0 : i32, i32
  }
  func.func @transform_4(%arg0: i32, %arg1: i32) -> (i32, i32) {
    %c0_i32 = arith.constant 0 : i32
    %c0_i32_0 = arith.constant 0 : i32
    %c0_i32_1 = arith.constant 0 : i32
    return %c0_i32, %c0_i32_0 : i32, i32
  }
  func.func @transform_5(%arg0: i32, %arg1: i32) -> (i32, i32, i32) {
    %c0_i32 = arith.constant 0 : i32
    %c0_i32_0 = arith.constant 0 : i32
    return %arg0, %arg1, %c0_i32 : i32, i32, i32
  }
}

module attributes {stable_mosaic.version = 11 : i64} {
  func.func @kernel(%arg0: i32, %arg1: i32, %arg2: memref<1x4x9x9x8xbf16, #tpu.memory_space<vmem>>, %arg3: memref<72x8xbf16, #tpu.memory_space<vmem>>, %arg4: memref<1x8xf32, #tpu.memory_space<vmem>>, %arg5: memref<1x8xf32, #tpu.memory_space<vmem>>, %arg6: memref<1x64x8xbf16, #tpu.memory_space<vmem>>, %arg7: memref<64x72xbf16, #tpu.memory_space<vmem>>) attributes {dimension_semantics = [#tpu.dimension_semantics<parallel>, #tpu.dimension_semantics<parallel>], iteration_bounds = array<i64: 2, 1>, scalar_prefetch = 0 : i64, scratch_operands = 1 : i64, tpu.core_type = #tpu.core_type<tc>, window_params = [{transform_indices = @transform_0, window_bounds = array<i64: 1, 4, 9, 9, 8>}, {pipeline_mode = #tpu.pipeline_mode<synchronous>, transform_indices = @transform_1, window_bounds = array<i64: 72, 8>}, {pipeline_mode = #tpu.pipeline_mode<synchronous>, transform_indices = @transform_2, window_bounds = array<i64: 1, 8>}, {pipeline_mode = #tpu.pipeline_mode<synchronous>, transform_indices = @transform_3, window_bounds = array<i64: 1, 8>}, {transform_indices = @transform_4, window_bounds = array<i64: 1, 64, 8>}]} {
    %c0 = arith.constant 0 : index
    %c0_0 = arith.constant 0 : index
    %c0_1 = arith.constant 0 : index
    %c0_2 = arith.constant 0 : index
    %c0_3 = arith.constant 0 : index
    %0 = vector.load %arg2[%c0, %c0_0, %c0_1, %c0_2, %c0_3] : memref<1x4x9x9x8xbf16, #tpu.memory_space<vmem>>, vector<1x1x8x8x8xbf16>
    %1 = vector.shape_cast %0 : vector<1x1x8x8x8xbf16> to vector<8x8x8xbf16>
    %2 = vector.shape_cast %1 : vector<8x8x8xbf16> to vector<64x8xbf16>
    %c0_4 = arith.constant 0 : index
    %c0_5 = arith.constant 0 : index
    %3 = vector.load %arg7[%c0_4, %c0_5] : memref<64x72xbf16, #tpu.memory_space<vmem>>, vector<64x8xbf16>
    tpu.vector_store %arg7[%c0_4, %c0_5], %2 {strides = array<i32>} : memref<64x72xbf16, #tpu.memory_space<vmem>>, vector<64x8xbf16>,
    %c0_6 = arith.constant 0 : index
    %c1 = arith.constant 1 : index
    %c0_7 = arith.constant 0 : index
    %c0_8 = arith.constant 0 : index
    %c0_9 = arith.constant 0 : index
    %4 = vector.load %arg2[%c0_6, %c1, %c0_7, %c0_8, %c0_9] : memref<1x4x9x9x8xbf16, #tpu.memory_space<vmem>>, vector<1x1x8x8x8xbf16>
    %5 = vector.shape_cast %4 : vector<1x1x8x8x8xbf16> to vector<8x8x8xbf16>
    %6 = vector.shape_cast %5 : vector<8x8x8xbf16> to vector<64x8xbf16>
    %c0_10 = arith.constant 0 : index
    %c8 = arith.constant 8 : index
    %7 = vector.load %arg7[%c0_10, %c8] : memref<64x72xbf16, #tpu.memory_space<vmem>>, vector<64x8xbf16>
    tpu.vector_store %arg7[%c0_10, %c8], %6 {strides = array<i32>} : memref<64x72xbf16, #tpu.memory_space<vmem>>, vector<64x8xbf16>,
    %c0_11 = arith.constant 0 : index
    %c0_12 = arith.constant 0 : index
    %c0_13 = arith.constant 0 : index
    %c1_14 = arith.constant 1 : index
    %c0_15 = arith.constant 0 : index
    %8 = vector.load %arg2[%c0_11, %c0_12, %c0_13, %c1_14, %c0_15] : memref<1x4x9x9x8xbf16, #tpu.memory_space<vmem>>, vector<1x1x8x8x8xbf16>
    %9 = vector.shape_cast %8 : vector<1x1x8x8x8xbf16> to vector<8x8x8xbf16>
    %10 = vector.shape_cast %9 : vector<8x8x8xbf16> to vector<64x8xbf16>
    %c0_16 = arith.constant 0 : index
    %c16 = arith.constant 16 : index
    %11 = vector.load %arg7[%c0_16, %c16] : memref<64x72xbf16, #tpu.memory_space<vmem>>, vector<64x8xbf16>
    tpu.vector_store %arg7[%c0_16, %c16], %10 {strides = array<i32>} : memref<64x72xbf16, #tpu.memory_space<vmem>>, vector<64x8xbf16>,
    %c0_17 = arith.constant 0 : index
    %c2 = arith.constant 2 : index
    %c0_18 = arith.constant 0 : index
    %c0_19 = arith.constant 0 : index
    %c0_20 = arith.constant 0 : index
    %12 = vector.load %arg2[%c0_17, %c2, %c0_18, %c0_19, %c0_20] : memref<1x4x9x9x8xbf16, #tpu.memory_space<vmem>>, vector<1x1x8x8x8xbf16>
    %13 = vector.shape_cast %12 : vector<1x1x8x8x8xbf16> to vector<8x8x8xbf16>
    %14 = vector.shape_cast %13 : vector<8x8x8xbf16> to vector<64x8xbf16>
    %c0_21 = arith.constant 0 : index
    %c24 = arith.constant 24 : index
    %15 = vector.load %arg7[%c0_21, %c24] : memref<64x72xbf16, #tpu.memory_space<vmem>>, vector<64x8xbf16>
    tpu.vector_store %arg7[%c0_21, %c24], %14 {strides = array<i32>} : memref<64x72xbf16, #tpu.memory_space<vmem>>, vector<64x8xbf16>,
    %c0_22 = arith.constant 0 : index
    %c3 = arith.constant 3 : index
    %c0_23 = arith.constant 0 : index
    %c0_24 = arith.constant 0 : index
    %c0_25 = arith.constant 0 : index
    %16 = vector.load %arg2[%c0_22, %c3, %c0_23, %c0_24, %c0_25] : memref<1x4x9x9x8xbf16, #tpu.memory_space<vmem>>, vector<1x1x8x8x8xbf16>
    %17 = vector.shape_cast %16 : vector<1x1x8x8x8xbf16> to vector<8x8x8xbf16>
    %18 = vector.shape_cast %17 : vector<8x8x8xbf16> to vector<64x8xbf16>
    %c0_26 = arith.constant 0 : index
    %c32 = arith.constant 32 : index
    %19 = vector.load %arg7[%c0_26, %c32] : memref<64x72xbf16, #tpu.memory_space<vmem>>, vector<64x8xbf16>
    tpu.vector_store %arg7[%c0_26, %c32], %18 {strides = array<i32>} : memref<64x72xbf16, #tpu.memory_space<vmem>>, vector<64x8xbf16>,
    %c0_27 = arith.constant 0 : index
    %c2_28 = arith.constant 2 : index
    %c0_29 = arith.constant 0 : index
    %c1_30 = arith.constant 1 : index
    %c0_31 = arith.constant 0 : index
    %20 = vector.load %arg2[%c0_27, %c2_28, %c0_29, %c1_30, %c0_31] : memref<1x4x9x9x8xbf16, #tpu.memory_space<vmem>>, vector<1x1x8x8x8xbf16>
    %21 = vector.shape_cast %20 : vector<1x1x8x8x8xbf16> to vector<8x8x8xbf16>
    %22 = vector.shape_cast %21 : vector<8x8x8xbf16> to vector<64x8xbf16>
    %c0_32 = arith.constant 0 : index
    %c40 = arith.constant 40 : index
    %23 = vector.load %arg7[%c0_32, %c40] : memref<64x72xbf16, #tpu.memory_space<vmem>>, vector<64x8xbf16>
    tpu.vector_store %arg7[%c0_32, %c40], %22 {strides = array<i32>} : memref<64x72xbf16, #tpu.memory_space<vmem>>, vector<64x8xbf16>,
    %c0_33 = arith.constant 0 : index
    %c0_34 = arith.constant 0 : index
    %c1_35 = arith.constant 1 : index
    %c0_36 = arith.constant 0 : index
    %c0_37 = arith.constant 0 : index
    %24 = vector.load %arg2[%c0_33, %c0_34, %c1_35, %c0_36, %c0_37] : memref<1x4x9x9x8xbf16, #tpu.memory_space<vmem>>, vector<1x1x8x8x8xbf16>
    %25 = vector.shape_cast %24 : vector<1x1x8x8x8xbf16> to vector<8x8x8xbf16>
    %26 = vector.shape_cast %25 : vector<8x8x8xbf16> to vector<64x8xbf16>
    %c0_38 = arith.constant 0 : index
    %c48 = arith.constant 48 : index
    %27 = vector.load %arg7[%c0_38, %c48] : memref<64x72xbf16, #tpu.memory_space<vmem>>, vector<64x8xbf16>
    tpu.vector_store %arg7[%c0_38, %c48], %26 {strides = array<i32>} : memref<64x72xbf16, #tpu.memory_space<vmem>>, vector<64x8xbf16>,
    %c0_39 = arith.constant 0 : index
    %c1_40 = arith.constant 1 : index
    %c1_41 = arith.constant 1 : index
    %c0_42 = arith.constant 0 : index
    %c0_43 = arith.constant 0 : index
    %28 = vector.load %arg2[%c0_39, %c1_40, %c1_41, %c0_42, %c0_43] : memref<1x4x9x9x8xbf16, #tpu.memory_space<vmem>>, vector<1x1x8x8x8xbf16>
    %29 = vector.shape_cast %28 : vector<1x1x8x8x8xbf16> to vector<8x8x8xbf16>
    %30 = vector.shape_cast %29 : vector<8x8x8xbf16> to vector<64x8xbf16>
    %c0_44 = arith.constant 0 : index
    %c56 = arith.constant 56 : index
    %31 = vector.load %arg7[%c0_44, %c56] : memref<64x72xbf16, #tpu.memory_space<vmem>>, vector<64x8xbf16>
    tpu.vector_store %arg7[%c0_44, %c56], %30 {strides = array<i32>} : memref<64x72xbf16, #tpu.memory_space<vmem>>, vector<64x8xbf16>,
    %c0_45 = arith.constant 0 : index
    %c0_46 = arith.constant 0 : index
    %c1_47 = arith.constant 1 : index
    %c1_48 = arith.constant 1 : index
    %c0_49 = arith.constant 0 : index
    %32 = vector.load %arg2[%c0_45, %c0_46, %c1_47, %c1_48, %c0_49] : memref<1x4x9x9x8xbf16, #tpu.memory_space<vmem>>, vector<1x1x8x8x8xbf16>
    %33 = vector.shape_cast %32 : vector<1x1x8x8x8xbf16> to vector<8x8x8xbf16>
    %34 = vector.shape_cast %33 : vector<8x8x8xbf16> to vector<64x8xbf16>
    %c0_50 = arith.constant 0 : index
    %c64 = arith.constant 64 : index
    %35 = vector.load %arg7[%c0_50, %c64] : memref<64x72xbf16, #tpu.memory_space<vmem>>, vector<64x8xbf16>
    tpu.vector_store %arg7[%c0_50, %c64], %34 {strides = array<i32>} : memref<64x72xbf16, #tpu.memory_space<vmem>>, vector<64x8xbf16>,
    %c0_51 = arith.constant 0 : index
    %c0_52 = arith.constant 0 : index
    %36 = vector.load %arg7[%c0_51, %c0_52] : memref<64x72xbf16, #tpu.memory_space<vmem>>, vector<64x72xbf16>
    %c0_53 = arith.constant 0 : index
    %c0_54 = arith.constant 0 : index
    %37 = vector.load %arg3[%c0_53, %c0_54] : memref<72x8xbf16, #tpu.memory_space<vmem>>, vector<72x8xbf16>
    %cst = arith.constant dense<0.000000e+00> : vector<64x8xf32>
    %38 = tpu.matmul %36, %37, %cst {dimension_numbers = #tpu.dot_dimension_numbers<[1], [0], [0], [1], [0, 0, 1, 1], [], []>} : vector<64x72xbf16>, vector<72x8xbf16>, vector<64x8xf32> -> vector<64x8xf32>
    %c0_55 = arith.constant 0 : index
    %c0_56 = arith.constant 0 : index
    %39 = vector.load %arg4[%c0_55, %c0_56] : memref<1x8xf32, #tpu.memory_space<vmem>>, vector<1x8xf32>
    %40 = vector.broadcast %39 : vector<1x8xf32> to vector<64x8xf32>
    %41 = arith.mulf %38, %40 : vector<64x8xf32>
    %c0_57 = arith.constant 0 : index
    %c0_58 = arith.constant 0 : index
    %42 = vector.load %arg5[%c0_57, %c0_58] : memref<1x8xf32, #tpu.memory_space<vmem>>, vector<1x8xf32>
    %43 = vector.broadcast %42 : vector<1x8xf32> to vector<64x8xf32>
    %44 = arith.addf %41, %43 : vector<64x8xf32>
    %45 = arith.truncf %44 : vector<64x8xf32> to vector<64x8xbf16>
    %c0_59 = arith.constant 0 : index
    %c0_60 = arith.constant 0 : index
    %c0_61 = arith.constant 0 : index
    %46 = vector.load %arg6[%c0_59, %c0_60, %c0_61] : memref<1x64x8xbf16, #tpu.memory_space<vmem>>, vector<1x64x8xbf16>
    %47 = vector.shape_cast %46 : vector<1x64x8xbf16> to vector<64x8xbf16>
    %48 = vector.shape_cast %45 : vector<64x8xbf16> to vector<1x64x8xbf16>
    tpu.vector_store %arg6[%c0_59, %c0_60, %c0_61], %48 {strides = array<i32>} : memref<1x64x8xbf16, #tpu.memory_space<vmem>>, vector<1x64x8xbf16>,
    return
  }
  func.func @transform_0(%arg0: i32, %arg1: i32) -> (i32, i32, i32, i32, i32) {
    %c1_i32 = arith.constant 1 : i32
    %0 = arith.muli %arg0, %c1_i32 : i32
    %1 = arith.addi %0, %arg1 : i32
    %c0_i32 = arith.constant 0 : i32
    %c0_i32_0 = arith.constant 0 : i32
    %c0_i32_1 = arith.constant 0 : i32
    %c0_i32_2 = arith.constant 0 : i32
    %c0_i32_3 = arith.constant 0 : i32
    return %1, %c0_i32, %c0_i32_0, %c0_i32_1, %c0_i32_2 : i32, i32, i32, i32, i32
  }
  func.func @transform_1(%arg0: i32, %arg1: i32) -> (i32, i32) {
    %c0_i32 = arith.constant 0 : i32
    %c0_i32_0 = arith.constant 0 : i32
    %c0_i32_1 = arith.constant 0 : i32
    return %c0_i32, %c0_i32_0 : i32, i32
  }
  func.func @transform_2(%arg0: i32, %arg1: i32) -> (i32, i32) {
    %c0_i32 = arith.constant 0 : i32
    %c0_i32_0 = arith.constant 0 : i32
    %c0_i32_1 = arith.constant 0 : i32
    return %c0_i32, %c0_i32_0 : i32, i32
  }
  func.func @transform_3(%arg0: i32, %arg1: i32) -> (i32, i32) {
    %c0_i32 = arith.constant 0 : i32
    %c0_i32_0 = arith.constant 0 : i32
    %c0_i32_1 = arith.constant 0 : i32
    return %c0_i32, %c0_i32_0 : i32, i32
  }
  func.func @transform_4(%arg0: i32, %arg1: i32) -> (i32, i32, i32) {
    %c0_i32 = arith.constant 0 : i32
    %c0_i32_0 = arith.constant 0 : i32
    return %arg0, %arg1, %c0_i32 : i32, i32, i32
  }
}

module attributes {stable_mosaic.version = 11 : i64} {
  func.func @kernel(%arg0: i32, %arg1: memref<128x8xbf16, #tpu.memory_space<vmem>>, %arg2: memref<8x8xbf16, #tpu.memory_space<vmem>>, %arg3: memref<8x8xbf16, #tpu.memory_space<vmem>>, %arg4: memref<8x8xbf16, #tpu.memory_space<vmem>>, %arg5: memref<128x8xbf16, #tpu.memory_space<vmem>>, %arg6: memref<128x8xbf16, #tpu.memory_space<vmem>>, %arg7: memref<128x8xbf16, #tpu.memory_space<vmem>>) attributes {dimension_semantics = [#tpu.dimension_semantics<parallel>], iteration_bounds = array<i64: 1>, scalar_prefetch = 0 : i64, scratch_operands = 0 : i64, tpu.core_type = #tpu.core_type<tc>, window_params = [{transform_indices = @transform_0, window_bounds = array<i64: 128, 8>}, {pipeline_mode = #tpu.pipeline_mode<synchronous>, transform_indices = @transform_1, window_bounds = array<i64: 8, 8>}, {pipeline_mode = #tpu.pipeline_mode<synchronous>, transform_indices = @transform_2, window_bounds = array<i64: 8, 8>}, {pipeline_mode = #tpu.pipeline_mode<synchronous>, transform_indices = @transform_3, window_bounds = array<i64: 8, 8>}, {transform_indices = @transform_4, window_bounds = array<i64: 128, 8>}, {transform_indices = @transform_5, window_bounds = array<i64: 128, 8>}, {transform_indices = @transform_6, window_bounds = array<i64: 128, 8>}]} {
    %c0 = arith.constant 0 : index
    %c0_0 = arith.constant 0 : index
    %0 = vector.load %arg1[%c0, %c0_0] : memref<128x8xbf16, #tpu.memory_space<vmem>>, vector<128x8xbf16>
    %c0_1 = arith.constant 0 : index
    %c0_2 = arith.constant 0 : index
    %1 = vector.load %arg2[%c0_1, %c0_2] : memref<8x8xbf16, #tpu.memory_space<vmem>>, vector<8x8xbf16>
    %cst = arith.constant dense<0.000000e+00> : vector<128x8xf32>
    %2 = tpu.matmul %0, %1, %cst {dimension_numbers = #tpu.dot_dimension_numbers<[1], [0], [0], [1], [0, 0, 1, 1], [], []>} : vector<128x8xbf16>, vector<8x8xbf16>, vector<128x8xf32> -> vector<128x8xf32>
    %3 = arith.truncf %2 : vector<128x8xf32> to vector<128x8xbf16>
    %c0_3 = arith.constant 0 : index
    %c0_4 = arith.constant 0 : index
    %4 = vector.load %arg5[%c0_3, %c0_4] : memref<128x8xbf16, #tpu.memory_space<vmem>>, vector<128x8xbf16>
    tpu.vector_store %arg5[%c0_3, %c0_4], %3 {strides = array<i32>} : memref<128x8xbf16, #tpu.memory_space<vmem>>, vector<128x8xbf16>,
    %c0_5 = arith.constant 0 : index
    %c0_6 = arith.constant 0 : index
    %5 = vector.load %arg3[%c0_5, %c0_6] : memref<8x8xbf16, #tpu.memory_space<vmem>>, vector<8x8xbf16>
    %cst_7 = arith.constant dense<0.000000e+00> : vector<128x8xf32>
    %6 = tpu.matmul %0, %5, %cst_7 {dimension_numbers = #tpu.dot_dimension_numbers<[1], [0], [0], [1], [0, 0, 1, 1], [], []>} : vector<128x8xbf16>, vector<8x8xbf16>, vector<128x8xf32> -> vector<128x8xf32>
    %7 = arith.truncf %6 : vector<128x8xf32> to vector<128x8xbf16>
    %c0_8 = arith.constant 0 : index
    %c0_9 = arith.constant 0 : index
    %8 = vector.load %arg6[%c0_8, %c0_9] : memref<128x8xbf16, #tpu.memory_space<vmem>>, vector<128x8xbf16>
    tpu.vector_store %arg6[%c0_8, %c0_9], %7 {strides = array<i32>} : memref<128x8xbf16, #tpu.memory_space<vmem>>, vector<128x8xbf16>,
    %c0_10 = arith.constant 0 : index
    %c0_11 = arith.constant 0 : index
    %9 = vector.load %arg4[%c0_10, %c0_11] : memref<8x8xbf16, #tpu.memory_space<vmem>>, vector<8x8xbf16>
    %cst_12 = arith.constant dense<0.000000e+00> : vector<128x8xf32>
    %10 = tpu.matmul %0, %9, %cst_12 {dimension_numbers = #tpu.dot_dimension_numbers<[1], [0], [0], [1], [0, 0, 1, 1], [], []>} : vector<128x8xbf16>, vector<8x8xbf16>, vector<128x8xf32> -> vector<128x8xf32>
    %11 = arith.truncf %10 : vector<128x8xf32> to vector<128x8xbf16>
    %c0_13 = arith.constant 0 : index
    %c0_14 = arith.constant 0 : index
    %12 = vector.load %arg7[%c0_13, %c0_14] : memref<128x8xbf16, #tpu.memory_space<vmem>>, vector<128x8xbf16>
    tpu.vector_store %arg7[%c0_13, %c0_14], %11 {strides = array<i32>} : memref<128x8xbf16, #tpu.memory_space<vmem>>, vector<128x8xbf16>,
    return
  }
  func.func @transform_0(%arg0: i32) -> (i32, i32) {
    %c0_i32 = arith.constant 0 : i32
    %c0_i32_0 = arith.constant 0 : i32
    return %arg0, %c0_i32 : i32, i32
  }
  func.func @transform_1(%arg0: i32) -> (i32, i32) {
    %c0_i32 = arith.constant 0 : i32
    %c0_i32_0 = arith.constant 0 : i32
    %c0_i32_1 = arith.constant 0 : i32
    return %c0_i32, %c0_i32_0 : i32, i32
  }
  func.func @transform_2(%arg0: i32) -> (i32, i32) {
    %c0_i32 = arith.constant 0 : i32
    %c0_i32_0 = arith.constant 0 : i32
    %c0_i32_1 = arith.constant 0 : i32
    return %c0_i32, %c0_i32_0 : i32, i32
  }
  func.func @transform_3(%arg0: i32) -> (i32, i32) {
    %c0_i32 = arith.constant 0 : i32
    %c0_i32_0 = arith.constant 0 : i32
    %c0_i32_1 = arith.constant 0 : i32
    return %c0_i32, %c0_i32_0 : i32, i32
  }
  func.func @transform_4(%arg0: i32) -> (i32, i32) {
    %c0_i32 = arith.constant 0 : i32
    %c0_i32_0 = arith.constant 0 : i32
    return %arg0, %c0_i32 : i32, i32
  }
  func.func @transform_5(%arg0: i32) -> (i32, i32) {
    %c0_i32 = arith.constant 0 : i32
    %c0_i32_0 = arith.constant 0 : i32
    return %arg0, %c0_i32 : i32, i32
  }
  func.func @transform_6(%arg0: i32) -> (i32, i32) {
    %c0_i32 = arith.constant 0 : i32
    %c0_i32_0 = arith.constant 0 : i32
    return %arg0, %c0_i32 : i32, i32
  }
}

module attributes {stable_mosaic.version = 11 : i64} {
  func.func @_sca_scores_kernel(%arg0: i32, %arg1: memref<1x16x8xbf16, #tpu.memory_space<vmem>>, %arg2: memref<1x16x8xbf16, #tpu.memory_space<vmem>>, %arg3: memref<1x8x8xf32, #tpu.memory_space<vmem>>) attributes {dimension_semantics = [#tpu.dimension_semantics<parallel>], iteration_bounds = array<i64: 2>, scalar_prefetch = 0 : i64, scratch_operands = 0 : i64, tpu.core_type = #tpu.core_type<tc>, window_params = [{transform_indices = @transform_0, window_bounds = array<i64: 1, 16, 8>}, {transform_indices = @transform_1, window_bounds = array<i64: 1, 16, 8>}, {transform_indices = @transform_2, window_bounds = array<i64: 1, 8, 8>}]} {
    %c0 = arith.constant 0 : index
    %c0_0 = arith.constant 0 : index
    %c0_1 = arith.constant 0 : index
    %0 = vector.load %arg2[%c0, %c0_0, %c0_1] : memref<1x16x8xbf16, #tpu.memory_space<vmem>>, vector<1x16x8xbf16>
    %1 = vector.shape_cast %0 : vector<1x16x8xbf16> to vector<16x8xbf16>
    %c0_2 = arith.constant 0 : index
    %c0_3 = arith.constant 0 : index
    %c0_4 = arith.constant 0 : index
    %2 = vector.load %arg1[%c0_2, %c0_3, %c0_4] : memref<1x16x8xbf16, #tpu.memory_space<vmem>>, vector<1x16x8xbf16>
    %3 = vector.shape_cast %2 : vector<1x16x8xbf16> to vector<16x8xbf16>
    %cst = arith.constant dense<0.000000e+00> : vector<8x8xf32>
    %4 = tpu.matmul %1, %3, %cst {dimension_numbers = #tpu.dot_dimension_numbers<[0], [0], [1], [1], [0, 1, 1, 1], [], []>} : vector<16x8xbf16>, vector<16x8xbf16>, vector<8x8xf32> -> vector<8x8xf32>
    %cst_5 = arith.constant dense<0xFF800000> : vector<8xf32>
    %5 = vector.multi_reduction <maximumf>, %4, %cst_5 [0] : vector<8x8xf32> to vector<8xf32>
    %6 = vector.shape_cast %5 : vector<8xf32> to vector<1x8xf32>
    %7 = vector.broadcast %6 : vector<1x8xf32> to vector<8x8xf32>
    %8 = arith.subf %4, %7 : vector<8x8xf32>
    %9 = math.exp %8 : vector<8x8xf32>
    %cst_6 = arith.constant dense<0.000000e+00> : vector<8xf32>
    %10 = vector.multi_reduction <add>, %9, %cst_6 [0] : vector<8x8xf32> to vector<8xf32>
    %11 = vector.shape_cast %10 : vector<8xf32> to vector<1x8xf32>
    %12 = tpu.reciprocal %11 {approx = true} : vector<1x8xf32> -> vector<1x8xf32>
    %13 = vector.broadcast %12 : vector<1x8xf32> to vector<8x8xf32>
    %14 = arith.mulf %9, %13 : vector<8x8xf32>
    %c0_7 = arith.constant 0 : index
    %c0_8 = arith.constant 0 : index
    %c0_9 = arith.constant 0 : index
    %15 = vector.load %arg3[%c0_7, %c0_8, %c0_9] : memref<1x8x8xf32, #tpu.memory_space<vmem>>, vector<1x8x8xf32>
    %16 = vector.shape_cast %15 : vector<1x8x8xf32> to vector<8x8xf32>
    %17 = vector.shape_cast %14 : vector<8x8xf32> to vector<1x8x8xf32>
    tpu.vector_store %arg3[%c0_7, %c0_8, %c0_9], %17 {strides = array<i32>} : memref<1x8x8xf32, #tpu.memory_space<vmem>>, vector<1x8x8xf32>,
    return
  }
  func.func @transform_0(%arg0: i32) -> (i32, i32, i32) {
    %c0_i32 = arith.constant 0 : i32
    %c0_i32_0 = arith.constant 0 : i32
    %c0_i32_1 = arith.constant 0 : i32
    return %arg0, %c0_i32, %c0_i32_0 : i32, i32, i32
  }
  func.func @transform_1(%arg0: i32) -> (i32, i32, i32) {
    %c0_i32 = arith.constant 0 : i32
    %c0_i32_0 = arith.constant 0 : i32
    %c0_i32_1 = arith.constant 0 : i32
    return %arg0, %c0_i32, %c0_i32_0 : i32, i32, i32
  }
  func.func @transform_2(%arg0: i32) -> (i32, i32, i32) {
    %c0_i32 = arith.constant 0 : i32
    %c0_i32_0 = arith.constant 0 : i32
    %c0_i32_1 = arith.constant 0 : i32
    return %arg0, %c0_i32, %c0_i32_0 : i32, i32, i32
  }
}

module attributes {stable_mosaic.version = 11 : i64} {
  func.func @_sca_apply_kernel(%arg0: i32, %arg1: i32, %arg2: memref<1x64x8xbf16, #tpu.memory_space<vmem>>, %arg3: memref<1x8x8xbf16, #tpu.memory_space<vmem>>, %arg4: memref<1x64x8xbf16, #tpu.memory_space<vmem>>, %arg5: memref<1x64x8xf32, #tpu.memory_space<vmem>>) attributes {dimension_semantics = [#tpu.dimension_semantics<parallel>, #tpu.dimension_semantics<parallel>], iteration_bounds = array<i64: 2, 1>, scalar_prefetch = 0 : i64, scratch_operands = 0 : i64, tpu.core_type = #tpu.core_type<tc>, window_params = [{transform_indices = @transform_0, window_bounds = array<i64: 1, 64, 8>}, {transform_indices = @transform_1, window_bounds = array<i64: 1, 8, 8>}, {transform_indices = @transform_2, window_bounds = array<i64: 1, 64, 8>}, {transform_indices = @transform_3, window_bounds = array<i64: 1, 64, 8>}]} {
    %c0 = arith.constant 0 : index
    %c0_0 = arith.constant 0 : index
    %c0_1 = arith.constant 0 : index
    %0 = vector.load %arg2[%c0, %c0_0, %c0_1] : memref<1x64x8xbf16, #tpu.memory_space<vmem>>, vector<1x64x8xbf16>
    %1 = vector.shape_cast %0 : vector<1x64x8xbf16> to vector<64x8xbf16>
    %c0_2 = arith.constant 0 : index
    %c0_3 = arith.constant 0 : index
    %c0_4 = arith.constant 0 : index
    %2 = vector.load %arg3[%c0_2, %c0_3, %c0_4] : memref<1x8x8xbf16, #tpu.memory_space<vmem>>, vector<1x8x8xbf16>
    %3 = vector.shape_cast %2 : vector<1x8x8xbf16> to vector<8x8xbf16>
    %cst = arith.constant dense<0.000000e+00> : vector<64x8xf32>
    %4 = tpu.matmul %1, %3, %cst {dimension_numbers = #tpu.dot_dimension_numbers<[1], [0], [0], [1], [0, 0, 1, 1], [], []>} : vector<64x8xbf16>, vector<8x8xbf16>, vector<64x8xf32> -> vector<64x8xf32>
    %c0_5 = arith.constant 0 : index
    %c0_6 = arith.constant 0 : index
    %c0_7 = arith.constant 0 : index
    %5 = vector.load %arg4[%c0_5, %c0_6, %c0_7] : memref<1x64x8xbf16, #tpu.memory_space<vmem>>, vector<1x64x8xbf16>
    %6 = vector.shape_cast %5 : vector<1x64x8xbf16> to vector<64x8xbf16>
    %7 = arith.extf %6 : vector<64x8xbf16> to vector<64x8xf32>
    %8 = arith.addf %4, %7 : vector<64x8xf32>
    %c0_8 = arith.constant 0 : index
    %c0_9 = arith.constant 0 : index
    %c0_10 = arith.constant 0 : index
    %9 = vector.load %arg5[%c0_8, %c0_9, %c0_10] : memref<1x64x8xf32, #tpu.memory_space<vmem>>, vector<1x64x8xf32>
    %10 = vector.shape_cast %9 : vector<1x64x8xf32> to vector<64x8xf32>
    %11 = vector.shape_cast %8 : vector<64x8xf32> to vector<1x64x8xf32>
    tpu.vector_store %arg5[%c0_8, %c0_9, %c0_10], %11 {strides = array<i32>} : memref<1x64x8xf32, #tpu.memory_space<vmem>>, vector<1x64x8xf32>,
    return
  }
  func.func @transform_0(%arg0: i32, %arg1: i32) -> (i32, i32, i32) {
    %c0_i32 = arith.constant 0 : i32
    %c0_i32_0 = arith.constant 0 : i32
    return %arg0, %arg1, %c0_i32 : i32, i32, i32
  }
  func.func @transform_1(%arg0: i32, %arg1: i32) -> (i32, i32, i32) {
    %c0_i32 = arith.constant 0 : i32
    %c0_i32_0 = arith.constant 0 : i32
    %c0_i32_1 = arith.constant 0 : i32
    return %arg0, %c0_i32, %c0_i32_0 : i32, i32, i32
  }
  func.func @transform_2(%arg0: i32, %arg1: i32) -> (i32, i32, i32) {
    %c0_i32 = arith.constant 0 : i32
    %c0_i32_0 = arith.constant 0 : i32
    return %arg0, %arg1, %c0_i32 : i32, i32, i32
  }
  func.func @transform_3(%arg0: i32, %arg1: i32) -> (i32, i32, i32) {
    %c0_i32 = arith.constant 0 : i32
    %c0_i32_0 = arith.constant 0 : i32
    return %arg0, %arg1, %c0_i32 : i32, i32, i32
  }
}

module attributes {stable_mosaic.version = 11 : i64} {
  func.func @kernel(%arg0: i32, %arg1: memref<128x8xf32, #tpu.memory_space<vmem>>, %arg2: memref<8x4xbf16, #tpu.memory_space<vmem>>, %arg3: memref<8x4xbf16, #tpu.memory_space<vmem>>, %arg4: memref<8x8xbf16, #tpu.memory_space<vmem>>, %arg5: memref<128x4xbf16, #tpu.memory_space<vmem>>, %arg6: memref<128x4xbf16, #tpu.memory_space<vmem>>, %arg7: memref<128x8xbf16, #tpu.memory_space<vmem>>) attributes {dimension_semantics = [#tpu.dimension_semantics<parallel>], iteration_bounds = array<i64: 1>, scalar_prefetch = 0 : i64, scratch_operands = 0 : i64, tpu.core_type = #tpu.core_type<tc>, window_params = [{transform_indices = @transform_0, window_bounds = array<i64: 128, 8>}, {pipeline_mode = #tpu.pipeline_mode<synchronous>, transform_indices = @transform_1, window_bounds = array<i64: 8, 4>}, {pipeline_mode = #tpu.pipeline_mode<synchronous>, transform_indices = @transform_2, window_bounds = array<i64: 8, 4>}, {pipeline_mode = #tpu.pipeline_mode<synchronous>, transform_indices = @transform_3, window_bounds = array<i64: 8, 8>}, {transform_indices = @transform_4, window_bounds = array<i64: 128, 4>}, {transform_indices = @transform_5, window_bounds = array<i64: 128, 4>}, {transform_indices = @transform_6, window_bounds = array<i64: 128, 8>}]} {
    %c0 = arith.constant 0 : index
    %c0_0 = arith.constant 0 : index
    %0 = vector.load %arg1[%c0, %c0_0] : memref<128x8xf32, #tpu.memory_space<vmem>>, vector<128x8xf32>
    %1 = arith.truncf %0 : vector<128x8xf32> to vector<128x8xbf16>
    %c0_1 = arith.constant 0 : index
    %c0_2 = arith.constant 0 : index
    %2 = vector.load %arg2[%c0_1, %c0_2] : memref<8x4xbf16, #tpu.memory_space<vmem>>, vector<8x4xbf16>
    %cst = arith.constant dense<0.000000e+00> : vector<128x4xf32>
    %3 = tpu.matmul %1, %2, %cst {dimension_numbers = #tpu.dot_dimension_numbers<[1], [0], [0], [1], [0, 0, 1, 1], [], []>} : vector<128x8xbf16>, vector<8x4xbf16>, vector<128x4xf32> -> vector<128x4xf32>
    %4 = arith.truncf %3 : vector<128x4xf32> to vector<128x4xbf16>
    %c0_3 = arith.constant 0 : index
    %c0_4 = arith.constant 0 : index
    %5 = vector.load %arg5[%c0_3, %c0_4] : memref<128x4xbf16, #tpu.memory_space<vmem>>, vector<128x4xbf16>
    tpu.vector_store %arg5[%c0_3, %c0_4], %4 {strides = array<i32>} : memref<128x4xbf16, #tpu.memory_space<vmem>>, vector<128x4xbf16>,
    %c0_5 = arith.constant 0 : index
    %c0_6 = arith.constant 0 : index
    %6 = vector.load %arg3[%c0_5, %c0_6] : memref<8x4xbf16, #tpu.memory_space<vmem>>, vector<8x4xbf16>
    %cst_7 = arith.constant dense<0.000000e+00> : vector<128x4xf32>
    %7 = tpu.matmul %1, %6, %cst_7 {dimension_numbers = #tpu.dot_dimension_numbers<[1], [0], [0], [1], [0, 0, 1, 1], [], []>} : vector<128x8xbf16>, vector<8x4xbf16>, vector<128x4xf32> -> vector<128x4xf32>
    %8 = arith.truncf %7 : vector<128x4xf32> to vector<128x4xbf16>
    %c0_8 = arith.constant 0 : index
    %c0_9 = arith.constant 0 : index
    %9 = vector.load %arg6[%c0_8, %c0_9] : memref<128x4xbf16, #tpu.memory_space<vmem>>, vector<128x4xbf16>
    tpu.vector_store %arg6[%c0_8, %c0_9], %8 {strides = array<i32>} : memref<128x4xbf16, #tpu.memory_space<vmem>>, vector<128x4xbf16>,
    %c0_10 = arith.constant 0 : index
    %c0_11 = arith.constant 0 : index
    %10 = vector.load %arg4[%c0_10, %c0_11] : memref<8x8xbf16, #tpu.memory_space<vmem>>, vector<8x8xbf16>
    %cst_12 = arith.constant dense<0.000000e+00> : vector<128x8xf32>
    %11 = tpu.matmul %1, %10, %cst_12 {dimension_numbers = #tpu.dot_dimension_numbers<[1], [0], [0], [1], [0, 0, 1, 1], [], []>} : vector<128x8xbf16>, vector<8x8xbf16>, vector<128x8xf32> -> vector<128x8xf32>
    %12 = arith.truncf %11 : vector<128x8xf32> to vector<128x8xbf16>
    %c0_13 = arith.constant 0 : index
    %c0_14 = arith.constant 0 : index
    %13 = vector.load %arg7[%c0_13, %c0_14] : memref<128x8xbf16, #tpu.memory_space<vmem>>, vector<128x8xbf16>
    tpu.vector_store %arg7[%c0_13, %c0_14], %12 {strides = array<i32>} : memref<128x8xbf16, #tpu.memory_space<vmem>>, vector<128x8xbf16>,
    return
  }
  func.func @transform_0(%arg0: i32) -> (i32, i32) {
    %c0_i32 = arith.constant 0 : i32
    %c0_i32_0 = arith.constant 0 : i32
    return %arg0, %c0_i32 : i32, i32
  }
  func.func @transform_1(%arg0: i32) -> (i32, i32) {
    %c0_i32 = arith.constant 0 : i32
    %c0_i32_0 = arith.constant 0 : i32
    %c0_i32_1 = arith.constant 0 : i32
    return %c0_i32, %c0_i32_0 : i32, i32
  }
  func.func @transform_2(%arg0: i32) -> (i32, i32) {
    %c0_i32 = arith.constant 0 : i32
    %c0_i32_0 = arith.constant 0 : i32
    %c0_i32_1 = arith.constant 0 : i32
    return %c0_i32, %c0_i32_0 : i32, i32
  }
  func.func @transform_3(%arg0: i32) -> (i32, i32) {
    %c0_i32 = arith.constant 0 : i32
    %c0_i32_0 = arith.constant 0 : i32
    %c0_i32_1 = arith.constant 0 : i32
    return %c0_i32, %c0_i32_0 : i32, i32
  }
  func.func @transform_4(%arg0: i32) -> (i32, i32) {
    %c0_i32 = arith.constant 0 : i32
    %c0_i32_0 = arith.constant 0 : i32
    return %arg0, %c0_i32 : i32, i32
  }
  func.func @transform_5(%arg0: i32) -> (i32, i32) {
    %c0_i32 = arith.constant 0 : i32
    %c0_i32_0 = arith.constant 0 : i32
    return %arg0, %c0_i32 : i32, i32
  }
  func.func @transform_6(%arg0: i32) -> (i32, i32) {
    %c0_i32 = arith.constant 0 : i32
    %c0_i32_0 = arith.constant 0 : i32
    return %arg0, %c0_i32 : i32, i32
  }
}

module attributes {stable_mosaic.version = 11 : i64} {
  func.func @_ssa_combine_conv_sc_kernel(%arg0: i32, %arg1: i32, %arg2: memref<1x64x4xbf16, #tpu.memory_space<vmem>>, %arg3: memref<1x4x16xbf16, #tpu.memory_space<vmem>>, %arg4: memref<1x16x8xbf16, #tpu.memory_space<vmem>>, %arg5: memref<1x64x8xf32, #tpu.memory_space<vmem>>, %arg6: memref<1x64x4xbf16, #tpu.memory_space<vmem>>, %arg7: memref<4x8xbf16, #tpu.memory_space<vmem>>, %arg8: memref<1x8xf32, #tpu.memory_space<vmem>>, %arg9: memref<1x8xf32, #tpu.memory_space<vmem>>, %arg10: memref<1x64x8xf32, #tpu.memory_space<vmem>>) attributes {dimension_semantics = [#tpu.dimension_semantics<parallel>, #tpu.dimension_semantics<parallel>], iteration_bounds = array<i64: 2, 1>, scalar_prefetch = 0 : i64, scratch_operands = 0 : i64, tpu.core_type = #tpu.core_type<tc>, window_params = [{transform_indices = @transform_0, window_bounds = array<i64: 1, 64, 4>}, {transform_indices = @transform_1, window_bounds = array<i64: 1, 4, 16>}, {transform_indices = @transform_2, window_bounds = array<i64: 1, 16, 8>}, {transform_indices = @transform_3, window_bounds = array<i64: 1, 64, 8>}, {transform_indices = @transform_4, window_bounds = array<i64: 1, 64, 4>}, {pipeline_mode = #tpu.pipeline_mode<synchronous>, transform_indices = @transform_5, window_bounds = array<i64: 4, 8>}, {pipeline_mode = #tpu.pipeline_mode<synchronous>, transform_indices = @transform_6, window_bounds = array<i64: 1, 8>}, {pipeline_mode = #tpu.pipeline_mode<synchronous>, transform_indices = @transform_7, window_bounds = array<i64: 1, 8>}, {transform_indices = @transform_8, window_bounds = array<i64: 1, 64, 8>}]} {
    %c0 = arith.constant 0 : index
    %c0_0 = arith.constant 0 : index
    %c0_1 = arith.constant 0 : index
    %0 = vector.load %arg2[%c0, %c0_0, %c0_1] : memref<1x64x4xbf16, #tpu.memory_space<vmem>>, vector<1x64x4xbf16>
    %1 = vector.shape_cast %0 : vector<1x64x4xbf16> to vector<64x4xbf16>
    %c0_2 = arith.constant 0 : index
    %c0_3 = arith.constant 0 : index
    %c0_4 = arith.constant 0 : index
    %2 = vector.load %arg3[%c0_2, %c0_3, %c0_4] : memref<1x4x16xbf16, #tpu.memory_space<vmem>>, vector<1x4x16xbf16>
    %3 = vector.shape_cast %2 : vector<1x4x16xbf16> to vector<4x16xbf16>
    %cst = arith.constant dense<0.000000e+00> : vector<64x16xf32>
    %4 = tpu.matmul %1, %3, %cst {dimension_numbers = #tpu.dot_dimension_numbers<[1], [0], [0], [1], [0, 0, 1, 1], [], []>} : vector<64x4xbf16>, vector<4x16xbf16>, vector<64x16xf32> -> vector<64x16xf32>
    %cst_5 = arith.constant dense<0xFF800000> : vector<64xf32>
    %5 = vector.multi_reduction <maximumf>, %4, %cst_5 [1] : vector<64x16xf32> to vector<64xf32>
    %6 = vector.shape_cast %5 : vector<64xf32> to vector<64x1xf32>
    %7 = vector.broadcast %6 : vector<64x1xf32> to vector<64x16xf32>
    %8 = arith.subf %4, %7 : vector<64x16xf32>
    %9 = math.exp %8 : vector<64x16xf32>
    %cst_6 = arith.constant dense<0.000000e+00> : vector<64xf32>
    %10 = vector.multi_reduction <add>, %9, %cst_6 [1] : vector<64x16xf32> to vector<64xf32>
    %11 = vector.shape_cast %10 : vector<64xf32> to vector<64x1xf32>
    %12 = tpu.reciprocal %11 {approx = true} : vector<64x1xf32> -> vector<64x1xf32>
    %13 = vector.broadcast %12 : vector<64x1xf32> to vector<64x16xf32>
    %14 = arith.mulf %9, %13 : vector<64x16xf32>
    %15 = arith.truncf %14 : vector<64x16xf32> to vector<64x16xbf16>
    %c0_7 = arith.constant 0 : index
    %c0_8 = arith.constant 0 : index
    %c0_9 = arith.constant 0 : index
    %16 = vector.load %arg4[%c0_7, %c0_8, %c0_9] : memref<1x16x8xbf16, #tpu.memory_space<vmem>>, vector<1x16x8xbf16>
    %17 = vector.shape_cast %16 : vector<1x16x8xbf16> to vector<16x8xbf16>
    %cst_10 = arith.constant dense<0.000000e+00> : vector<64x8xf32>
    %18 = tpu.matmul %15, %17, %cst_10 {dimension_numbers = #tpu.dot_dimension_numbers<[1], [0], [0], [1], [0, 0, 1, 1], [], []>} : vector<64x16xbf16>, vector<16x8xbf16>, vector<64x8xf32> -> vector<64x8xf32>
    %c0_11 = arith.constant 0 : index
    %c0_12 = arith.constant 0 : index
    %c0_13 = arith.constant 0 : index
    %19 = vector.load %arg6[%c0_11, %c0_12, %c0_13] : memref<1x64x4xbf16, #tpu.memory_space<vmem>>, vector<1x64x4xbf16>
    %20 = vector.shape_cast %19 : vector<1x64x4xbf16> to vector<64x4xbf16>
    %c0_14 = arith.constant 0 : index
    %c0_15 = arith.constant 0 : index
    %21 = vector.load %arg7[%c0_14, %c0_15] : memref<4x8xbf16, #tpu.memory_space<vmem>>, vector<4x8xbf16>
    %cst_16 = arith.constant dense<0.000000e+00> : vector<64x8xf32>
    %22 = tpu.matmul %20, %21, %cst_16 {dimension_numbers = #tpu.dot_dimension_numbers<[1], [0], [0], [1], [0, 0, 1, 1], [], []>} : vector<64x4xbf16>, vector<4x8xbf16>, vector<64x8xf32> -> vector<64x8xf32>
    %c0_17 = arith.constant 0 : index
    %c0_18 = arith.constant 0 : index
    %23 = vector.load %arg8[%c0_17, %c0_18] : memref<1x8xf32, #tpu.memory_space<vmem>>, vector<1x8xf32>
    %24 = vector.broadcast %23 : vector<1x8xf32> to vector<64x8xf32>
    %25 = arith.mulf %22, %24 : vector<64x8xf32>
    %c0_19 = arith.constant 0 : index
    %c0_20 = arith.constant 0 : index
    %26 = vector.load %arg9[%c0_19, %c0_20] : memref<1x8xf32, #tpu.memory_space<vmem>>, vector<1x8xf32>
    %27 = vector.broadcast %26 : vector<1x8xf32> to vector<64x8xf32>
    %28 = arith.addf %25, %27 : vector<64x8xf32>
    %c0_21 = arith.constant 0 : index
    %c0_22 = arith.constant 0 : index
    %c0_23 = arith.constant 0 : index
    %29 = vector.load %arg5[%c0_21, %c0_22, %c0_23] : memref<1x64x8xf32, #tpu.memory_space<vmem>>, vector<1x64x8xf32>
    %30 = vector.shape_cast %29 : vector<1x64x8xf32> to vector<64x8xf32>
    %31 = arith.addf %18, %30 : vector<64x8xf32>
    %32 = arith.addf %31, %28 : vector<64x8xf32>
    %c0_24 = arith.constant 0 : index
    %c0_25 = arith.constant 0 : index
    %c0_26 = arith.constant 0 : index
    %33 = vector.load %arg10[%c0_24, %c0_25, %c0_26] : memref<1x64x8xf32, #tpu.memory_space<vmem>>, vector<1x64x8xf32>
    %34 = vector.shape_cast %33 : vector<1x64x8xf32> to vector<64x8xf32>
    %35 = vector.shape_cast %32 : vector<64x8xf32> to vector<1x64x8xf32>
    tpu.vector_store %arg10[%c0_24, %c0_25, %c0_26], %35 {strides = array<i32>} : memref<1x64x8xf32, #tpu.memory_space<vmem>>, vector<1x64x8xf32>,
    return
  }
  func.func @transform_0(%arg0: i32, %arg1: i32) -> (i32, i32, i32) {
    %c0_i32 = arith.constant 0 : i32
    %c0_i32_0 = arith.constant 0 : i32
    return %arg0, %arg1, %c0_i32 : i32, i32, i32
  }
  func.func @transform_1(%arg0: i32, %arg1: i32) -> (i32, i32, i32) {
    %c0_i32 = arith.constant 0 : i32
    %c0_i32_0 = arith.constant 0 : i32
    %c0_i32_1 = arith.constant 0 : i32
    return %arg0, %c0_i32, %c0_i32_0 : i32, i32, i32
  }
  func.func @transform_2(%arg0: i32, %arg1: i32) -> (i32, i32, i32) {
    %c0_i32 = arith.constant 0 : i32
    %c0_i32_0 = arith.constant 0 : i32
    %c0_i32_1 = arith.constant 0 : i32
    return %arg0, %c0_i32, %c0_i32_0 : i32, i32, i32
  }
  func.func @transform_3(%arg0: i32, %arg1: i32) -> (i32, i32, i32) {
    %c0_i32 = arith.constant 0 : i32
    %c0_i32_0 = arith.constant 0 : i32
    return %arg0, %arg1, %c0_i32 : i32, i32, i32
  }
  func.func @transform_4(%arg0: i32, %arg1: i32) -> (i32, i32, i32) {
    %c0_i32 = arith.constant 0 : i32
    %c0_i32_0 = arith.constant 0 : i32
    return %arg0, %arg1, %c0_i32 : i32, i32, i32
  }
  func.func @transform_5(%arg0: i32, %arg1: i32) -> (i32, i32) {
    %c0_i32 = arith.constant 0 : i32
    %c0_i32_0 = arith.constant 0 : i32
    %c0_i32_1 = arith.constant 0 : i32
    return %c0_i32, %c0_i32_0 : i32, i32
  }
  func.func @transform_6(%arg0: i32, %arg1: i32) -> (i32, i32) {
    %c0_i32 = arith.constant 0 : i32
    %c0_i32_0 = arith.constant 0 : i32
    %c0_i32_1 = arith.constant 0 : i32
    return %c0_i32, %c0_i32_0 : i32, i32
  }
  func.func @transform_7(%arg0: i32, %arg1: i32) -> (i32, i32) {
    %c0_i32 = arith.constant 0 : i32
    %c0_i32_0 = arith.constant 0 : i32
    %c0_i32_1 = arith.constant 0 : i32
    return %c0_i32, %c0_i32_0 : i32, i32
  }
  func.func @transform_8(%arg0: i32, %arg1: i32) -> (i32, i32, i32) {
    %c0_i32 = arith.constant 0 : i32
    %c0_i32_0 = arith.constant 0 : i32
    return %arg0, %arg1, %c0_i32 : i32, i32, i32
  }
}

</mosaic_0001>

<llo_original>
// kernel: bottleneck_ir_sram_forward.9
$region0: #{bottleneck_ir_sram_forward.9}
  #allocation0 [shape = 'u32[]', space=smem, size = 0x4, offset = 0x4, fixed_abs, tag = 'smem constant byte address 0x4 - core index']
  #allocation1 [shape = 'u32[72,128]{1,0:T(1,128)}', space=vmem, size = 0x9000, scoped, tag = 'internal scratch']
  %s0 = inlined_call_operand.vmem [shape: bf16[128,8], index: 0, kind: input, shape index: {}]
  %s1 = inlined_call_operand.vmem [shape: bf16[8,8], index: 1, kind: input, shape index: {}]
  %s2 = inlined_call_operand.vmem [shape: bf16[8,8], index: 2, kind: input, shape index: {}]
  %s3 = inlined_call_operand.vmem [shape: bf16[8,8], index: 3, kind: input, shape index: {}]
  %s4 = inlined_call_operand.vmem [shape: bf16[128,8], index: 4, kind: output, shape index: {0}]
  %s5 = inlined_call_operand.vmem [shape: bf16[128,8], index: 5, kind: output, shape index: {1}]
  %s6 = inlined_call_operand.vmem [shape: bf16[128,8], index: 6, kind: output, shape index: {2}]
  %7 = xla_tuple %s4, %s5, %s6
  %s8 = sld [smem:[#allocation0]]
  $region42: #{bottleneck_ir_sram_forward.9} parent=0
    _
  %s10 = ssub.s32 1, %s8
  %s11 = scalar_select 0, %s10, %s8
  // Predicated region
  $region2: #{bottleneck_ir_sram_forward.9} parent=0 // pred_check
    _
  $region3: #{bottleneck_ir_sram_forward.9} parent=0 // pred_check_branch
    %13 = sbr.rel (0) target = $region5
  $region4: #{bottleneck_ir_sram_forward.9} parent=0 // pred_region
    _
  $region5: #{bottleneck_ir_sram_forward.9} parent=0 // pred_fallthru
    _
  // Predicated region
  $region6: #{bottleneck_ir_sram_forward.9} parent=0 // pred_check
    _
  $region7: #{bottleneck_ir_sram_forward.9} parent=0 // pred_check_branch
    %15 = sbr.rel (0) target = $region9
  $region8: #{bottleneck_ir_sram_forward.9} parent=0 // pred_region
    _
  $region9: #{bottleneck_ir_sram_forward.9} parent=0 // pred_fallthru
    _
  // Predicated region
  $region10: #{bottleneck_ir_sram_forward.9} parent=0 // pred_check
    _
  $region11: #{bottleneck_ir_sram_forward.9} parent=0 // pred_check_branch
    %17 = sbr.rel (0) target = $region13
  $region12: #{bottleneck_ir_sram_forward.9} parent=0 // pred_region
    _
  $region13: #{bottleneck_ir_sram_forward.9} parent=0 // pred_fallthru
    _
  // Predicated region
  $region14: #{bottleneck_ir_sram_forward.9} parent=0 // pred_check
    _
  $region15: #{bottleneck_ir_sram_forward.9} parent=0 // pred_check_branch
    %19 = sbr.rel (0) target = $region17
  $region16: #{bottleneck_ir_sram_forward.9} parent=0 // pred_region
    _
  $region17: #{bottleneck_ir_sram_forward.9} parent=0 // pred_fallthru
    _
  %v21 = vld [vmem:[%s0] sm:$0xf]
  %v22 = vld [vmem:[%s0 + $0x4] sm:$0xf]
  %v23 = vld [vmem:[%s0 + $0x8] sm:$0xf]
  %v24 = vld [vmem:[%s0 + $0xc] sm:$0xf]
  %v25 = vld [vmem:[%s0 + $0x10] sm:$0xf]
  %v26 = vld [vmem:[%s0 + $0x14] sm:$0xf]
  %v27 = vld [vmem:[%s0 + $0x18] sm:$0xf]
  %v28 = vld [vmem:[%s0 + $0x1c] sm:$0xf]
  %v29 = vld [vmem:[%s0 + $0x20] sm:$0xf]
  %v30 = vld [vmem:[%s0 + $0x24] sm:$0xf]
  %v31 = vld [vmem:[%s0 + $0x28] sm:$0xf]
  %v32 = vld [vmem:[%s0 + $0x2c] sm:$0xf]
  %v33 = vld [vmem:[%s0 + $0x30] sm:$0xf]
  %v34 = vld [vmem:[%s0 + $0x34] sm:$0xf]
  %v35 = vld [vmem:[%s0 + $0x38] sm:$0xf]
  %v36 = vld [vmem:[%s0 + $0x3c] sm:$0xf]
  %v37 = vld [vmem:[%s1] sm:$0xf]
  %v54 = vunpack.c.l.b16 %v21
  %v55 = vunpack.c.l.b16 %v22
  %v56 = vunpack.c.l.b16 %v23
  %v57 = vunpack.c.l.b16 %v24
  %v58 = vunpack.c.l.b16 %v25
  %v59 = vunpack.c.l.b16 %v26
  %v60 = vunpack.c.l.b16 %v27
  %v61 = vunpack.c.l.b16 %v28
  %v62 = vunpack.c.l.b16 %v29
  %v63 = vunpack.c.l.b16 %v30
  %v64 = vunpack.c.l.b16 %v31
  %v65 = vunpack.c.l.b16 %v32
  %v66 = vunpack.c.l.b16 %v33
  %v67 = vunpack.c.l.b16 %v34
  %v68 = vunpack.c.l.b16 %v35
  %v69 = vunpack.c.l.b16 %v36
  %v70 = vpack.c.b16 %v55, %v54
  %v71 = vpack.c.b16 %v57, %v56
  %v72 = vpack.c.b16 %v59, %v58
  %v73 = vpack.c.b16 %v61, %v60
  %v74 = vpack.c.b16 %v63, %v62
  %v75 = vpack.c.b16 %v65, %v64
  %v76 = vpack.c.b16 %v67, %v66
  %v77 = vpack.c.b16 %v69, %v68
  %vm78 = vcmask 64512
  %v80 = vsel %vm78, %v70, 0
  %v83 = vsel %vm78, %v71, 0
  %v86 = vsel %vm78, %v72, 0
  %v89 = vsel %vm78, %v73, 0
  %v92 = vsel %vm78, %v74, 0
  %v95 = vsel %vm78, %v75, 0
  %v98 = vsel %vm78, %v76, 0
  %v101 = vsel %vm78, %v77, 0
  %vm103 = vcmask 1043456
  %v105 = vsel %vm103, %v37, 0
  %107 = vmatpush.bf16.msra.mxu0 0
  %108 = vmatpush.bf16.msra.mxu0 0
  %109 = vmatpush.bf16.msra.mxu0 0
  %110 = vmatpush.bf16.msra.mxu0 0
  %111 = vmatpush.bf16.msra.mxu0 0
  %112 = vmatpush.bf16.msra.mxu0 0
  %113 = vmatpush.bf16.msra.mxu0 0
  %114 = vmatpush.bf16.msra.mxu0 %v105
  %115 = vmatmul.bf16.gmra.mxu0 %v80
  %v116 = vpop.f32.mrf.mxu0
  %v117 = vadd.f32 0.0, %v116
  %v118 = vpop.f32.mrf.mxu0
  %v119 = vadd.f32 0.0, %v118
  %120 = vmatmul.bf16.gmra.mxu0 %v83
  %v121 = vpop.f32.mrf.mxu0
  %v122 = vadd.f32 0.0, %v121
  %v123 = vpop.f32.mrf.mxu0
  %v124 = vadd.f32 0.0, %v123
  %125 = vmatmul.bf16.gmra.mxu0 %v86
  %v126 = vpop.f32.mrf.mxu0
  %v127 = vadd.f32 0.0, %v126
  %v128 = vpop.f32.mrf.mxu0
  %v129 = vadd.f32 0.0, %v128
  %130 = vmatmul.bf16.gmra.mxu0 %v89
  %v131 = vpop.f32.mrf.mxu0
  %v132 = vadd.f32 0.0, %v131
  %v133 = vpop.f32.mrf.mxu0
  %v134 = vadd.f32 0.0, %v133
  %135 = vmatmul.bf16.gmra.mxu0 %v92
  %v136 = vpop.f32.mrf.mxu0
  %v137 = vadd.f32 0.0, %v136
  %v138 = vpop.f32.mrf.mxu0
  %v139 = vadd.f32 0.0, %v138
  %140 = vmatmul.bf16.gmra.mxu0 %v95
  %v141 = vpop.f32.mrf.mxu0
  %v142 = vadd.f32 0.0, %v141
  %v143 = vpop.f32.mrf.mxu0
  %v144 = vadd.f32 0.0, %v143
  %145 = vmatmul.bf16.gmra.mxu0 %v98
  %v146 = vpop.f32.mrf.mxu0
  %v147 = vadd.f32 0.0, %v146
  %v148 = vpop.f32.mrf.mxu0
  %v149 = vadd.f32 0.0, %v148
  %150 = vmatmul.bf16.gmra.mxu0 %v101
  %v151 = vpop.f32.mrf.mxu0
  %v152 = vadd.f32 0.0, %v151
  %v153 = vpop.f32.mrf.mxu0
  %v154 = vadd.f32 0.0, %v153
  %155 = vdwg.mxu0
  %v156 = vpack.c.bf16 %v117, %v117
  %v157 = vpack.c.bf16 %v119, %v119
  %v158 = vpack.c.bf16 %v122, %v122
  %v159 = vpack.c.bf16 %v124, %v124
  %v160 = vpack.c.bf16 %v127, %v127
  %v161 = vpack.c.bf16 %v129, %v129
  %v162 = vpack.c.bf16 %v132, %v132
  %v163 = vpack.c.bf16 %v134, %v134
  %v164 = vpack.c.bf16 %v137, %v137
  %v165 = vpack.c.bf16 %v139, %v139
  %v166 = vpack.c.bf16 %v142, %v142
  %v167 = vpack.c.bf16 %v144, %v144
  %v168 = vpack.c.bf16 %v147, %v147
  %v169 = vpack.c.bf16 %v149, %v149
  %v170 = vpack.c.bf16 %v152, %v152
  %v171 = vpack.c.bf16 %v154, %v154
  %vm172 = vcmask 60416
  %173 = vst.msk [vmem:[%s4] sm:$0xf] %vm172, %v156
  %174 = vst.msk [vmem:[%s4 + $0x4] sm:$0xf] %vm172, %v157
  %175 = vst.msk [vmem:[%s4 + $0x8] sm:$0xf] %vm172, %v158
  %176 = vst.msk [vmem:[%s4 + $0xc] sm:$0xf] %vm172, %v159
  %177 = vst.msk [vmem:[%s4 + $0x10] sm:$0xf] %vm172, %v160
  %178 = vst.msk [vmem:[%s4 + $0x14] sm:$0xf] %vm172, %v161
  %179 = vst.msk [vmem:[%s4 + $0x18] sm:$0xf] %vm172, %v162
  %180 = vst.msk [vmem:[%s4 + $0x1c] sm:$0xf] %vm172, %v163
  %181 = vst.msk [vmem:[%s4 + $0x20] sm:$0xf] %vm172, %v164
  %182 = vst.msk [vmem:[%s4 + $0x24] sm:$0xf] %vm172, %v165
  %183 = vst.msk [vmem:[%s4 + $0x28] sm:$0xf] %vm172, %v166
  %184 = vst.msk [vmem:[%s4 + $0x2c] sm:$0xf] %vm172, %v167
  %185 = vst.msk [vmem:[%s4 + $0x30] sm:$0xf] %vm172, %v168
  %186 = vst.msk [vmem:[%s4 + $0x34] sm:$0xf] %vm172, %v169
  %187 = vst.msk [vmem:[%s4 + $0x38] sm:$0xf] %vm172, %v170
  %188 = vst.msk [vmem:[%s4 + $0x3c] sm:$0xf] %vm172, %v171
  %v189 = vld [vmem:[%s2] sm:$0xf]
  %v191 = vsel %vm103, %v189, 0
  %193 = vmatpush.bf16.msra.mxu0 0
  %194 = vmatpush.bf16.msra.mxu0 0
  %195 = vmatpush.bf16.msra.mxu0 0
  %196 = vmatpush.bf16.msra.mxu0 0
  %197 = vmatpush.bf16.msra.mxu0 0
  %198 = vmatpush.bf16.msra.mxu0 0
  %199 = vmatpush.bf16.msra.mxu0 0
  %200 = vmatpush.bf16.msra.mxu0 %v191
  %201 = vmatmul.bf16.gmra.mxu0 %v80
  %v202 = vpop.f32.mrf.mxu0
  %v203 = vadd.f32 0.0, %v202
  %v204 = vpop.f32.mrf.mxu0
  %v205 = vadd.f32 0.0, %v204
  %206 = vmatmul.bf16.gmra.mxu0 %v83
  %v207 = vpop.f32.mrf.mxu0
  %v208 = vadd.f32 0.0, %v207
  %v209 = vpop.f32.mrf.mxu0
  %v210 = vadd.f32 0.0, %v209
  %211 = vmatmul.bf16.gmra.mxu0 %v86
  %v212 = vpop.f32.mrf.mxu0
  %v213 = vadd.f32 0.0, %v212
  %v214 = vpop.f32.mrf.mxu0
  %v215 = vadd.f32 0.0, %v214
  %216 = vmatmul.bf16.gmra.mxu0 %v89
  %v217 = vpop.f32.mrf.mxu0
  %v218 = vadd.f32 0.0, %v217
  %v219 = vpop.f32.mrf.mxu0
  %v220 = vadd.f32 0.0, %v219
  %221 = vmatmul.bf16.gmra.mxu0 %v92
  %v222 = vpop.f32.mrf.mxu0
  %v223 = vadd.f32 0.0, %v222
  %v224 = vpop.f32.mrf.mxu0
  %v225 = vadd.f32 0.0, %v224
  %226 = vmatmul.bf16.gmra.mxu0 %v95
  %v227 = vpop.f32.mrf.mxu0
  %v228 = vadd.f32 0.0, %v227
  %v229 = vpop.f32.mrf.mxu0
  %v230 = vadd.f32 0.0, %v229
  %231 = vmatmul.bf16.gmra.mxu0 %v98
  %v232 = vpop.f32.mrf.mxu0
  %v233 = vadd.f32 0.0, %v232
  %v234 = vpop.f32.mrf.mxu0
  %v235 = vadd.f32 0.0, %v234
  %236 = vmatmul.bf16.gmra.mxu0 %v101
  %v237 = vpop.f32.mrf.mxu0
  %v238 = vadd.f32 0.0, %v237
  %v239 = vpop.f32.mrf.mxu0
  %v240 = vadd.f32 0.0, %v239
  %241 = vdwg.mxu0
  %v242 = vpack.c.bf16 %v203, %v203
  %v243 = vpack.c.bf16 %v205, %v205
  %v244 = vpack.c.bf16 %v208, %v208
  %v245 = vpack.c.bf16 %v210, %v210
  %v246 = vpack.c.bf16 %v213, %v213
  %v247 = vpack.c.bf16 %v215, %v215
  %v248 = vpack.c.bf16 %v218, %v218
  %v249 = vpack.c.bf16 %v220, %v220
  %v250 = vpack.c.bf16 %v223, %v223
  %v251 = vpack.c.bf16 %v225, %v225
  %v252 = vpack.c.bf16 %v228, %v228
  %v253 = vpack.c.bf16 %v230, %v230
  %v254 = vpack.c.bf16 %v233, %v233
  %v255 = vpack.c.bf16 %v235, %v235
  %v256 = vpack.c.bf16 %v238, %v238
  %v257 = vpack.c.bf16 %v240, %v240
  %258 = vst.msk [vmem:[%s5] sm:$0xf] %vm172, %v242
  %259 = vst.msk [vmem:[%s5 + $0x4] sm:$0xf] %vm172, %v243
  %260 = vst.msk [vmem:[%s5 + $0x8] sm:$0xf] %vm172, %v244
  %261 = vst.msk [vmem:[%s5 + $0xc] sm:$0xf] %vm172, %v245
  %262 = vst.msk [vmem:[%s5 + $0x10] sm:$0xf] %vm172, %v246
  %263 = vst.msk [vmem:[%s5 + $0x14] sm:$0xf] %vm172, %v247
  %264 = vst.msk [vmem:[%s5 + $0x18] sm:$0xf] %vm172, %v248
  %265 = vst.msk [vmem:[%s5 + $0x1c] sm:$0xf] %vm172, %v249
  %266 = vst.msk [vmem:[%s5 + $0x20] sm:$0xf] %vm172, %v250
  %267 = vst.msk [vmem:[%s5 + $0x24] sm:$0xf] %vm172, %v251
  %268 = vst.msk [vmem:[%s5 + $0x28] sm:$0xf] %vm172, %v252
  %269 = vst.msk [vmem:[%s5 + $0x2c] sm:$0xf] %vm172, %v253
  %270 = vst.msk [vmem:[%s5 + $0x30] sm:$0xf] %vm172, %v254
  %271 = vst.msk [vmem:[%s5 + $0x34] sm:$0xf] %vm172, %v255
  %272 = vst.msk [vmem:[%s5 + $0x38] sm:$0xf] %vm172, %v256
  %273 = vst.msk [vmem:[%s5 + $0x3c] sm:$0xf] %vm172, %v257
  %v274 = vld [vmem:[%s3] sm:$0xf]
  %v276 = vsel %vm103, %v274, 0
  %278 = vmatpush.bf16.msra.mxu0 0
  %279 = vmatpush.bf16.msra.mxu0 0
  %280 = vmatpush.bf16.msra.mxu0 0
  %281 = vmatpush.bf16.msra.mxu0 0
  %282 = vmatpush.bf16.msra.mxu0 0
  %283 = vmatpush.bf16.msra.mxu0 0
  %284 = vmatpush.bf16.msra.mxu0 0
  %285 = vmatpush.bf16.msra.mxu0 %v276
  %286 = vmatmul.bf16.gmra.mxu0 %v80
  %v287 = vpop.f32.mrf.mxu0
  %v288 = vadd.f32 0.0, %v287
  %v289 = vpop.f32.mrf.mxu0
  %v290 = vadd.f32 0.0, %v289
  %291 = vmatmul.bf16.gmra.mxu0 %v83
  %v292 = vpop.f32.mrf.mxu0
  %v293 = vadd.f32 0.0, %v292
  %v294 = vpop.f32.mrf.mxu0
  %v295 = vadd.f32 0.0, %v294
  %296 = vmatmul.bf16.gmra.mxu0 %v86
  %v297 = vpop.f32.mrf.mxu0
  %v298 = vadd.f32 0.0, %v297
  %v299 = vpop.f32.mrf.mxu0
  %v300 = vadd.f32 0.0, %v299
  %301 = vmatmul.bf16.gmra.mxu0 %v89
  %v302 = vpop.f32.mrf.mxu0
  %v303 = vadd.f32 0.0, %v302
  %v304 = vpop.f32.mrf.mxu0
  %v305 = vadd.f32 0.0, %v304
  %306 = vmatmul.bf16.gmra.mxu0 %v92
  %v307 = vpop.f32.mrf.mxu0
  %v308 = vadd.f32 0.0, %v307
  %v309 = vpop.f32.mrf.mxu0
  %v310 = vadd.f32 0.0, %v309
  %311 = vmatmul.bf16.gmra.mxu0 %v95
  %v312 = vpop.f32.mrf.mxu0
  %v313 = vadd.f32 0.0, %v312
  %v314 = vpop.f32.mrf.mxu0
  %v315 = vadd.f32 0.0, %v314
  %316 = vmatmul.bf16.gmra.mxu0 %v98
  %v317 = vpop.f32.mrf.mxu0
  %v318 = vadd.f32 0.0, %v317
  %v319 = vpop.f32.mrf.mxu0
  %v320 = vadd.f32 0.0, %v319
  %321 = vmatmul.bf16.gmra.mxu0 %v101
  %v322 = vpop.f32.mrf.mxu0
  %v323 = vadd.f32 0.0, %v322
  %v324 = vpop.f32.mrf.mxu0
  %v325 = vadd.f32 0.0, %v324
  %326 = vdwg.mxu0
  %v327 = vpack.c.bf16 %v288, %v288
  %v328 = vpack.c.bf16 %v290, %v290
  %v329 = vpack.c.bf16 %v293, %v293
  %v330 = vpack.c.bf16 %v295, %v295
  %v331 = vpack.c.bf16 %v298, %v298
  %v332 = vpack.c.bf16 %v300, %v300
  %v333 = vpack.c.bf16 %v303, %v303
  %v334 = vpack.c.bf16 %v305, %v305
  %v335 = vpack.c.bf16 %v308, %v308
  %v336 = vpack.c.bf16 %v310, %v310
  %v337 = vpack.c.bf16 %v313, %v313
  %v338 = vpack.c.bf16 %v315, %v315
  %v339 = vpack.c.bf16 %v318, %v318
  %v340 = vpack.c.bf16 %v320, %v320
  %v341 = vpack.c.bf16 %v323, %v323
  %v342 = vpack.c.bf16 %v325, %v325
  %343 = vst.msk [vmem:[%s6] sm:$0xf] %vm172, %v327
  %344 = vst.msk [vmem:[%s6 + $0x4] sm:$0xf] %vm172, %v328
  %345 = vst.msk [vmem:[%s6 + $0x8] sm:$0xf] %vm172, %v329
  %346 = vst.msk [vmem:[%s6 + $0xc] sm:$0xf] %vm172, %v330
  %347 = vst.msk [vmem:[%s6 + $0x10] sm:$0xf] %vm172, %v331
  %348 = vst.msk [vmem:[%s6 + $0x14] sm:$0xf] %vm172, %v332
  %349 = vst.msk [vmem:[%s6 + $0x18] sm:$0xf] %vm172, %v333
  %350 = vst.msk [vmem:[%s6 + $0x1c] sm:$0xf] %vm172, %v334
  %351 = vst.msk [vmem:[%s6 + $0x20] sm:$0xf] %vm172, %v335
  %352 = vst.msk [vmem:[%s6 + $0x24] sm:$0xf] %vm172, %v336
  %353 = vst.msk [vmem:[%s6 + $0x28] sm:$0xf] %vm172, %v337
  %354 = vst.msk [vmem:[%s6 + $0x2c] sm:$0xf] %vm172, %v338
  %355 = vst.msk [vmem:[%s6 + $0x30] sm:$0xf] %vm172, %v339
  %356 = vst.msk [vmem:[%s6 + $0x34] sm:$0xf] %vm172, %v340
  %357 = vst.msk [vmem:[%s6 + $0x38] sm:$0xf] %vm172, %v341
  %358 = vst.msk [vmem:[%s6 + $0x3c] sm:$0xf] %vm172, %v342
  // Predicated region
  $region18: #{bottleneck_ir_sram_forward.9} parent=0 // pred_check
    _
  $region19: #{bottleneck_ir_sram_forward.9} parent=0 // pred_check_branch
    %360 = sbr.rel (0) target = $region21
  $region20: #{bottleneck_ir_sram_forward.9} parent=0 // pred_region
    _
  $region21: #{bottleneck_ir_sram_forward.9} parent=0 // pred_fallthru
    _
  // Predicated region
  $region22: #{bottleneck_ir_sram_forward.9} parent=0 // pred_check
    _
  $region23: #{bottleneck_ir_sram_forward.9} parent=0 // pred_check_branch
    %362 = sbr.rel (0) target = $region25
  $region24: #{bottleneck_ir_sram_forward.9} parent=0 // pred_region
    _
  $region25: #{bottleneck_ir_sram_forward.9} parent=0 // pred_fallthru
    _
  // Predicated region
  $region26: #{bottleneck_ir_sram_forward.9} parent=0 // pred_check
    _
  $region27: #{bottleneck_ir_sram_forward.9} parent=0 // pred_check_branch
    %364 = sbr.rel (0) target = $region29
  $region28: #{bottleneck_ir_sram_forward.9} parent=0 // pred_region
    _
  $region29: #{bottleneck_ir_sram_forward.9} parent=0 // pred_fallthru
    _
  // Predicated region
  $region30: #{bottleneck_ir_sram_forward.9} parent=0 // pred_check
    _
  $region31: #{bottleneck_ir_sram_forward.9} parent=0 // pred_check_branch
    %366 = sbr.rel (0) target = $region33
  $region32: #{bottleneck_ir_sram_forward.9} parent=0 // pred_region
    _
  $region33: #{bottleneck_ir_sram_forward.9} parent=0 // pred_fallthru
    _
  // Predicated region
  $region34: #{bottleneck_ir_sram_forward.9} parent=0 // pred_check
    _
  $region35: #{bottleneck_ir_sram_forward.9} parent=0 // pred_check_branch
    %368 = sbr.rel (0) target = $region37
  $region36: #{bottleneck_ir_sram_forward.9} parent=0 // pred_region
    _
  $region37: #{bottleneck_ir_sram_forward.9} parent=0 // pred_fallthru
    _
  // Predicated region
  $region38: #{bottleneck_ir_sram_forward.9} parent=0 // pred_check
    _
  $region39: #{bottleneck_ir_sram_forward.9} parent=0 // pred_check_branch
    %370 = sbr.rel (0) target = $region41
  $region40: #{bottleneck_ir_sram_forward.9} parent=0 // pred_region
    _
  $region41: #{bottleneck_ir_sram_forward.9} parent=0 // pred_fallthru
    _

// kernel: bottleneck_ir_sram_forward.8
$region0: #{bottleneck_ir_sram_forward.8}
  #allocation0 [shape = 'u32[]', space=smem, size = 0x4, offset = 0x4, fixed_abs, tag = 'smem constant byte address 0x4 - core index']
  #allocation1 [shape = 'u32[72,128]{1,0:T(1,128)}', space=vmem, size = 0x9000, scoped, tag = 'internal scratch']
  #allocation2 [shape = 'bf16[64,72]{1,0:T(8,128)(2,1)}', space=vmem, size = 0x4000, scoped, tag = 'scratch operand']
  %s0 = inlined_call_operand.vmem [shape: bf16[2,4,9,9,8], index: 0, kind: input, shape index: {}]
  %s1 = inlined_call_operand.vmem [shape: bf16[72,8], index: 1, kind: input, shape index: {}]
  %s2 = inlined_call_operand.vmem [shape: f32[1,8], index: 2, kind: input, shape index: {}]
  %s3 = inlined_call_operand.vmem [shape: f32[1,8], index: 3, kind: input, shape index: {}]
  %s4 = inlined_call_operand.vmem [shape: bf16[2,64,8], index: 4, kind: output, shape index: {}]
  %s5 = sld [smem:[#allocation0]]
  $region49: #{bottleneck_ir_sram_forward.8} parent=0
    _
  %s7 = ssub.s32 1, %s5
  %s8 = scalar_select 0, %s7, %s5
  loop: start=0, step=1, limit=4
  $region2: #{bottleneck_ir_sram_forward.8} parent=0 // loop_pre_header
    _
  $region3: #{bottleneck_ir_sram_forward.8} parent=0 // loop_header
    %s10 = sphi 0, %s14
    %p11 = scmp.ge.s32.totalorder %s10, 4
    %s17 = sphi 0, %s29
    %s18 = sphi 0, %s25
    %s19 = sphi 0, %s17
    %s20 = sphi 0, %s18
    %s21 = sphi 0, %s19
    %s22 = sphi 0, %s20
    %s34 = sphi 0, %s36
    %s37 = sphi 0, %s34
    %s38 = sphi 0, %s37
    %s54 = sphi 0, %s38
    %s58 = sphi 0, %s58
    %s60 = sphi 0, %s58
    %s61 = sphi 0, %s60
    %s75 = sphi 0, %s61
    %s79 = sphi 0, %s79
    %s81 = sphi 0, %s79
    %s82 = sphi 0, %s81
    %s96 = sphi 0, %s82
    %s100 = sphi 0, %s100
    %s102 = sphi 0, %s100
    %s103 = sphi 0, %s102
    %s117 = sphi 0, %s103
    %s125 = sphi 0, %s127
    %s128 = sphi 0, %s125
    %s129 = sphi 0, %s128
    %s145 = sphi 0, %s129
  $region4: #{bottleneck_ir_sram_forward.8} parent=0 // loop_header_branch
    %13 = sbr.rel (%p11) target = $region8
  $region5: #{bottleneck_ir_sram_forward.8} parent=0 // loop_body
    %s15 = ssub.s32 %s10, 1
    %s16 = ssub.s32 %s10, 2
    %s23 = sadd.s32 1, %s18
    %p24 = scmp.ge.s32.totalorder %s23, 1
    %s25 = scalar_select %p24, 0, %s23
    %s26 = sadd.s32 1, %s17
    %s27 = scalar_select %p24, %s26, %s17
    %p28 = scmp.ge.s32.totalorder %s27, 2
    %s29 = scalar_select %p28, 0, %s27
    %s30 = sadd.s32 %s17, %s18
    %s31 = sadd.s32 %s29, %s25
    %s32 = ssub.s32 %s30, %s31
    %p33 = scmp.eq.s32.totalorder %s32, 0
    %s35 = sadd.s32 %s34, 1
    %s36 = scalar_select %p33, %s34, %s35
    %p39 = pneg %p33
    %p40 = scmp.eq.s32.totalorder %s10, 1
    %p41 = por %p39, %p40
    %p42 = scmp.ne.s32.totalorder %s34, %s37
    %p43 = scmp.eq.s32.totalorder %s10, 0
    %p44 = por %p42, %p43
    %p45 = scmp.ne.s32.totalorder %s34, %s37
    %p46 = scmp.eq.s32.totalorder %s15, 1
    %p47 = por %p45, %p46
    %p48 = scmp.ne.s32.totalorder %s37, %s38
    %p49 = scmp.eq.s32.totalorder %s15, 0
    %p50 = por %p48, %p49
    %p51 = scmp.ne.s32.totalorder %s37, %s38
    %p52 = scmp.eq.s32.totalorder %s16, 1
    %p53 = por %p51, %p52
    %p55 = scmp.ne.s32.totalorder %s38, %s54
    %p56 = scmp.eq.s32.totalorder %s16, 0
    %p57 = por %p55, %p56
    %s59 = sadd.s32 %s58, 1
    %p62 = scmp.eq.s32.totalorder %s10, 1
    %p63 = scmp.ne.s32.totalorder %s58, %s60
    %p64 = scmp.eq.s32.totalorder %s10, 0
    %p65 = por %p63, %p64
    %p66 = scmp.ne.s32.totalorder %s58, %s60
    %p67 = scmp.eq.s32.totalorder %s15, 1
    %p68 = por %p66, %p67
    %p69 = scmp.ne.s32.totalorder %s60, %s61
    %p70 = scmp.eq.s32.totalorder %s15, 0
    %p71 = por %p69, %p70
    %p72 = scmp.ne.s32.totalorder %s60, %s61
    %p73 = scmp.eq.s32.totalorder %s16, 1
    %p74 = por %p72, %p73
    %p76 = scmp.ne.s32.totalorder %s61, %s75
    %p77 = scmp.eq.s32.totalorder %s16, 0
    %p78 = por %p76, %p77
    %s80 = sadd.s32 %s79, 1
    %p83 = scmp.eq.s32.totalorder %s10, 1
    %p84 = scmp.ne.s32.totalorder %s79, %s81
    %p85 = scmp.eq.s32.totalorder %s10, 0
    %p86 = por %p84, %p85
    %p87 = scmp.ne.s32.totalorder %s79, %s81
    %p88 = scmp.eq.s32.totalorder %s15, 1
    %p89 = por %p87, %p88
    %p90 = scmp.ne.s32.totalorder %s81, %s82
    %p91 = scmp.eq.s32.totalorder %s15, 0
    %p92 = por %p90, %p91
    %p93 = scmp.ne.s32.totalorder %s81, %s82
    %p94 = scmp.eq.s32.totalorder %s16, 1
    %p95 = por %p93, %p94
    %p97 = scmp.ne.s32.totalorder %s82, %s96
    %p98 = scmp.eq.s32.totalorder %s16, 0
    %p99 = por %p97, %p98
    %s101 = sadd.s32 %s100, 1
    %p104 = scmp.eq.s32.totalorder %s10, 1
    %p105 = scmp.ne.s32.totalorder %s100, %s102
    %p106 = scmp.eq.s32.totalorder %s10, 0
    %p107 = por %p105, %p106
    %p108 = scmp.ne.s32.totalorder %s100, %s102
    %p109 = scmp.eq.s32.totalorder %s15, 1
    %p110 = por %p108, %p109
    %p111 = scmp.ne.s32.totalorder %s102, %s103
    %p112 = scmp.eq.s32.totalorder %s15, 0
    %p113 = por %p111, %p112
    %p114 = scmp.ne.s32.totalorder %s102, %s103
    %p115 = scmp.eq.s32.totalorder %s16, 1
    %p116 = por %p114, %p115
    %p118 = scmp.ne.s32.totalorder %s103, %s117
    %p119 = scmp.eq.s32.totalorder %s16, 0
    %p120 = por %p118, %p119
    %s121 = ssub.s32 %s17, %s29
    %s122 = ssub.s32 %s18, %s25
    %s123 = sor.u32 %s121, %s122
    %p124 = scmp.eq.s32.totalorder %s123, 0
    %s126 = sadd.s32 %s125, 1
    %s127 = scalar_select %p124, %s125, %s126
    %p130 = pneg %p124
    %p131 = scmp.eq.s32.totalorder %s10, 1
    %p132 = por %p130, %p131
    %p133 = scmp.ne.s32.totalorder %s125, %s128
    %p134 = scmp.eq.s32.totalorder %s10, 0
    %p135 = por %p133, %p134
    %p136 = scmp.ne.s32.totalorder %s125, %s128
    %p137 = scmp.eq.s32.totalorder %s15, 1
    %p138 = por %p136, %p137
    %p139 = scmp.ne.s32.totalorder %s128, %s129
    %p140 = scmp.eq.s32.totalorder %s15, 0
    %p141 = por %p139, %p140
    %p142 = scmp.ne.s32.totalorder %s128, %s129
    %p143 = scmp.eq.s32.totalorder %s16, 1
    %p144 = por %p142, %p143
    %p146 = scmp.ne.s32.totalorder %s129, %s145
    %p147 = scmp.eq.s32.totalorder %s16, 0
    %p148 = por %p146, %p147
    %p149 = scmp.le.s32.totalorder 1, %s10
    %p150 = scmp.lt.s32.totalorder %s10, 3
    %p151 = pnand %p149, %p150
    %p152 = pneg %p151
    // Predicated region
    $region9: #{bottleneck_ir_sram_forward.8} parent=5 // pred_check
      _
    $region10: #{bottleneck_ir_sram_forward.8} parent=5 // pred_check_branch
      %154 = sbr.rel (%p151) target = $region12
    $region11: #{bottleneck_ir_sram_forward.8} parent=5 // pred_region
      %s155 = ssub.s32 %s10, 1
      // Predicated region
      $region13: #{bottleneck_ir_sram_forward.8} parent=11 // pred_check
        %p156 = pneg %p71
      $region14: #{bottleneck_ir_sram_forward.8} parent=11 // pred_check_branch
        %158 = sbr.rel (%p156) target = $region16
      $region15: #{bottleneck_ir_sram_forward.8} parent=11 // pred_region
        _
      $region16: #{bottleneck_ir_sram_forward.8} parent=11 // pred_fallthru
        _
      // Predicated region
      $region17: #{bottleneck_ir_sram_forward.8} parent=11 // pred_check
        %p159 = pneg %p92
      $region18: #{bottleneck_ir_sram_forward.8} parent=11 // pred_check_branch
        %161 = sbr.rel (%p159) target = $region20
      $region19: #{bottleneck_ir_sram_forward.8} parent=11 // pred_region
        _
      $region20: #{bottleneck_ir_sram_forward.8} parent=11 // pred_fallthru
        _
      // Predicated region
      $region21: #{bottleneck_ir_sram_forward.8} parent=11 // pred_check
        %p162 = pneg %p113
      $region22: #{bottleneck_ir_sram_forward.8} parent=11 // pred_check_branch
        %164 = sbr.rel (%p162) target = $region24
      $region23: #{bottleneck_ir_sram_forward.8} parent=11 // pred_region
        _
      $region24: #{bottleneck_ir_sram_forward.8} parent=11 // pred_fallthru
        _
    $region12: #{bottleneck_ir_sram_forward.8} parent=5 // pred_fallthru
      _
    %p165 = scmp.lt.s32.totalorder %s10, 2
    // Predicated region
    $region25: #{bottleneck_ir_sram_forward.8} parent=5 // pred_check
      %p166 = pneg %p165
    $region26: #{bottleneck_ir_sram_forward.8} parent=5 // pred_check_branch
      %168 = sbr.rel (%p166) target = $region28
    $region27: #{bottleneck_ir_sram_forward.8} parent=5 // pred_region
      // Predicated region
      $region29: #{bottleneck_ir_sram_forward.8} parent=27 // pred_check
        %p169 = pneg %p44
      $region30: #{bottleneck_ir_sram_forward.8} parent=27 // pred_check_branch
        %171 = sbr.rel (%p169) target = $region32
      $region31: #{bottleneck_ir_sram_forward.8} parent=27 // pred_region
        %s172 = sadd.s32 %s17, %s18
        %p173 = scmp.lt.s32.totalorder %s172, 1
        %s174 = scalar_select %p173, %s172, 1
        %s175 = smul.addr %s174, 72
        %s176 = smul.addr %s175, 4
        %s177 = scalar_lea.vmem %s0, %s176
        %s178 = sadd.s32 %s17, %s18
      $region32: #{bottleneck_ir_sram_forward.8} parent=27 // pred_fallthru
        _
    $region28: #{bottleneck_ir_sram_forward.8} parent=5 // pred_fallthru
      _
    %p179 = scmp.le.s32.totalorder 1, %s10
    %p180 = scmp.lt.s32.totalorder %s10, 3
    %p181 = pnand %p179, %p180
    %p182 = pneg %p181
    // Predicated region
    $region33: #{bottleneck_ir_sram_forward.8} parent=5 // pred_check
      _
    $region34: #{bottleneck_ir_sram_forward.8} parent=5 // pred_check_branch
      %184 = sbr.rel (%p181) target = $region36
    $region35: #{bottleneck_ir_sram_forward.8} parent=5 // pred_region
      %s185 = ssub.s32 %s10, 1
      %s186 = sadd.s32 %s19, %s20
      %p187 = scmp.lt.s32.totalorder %s186, 1
      %s188 = scalar_select %p187, %s186, 1
      %s189 = smul.addr %s188, 72
      %s190 = smul.addr %s189, 4
      %s191 = scalar_lea.vmem %s0, %s190
      %p192 = pneg %p50
      %p193 = pneg %p47
      %p194 = pneg %p71
      %p195 = pneg %p68
      %p196 = pneg %p92
      %p197 = pneg %p89
      %p198 = pneg %p113
      %p199 = pneg %p110
      %p200 = pneg %p141
      %p201 = pneg %p138
      %s202 = smul.u32 8, %s20
      %p203 = scmp.lt.s32.totalorder %s19, 1
      %s204 = scalar_select %p203, %s19, 1
      %p205 = scmp.lt.s32.totalorder %s202, 7
      %s206 = scalar_select %p205, %s202, 7
      %s207 = smul.addr %s204, 8
      %s208 = sadd.s32 %s206, %s207
      %s209 = smul.addr %s208, 4
      %s210 = scalar_lea.vmem %s4, %s209
      %s211 = sadd.s32 %s19, %s20
      %p212 = scmp.lt.s32.totalorder %s211, 1
      %s213 = scalar_select %p212, %s211, 1
      %s214 = smul.addr %s213, 72
      %s215 = smul.addr %s214, 4
      %s216 = scalar_lea.vmem %s0, %s215
      %s217 = sadd.s32 %s19, %s20
      %s218 = smul.u32 8, %s20
      %p219 = scmp.lt.s32.totalorder %s19, 1
      %s220 = scalar_select %p219, %s19, 1
      %p221 = scmp.lt.s32.totalorder %s218, 7
      %s222 = scalar_select %p221, %s218, 7
      %s223 = smul.addr %s220, 8
      %s224 = sadd.s32 %s222, %s223
      %s225 = smul.addr %s224, 4
      %s226 = scalar_lea.vmem %s4, %s225
      %s227 = smul.u32 8, %s20
      %v229 = vld [vmem:[%s216] sm:$0xf]
      %v230 = vld [vmem:[%s216 + $0x8] sm:$0xf]
      %v231 = vld [vmem:[%s216 + $0x10] sm:$0xf]
      %v232 = vld [vmem:[%s216 + $0x18] sm:$0xf]
      %v233 = vld [vmem:[%s216 + $0x20] sm:$0xf]
      %v234 = vld [vmem:[%s216 + $0x28] sm:$0xf]
      %v235 = vld [vmem:[%s216 + $0x30] sm:$0xf]
      %v236 = vld [vmem:[%s216 + $0x38] sm:$0xf]
      %vm237 = vcmask 60416
      %238 = vst.msk [vmem:[#allocation2] sm:$0xf] %vm237, %v229
      %239 = vst.msk [vmem:[#allocation2 + $0x4] sm:$0xf] %vm237, %v230
      %240 = vst.msk [vmem:[#allocation2 + $0x8] sm:$0xf] %vm237, %v231
      %241 = vst.msk [vmem:[#allocation2 + $0xc] sm:$0xf] %vm237, %v232
      %242 = vst.msk [vmem:[#allocation2 + $0x10] sm:$0xf] %vm237, %v233
      %243 = vst.msk [vmem:[#allocation2 + $0x14] sm:$0xf] %vm237, %v234
      %244 = vst.msk [vmem:[#allocation2 + $0x18] sm:$0xf] %vm237, %v235
      %245 = vst.msk [vmem:[#allocation2 + $0x1c] sm:$0xf] %vm237, %v236
      %s246 = scalar_lea.vmem %s216, 72
      %v247 = vld [vmem:[%s246] sm:$0xf]
      %v248 = vld [vmem:[%s246 + $0x8] sm:$0xf]
      %v249 = vld [vmem:[%s246 + $0x10] sm:$0xf]
      %v250 = vld [vmem:[%s246 + $0x18] sm:$0xf]
      %v251 = vld [vmem:[%s246 + $0x20] sm:$0xf]
      %v252 = vld [vmem:[%s246 + $0x28] sm:$0xf]
      %v253 = vld [vmem:[%s246 + $0x30] sm:$0xf]
      %v254 = vld [vmem:[%s246 + $0x38] sm:$0xf]
      %263 = vrot.lane.b32.xlu0 %v247, 8
      %v264 = vpop.permute.xlu0 %263
      %265 = vrot.lane.b32.xlu0 %v248, 8
      %v266 = vpop.permute.xlu0 %265
      %267 = vrot.lane.b32.xlu0 %v249, 8
      %v268 = vpop.permute.xlu0 %267
      %269 = vrot.lane.b32.xlu0 %v250, 8
      %v270 = vpop.permute.xlu0 %269
      %271 = vrot.lane.b32.xlu0 %v251, 8
      %v272 = vpop.permute.xlu0 %271
      %273 = vrot.lane.b32.xlu0 %v252, 8
      %v274 = vpop.permute.xlu0 %273
      %275 = vrot.lane.b32.xlu0 %v253, 8
      %v276 = vpop.permute.xlu0 %275
      %277 = vrot.lane.b32.xlu0 %v254, 8
      %v278 = vpop.permute.xlu0 %277
      %vm287 = vcmask 126016
      %288 = vst.msk [vmem:[#allocation2] sm:$0xf] %vm287, %v264
      %289 = vst.msk [vmem:[#allocation2 + $0x4] sm:$0xf] %vm287, %v266
      %290 = vst.msk [vmem:[#allocation2 + $0x8] sm:$0xf] %vm287, %v268
      %291 = vst.msk [vmem:[#allocation2 + $0xc] sm:$0xf] %vm287, %v270
      %292 = vst.msk [vmem:[#allocation2 + $0x10] sm:$0xf] %vm287, %v272
      %293 = vst.msk [vmem:[#allocation2 + $0x14] sm:$0xf] %vm287, %v274
      %294 = vst.msk [vmem:[#allocation2 + $0x18] sm:$0xf] %vm287, %v276
      %295 = vst.msk [vmem:[#allocation2 + $0x1c] sm:$0xf] %vm287, %v278
      %v296 = vld [vmem:[%s216] sm:$0xf]
      %v297 = vld [vmem:[%s216 + $0x4] sm:$0x1]
      %v298 = vld [vmem:[%s216 + $0x8] sm:$0xf]
      %v299 = vld [vmem:[%s216 + $0xc] sm:$0x1]
      %v300 = vld [vmem:[%s216 + $0x10] sm:$0xf]
      %v301 = vld [vmem:[%s216 + $0x14] sm:$0x1]
      %v302 = vld [vmem:[%s216 + $0x18] sm:$0xf]
      %v303 = vld [vmem:[%s216 + $0x1c] sm:$0x1]
      %v304 = vld [vmem:[%s216 + $0x20] sm:$0xf]
      %v305 = vld [vmem:[%s216 + $0x24] sm:$0x1]
      %v306 = vld [vmem:[%s216 + $0x28] sm:$0xf]
      %v307 = vld [vmem:[%s216 + $0x2c] sm:$0x1]
      %v308 = vld [vmem:[%s216 + $0x30] sm:$0xf]
      %v309 = vld [vmem:[%s216 + $0x34] sm:$0x1]
      %v310 = vld [vmem:[%s216 + $0x38] sm:$0xf]
      %v311 = vld [vmem:[%s216 + $0x3c] sm:$0x1]
      %vm312 = vsmask.f32 3328
      %vm313 = vsmask.f32 7440
      %vm314 = vmor %vm312, %vm313
      %v316 = vshrl.u32 %v296, 16
      %v318 = vrot.slane %v316, 4
      %v319 = vshll.u32 %v296, 16
      %v321 = vrot.slane %v319, 5
      %v322 = vor.u32 %v318, %v321
      %v323 = vrot.slane %v322, 4
      %v325 = vshll.u32 %v297, 16
      %v327 = vrot.slane %v325, 5
      %v328 = vsel %vm314, %v323, %v327
      %v330 = vshrl.u32 %v298, 16
      %v332 = vrot.slane %v330, 4
      %v333 = vshll.u32 %v298, 16
      %v335 = vrot.slane %v333, 5
      %v336 = vor.u32 %v332, %v335
      %v337 = vrot.slane %v336, 4
      %v339 = vshll.u32 %v299, 16
      %v341 = vrot.slane %v339, 5
      %v342 = vsel %vm314, %v337, %v341
      %v344 = vshrl.u32 %v300, 16
      %v346 = vrot.slane %v344, 4
      %v347 = vshll.u32 %v300, 16
      %v349 = vrot.slane %v347, 5
      %v350 = vor.u32 %v346, %v349
      %v351 = vrot.slane %v350, 4
      %v353 = vshll.u32 %v301, 16
      %v355 = vrot.slane %v353, 5
      %v356 = vsel %vm314, %v351, %v355
      %v358 = vshrl.u32 %v302, 16
      %v360 = vrot.slane %v358, 4
      %v361 = vshll.u32 %v302, 16
      %v363 = vrot.slane %v361, 5
      %v364 = vor.u32 %v360, %v363
      %v365 = vrot.slane %v364, 4
      %v367 = vshll.u32 %v303, 16
      %v369 = vrot.slane %v367, 5
      %v370 = vsel %vm314, %v365, %v369
      %v372 = vshrl.u32 %v304, 16
      %v374 = vrot.slane %v372, 4
      %v375 = vshll.u32 %v304, 16
      %v377 = vrot.slane %v375, 5
      %v378 = vor.u32 %v374, %v377
      %v379 = vrot.slane %v378, 4
      %v381 = vshll.u32 %v305, 16
      %v383 = vrot.slane %v381, 5
      %v384 = vsel %vm314, %v379, %v383
      %v386 = vshrl.u32 %v306, 16
      %v388 = vrot.slane %v386, 4
      %v389 = vshll.u32 %v306, 16
      %v391 = vrot.slane %v389, 5
      %v392 = vor.u32 %v388, %v391
      %v393 = vrot.slane %v392, 4
      %v395 = vshll.u32 %v307, 16
      %v397 = vrot.slane %v395, 5
      %v398 = vsel %vm314, %v393, %v397
      %v400 = vshrl.u32 %v308, 16
      %v402 = vrot.slane %v400, 4
      %v403 = vshll.u32 %v308, 16
      %v405 = vrot.slane %v403, 5
      %v406 = vor.u32 %v402, %v405
      %v407 = vrot.slane %v406, 4
      %v409 = vshll.u32 %v309, 16
      %v411 = vrot.slane %v409, 5
      %v412 = vsel %vm314, %v407, %v411
      %v414 = vshrl.u32 %v310, 16
      %v416 = vrot.slane %v414, 4
      %v417 = vshll.u32 %v310, 16
      %v419 = vrot.slane %v417, 5
      %v420 = vor.u32 %v416, %v419
      %v421 = vrot.slane %v420, 4
      %v423 = vshll.u32 %v311, 16
      %v425 = vrot.slane %v423, 5
      %v426 = vsel %vm314, %v421, %v425
      %427 = vrot.lane.b32.xlu0 %v328, 16
      %v428 = vpop.permute.xlu0 %427
      %429 = vrot.lane.b32.xlu0 %v342, 16
      %v430 = vpop.permute.xlu0 %429
      %431 = vrot.lane.b32.xlu0 %v356, 16
      %v432 = vpop.permute.xlu0 %431
      %433 = vrot.lane.b32.xlu0 %v370, 16
      %v434 = vpop.permute.xlu0 %433
      %435 = vrot.lane.b32.xlu0 %v384, 16
      %v436 = vpop.permute.xlu0 %435
      %437 = vrot.lane.b32.xlu0 %v398, 16
      %v438 = vpop.permute.xlu0 %437
      %439 = vrot.lane.b32.xlu0 %v412, 16
      %v440 = vpop.permute.xlu0 %439
      %441 = vrot.lane.b32.xlu0 %v426, 16
      %v442 = vpop.permute.xlu0 %441
      %vm451 = vcmask 191616
      %452 = vst.msk [vmem:[#allocation2] sm:$0xf] %vm451, %v428
      %453 = vst.msk [vmem:[#allocation2 + $0x4] sm:$0xf] %vm451, %v430
      %454 = vst.msk [vmem:[#allocation2 + $0x8] sm:$0xf] %vm451, %v432
      %455 = vst.msk [vmem:[#allocation2 + $0xc] sm:$0xf] %vm451, %v434
      %456 = vst.msk [vmem:[#allocation2 + $0x10] sm:$0xf] %vm451, %v436
      %457 = vst.msk [vmem:[#allocation2 + $0x14] sm:$0xf] %vm451, %v438
      %458 = vst.msk [vmem:[#allocation2 + $0x18] sm:$0xf] %vm451, %v440
      %459 = vst.msk [vmem:[#allocation2 + $0x1c] sm:$0xf] %vm451, %v442
      %s460 = scalar_lea.vmem %s216, 144
      %v461 = vld [vmem:[%s460] sm:$0xf]
      %v462 = vld [vmem:[%s460 + $0x8] sm:$0xf]
      %v463 = vld [vmem:[%s460 + $0x10] sm:$0xf]
      %v464 = vld [vmem:[%s460 + $0x18] sm:$0xf]
      %v465 = vld [vmem:[%s460 + $0x20] sm:$0xf]
      %v466 = vld [vmem:[%s460 + $0x28] sm:$0xf]
      %v467 = vld [vmem:[%s460 + $0x30] sm:$0xf]
      %v468 = vld [vmem:[%s460 + $0x38] sm:$0xf]
      %477 = vrot.lane.b32.xlu0 %v461, 24
      %v478 = vpop.permute.xlu0 %477
      %479 = vrot.lane.b32.xlu0 %v462, 24
      %v480 = vpop.permute.xlu0 %479
      %481 = vrot.lane.b32.xlu0 %v463, 24
      %v482 = vpop.permute.xlu0 %481
      %483 = vrot.lane.b32.xlu0 %v464, 24
      %v484 = vpop.permute.xlu0 %483
      %485 = vrot.lane.b32.xlu0 %v465, 24
      %v486 = vpop.permute.xlu0 %485
      %487 = vrot.lane.b32.xlu0 %v466, 24
      %v488 = vpop.permute.xlu0 %487
      %489 = vrot.lane.b32.xlu0 %v467, 24
      %v490 = vpop.permute.xlu0 %489
      %491 = vrot.lane.b32.xlu0 %v468, 24
      %v492 = vpop.permute.xlu0 %491
      %vm501 = vcmask 257216
      %502 = vst.msk [vmem:[#allocation2] sm:$0xf] %vm501, %v478
      %503 = vst.msk [vmem:[#allocation2 + $0x4] sm:$0xf] %vm501, %v480
      %504 = vst.msk [vmem:[#allocation2 + $0x8] sm:$0xf] %vm501, %v482
      %505 = vst.msk [vmem:[#allocation2 + $0xc] sm:$0xf] %vm501, %v484
      %506 = vst.msk [vmem:[#allocation2 + $0x10] sm:$0xf] %vm501, %v486
      %507 = vst.msk [vmem:[#allocation2 + $0x14] sm:$0xf] %vm501, %v488
      %508 = vst.msk [vmem:[#allocation2 + $0x18] sm:$0xf] %vm501, %v490
      %509 = vst.msk [vmem:[#allocation2 + $0x1c] sm:$0xf] %vm501, %v492
      %s510 = scalar_lea.vmem %s216, 216
      %v511 = vld [vmem:[%s510] sm:$0xf]
      %v512 = vld [vmem:[%s510 + $0x8] sm:$0xf]
      %v513 = vld [vmem:[%s510 + $0x10] sm:$0xf]
      %v514 = vld [vmem:[%s510 + $0x18] sm:$0xf]
      %v515 = vld [vmem:[%s510 + $0x20] sm:$0xf]
      %v516 = vld [vmem:[%s510 + $0x28] sm:$0xf]
      %v517 = vld [vmem:[%s510 + $0x30] sm:$0xf]
      %v518 = vld [vmem:[%s510 + $0x38] sm:$0xf]
      %527 = vrot.lane.b32.xlu0 %v511, 32
      %v528 = vpop.permute.xlu0 %527
      %529 = vrot.lane.b32.xlu0 %v512, 32
      %v530 = vpop.permute.xlu0 %529
      %531 = vrot.lane.b32.xlu0 %v513, 32
      %v532 = vpop.permute.xlu0 %531
      %533 = vrot.lane.b32.xlu0 %v514, 32
      %v534 = vpop.permute.xlu0 %533
      %535 = vrot.lane.b32.xlu0 %v515, 32
      %v536 = vpop.permute.xlu0 %535
      %537 = vrot.lane.b32.xlu0 %v516, 32
      %v538 = vpop.permute.xlu0 %537
      %539 = vrot.lane.b32.xlu0 %v517, 32
      %v540 = vpop.permute.xlu0 %539
      %541 = vrot.lane.b32.xlu0 %v518, 32
      %v542 = vpop.permute.xlu0 %541
      %vm551 = vcmask 322816
      %552 = vst.msk [vmem:[#allocation2] sm:$0xf] %vm551, %v528
      %553 = vst.msk [vmem:[#allocation2 + $0x4] sm:$0xf] %vm551, %v530
      %554 = vst.msk [vmem:[#allocation2 + $0x8] sm:$0xf] %vm551, %v532
      %555 = vst.msk [vmem:[#allocation2 + $0xc] sm:$0xf] %vm551, %v534
      %556 = vst.msk [vmem:[#allocation2 + $0x10] sm:$0xf] %vm551, %v536
      %557 = vst.msk [vmem:[#allocation2 + $0x14] sm:$0xf] %vm551, %v538
      %558 = vst.msk [vmem:[#allocation2 + $0x18] sm:$0xf] %vm551, %v540
      %559 = vst.msk [vmem:[#allocation2 + $0x1c] sm:$0xf] %vm551, %v542
      %v560 = vld [vmem:[%s460] sm:$0xf]
      %v561 = vld [vmem:[%s460 + $0x4] sm:$0x1]
      %v562 = vld [vmem:[%s460 + $0x8] sm:$0xf]
      %v563 = vld [vmem:[%s460 + $0xc] sm:$0x1]
      %v564 = vld [vmem:[%s460 + $0x10] sm:$0xf]
      %v565 = vld [vmem:[%s460 + $0x14] sm:$0x1]
      %v566 = vld [vmem:[%s460 + $0x18] sm:$0xf]
      %v567 = vld [vmem:[%s460 + $0x1c] sm:$0x1]
      %v568 = vld [vmem:[%s460 + $0x20] sm:$0xf]
      %v569 = vld [vmem:[%s460 + $0x24] sm:$0x1]
      %v570 = vld [vmem:[%s460 + $0x28] sm:$0xf]
      %v571 = vld [vmem:[%s460 + $0x2c] sm:$0x1]
      %v572 = vld [vmem:[%s460 + $0x30] sm:$0xf]
      %v573 = vld [vmem:[%s460 + $0x34] sm:$0x1]
      %v574 = vld [vmem:[%s460 + $0x38] sm:$0xf]
      %v575 = vld [vmem:[%s460 + $0x3c] sm:$0x1]
      %v577 = vshrl.u32 %v560, 16
      %v579 = vrot.slane %v577, 4
      %v580 = vshll.u32 %v560, 16
      %v582 = vrot.slane %v580, 5
      %v583 = vor.u32 %v579, %v582
      %v584 = vrot.slane %v583, 4
      %v586 = vshll.u32 %v561, 16
      %v588 = vrot.slane %v586, 5
      %v589 = vsel %vm314, %v584, %v588
      %v591 = vshrl.u32 %v562, 16
      %v593 = vrot.slane %v591, 4
      %v594 = vshll.u32 %v562, 16
      %v596 = vrot.slane %v594, 5
      %v597 = vor.u32 %v593, %v596
      %v598 = vrot.slane %v597, 4
      %v600 = vshll.u32 %v563, 16
      %v602 = vrot.slane %v600, 5
      %v603 = vsel %vm314, %v598, %v602
      %v605 = vshrl.u32 %v564, 16
      %v607 = vrot.slane %v605, 4
      %v608 = vshll.u32 %v564, 16
      %v610 = vrot.slane %v608, 5
      %v611 = vor.u32 %v607, %v610
      %v612 = vrot.slane %v611, 4
      %v614 = vshll.u32 %v565, 16
      %v616 = vrot.slane %v614, 5
      %v617 = vsel %vm314, %v612, %v616
      %v619 = vshrl.u32 %v566, 16
      %v621 = vrot.slane %v619, 4
      %v622 = vshll.u32 %v566, 16
      %v624 = vrot.slane %v622, 5
      %v625 = vor.u32 %v621, %v624
      %v626 = vrot.slane %v625, 4
      %v628 = vshll.u32 %v567, 16
      %v630 = vrot.slane %v628, 5
      %v631 = vsel %vm314, %v626, %v630
      %v633 = vshrl.u32 %v568, 16
      %v635 = vrot.slane %v633, 4
      %v636 = vshll.u32 %v568, 16
      %v638 = vrot.slane %v636, 5
      %v639 = vor.u32 %v635, %v638
      %v640 = vrot.slane %v639, 4
      %v642 = vshll.u32 %v569, 16
      %v644 = vrot.slane %v642, 5
      %v645 = vsel %vm314, %v640, %v644
      %v647 = vshrl.u32 %v570, 16
      %v649 = vrot.slane %v647, 4
      %v650 = vshll.u32 %v570, 16
      %v652 = vrot.slane %v650, 5
      %v653 = vor.u32 %v649, %v652
      %v654 = vrot.slane %v653, 4
      %v656 = vshll.u32 %v571, 16
      %v658 = vrot.slane %v656, 5
      %v659 = vsel %vm314, %v654, %v658
      %v661 = vshrl.u32 %v572, 16
      %v663 = vrot.slane %v661, 4
      %v664 = vshll.u32 %v572, 16
      %v666 = vrot.slane %v664, 5
      %v667 = vor.u32 %v663, %v666
      %v668 = vrot.slane %v667, 4
      %v670 = vshll.u32 %v573, 16
      %v672 = vrot.slane %v670, 5
      %v673 = vsel %vm314, %v668, %v672
      %v675 = vshrl.u32 %v574, 16
      %v677 = vrot.slane %v675, 4
      %v678 = vshll.u32 %v574, 16
      %v680 = vrot.slane %v678, 5
      %v681 = vor.u32 %v677, %v680
      %v682 = vrot.slane %v681, 4
      %v684 = vshll.u32 %v575, 16
      %v686 = vrot.slane %v684, 5
      %v687 = vsel %vm314, %v682, %v686
      %688 = vrot.lane.b32.xlu0 %v589, 40
      %v689 = vpop.permute.xlu0 %688
      %690 = vrot.lane.b32.xlu0 %v603, 40
      %v691 = vpop.permute.xlu0 %690
      %692 = vrot.lane.b32.xlu0 %v617, 40
      %v693 = vpop.permute.xlu0 %692
      %694 = vrot.lane.b32.xlu0 %v631, 40
      %v695 = vpop.permute.xlu0 %694
      %696 = vrot.lane.b32.xlu0 %v645, 40
      %v697 = vpop.permute.xlu0 %696
      %698 = vrot.lane.b32.xlu0 %v659, 40
      %v699 = vpop.permute.xlu0 %698
      %700 = vrot.lane.b32.xlu0 %v673, 40
      %v701 = vpop.permute.xlu0 %700
      %702 = vrot.lane.b32.xlu0 %v687, 40
      %v703 = vpop.permute.xlu0 %702
      %vm712 = vcmask 388416
      %713 = vst.msk [vmem:[#allocation2] sm:$0xf] %vm712, %v689
      %714 = vst.msk [vmem:[#allocation2 + $0x4] sm:$0xf] %vm712, %v691
      %715 = vst.msk [vmem:[#allocation2 + $0x8] sm:$0xf] %vm712, %v693
      %716 = vst.msk [vmem:[#allocation2 + $0xc] sm:$0xf] %vm712, %v695
      %717 = vst.msk [vmem:[#allocation2 + $0x10] sm:$0xf] %vm712, %v697
      %718 = vst.msk [vmem:[#allocation2 + $0x14] sm:$0xf] %vm712, %v699
      %719 = vst.msk [vmem:[#allocation2 + $0x18] sm:$0xf] %vm712, %v701
      %720 = vst.msk [vmem:[#allocation2 + $0x1c] sm:$0xf] %vm712, %v703
      %s721 = scalar_lea.vmem %s216, 8
      %v722 = vld [vmem:[%s721] sm:$0xf]
      %v723 = vld [vmem:[%s721 + $0x8] sm:$0xf]
      %v724 = vld [vmem:[%s721 + $0x10] sm:$0xf]
      %v725 = vld [vmem:[%s721 + $0x18] sm:$0xf]
      %v726 = vld [vmem:[%s721 + $0x20] sm:$0xf]
      %v727 = vld [vmem:[%s721 + $0x28] sm:$0xf]
      %v728 = vld [vmem:[%s721 + $0x30] sm:$0xf]
      %v729 = vld [vmem:[%s721 + $0x38] sm:$0xf]
      %738 = vrot.lane.b32.xlu0 %v722, 48
      %v739 = vpop.permute.xlu0 %738
      %740 = vrot.lane.b32.xlu0 %v723, 48
      %v741 = vpop.permute.xlu0 %740
      %742 = vrot.lane.b32.xlu0 %v724, 48
      %v743 = vpop.permute.xlu0 %742
      %744 = vrot.lane.b32.xlu0 %v725, 48
      %v745 = vpop.permute.xlu0 %744
      %746 = vrot.lane.b32.xlu0 %v726, 48
      %v747 = vpop.permute.xlu0 %746
      %748 = vrot.lane.b32.xlu0 %v727, 48
      %v749 = vpop.permute.xlu0 %748
      %750 = vrot.lane.b32.xlu0 %v728, 48
      %v751 = vpop.permute.xlu0 %750
      %752 = vrot.lane.b32.xlu0 %v729, 48
      %v753 = vpop.permute.xlu0 %752
      %vm762 = vcmask 454016
      %763 = vst.msk [vmem:[#allocation2] sm:$0xf] %vm762, %v739
      %764 = vst.msk [vmem:[#allocation2 + $0x4] sm:$0xf] %vm762, %v741
      %765 = vst.msk [vmem:[#allocation2 + $0x8] sm:$0xf] %vm762, %v743
      %766 = vst.msk [vmem:[#allocation2 + $0xc] sm:$0xf] %vm762, %v745
      %767 = vst.msk [vmem:[#allocation2 + $0x10] sm:$0xf] %vm762, %v747
      %768 = vst.msk [vmem:[#allocation2 + $0x14] sm:$0xf] %vm762, %v749
      %769 = vst.msk [vmem:[#allocation2 + $0x18] sm:$0xf] %vm762, %v751
      %770 = vst.msk [vmem:[#allocation2 + $0x1c] sm:$0xf] %vm762, %v753
      %s771 = scalar_lea.vmem %s216, 80
      %v772 = vld [vmem:[%s771] sm:$0xf]
      %v773 = vld [vmem:[%s771 + $0x8] sm:$0xf]
      %v774 = vld [vmem:[%s771 + $0x10] sm:$0xf]
      %v775 = vld [vmem:[%s771 + $0x18] sm:$0xf]
      %v776 = vld [vmem:[%s771 + $0x20] sm:$0xf]
      %v777 = vld [vmem:[%s771 + $0x28] sm:$0xf]
      %v778 = vld [vmem:[%s771 + $0x30] sm:$0xf]
      %v779 = vld [vmem:[%s771 + $0x38] sm:$0xf]
      %788 = vrot.lane.b32.xlu0 %v772, 56
      %v789 = vpop.permute.xlu0 %788
      %790 = vrot.lane.b32.xlu0 %v773, 56
      %v791 = vpop.permute.xlu0 %790
      %792 = vrot.lane.b32.xlu0 %v774, 56
      %v793 = vpop.permute.xlu0 %792
      %794 = vrot.lane.b32.xlu0 %v775, 56
      %v795 = vpop.permute.xlu0 %794
      %796 = vrot.lane.b32.xlu0 %v776, 56
      %v797 = vpop.permute.xlu0 %796
      %798 = vrot.lane.b32.xlu0 %v777, 56
      %v799 = vpop.permute.xlu0 %798
      %800 = vrot.lane.b32.xlu0 %v778, 56
      %v801 = vpop.permute.xlu0 %800
      %802 = vrot.lane.b32.xlu0 %v779, 56
      %v803 = vpop.permute.xlu0 %802
      %vm812 = vcmask 519616
      %813 = vst.msk [vmem:[#allocation2] sm:$0xf] %vm812, %v789
      %814 = vst.msk [vmem:[#allocation2 + $0x4] sm:$0xf] %vm812, %v791
      %815 = vst.msk [vmem:[#allocation2 + $0x8] sm:$0xf] %vm812, %v793
      %816 = vst.msk [vmem:[#allocation2 + $0xc] sm:$0xf] %vm812, %v795
      %817 = vst.msk [vmem:[#allocation2 + $0x10] sm:$0xf] %vm812, %v797
      %818 = vst.msk [vmem:[#allocation2 + $0x14] sm:$0xf] %vm812, %v799
      %819 = vst.msk [vmem:[#allocation2 + $0x18] sm:$0xf] %vm812, %v801
      %820 = vst.msk [vmem:[#allocation2 + $0x1c] sm:$0xf] %vm812, %v803
      %v821 = vld [vmem:[%s721] sm:$0xf]
      %v822 = vld [vmem:[%s721 + $0x4] sm:$0x1]
      %v823 = vld [vmem:[%s721 + $0x8] sm:$0xf]
      %v824 = vld [vmem:[%s721 + $0xc] sm:$0x1]
      %v825 = vld [vmem:[%s721 + $0x10] sm:$0xf]
      %v826 = vld [vmem:[%s721 + $0x14] sm:$0x1]
      %v827 = vld [vmem:[%s721 + $0x18] sm:$0xf]
      %v828 = vld [vmem:[%s721 + $0x1c] sm:$0x1]
      %v829 = vld [vmem:[%s721 + $0x20] sm:$0xf]
      %v830 = vld [vmem:[%s721 + $0x24] sm:$0x1]
      %v831 = vld [vmem:[%s721 + $0x28] sm:$0xf]
      %v832 = vld [vmem:[%s721 + $0x2c] sm:$0x1]
      %v833 = vld [vmem:[%s721 + $0x30] sm:$0xf]
      %v834 = vld [vmem:[%s721 + $0x34] sm:$0x1]
      %v835 = vld [vmem:[%s721 + $0x38] sm:$0xf]
      %v836 = vld [vmem:[%s721 + $0x3c] sm:$0x1]
      %v838 = vshrl.u32 %v821, 16
      %v840 = vrot.slane %v838, 4
      %v841 = vshll.u32 %v821, 16
      %v843 = vrot.slane %v841, 5
      %v844 = vor.u32 %v840, %v843
      %v845 = vrot.slane %v844, 4
      %v847 = vshll.u32 %v822, 16
      %v849 = vrot.slane %v847, 5
      %v850 = vsel %vm314, %v845, %v849
      %v852 = vshrl.u32 %v823, 16
      %v854 = vrot.slane %v852, 4
      %v855 = vshll.u32 %v823, 16
      %v857 = vrot.slane %v855, 5
      %v858 = vor.u32 %v854, %v857
      %v859 = vrot.slane %v858, 4
      %v861 = vshll.u32 %v824, 16
      %v863 = vrot.slane %v861, 5
      %v864 = vsel %vm314, %v859, %v863
      %v866 = vshrl.u32 %v825, 16
      %v868 = vrot.slane %v866, 4
      %v869 = vshll.u32 %v825, 16
      %v871 = vrot.slane %v869, 5
      %v872 = vor.u32 %v868, %v871
      %v873 = vrot.slane %v872, 4
      %v875 = vshll.u32 %v826, 16
      %v877 = vrot.slane %v875, 5
      %v878 = vsel %vm314, %v873, %v877
      %v880 = vshrl.u32 %v827, 16
      %v882 = vrot.slane %v880, 4
      %v883 = vshll.u32 %v827, 16
      %v885 = vrot.slane %v883, 5
      %v886 = vor.u32 %v882, %v885
      %v887 = vrot.slane %v886, 4
      %v889 = vshll.u32 %v828, 16
      %v891 = vrot.slane %v889, 5
      %v892 = vsel %vm314, %v887, %v891
      %v894 = vshrl.u32 %v829, 16
      %v896 = vrot.slane %v894, 4
      %v897 = vshll.u32 %v829, 16
      %v899 = vrot.slane %v897, 5
      %v900 = vor.u32 %v896, %v899
      %v901 = vrot.slane %v900, 4
      %v903 = vshll.u32 %v830, 16
      %v905 = vrot.slane %v903, 5
      %v906 = vsel %vm314, %v901, %v905
      %v908 = vshrl.u32 %v831, 16
      %v910 = vrot.slane %v908, 4
      %v911 = vshll.u32 %v831, 16
      %v913 = vrot.slane %v911, 5
      %v914 = vor.u32 %v910, %v913
      %v915 = vrot.slane %v914, 4
      %v917 = vshll.u32 %v832, 16
      %v919 = vrot.slane %v917, 5
      %v920 = vsel %vm314, %v915, %v919
      %v922 = vshrl.u32 %v833, 16
      %v924 = vrot.slane %v922, 4
      %v925 = vshll.u32 %v833, 16
      %v927 = vrot.slane %v925, 5
      %v928 = vor.u32 %v924, %v927
      %v929 = vrot.slane %v928, 4
      %v931 = vshll.u32 %v834, 16
      %v933 = vrot.slane %v931, 5
      %v934 = vsel %vm314, %v929, %v933
      %v936 = vshrl.u32 %v835, 16
      %v938 = vrot.slane %v936, 4
      %v939 = vshll.u32 %v835, 16
      %v941 = vrot.slane %v939, 5
      %v942 = vor.u32 %v938, %v941
      %v943 = vrot.slane %v942, 4
      %v945 = vshll.u32 %v836, 16
      %v947 = vrot.slane %v945, 5
      %v948 = vsel %vm314, %v943, %v947
      %949 = vrot.lane.b32.xlu0 %v850, 64
      %v950 = vpop.permute.xlu0 %949
      %951 = vrot.lane.b32.xlu0 %v864, 64
      %v952 = vpop.permute.xlu0 %951
      %953 = vrot.lane.b32.xlu0 %v878, 64
      %v954 = vpop.permute.xlu0 %953
      %955 = vrot.lane.b32.xlu0 %v892, 64
      %v956 = vpop.permute.xlu0 %955
      %957 = vrot.lane.b32.xlu0 %v906, 64
      %v958 = vpop.permute.xlu0 %957
      %959 = vrot.lane.b32.xlu0 %v920, 64
      %v960 = vpop.permute.xlu0 %959
      %961 = vrot.lane.b32.xlu0 %v934, 64
      %v962 = vpop.permute.xlu0 %961
      %963 = vrot.lane.b32.xlu0 %v948, 64
      %v964 = vpop.permute.xlu0 %963
      %vm973 = vcmask 585216
      %974 = vst.msk [vmem:[#allocation2] sm:$0xf] %vm973, %v950
      %975 = vst.msk [vmem:[#allocation2 + $0x4] sm:$0xf] %vm973, %v952
      %976 = vst.msk [vmem:[#allocation2 + $0x8] sm:$0xf] %vm973, %v954
      %977 = vst.msk [vmem:[#allocation2 + $0xc] sm:$0xf] %vm973, %v956
      %978 = vst.msk [vmem:[#allocation2 + $0x10] sm:$0xf] %vm973, %v958
      %979 = vst.msk [vmem:[#allocation2 + $0x14] sm:$0xf] %vm973, %v960
      %980 = vst.msk [vmem:[#allocation2 + $0x18] sm:$0xf] %vm973, %v962
      %981 = vst.msk [vmem:[#allocation2 + $0x1c] sm:$0xf] %vm973, %v964
      %v982 = vld [vmem:[#allocation2] sm:$0xf]
      %v983 = vld [vmem:[#allocation2 + $0x4] sm:$0xf]
      %v984 = vld [vmem:[#allocation2 + $0x8] sm:$0xf]
      %v985 = vld [vmem:[#allocation2 + $0xc] sm:$0xf]
      %v986 = vld [vmem:[#allocation2 + $0x10] sm:$0xf]
      %v987 = vld [vmem:[#allocation2 + $0x14] sm:$0xf]
      %v988 = vld [vmem:[#allocation2 + $0x18] sm:$0xf]
      %v989 = vld [vmem:[#allocation2 + $0x1c] sm:$0xf]
      %v990 = vld [vmem:[%s1] sm:$0xf]
      %v991 = vld [vmem:[%s1 + $0x4] sm:$0xf]
      %v992 = vld [vmem:[%s1 + $0x8] sm:$0xf]
      %v993 = vld [vmem:[%s1 + $0xc] sm:$0xf]
      %v994 = vld [vmem:[%s1 + $0x10] sm:$0xf]
      %v995 = vld [vmem:[%s1 + $0x14] sm:$0xf]
      %v996 = vld [vmem:[%s1 + $0x18] sm:$0xf]
      %v997 = vld [vmem:[%s1 + $0x1c] sm:$0xf]
      %v998 = vld [vmem:[%s1 + $0x20] sm:$0xf]
      %v1007 = vunpack.c.l.b16 %v982
      %v1008 = vunpack.c.l.b16 %v983
      %v1009 = vunpack.c.l.b16 %v984
      %v1010 = vunpack.c.l.b16 %v985
      %v1011 = vunpack.c.l.b16 %v986
      %v1012 = vunpack.c.l.b16 %v987
      %v1013 = vunpack.c.l.b16 %v988
      %v1014 = vunpack.c.l.b16 %v989
      %v1015 = vpack.c.b16 %v1008, %v1007
      %v1016 = vpack.c.b16 %v1010, %v1009
      %v1017 = vpack.c.b16 %v1012, %v1011
      %v1018 = vpack.c.b16 %v1014, %v1013
      %v1028 = vunpack.c.l.b16 %v990
      %v1029 = vunpack.c.l.b16 %v991
      %v1030 = vunpack.c.l.b16 %v992
      %v1031 = vunpack.c.l.b16 %v993
      %v1032 = vunpack.c.l.b16 %v994
      %v1033 = vunpack.c.l.b16 %v995
      %v1034 = vunpack.c.l.b16 %v996
      %v1035 = vunpack.c.l.b16 %v997
      %v1036 = vunpack.c.l.b16 %v998
      %v1037 = vpack.c.b16 %v1029, %v1028
      %v1038 = vpack.c.b16 %v1031, %v1030
      %v1039 = vpack.c.b16 %v1033, %v1032
      %v1040 = vpack.c.b16 %v1035, %v1034
      %v1041 = vpack.c.b16 %v1036, %v1036
      %vm1046 = vcmask 588800
      %v1048 = vsel %vm1046, %v1015, 0
      %v1051 = vsel %vm1046, %v1016, 0
      %v1054 = vsel %vm1046, %v1017, 0
      %v1057 = vsel %vm1046, %v1018, 0
      %vm1059 = vcmask 1043456
      %v1061 = vsel %vm1059, %v1041, 0
      %1063 = vmatpush.bf16.msra.mxu0 0
      %1064 = vmatpush.bf16.msra.mxu0 0
      %1065 = vmatpush.bf16.msra.mxu0 0
      %1066 = vmatpush.bf16.msra.mxu0 %v1061
      %1067 = vmatpush.bf16.msra.mxu0 %v1040
      %1068 = vmatpush.bf16.msra.mxu0 %v1039
      %1069 = vmatpush.bf16.msra.mxu0 %v1038
      %1070 = vmatpush.bf16.msra.mxu0 %v1037
      %1071 = vmatmul.bf16.gmra.mxu0 %v1048
      %v1072 = vpop.f32.mrf.mxu0
      %v1073 = vadd.f32 0.0, %v1072
      %v1074 = vpop.f32.mrf.mxu0
      %v1075 = vadd.f32 0.0, %v1074
      %1076 = vmatmul.bf16.gmra.mxu0 %v1051
      %v1077 = vpop.f32.mrf.mxu0
      %v1078 = vadd.f32 0.0, %v1077
      %v1079 = vpop.f32.mrf.mxu0
      %v1080 = vadd.f32 0.0, %v1079
      %1081 = vmatmul.bf16.gmra.mxu0 %v1054
      %v1082 = vpop.f32.mrf.mxu0
      %v1083 = vadd.f32 0.0, %v1082
      %v1084 = vpop.f32.mrf.mxu0
      %v1085 = vadd.f32 0.0, %v1084
      %1086 = vmatmul.bf16.gmra.mxu0 %v1057
      %v1087 = vpop.f32.mrf.mxu0
      %v1088 = vadd.f32 0.0, %v1087
      %v1089 = vpop.f32.mrf.mxu0
      %v1090 = vadd.f32 0.0, %v1089
      %1091 = vdwg.mxu0
      %v1092 = vld [vmem:[%s2] sm:$0x1]
      %v1094 = vperm.slane %v1092, 0
      %v1096 = vmul.f32 %v1073, %v1094
      %v1097 = vmul.f32 %v1075, %v1094
      %v1098 = vmul.f32 %v1078, %v1094
      %v1099 = vmul.f32 %v1080, %v1094
      %v1100 = vmul.f32 %v1083, %v1094
      %v1101 = vmul.f32 %v1085, %v1094
      %v1102 = vmul.f32 %v1088, %v1094
      %v1103 = vmul.f32 %v1090, %v1094
      %v1104 = vld [vmem:[%s3] sm:$0x1]
      %v1106 = vperm.slane %v1104, 0
      %v1108 = vadd.f32 %v1096, %v1106
      %v1109 = vadd.f32 %v1097, %v1106
      %v1110 = vadd.f32 %v1098, %v1106
      %v1111 = vadd.f32 %v1099, %v1106
      %v1112 = vadd.f32 %v1100, %v1106
      %v1113 = vadd.f32 %v1101, %v1106
      %v1114 = vadd.f32 %v1102, %v1106
      %v1115 = vadd.f32 %v1103, %v1106
      %v1116 = vpack.c.bf16 %v1108, %v1108
      %v1117 = vpack.c.bf16 %v1109, %v1109
      %v1118 = vpack.c.bf16 %v1110, %v1110
      %v1119 = vpack.c.bf16 %v1111, %v1111
      %v1120 = vpack.c.bf16 %v1112, %v1112
      %v1121 = vpack.c.bf16 %v1113, %v1113
      %v1122 = vpack.c.bf16 %v1114, %v1114
      %v1123 = vpack.c.bf16 %v1115, %v1115
      %1124 = vst.msk [vmem:[%s226] sm:$0xf] %vm237, %v1116
      %1125 = vst.msk [vmem:[%s226 + $0x4] sm:$0xf] %vm237, %v1117
      %1126 = vst.msk [vmem:[%s226 + $0x8] sm:$0xf] %vm237, %v1118
      %1127 = vst.msk [vmem:[%s226 + $0xc] sm:$0xf] %vm237, %v1119
      %1128 = vst.msk [vmem:[%s226 + $0x10] sm:$0xf] %vm237, %v1120
      %1129 = vst.msk [vmem:[%s226 + $0x14] sm:$0xf] %vm237, %v1121
      %1130 = vst.msk [vmem:[%s226 + $0x18] sm:$0xf] %vm237, %v1122
      %1131 = vst.msk [vmem:[%s226 + $0x1c] sm:$0xf] %vm237, %v1123
      %s1132 = smul.u32 8, %s20
      %p1133 = scmp.lt.s32.totalorder %s19, 1
      %s1134 = scalar_select %p1133, %s19, 1
      %p1135 = scmp.lt.s32.totalorder %s1132, 7
      %s1136 = scalar_select %p1135, %s1132, 7
      %s1137 = smul.addr %s1134, 8
      %s1138 = sadd.s32 %s1136, %s1137
      %s1139 = smul.addr %s1138, 4
      %s1140 = scalar_lea.vmem %s4, %s1139
      // Predicated region
      $region37: #{bottleneck_ir_sram_forward.8} parent=35 // pred_check
        %p1141 = pneg %p138
      $region38: #{bottleneck_ir_sram_forward.8} parent=35 // pred_check_branch
        %1143 = sbr.rel (%p1141) target = $region40
      $region39: #{bottleneck_ir_sram_forward.8} parent=35 // pred_region
        %s1144 = smul.u32 8, %s20
      $region40: #{bottleneck_ir_sram_forward.8} parent=35 // pred_fallthru
        _
    $region36: #{bottleneck_ir_sram_forward.8} parent=5 // pred_fallthru
      _
    %p1145 = scmp.le.s32.totalorder 2, %s10
    // Predicated region
    $region41: #{bottleneck_ir_sram_forward.8} parent=5 // pred_check
      %p1146 = pneg %p1145
    $region42: #{bottleneck_ir_sram_forward.8} parent=5 // pred_check_branch
      %1148 = sbr.rel (%p1146) target = $region44
    $region43: #{bottleneck_ir_sram_forward.8} parent=5 // pred_region
      %s1149 = ssub.s32 %s10, 2
      // Predicated region
      $region45: #{bottleneck_ir_sram_forward.8} parent=43 // pred_check
        %p1150 = pneg %p144
      $region46: #{bottleneck_ir_sram_forward.8} parent=43 // pred_check_branch
        %1152 = sbr.rel (%p1150) target = $region48
      $region47: #{bottleneck_ir_sram_forward.8} parent=43 // pred_region
        %s1153 = smul.u32 8, %s22
        %p1154 = scmp.lt.s32.totalorder %s21, 1
        %s1155 = scalar_select %p1154, %s21, 1
        %p1156 = scmp.lt.s32.totalorder %s1153, 7
        %s1157 = scalar_select %p1156, %s1153, 7
        %s1158 = smul.addr %s1155, 8
        %s1159 = sadd.s32 %s1157, %s1158
        %s1160 = smul.addr %s1159, 4
        %s1161 = scalar_lea.vmem %s4, %s1160
      $region48: #{bottleneck_ir_sram_forward.8} parent=43 // pred_fallthru
        _
    $region44: #{bottleneck_ir_sram_forward.8} parent=5 // pred_fallthru
      _
  $region6: #{bottleneck_ir_sram_forward.8} parent=0 // loop_footer
    %s14 = sadd.s32 1, %s10
  $region7: #{bottleneck_ir_sram_forward.8} parent=0 // loop_footer_branch
    %9 = sbr.rel target = $region3
  $region8: #{bottleneck_ir_sram_forward.8} parent=0 // loop_exit
    _

// kernel: bottleneck_ir_sram_forward.10
$region0: #{bottleneck_ir_sram_forward.10}
  #allocation0 [shape = 'u32[]', space=smem, size = 0x4, offset = 0x4, fixed_abs, tag = 'smem constant byte address 0x4 - core index']
  #allocation1 [shape = 'u32[72,128]{1,0:T(1,128)}', space=vmem, size = 0x9000, scoped, tag = 'internal scratch']
  %s0 = inlined_call_operand.vmem [shape: bf16[2,16,8], index: 0, kind: input, shape index: {}]
  %s1 = inlined_call_operand.vmem [shape: bf16[2,16,8], index: 1, kind: input, shape index: {}]
  %s2 = inlined_call_operand.vmem [shape: f32[2,8,8], index: 2, kind: output, shape index: {}]
  %s3 = sld [smem:[#allocation0]]
  $region41: #{bottleneck_ir_sram_forward.10} parent=0
    _
  %s5 = ssub.s32 1, %s3
  %s6 = scalar_select 0, %s5, %s3
  loop: start=0, step=1, limit=4
  $region2: #{bottleneck_ir_sram_forward.10} parent=0 // loop_pre_header
    _
  $region3: #{bottleneck_ir_sram_forward.10} parent=0 // loop_header
    %s8 = sphi 0, %s12
    %p9 = scmp.ge.s32.totalorder %s8, 4
    %s18 = sphi 0, %s20
    %s21 = sphi 0, %s18
    %s22 = sphi 0, %s21
    %s38 = sphi 0, %s22
    %s44 = sphi 0, %s46
    %s47 = sphi 0, %s44
    %s48 = sphi 0, %s47
    %s64 = sphi 0, %s48
    %s70 = sphi 0, %s72
    %s73 = sphi 0, %s70
    %s74 = sphi 0, %s73
    %s90 = sphi 0, %s74
  $region4: #{bottleneck_ir_sram_forward.10} parent=0 // loop_header_branch
    %11 = sbr.rel (%p9) target = $region8
  $region5: #{bottleneck_ir_sram_forward.10} parent=0 // loop_body
    %s13 = ssub.s32 %s8, 1
    %s14 = ssub.s32 %s8, 2
    %s15 = sadd.s32 %s8, 1
    %s16 = ssub.s32 %s8, %s15
    %p17 = scmp.eq.s32.totalorder %s16, 0
    %s19 = sadd.s32 %s18, 1
    %s20 = scalar_select %p17, %s18, %s19
    %p23 = pneg %p17
    %p24 = scmp.eq.s32.totalorder %s8, 1
    %p25 = por %p23, %p24
    %p26 = scmp.ne.s32.totalorder %s18, %s21
    %p27 = scmp.eq.s32.totalorder %s8, 0
    %p28 = por %p26, %p27
    %p29 = scmp.ne.s32.totalorder %s18, %s21
    %p30 = scmp.eq.s32.totalorder %s13, 1
    %p31 = por %p29, %p30
    %p32 = scmp.ne.s32.totalorder %s21, %s22
    %p33 = scmp.eq.s32.totalorder %s13, 0
    %p34 = por %p32, %p33
    %p35 = scmp.ne.s32.totalorder %s21, %s22
    %p36 = scmp.eq.s32.totalorder %s14, 1
    %p37 = por %p35, %p36
    %p39 = scmp.ne.s32.totalorder %s22, %s38
    %p40 = scmp.eq.s32.totalorder %s14, 0
    %p41 = por %p39, %p40
    %s42 = ssub.s32 %s8, %s15
    %p43 = scmp.eq.s32.totalorder %s42, 0
    %s45 = sadd.s32 %s44, 1
    %s46 = scalar_select %p43, %s44, %s45
    %p49 = pneg %p43
    %p50 = scmp.eq.s32.totalorder %s8, 1
    %p51 = por %p49, %p50
    %p52 = scmp.ne.s32.totalorder %s44, %s47
    %p53 = scmp.eq.s32.totalorder %s8, 0
    %p54 = por %p52, %p53
    %p55 = scmp.ne.s32.totalorder %s44, %s47
    %p56 = scmp.eq.s32.totalorder %s13, 1
    %p57 = por %p55, %p56
    %p58 = scmp.ne.s32.totalorder %s47, %s48
    %p59 = scmp.eq.s32.totalorder %s13, 0
    %p60 = por %p58, %p59
    %p61 = scmp.ne.s32.totalorder %s47, %s48
    %p62 = scmp.eq.s32.totalorder %s14, 1
    %p63 = por %p61, %p62
    %p65 = scmp.ne.s32.totalorder %s48, %s64
    %p66 = scmp.eq.s32.totalorder %s14, 0
    %p67 = por %p65, %p66
    %s68 = ssub.s32 %s8, %s15
    %p69 = scmp.eq.s32.totalorder %s68, 0
    %s71 = sadd.s32 %s70, 1
    %s72 = scalar_select %p69, %s70, %s71
    %p75 = pneg %p69
    %p76 = scmp.eq.s32.totalorder %s8, 1
    %p77 = por %p75, %p76
    %p78 = scmp.ne.s32.totalorder %s70, %s73
    %p79 = scmp.eq.s32.totalorder %s8, 0
    %p80 = por %p78, %p79
    %p81 = scmp.ne.s32.totalorder %s70, %s73
    %p82 = scmp.eq.s32.totalorder %s13, 1
    %p83 = por %p81, %p82
    %p84 = scmp.ne.s32.totalorder %s73, %s74
    %p85 = scmp.eq.s32.totalorder %s13, 0
    %p86 = por %p84, %p85
    %p87 = scmp.ne.s32.totalorder %s73, %s74
    %p88 = scmp.eq.s32.totalorder %s14, 1
    %p89 = por %p87, %p88
    %p91 = scmp.ne.s32.totalorder %s74, %s90
    %p92 = scmp.eq.s32.totalorder %s14, 0
    %p93 = por %p91, %p92
    %p94 = scmp.le.s32.totalorder 1, %s8
    %p95 = scmp.lt.s32.totalorder %s8, 3
    %p96 = pnand %p94, %p95
    %p97 = pneg %p96
    // Predicated region
    $region9: #{bottleneck_ir_sram_forward.10} parent=5 // pred_check
      _
    $region10: #{bottleneck_ir_sram_forward.10} parent=5 // pred_check_branch
      %99 = sbr.rel (%p96) target = $region12
    $region11: #{bottleneck_ir_sram_forward.10} parent=5 // pred_region
      %s100 = ssub.s32 %s8, 1
    $region12: #{bottleneck_ir_sram_forward.10} parent=5 // pred_fallthru
      _
    %p101 = scmp.lt.s32.totalorder %s8, 2
    // Predicated region
    $region13: #{bottleneck_ir_sram_forward.10} parent=5 // pred_check
      %p102 = pneg %p101
    $region14: #{bottleneck_ir_sram_forward.10} parent=5 // pred_check_branch
      %104 = sbr.rel (%p102) target = $region16
    $region15: #{bottleneck_ir_sram_forward.10} parent=5 // pred_region
      // Predicated region
      $region17: #{bottleneck_ir_sram_forward.10} parent=15 // pred_check
        %p105 = pneg %p28
      $region18: #{bottleneck_ir_sram_forward.10} parent=15 // pred_check_branch
        %107 = sbr.rel (%p105) target = $region20
      $region19: #{bottleneck_ir_sram_forward.10} parent=15 // pred_region
        %p108 = scmp.lt.s32.totalorder %s8, 1
        %s109 = scalar_select %p108, %s8, 1
        %s110 = smul.addr %s109, 2
        %s111 = smul.addr %s110, 4
        %s112 = scalar_lea.vmem %s0, %s111
      $region20: #{bottleneck_ir_sram_forward.10} parent=15 // pred_fallthru
        _
      // Predicated region
      $region21: #{bottleneck_ir_sram_forward.10} parent=15 // pred_check
        %p113 = pneg %p54
      $region22: #{bottleneck_ir_sram_forward.10} parent=15 // pred_check_branch
        %115 = sbr.rel (%p113) target = $region24
      $region23: #{bottleneck_ir_sram_forward.10} parent=15 // pred_region
        %p116 = scmp.lt.s32.totalorder %s8, 1
        %s117 = scalar_select %p116, %s8, 1
        %s118 = smul.addr %s117, 2
        %s119 = smul.addr %s118, 4
        %s120 = scalar_lea.vmem %s1, %s119
      $region24: #{bottleneck_ir_sram_forward.10} parent=15 // pred_fallthru
        _
    $region16: #{bottleneck_ir_sram_forward.10} parent=5 // pred_fallthru
      _
    %p121 = scmp.le.s32.totalorder 1, %s8
    %p122 = scmp.lt.s32.totalorder %s8, 3
    %p123 = pnand %p121, %p122
    %p124 = pneg %p123
    // Predicated region
    $region25: #{bottleneck_ir_sram_forward.10} parent=5 // pred_check
      _
    $region26: #{bottleneck_ir_sram_forward.10} parent=5 // pred_check_branch
      %126 = sbr.rel (%p123) target = $region28
    $region27: #{bottleneck_ir_sram_forward.10} parent=5 // pred_region
      %s127 = ssub.s32 %s8, 1
      %p128 = scmp.lt.s32.totalorder %s13, 1
      %s129 = scalar_select %p128, %s13, 1
      %s130 = smul.addr %s129, 2
      %s131 = smul.addr %s130, 4
      %s132 = scalar_lea.vmem %s0, %s131
      %p133 = pneg %p34
      %p134 = pneg %p31
      %p135 = scmp.lt.s32.totalorder %s13, 1
      %s136 = scalar_select %p135, %s13, 1
      %s137 = smul.addr %s136, 2
      %s138 = smul.addr %s137, 4
      %s139 = scalar_lea.vmem %s1, %s138
      %p140 = pneg %p60
      %p141 = pneg %p57
      %p142 = pneg %p86
      %p143 = pneg %p83
      %p144 = scmp.lt.s32.totalorder %s13, 1
      %s145 = scalar_select %p144, %s13, 1
      %s146 = smul.addr %s145, 8
      %s147 = scalar_lea.vmem %s2, %s146
      %p148 = scmp.lt.s32.totalorder %s13, 1
      %s149 = scalar_select %p148, %s13, 1
      %s150 = smul.addr %s149, 2
      %s151 = smul.addr %s150, 4
      %s152 = scalar_lea.vmem %s0, %s151
      %p153 = scmp.lt.s32.totalorder %s13, 1
      %s154 = scalar_select %p153, %s13, 1
      %s155 = smul.addr %s154, 2
      %s156 = smul.addr %s155, 4
      %s157 = scalar_lea.vmem %s1, %s156
      %p158 = scmp.lt.s32.totalorder %s13, 1
      %s159 = scalar_select %p158, %s13, 1
      %s160 = smul.addr %s159, 8
      %s161 = scalar_lea.vmem %s2, %s160
      %v163 = vld [vmem:[%s157] sm:$0xf]
      %v164 = vld [vmem:[%s157 + $0x4] sm:$0xf]
      %v165 = vld [vmem:[%s152] sm:$0xf]
      %v166 = vld [vmem:[%s152 + $0x4] sm:$0xf]
      %v169 = vunpack.c.l.b16 %v163
      %v170 = vunpack.c.l.b16 %v164
      %v171 = vpack.c.b16 %v170, %v169
      %173 = vxpose.xlu0.c.b16.start [1/8] %v171, 128
      %174 = vxpose.xlu0.c.b16.cont [2/8] 0, 128
      %175 = vxpose.xlu0.c.b16.cont [3/8] 0, 128
      %176 = vxpose.xlu0.c.b16.cont [4/8] 0, 128
      %177 = vxpose.xlu0.c.b16.cont [5/8] 0, 128
      %178 = vxpose.xlu0.c.b16.cont [6/8] 0, 128
      %179 = vxpose.xlu0.c.b16.cont [7/8] 0, 128
      %180 = vxpose.xlu0.c.b16.end [8/8] 0, 128
      %v181 = vpop.trf.xlu0
      %v182 = vpop.trf.xlu0
      %v183 = vpop.trf.xlu0
      %v184 = vpop.trf.xlu0
      %v185 = vpop.trf.xlu0
      %v186 = vpop.trf.xlu0
      %v187 = vpop.trf.xlu0
      %v188 = vpop.trf.xlu0
      %v191 = vunpack.c.l.b16 %v165
      %v192 = vunpack.c.l.b16 %v166
      %v193 = vpack.c.b16 %v192, %v191
      %vm195 = vcmask 130048
      %v197 = vsel %vm195, %v181, 0
      %199 = vmatpush.bf16.msra.mxu0 0
      %200 = vmatpush.bf16.msra.mxu0 0
      %201 = vmatpush.bf16.msra.mxu0 0
      %202 = vmatpush.bf16.msra.mxu0 0
      %203 = vmatpush.bf16.msra.mxu0 0
      %204 = vmatpush.bf16.msra.mxu0 0
      %205 = vmatpush.bf16.msra.mxu0 0
      %206 = vmatpush.bf16.msra.mxu0 %v193
      %207 = vmatmul.bf16.gmra.mxu0 %v197
      %v208 = vpop.f32.mrf.mxu0
      %v209 = vadd.f32 0.0, %v208
      %v210 = vpop.f32.mrf.mxu0
      %211 = vdwg.mxu0
      %vm212 = vcmask 64512
      %v213 = vsel %vm212, %v209, -inf
      %v214 = vrot.slane %v213, 4
      %v215 = vmax.f32 %v213, %v214
      %v216 = vrot.slane %v215, 2
      %v217 = vmax.f32 %v215, %v216
      %v218 = vrot.slane %v217, 1
      %v219 = vmax.f32 %v217, %v218
      %v220 = vsub.f32 %v209, %v219
      %v221 = vmul.f32 %v220, 1.442695
      %v222 = vpow.pop %v221
      %v223 = vsel %vm212, %v222, 0.0
      %v224 = vrot.slane %v223, 4
      %v225 = vadd.f32 %v223, %v224
      %v226 = vrot.slane %v225, 2
      %v227 = vadd.f32 %v225, %v226
      %v228 = vrot.slane %v227, 1
      %v229 = vadd.f32 %v227, %v228
      %v230 = vrcp.pop %v229
      %v231 = vmul.f32 %v222, %v230
      %232 = vst.msk [vmem:[%s161] sm:$0xff] %vm212, %v231
      %p233 = scmp.lt.s32.totalorder %s13, 1
      %s234 = scalar_select %p233, %s13, 1
      %s235 = smul.addr %s234, 8
      %s236 = scalar_lea.vmem %s2, %s235
      // Predicated region
      $region29: #{bottleneck_ir_sram_forward.10} parent=27 // pred_check
        %p237 = pneg %p83
      $region30: #{bottleneck_ir_sram_forward.10} parent=27 // pred_check_branch
        %239 = sbr.rel (%p237) target = $region32
      $region31: #{bottleneck_ir_sram_forward.10} parent=27 // pred_region
        _
      $region32: #{bottleneck_ir_sram_forward.10} parent=27 // pred_fallthru
        _
    $region28: #{bottleneck_ir_sram_forward.10} parent=5 // pred_fallthru
      _
    %p240 = scmp.le.s32.totalorder 2, %s8
    // Predicated region
    $region33: #{bottleneck_ir_sram_forward.10} parent=5 // pred_check
      %p241 = pneg %p240
    $region34: #{bottleneck_ir_sram_forward.10} parent=5 // pred_check_branch
      %243 = sbr.rel (%p241) target = $region36
    $region35: #{bottleneck_ir_sram_forward.10} parent=5 // pred_region
      %s244 = ssub.s32 %s8, 2
      // Predicated region
      $region37: #{bottleneck_ir_sram_forward.10} parent=35 // pred_check
        %p245 = pneg %p89
      $region38: #{bottleneck_ir_sram_forward.10} parent=35 // pred_check_branch
        %247 = sbr.rel (%p245) target = $region40
      $region39: #{bottleneck_ir_sram_forward.10} parent=35 // pred_region
        %p248 = scmp.lt.s32.totalorder %s14, 1
        %s249 = scalar_select %p248, %s14, 1
        %s250 = smul.addr %s249, 8
        %s251 = scalar_lea.vmem %s2, %s250
      $region40: #{bottleneck_ir_sram_forward.10} parent=35 // pred_fallthru
        _
    $region36: #{bottleneck_ir_sram_forward.10} parent=5 // pred_fallthru
      _
  $region6: #{bottleneck_ir_sram_forward.10} parent=0 // loop_footer
    %s12 = sadd.s32 1, %s8
  $region7: #{bottleneck_ir_sram_forward.10} parent=0 // loop_footer_branch
    %7 = sbr.rel target = $region3
  $region8: #{bottleneck_ir_sram_forward.10} parent=0 // loop_exit
    _

// kernel: bottleneck_ir_sram_forward.11
$region0: #{bottleneck_ir_sram_forward.11}
  #allocation0 [shape = 'u32[]', space=smem, size = 0x4, offset = 0x4, fixed_abs, tag = 'smem constant byte address 0x4 - core index']
  #allocation1 [shape = 'u32[72,128]{1,0:T(1,128)}', space=vmem, size = 0x9000, scoped, tag = 'internal scratch']
  %s0 = inlined_call_operand.vmem [shape: bf16[2,64,8], index: 0, kind: input, shape index: {}]
  %s1 = inlined_call_operand.vmem [shape: bf16[2,8,8], index: 1, kind: input, shape index: {}]
  %s2 = inlined_call_operand.vmem [shape: bf16[2,64,8], index: 2, kind: input, shape index: {}]
  %s3 = inlined_call_operand.vmem [shape: f32[2,64,8], index: 3, kind: output, shape index: {}]
  %s4 = sld [smem:[#allocation0]]
  $region45: #{bottleneck_ir_sram_forward.11} parent=0
    _
  %s6 = ssub.s32 1, %s4
  %s7 = scalar_select 0, %s6, %s4
  loop: start=0, step=1, limit=4
  $region2: #{bottleneck_ir_sram_forward.11} parent=0 // loop_pre_header
    _
  $region3: #{bottleneck_ir_sram_forward.11} parent=0 // loop_header
    %s9 = sphi 0, %s13
    %p10 = scmp.ge.s32.totalorder %s9, 4
    %s16 = sphi 0, %s28
    %s17 = sphi 0, %s24
    %s18 = sphi 0, %s16
    %s19 = sphi 0, %s17
    %s20 = sphi 0, %s18
    %s21 = sphi 0, %s19
    %s33 = sphi 0, %s35
    %s36 = sphi 0, %s33
    %s37 = sphi 0, %s36
    %s53 = sphi 0, %s37
    %s59 = sphi 0, %s61
    %s62 = sphi 0, %s59
    %s63 = sphi 0, %s62
    %s79 = sphi 0, %s63
    %s87 = sphi 0, %s89
    %s90 = sphi 0, %s87
    %s91 = sphi 0, %s90
    %s107 = sphi 0, %s91
    %s115 = sphi 0, %s117
    %s118 = sphi 0, %s115
    %s119 = sphi 0, %s118
    %s135 = sphi 0, %s119
  $region4: #{bottleneck_ir_sram_forward.11} parent=0 // loop_header_branch
    %12 = sbr.rel (%p10) target = $region8
  $region5: #{bottleneck_ir_sram_forward.11} parent=0 // loop_body
    %s14 = ssub.s32 %s9, 1
    %s15 = ssub.s32 %s9, 2
    %s22 = sadd.s32 1, %s17
    %p23 = scmp.ge.s32.totalorder %s22, 1
    %s24 = scalar_select %p23, 0, %s22
    %s25 = sadd.s32 1, %s16
    %s26 = scalar_select %p23, %s25, %s16
    %p27 = scmp.ge.s32.totalorder %s26, 2
    %s28 = scalar_select %p27, 0, %s26
    %s29 = ssub.s32 %s16, %s28
    %s30 = ssub.s32 %s17, %s24
    %s31 = sor.u32 %s29, %s30
    %p32 = scmp.eq.s32.totalorder %s31, 0
    %s34 = sadd.s32 %s33, 1
    %s35 = scalar_select %p32, %s33, %s34
    %p38 = pneg %p32
    %p39 = scmp.eq.s32.totalorder %s9, 1
    %p40 = por %p38, %p39
    %p41 = scmp.ne.s32.totalorder %s33, %s36
    %p42 = scmp.eq.s32.totalorder %s9, 0
    %p43 = por %p41, %p42
    %p44 = scmp.ne.s32.totalorder %s33, %s36
    %p45 = scmp.eq.s32.totalorder %s14, 1
    %p46 = por %p44, %p45
    %p47 = scmp.ne.s32.totalorder %s36, %s37
    %p48 = scmp.eq.s32.totalorder %s14, 0
    %p49 = por %p47, %p48
    %p50 = scmp.ne.s32.totalorder %s36, %s37
    %p51 = scmp.eq.s32.totalorder %s15, 1
    %p52 = por %p50, %p51
    %p54 = scmp.ne.s32.totalorder %s37, %s53
    %p55 = scmp.eq.s32.totalorder %s15, 0
    %p56 = por %p54, %p55
    %s57 = ssub.s32 %s16, %s28
    %p58 = scmp.eq.s32.totalorder %s57, 0
    %s60 = sadd.s32 %s59, 1
    %s61 = scalar_select %p58, %s59, %s60
    %p64 = pneg %p58
    %p65 = scmp.eq.s32.totalorder %s9, 1
    %p66 = por %p64, %p65
    %p67 = scmp.ne.s32.totalorder %s59, %s62
    %p68 = scmp.eq.s32.totalorder %s9, 0
    %p69 = por %p67, %p68
    %p70 = scmp.ne.s32.totalorder %s59, %s62
    %p71 = scmp.eq.s32.totalorder %s14, 1
    %p72 = por %p70, %p71
    %p73 = scmp.ne.s32.totalorder %s62, %s63
    %p74 = scmp.eq.s32.totalorder %s14, 0
    %p75 = por %p73, %p74
    %p76 = scmp.ne.s32.totalorder %s62, %s63
    %p77 = scmp.eq.s32.totalorder %s15, 1
    %p78 = por %p76, %p77
    %p80 = scmp.ne.s32.totalorder %s63, %s79
    %p81 = scmp.eq.s32.totalorder %s15, 0
    %p82 = por %p80, %p81
    %s83 = ssub.s32 %s16, %s28
    %s84 = ssub.s32 %s17, %s24
    %s85 = sor.u32 %s83, %s84
    %p86 = scmp.eq.s32.totalorder %s85, 0
    %s88 = sadd.s32 %s87, 1
    %s89 = scalar_select %p86, %s87, %s88
    %p92 = pneg %p86
    %p93 = scmp.eq.s32.totalorder %s9, 1
    %p94 = por %p92, %p93
    %p95 = scmp.ne.s32.totalorder %s87, %s90
    %p96 = scmp.eq.s32.totalorder %s9, 0
    %p97 = por %p95, %p96
    %p98 = scmp.ne.s32.totalorder %s87, %s90
    %p99 = scmp.eq.s32.totalorder %s14, 1
    %p100 = por %p98, %p99
    %p101 = scmp.ne.s32.totalorder %s90, %s91
    %p102 = scmp.eq.s32.totalorder %s14, 0
    %p103 = por %p101, %p102
    %p104 = scmp.ne.s32.totalorder %s90, %s91
    %p105 = scmp.eq.s32.totalorder %s15, 1
    %p106 = por %p104, %p105
    %p108 = scmp.ne.s32.totalorder %s91, %s107
    %p109 = scmp.eq.s32.totalorder %s15, 0
    %p110 = por %p108, %p109
    %s111 = ssub.s32 %s16, %s28
    %s112 = ssub.s32 %s17, %s24
    %s113 = sor.u32 %s111, %s112
    %p114 = scmp.eq.s32.totalorder %s113, 0
    %s116 = sadd.s32 %s115, 1
    %s117 = scalar_select %p114, %s115, %s116
    %p120 = pneg %p114
    %p121 = scmp.eq.s32.totalorder %s9, 1
    %p122 = por %p120, %p121
    %p123 = scmp.ne.s32.totalorder %s115, %s118
    %p124 = scmp.eq.s32.totalorder %s9, 0
    %p125 = por %p123, %p124
    %p126 = scmp.ne.s32.totalorder %s115, %s118
    %p127 = scmp.eq.s32.totalorder %s14, 1
    %p128 = por %p126, %p127
    %p129 = scmp.ne.s32.totalorder %s118, %s119
    %p130 = scmp.eq.s32.totalorder %s14, 0
    %p131 = por %p129, %p130
    %p132 = scmp.ne.s32.totalorder %s118, %s119
    %p133 = scmp.eq.s32.totalorder %s15, 1
    %p134 = por %p132, %p133
    %p136 = scmp.ne.s32.totalorder %s119, %s135
    %p137 = scmp.eq.s32.totalorder %s15, 0
    %p138 = por %p136, %p137
    %p139 = scmp.le.s32.totalorder 1, %s9
    %p140 = scmp.lt.s32.totalorder %s9, 3
    %p141 = pnand %p139, %p140
    %p142 = pneg %p141
    // Predicated region
    $region9: #{bottleneck_ir_sram_forward.11} parent=5 // pred_check
      _
    $region10: #{bottleneck_ir_sram_forward.11} parent=5 // pred_check_branch
      %144 = sbr.rel (%p141) target = $region12
    $region11: #{bottleneck_ir_sram_forward.11} parent=5 // pred_region
      %s145 = ssub.s32 %s9, 1
    $region12: #{bottleneck_ir_sram_forward.11} parent=5 // pred_fallthru
      _
    %p146 = scmp.lt.s32.totalorder %s9, 2
    // Predicated region
    $region13: #{bottleneck_ir_sram_forward.11} parent=5 // pred_check
      %p147 = pneg %p146
    $region14: #{bottleneck_ir_sram_forward.11} parent=5 // pred_check_branch
      %149 = sbr.rel (%p147) target = $region16
    $region15: #{bottleneck_ir_sram_forward.11} parent=5 // pred_region
      // Predicated region
      $region17: #{bottleneck_ir_sram_forward.11} parent=15 // pred_check
        %p150 = pneg %p43
      $region18: #{bottleneck_ir_sram_forward.11} parent=15 // pred_check_branch
        %152 = sbr.rel (%p150) target = $region20
      $region19: #{bottleneck_ir_sram_forward.11} parent=15 // pred_region
        %s153 = smul.u32 8, %s17
        %p154 = scmp.lt.s32.totalorder %s16, 1
        %s155 = scalar_select %p154, %s16, 1
        %p156 = scmp.lt.s32.totalorder %s153, 7
        %s157 = scalar_select %p156, %s153, 7
        %s158 = smul.addr %s155, 8
        %s159 = sadd.s32 %s157, %s158
        %s160 = smul.addr %s159, 4
        %s161 = scalar_lea.vmem %s0, %s160
        %s162 = smul.u32 8, %s17
      $region20: #{bottleneck_ir_sram_forward.11} parent=15 // pred_fallthru
        _
      // Predicated region
      $region21: #{bottleneck_ir_sram_forward.11} parent=15 // pred_check
        %p163 = pneg %p69
      $region22: #{bottleneck_ir_sram_forward.11} parent=15 // pred_check_branch
        %165 = sbr.rel (%p163) target = $region24
      $region23: #{bottleneck_ir_sram_forward.11} parent=15 // pred_region
        %p166 = scmp.lt.s32.totalorder %s16, 1
        %s167 = scalar_select %p166, %s16, 1
        %s168 = smul.addr %s167, 4
        %s169 = scalar_lea.vmem %s1, %s168
      $region24: #{bottleneck_ir_sram_forward.11} parent=15 // pred_fallthru
        _
      // Predicated region
      $region25: #{bottleneck_ir_sram_forward.11} parent=15 // pred_check
        %p170 = pneg %p97
      $region26: #{bottleneck_ir_sram_forward.11} parent=15 // pred_check_branch
        %172 = sbr.rel (%p170) target = $region28
      $region27: #{bottleneck_ir_sram_forward.11} parent=15 // pred_region
        %s173 = smul.u32 8, %s17
        %p174 = scmp.lt.s32.totalorder %s16, 1
        %s175 = scalar_select %p174, %s16, 1
        %p176 = scmp.lt.s32.totalorder %s173, 7
        %s177 = scalar_select %p176, %s173, 7
        %s178 = smul.addr %s175, 8
        %s179 = sadd.s32 %s177, %s178
        %s180 = smul.addr %s179, 4
        %s181 = scalar_lea.vmem %s2, %s180
        %s182 = smul.u32 8, %s17
      $region28: #{bottleneck_ir_sram_forward.11} parent=15 // pred_fallthru
        _
    $region16: #{bottleneck_ir_sram_forward.11} parent=5 // pred_fallthru
      _
    %p183 = scmp.le.s32.totalorder 1, %s9
    %p184 = scmp.lt.s32.totalorder %s9, 3
    %p185 = pnand %p183, %p184
    %p186 = pneg %p185
    // Predicated region
    $region29: #{bottleneck_ir_sram_forward.11} parent=5 // pred_check
      _
    $region30: #{bottleneck_ir_sram_forward.11} parent=5 // pred_check_branch
      %188 = sbr.rel (%p185) target = $region32
    $region31: #{bottleneck_ir_sram_forward.11} parent=5 // pred_region
      %s189 = ssub.s32 %s9, 1
      %s190 = smul.u32 8, %s19
      %p191 = scmp.lt.s32.totalorder %s18, 1
      %s192 = scalar_select %p191, %s18, 1
      %p193 = scmp.lt.s32.totalorder %s190, 7
      %s194 = scalar_select %p193, %s190, 7
      %s195 = smul.addr %s192, 8
      %s196 = sadd.s32 %s194, %s195
      %s197 = smul.addr %s196, 4
      %s198 = scalar_lea.vmem %s0, %s197
      %p199 = pneg %p49
      %p200 = pneg %p46
      %p201 = scmp.lt.s32.totalorder %s18, 1
      %s202 = scalar_select %p201, %s18, 1
      %s203 = smul.addr %s202, 4
      %s204 = scalar_lea.vmem %s1, %s203
      %p205 = pneg %p75
      %p206 = pneg %p72
      %s207 = smul.u32 8, %s19
      %p208 = scmp.lt.s32.totalorder %s18, 1
      %s209 = scalar_select %p208, %s18, 1
      %p210 = scmp.lt.s32.totalorder %s207, 7
      %s211 = scalar_select %p210, %s207, 7
      %s212 = smul.addr %s209, 8
      %s213 = sadd.s32 %s211, %s212
      %s214 = smul.addr %s213, 4
      %s215 = scalar_lea.vmem %s2, %s214
      %p216 = pneg %p103
      %p217 = pneg %p100
      %p218 = pneg %p131
      %p219 = pneg %p128
      %s220 = smul.u32 8, %s19
      %p221 = scmp.lt.s32.totalorder %s18, 1
      %s222 = scalar_select %p221, %s18, 1
      %p223 = scmp.lt.s32.totalorder %s220, 7
      %s224 = scalar_select %p223, %s220, 7
      %s225 = smul.addr %s222, 8
      %s226 = sadd.s32 %s224, %s225
      %s227 = smul.addr %s226, 8
      %s228 = scalar_lea.vmem %s3, %s227
      %s229 = smul.u32 8, %s19
      %p230 = scmp.lt.s32.totalorder %s18, 1
      %s231 = scalar_select %p230, %s18, 1
      %p232 = scmp.lt.s32.totalorder %s229, 7
      %s233 = scalar_select %p232, %s229, 7
      %s234 = smul.addr %s231, 8
      %s235 = sadd.s32 %s233, %s234
      %s236 = smul.addr %s235, 4
      %s237 = scalar_lea.vmem %s0, %s236
      %s238 = smul.u32 8, %s19
      %p239 = scmp.lt.s32.totalorder %s18, 1
      %s240 = scalar_select %p239, %s18, 1
      %s241 = smul.addr %s240, 4
      %s242 = scalar_lea.vmem %s1, %s241
      %s243 = smul.u32 8, %s19
      %p244 = scmp.lt.s32.totalorder %s18, 1
      %s245 = scalar_select %p244, %s18, 1
      %p246 = scmp.lt.s32.totalorder %s243, 7
      %s247 = scalar_select %p246, %s243, 7
      %s248 = smul.addr %s245, 8
      %s249 = sadd.s32 %s247, %s248
      %s250 = smul.addr %s249, 4
      %s251 = scalar_lea.vmem %s2, %s250
      %s252 = smul.u32 8, %s19
      %s253 = smul.u32 8, %s19
      %p254 = scmp.lt.s32.totalorder %s18, 1
      %s255 = scalar_select %p254, %s18, 1
      %p256 = scmp.lt.s32.totalorder %s253, 7
      %s257 = scalar_select %p256, %s253, 7
      %s258 = smul.addr %s255, 8
      %s259 = sadd.s32 %s257, %s258
      %s260 = smul.addr %s259, 8
      %s261 = scalar_lea.vmem %s3, %s260
      %s262 = smul.u32 8, %s19
      %v264 = vld [vmem:[%s237] sm:$0xf]
      %v265 = vld [vmem:[%s237 + $0x4] sm:$0xf]
      %v266 = vld [vmem:[%s237 + $0x8] sm:$0xf]
      %v267 = vld [vmem:[%s237 + $0xc] sm:$0xf]
      %v268 = vld [vmem:[%s237 + $0x10] sm:$0xf]
      %v269 = vld [vmem:[%s237 + $0x14] sm:$0xf]
      %v270 = vld [vmem:[%s237 + $0x18] sm:$0xf]
      %v271 = vld [vmem:[%s237 + $0x1c] sm:$0xf]
      %v272 = vld [vmem:[%s242] sm:$0xf]
      %v273 = vld [vmem:[%s251] sm:$0xf]
      %v274 = vld [vmem:[%s251 + $0x4] sm:$0xf]
      %v275 = vld [vmem:[%s251 + $0x8] sm:$0xf]
      %v276 = vld [vmem:[%s251 + $0xc] sm:$0xf]
      %v277 = vld [vmem:[%s251 + $0x10] sm:$0xf]
      %v278 = vld [vmem:[%s251 + $0x14] sm:$0xf]
      %v279 = vld [vmem:[%s251 + $0x18] sm:$0xf]
      %v280 = vld [vmem:[%s251 + $0x1c] sm:$0xf]
      %v281 = vunpack.c.l.bf16 %v273
      %v282 = vunpack.c.l.bf16 %v274
      %v283 = vunpack.c.l.bf16 %v275
      %v284 = vunpack.c.l.bf16 %v276
      %v285 = vunpack.c.l.bf16 %v277
      %v286 = vunpack.c.l.bf16 %v278
      %v287 = vunpack.c.l.bf16 %v279
      %v288 = vunpack.c.l.bf16 %v280
      %v297 = vunpack.c.l.b16 %v264
      %v298 = vunpack.c.l.b16 %v265
      %v299 = vunpack.c.l.b16 %v266
      %v300 = vunpack.c.l.b16 %v267
      %v301 = vunpack.c.l.b16 %v268
      %v302 = vunpack.c.l.b16 %v269
      %v303 = vunpack.c.l.b16 %v270
      %v304 = vunpack.c.l.b16 %v271
      %v305 = vpack.c.b16 %v298, %v297
      %v306 = vpack.c.b16 %v300, %v299
      %v307 = vpack.c.b16 %v302, %v301
      %v308 = vpack.c.b16 %v304, %v303
      %vm309 = vcmask 64512
      %v311 = vsel %vm309, %v305, 0
      %v314 = vsel %vm309, %v306, 0
      %v317 = vsel %vm309, %v307, 0
      %v320 = vsel %vm309, %v308, 0
      %vm322 = vcmask 1043456
      %v324 = vsel %vm322, %v272, 0
      %326 = vmatpush.bf16.msra.mxu0 0
      %327 = vmatpush.bf16.msra.mxu0 0
      %328 = vmatpush.bf16.msra.mxu0 0
      %329 = vmatpush.bf16.msra.mxu0 0
      %330 = vmatpush.bf16.msra.mxu0 0
      %331 = vmatpush.bf16.msra.mxu0 0
      %332 = vmatpush.bf16.msra.mxu0 0
      %333 = vmatpush.bf16.msra.mxu0 %v324
      %334 = vmatmul.bf16.gmra.mxu0 %v311
      %v335 = vpop.f32.mrf.mxu0
      %v336 = vadd.f32 %v281, %v335
      %v337 = vpop.f32.mrf.mxu0
      %v338 = vadd.f32 %v282, %v337
      %339 = vmatmul.bf16.gmra.mxu0 %v314
      %v340 = vpop.f32.mrf.mxu0
      %v341 = vadd.f32 %v283, %v340
      %v342 = vpop.f32.mrf.mxu0
      %v343 = vadd.f32 %v284, %v342
      %344 = vmatmul.bf16.gmra.mxu0 %v317
      %v345 = vpop.f32.mrf.mxu0
      %v346 = vadd.f32 %v285, %v345
      %v347 = vpop.f32.mrf.mxu0
      %v348 = vadd.f32 %v286, %v347
      %349 = vmatmul.bf16.gmra.mxu0 %v320
      %v350 = vpop.f32.mrf.mxu0
      %v351 = vadd.f32 %v287, %v350
      %v352 = vpop.f32.mrf.mxu0
      %v353 = vadd.f32 %v288, %v352
      %354 = vdwg.mxu0
      %355 = vst.msk [vmem:[%s261] sm:$0xff] %vm309, %v336
      %356 = vst.msk [vmem:[%s261 + $0x8] sm:$0xff] %vm309, %v338
      %357 = vst.msk [vmem:[%s261 + $0x10] sm:$0xff] %vm309, %v341
      %358 = vst.msk [vmem:[%s261 + $0x18] sm:$0xff] %vm309, %v343
      %359 = vst.msk [vmem:[%s261 + $0x20] sm:$0xff] %vm309, %v346
      %360 = vst.msk [vmem:[%s261 + $0x28] sm:$0xff] %vm309, %v348
      %361 = vst.msk [vmem:[%s261 + $0x30] sm:$0xff] %vm309, %v351
      %362 = vst.msk [vmem:[%s261 + $0x38] sm:$0xff] %vm309, %v353
      %s363 = smul.u32 8, %s19
      %p364 = scmp.lt.s32.totalorder %s18, 1
      %s365 = scalar_select %p364, %s18, 1
      %p366 = scmp.lt.s32.totalorder %s363, 7
      %s367 = scalar_select %p366, %s363, 7
      %s368 = smul.addr %s365, 8
      %s369 = sadd.s32 %s367, %s368
      %s370 = smul.addr %s369, 8
      %s371 = scalar_lea.vmem %s3, %s370
      // Predicated region
      $region33: #{bottleneck_ir_sram_forward.11} parent=31 // pred_check
        %p372 = pneg %p128
      $region34: #{bottleneck_ir_sram_forward.11} parent=31 // pred_check_branch
        %374 = sbr.rel (%p372) target = $region36
      $region35: #{bottleneck_ir_sram_forward.11} parent=31 // pred_region
        %s375 = smul.u32 8, %s19
      $region36: #{bottleneck_ir_sram_forward.11} parent=31 // pred_fallthru
        _
    $region32: #{bottleneck_ir_sram_forward.11} parent=5 // pred_fallthru
      _
    %p376 = scmp.le.s32.totalorder 2, %s9
    // Predicated region
    $region37: #{bottleneck_ir_sram_forward.11} parent=5 // pred_check
      %p377 = pneg %p376
    $region38: #{bottleneck_ir_sram_forward.11} parent=5 // pred_check_branch
      %379 = sbr.rel (%p377) target = $region40
    $region39: #{bottleneck_ir_sram_forward.11} parent=5 // pred_region
      %s380 = ssub.s32 %s9, 2
      // Predicated region
      $region41: #{bottleneck_ir_sram_forward.11} parent=39 // pred_check
        %p381 = pneg %p134
      $region42: #{bottleneck_ir_sram_forward.11} parent=39 // pred_check_branch
        %383 = sbr.rel (%p381) target = $region44
      $region43: #{bottleneck_ir_sram_forward.11} parent=39 // pred_region
        %s384 = smul.u32 8, %s21
        %p385 = scmp.lt.s32.totalorder %s20, 1
        %s386 = scalar_select %p385, %s20, 1
        %p387 = scmp.lt.s32.totalorder %s384, 7
        %s388 = scalar_select %p387, %s384, 7
        %s389 = smul.addr %s386, 8
        %s390 = sadd.s32 %s388, %s389
        %s391 = smul.addr %s390, 8
        %s392 = scalar_lea.vmem %s3, %s391
      $region44: #{bottleneck_ir_sram_forward.11} parent=39 // pred_fallthru
        _
    $region40: #{bottleneck_ir_sram_forward.11} parent=5 // pred_fallthru
      _
  $region6: #{bottleneck_ir_sram_forward.11} parent=0 // loop_footer
    %s13 = sadd.s32 1, %s9
  $region7: #{bottleneck_ir_sram_forward.11} parent=0 // loop_footer_branch
    %8 = sbr.rel target = $region3
  $region8: #{bottleneck_ir_sram_forward.11} parent=0 // loop_exit
    _

// kernel: bottleneck_ir_sram_forward.12
$region0: #{bottleneck_ir_sram_forward.12}
  #allocation0 [shape = 'u32[]', space=smem, size = 0x4, offset = 0x4, fixed_abs, tag = 'smem constant byte address 0x4 - core index']
  #allocation1 [shape = 'u32[72,128]{1,0:T(1,128)}', space=vmem, size = 0x9000, scoped, tag = 'internal scratch']
  %s0 = inlined_call_operand.vmem [shape: f32[128,8], index: 0, kind: input, shape index: {}]
  %s1 = inlined_call_operand.vmem [shape: bf16[8,4], index: 1, kind: input, shape index: {}]
  %s2 = inlined_call_operand.vmem [shape: bf16[8,4], index: 2, kind: input, shape index: {}]
  %s3 = inlined_call_operand.vmem [shape: bf16[8,8], index: 3, kind: input, shape index: {}]
  %s4 = inlined_call_operand.vmem [shape: bf16[128,4], index: 4, kind: output, shape index: {0}]
  %s5 = inlined_call_operand.vmem [shape: bf16[128,4], index: 5, kind: output, shape index: {1}]
  %s6 = inlined_call_operand.vmem [shape: bf16[128,8], index: 6, kind: output, shape index: {2}]
  %7 = xla_tuple %s4, %s5, %s6
  %s8 = sld [smem:[#allocation0]]
  $region42: #{bottleneck_ir_sram_forward.12} parent=0
    _
  %s10 = ssub.s32 1, %s8
  %s11 = scalar_select 0, %s10, %s8
  // Predicated region
  $region2: #{bottleneck_ir_sram_forward.12} parent=0 // pred_check
    _
  $region3: #{bottleneck_ir_sram_forward.12} parent=0 // pred_check_branch
    %13 = sbr.rel (0) target = $region5
  $region4: #{bottleneck_ir_sram_forward.12} parent=0 // pred_region
    _
  $region5: #{bottleneck_ir_sram_forward.12} parent=0 // pred_fallthru
    _
  // Predicated region
  $region6: #{bottleneck_ir_sram_forward.12} parent=0 // pred_check
    _
  $region7: #{bottleneck_ir_sram_forward.12} parent=0 // pred_check_branch
    %15 = sbr.rel (0) target = $region9
  $region8: #{bottleneck_ir_sram_forward.12} parent=0 // pred_region
    _
  $region9: #{bottleneck_ir_sram_forward.12} parent=0 // pred_fallthru
    _
  // Predicated region
  $region10: #{bottleneck_ir_sram_forward.12} parent=0 // pred_check
    _
  $region11: #{bottleneck_ir_sram_forward.12} parent=0 // pred_check_branch
    %17 = sbr.rel (0) target = $region13
  $region12: #{bottleneck_ir_sram_forward.12} parent=0 // pred_region
    _
  $region13: #{bottleneck_ir_sram_forward.12} parent=0 // pred_fallthru
    _
  // Predicated region
  $region14: #{bottleneck_ir_sram_forward.12} parent=0 // pred_check
    _
  $region15: #{bottleneck_ir_sram_forward.12} parent=0 // pred_check_branch
    %19 = sbr.rel (0) target = $region17
  $region16: #{bottleneck_ir_sram_forward.12} parent=0 // pred_region
    _
  $region17: #{bottleneck_ir_sram_forward.12} parent=0 // pred_fallthru
    _
  %v21 = vld [vmem:[%s0] sm:$0xff]
  %v22 = vld [vmem:[%s0 + $0x8] sm:$0xff]
  %v23 = vld [vmem:[%s0 + $0x10] sm:$0xff]
  %v24 = vld [vmem:[%s0 + $0x18] sm:$0xff]
  %v25 = vld [vmem:[%s0 + $0x20] sm:$0xff]
  %v26 = vld [vmem:[%s0 + $0x28] sm:$0xff]
  %v27 = vld [vmem:[%s0 + $0x30] sm:$0xff]
  %v28 = vld [vmem:[%s0 + $0x38] sm:$0xff]
  %v29 = vld [vmem:[%s0 + $0x40] sm:$0xff]
  %v30 = vld [vmem:[%s0 + $0x48] sm:$0xff]
  %v31 = vld [vmem:[%s0 + $0x50] sm:$0xff]
  %v32 = vld [vmem:[%s0 + $0x58] sm:$0xff]
  %v33 = vld [vmem:[%s0 + $0x60] sm:$0xff]
  %v34 = vld [vmem:[%s0 + $0x68] sm:$0xff]
  %v35 = vld [vmem:[%s0 + $0x70] sm:$0xff]
  %v36 = vld [vmem:[%s0 + $0x78] sm:$0xff]
  %v37 = vpack.c.bf16 %v22, %v21
  %v38 = vpack.c.bf16 %v24, %v23
  %v39 = vpack.c.bf16 %v26, %v25
  %v40 = vpack.c.bf16 %v28, %v27
  %v41 = vpack.c.bf16 %v30, %v29
  %v42 = vpack.c.bf16 %v32, %v31
  %v43 = vpack.c.bf16 %v34, %v33
  %v44 = vpack.c.bf16 %v36, %v35
  %v45 = vld [vmem:[%s1] sm:$0xf]
  %vm46 = vcmask 64512
  %v48 = vsel %vm46, %v37, 0
  %v51 = vsel %vm46, %v38, 0
  %v54 = vsel %vm46, %v39, 0
  %v57 = vsel %vm46, %v40, 0
  %v60 = vsel %vm46, %v41, 0
  %v63 = vsel %vm46, %v42, 0
  %v66 = vsel %vm46, %v43, 0
  %v69 = vsel %vm46, %v44, 0
  %vm71 = vcmask 1043456
  %v73 = vsel %vm71, %v45, 0
  %75 = vmatpush.bf16.msra.mxu0 0
  %76 = vmatpush.bf16.msra.mxu0 0
  %77 = vmatpush.bf16.msra.mxu0 0
  %78 = vmatpush.bf16.msra.mxu0 0
  %79 = vmatpush.bf16.msra.mxu0 0
  %80 = vmatpush.bf16.msra.mxu0 0
  %81 = vmatpush.bf16.msra.mxu0 0
  %82 = vmatpush.bf16.msra.mxu0 %v73
  %83 = vmatmul.bf16.gmra.mxu0 %v48
  %v84 = vpop.f32.mrf.mxu0
  %v85 = vadd.f32 0.0, %v84
  %v86 = vpop.f32.mrf.mxu0
  %v87 = vadd.f32 0.0, %v86
  %88 = vmatmul.bf16.gmra.mxu0 %v51
  %v89 = vpop.f32.mrf.mxu0
  %v90 = vadd.f32 0.0, %v89
  %v91 = vpop.f32.mrf.mxu0
  %v92 = vadd.f32 0.0, %v91
  %93 = vmatmul.bf16.gmra.mxu0 %v54
  %v94 = vpop.f32.mrf.mxu0
  %v95 = vadd.f32 0.0, %v94
  %v96 = vpop.f32.mrf.mxu0
  %v97 = vadd.f32 0.0, %v96
  %98 = vmatmul.bf16.gmra.mxu0 %v57
  %v99 = vpop.f32.mrf.mxu0
  %v100 = vadd.f32 0.0, %v99
  %v101 = vpop.f32.mrf.mxu0
  %v102 = vadd.f32 0.0, %v101
  %103 = vmatmul.bf16.gmra.mxu0 %v60
  %v104 = vpop.f32.mrf.mxu0
  %v105 = vadd.f32 0.0, %v104
  %v106 = vpop.f32.mrf.mxu0
  %v107 = vadd.f32 0.0, %v106
  %108 = vmatmul.bf16.gmra.mxu0 %v63
  %v109 = vpop.f32.mrf.mxu0
  %v110 = vadd.f32 0.0, %v109
  %v111 = vpop.f32.mrf.mxu0
  %v112 = vadd.f32 0.0, %v111
  %113 = vmatmul.bf16.gmra.mxu0 %v66
  %v114 = vpop.f32.mrf.mxu0
  %v115 = vadd.f32 0.0, %v114
  %v116 = vpop.f32.mrf.mxu0
  %v117 = vadd.f32 0.0, %v116
  %118 = vmatmul.bf16.gmra.mxu0 %v69
  %v119 = vpop.f32.mrf.mxu0
  %v120 = vadd.f32 0.0, %v119
  %v121 = vpop.f32.mrf.mxu0
  %v122 = vadd.f32 0.0, %v121
  %123 = vdwg.mxu0
  %v124 = vpack.c.bf16 %v85, %v85
  %v125 = vpack.c.bf16 %v87, %v87
  %v126 = vpack.c.bf16 %v90, %v90
  %v127 = vpack.c.bf16 %v92, %v92
  %v128 = vpack.c.bf16 %v95, %v95
  %v129 = vpack.c.bf16 %v97, %v97
  %v130 = vpack.c.bf16 %v100, %v100
  %v131 = vpack.c.bf16 %v102, %v102
  %v132 = vpack.c.bf16 %v105, %v105
  %v133 = vpack.c.bf16 %v107, %v107
  %v134 = vpack.c.bf16 %v110, %v110
  %v135 = vpack.c.bf16 %v112, %v112
  %v136 = vpack.c.bf16 %v115, %v115
  %v137 = vpack.c.bf16 %v117, %v117
  %v138 = vpack.c.bf16 %v120, %v120
  %v139 = vpack.c.bf16 %v122, %v122
  %vm140 = vcmask 27648
  %141 = vst.msk [vmem:[%s4] sm:$0xf] %vm140, %v124
  %142 = vst.msk [vmem:[%s4 + $0x4] sm:$0xf] %vm140, %v125
  %143 = vst.msk [vmem:[%s4 + $0x8] sm:$0xf] %vm140, %v126
  %144 = vst.msk [vmem:[%s4 + $0xc] sm:$0xf] %vm140, %v127
  %145 = vst.msk [vmem:[%s4 + $0x10] sm:$0xf] %vm140, %v128
  %146 = vst.msk [vmem:[%s4 + $0x14] sm:$0xf] %vm140, %v129
  %147 = vst.msk [vmem:[%s4 + $0x18] sm:$0xf] %vm140, %v130
  %148 = vst.msk [vmem:[%s4 + $0x1c] sm:$0xf] %vm140, %v131
  %149 = vst.msk [vmem:[%s4 + $0x20] sm:$0xf] %vm140, %v132
  %150 = vst.msk [vmem:[%s4 + $0x24] sm:$0xf] %vm140, %v133
  %151 = vst.msk [vmem:[%s4 + $0x28] sm:$0xf] %vm140, %v134
  %152 = vst.msk [vmem:[%s4 + $0x2c] sm:$0xf] %vm140, %v135
  %153 = vst.msk [vmem:[%s4 + $0x30] sm:$0xf] %vm140, %v136
  %154 = vst.msk [vmem:[%s4 + $0x34] sm:$0xf] %vm140, %v137
  %155 = vst.msk [vmem:[%s4 + $0x38] sm:$0xf] %vm140, %v138
  %156 = vst.msk [vmem:[%s4 + $0x3c] sm:$0xf] %vm140, %v139
  %v157 = vld [vmem:[%s2] sm:$0xf]
  %v159 = vsel %vm71, %v157, 0
  %161 = vmatpush.bf16.msra.mxu0 0
  %162 = vmatpush.bf16.msra.mxu0 0
  %163 = vmatpush.bf16.msra.mxu0 0
  %164 = vmatpush.bf16.msra.mxu0 0
  %165 = vmatpush.bf16.msra.mxu0 0
  %166 = vmatpush.bf16.msra.mxu0 0
  %167 = vmatpush.bf16.msra.mxu0 0
  %168 = vmatpush.bf16.msra.mxu0 %v159
  %169 = vmatmul.bf16.gmra.mxu0 %v48
  %v170 = vpop.f32.mrf.mxu0
  %v171 = vadd.f32 0.0, %v170
  %v172 = vpop.f32.mrf.mxu0
  %v173 = vadd.f32 0.0, %v172
  %174 = vmatmul.bf16.gmra.mxu0 %v51
  %v175 = vpop.f32.mrf.mxu0
  %v176 = vadd.f32 0.0, %v175
  %v177 = vpop.f32.mrf.mxu0
  %v178 = vadd.f32 0.0, %v177
  %179 = vmatmul.bf16.gmra.mxu0 %v54
  %v180 = vpop.f32.mrf.mxu0
  %v181 = vadd.f32 0.0, %v180
  %v182 = vpop.f32.mrf.mxu0
  %v183 = vadd.f32 0.0, %v182
  %184 = vmatmul.bf16.gmra.mxu0 %v57
  %v185 = vpop.f32.mrf.mxu0
  %v186 = vadd.f32 0.0, %v185
  %v187 = vpop.f32.mrf.mxu0
  %v188 = vadd.f32 0.0, %v187
  %189 = vmatmul.bf16.gmra.mxu0 %v60
  %v190 = vpop.f32.mrf.mxu0
  %v191 = vadd.f32 0.0, %v190
  %v192 = vpop.f32.mrf.mxu0
  %v193 = vadd.f32 0.0, %v192
  %194 = vmatmul.bf16.gmra.mxu0 %v63
  %v195 = vpop.f32.mrf.mxu0
  %v196 = vadd.f32 0.0, %v195
  %v197 = vpop.f32.mrf.mxu0
  %v198 = vadd.f32 0.0, %v197
  %199 = vmatmul.bf16.gmra.mxu0 %v66
  %v200 = vpop.f32.mrf.mxu0
  %v201 = vadd.f32 0.0, %v200
  %v202 = vpop.f32.mrf.mxu0
  %v203 = vadd.f32 0.0, %v202
  %204 = vmatmul.bf16.gmra.mxu0 %v69
  %v205 = vpop.f32.mrf.mxu0
  %v206 = vadd.f32 0.0, %v205
  %v207 = vpop.f32.mrf.mxu0
  %v208 = vadd.f32 0.0, %v207
  %209 = vdwg.mxu0
  %v210 = vpack.c.bf16 %v171, %v171
  %v211 = vpack.c.bf16 %v173, %v173
  %v212 = vpack.c.bf16 %v176, %v176
  %v213 = vpack.c.bf16 %v178, %v178
  %v214 = vpack.c.bf16 %v181, %v181
  %v215 = vpack.c.bf16 %v183, %v183
  %v216 = vpack.c.bf16 %v186, %v186
  %v217 = vpack.c.bf16 %v188, %v188
  %v218 = vpack.c.bf16 %v191, %v191
  %v219 = vpack.c.bf16 %v193, %v193
  %v220 = vpack.c.bf16 %v196, %v196
  %v221 = vpack.c.bf16 %v198, %v198
  %v222 = vpack.c.bf16 %v201, %v201
  %v223 = vpack.c.bf16 %v203, %v203
  %v224 = vpack.c.bf16 %v206, %v206
  %v225 = vpack.c.bf16 %v208, %v208
  %226 = vst.msk [vmem:[%s5] sm:$0xf] %vm140, %v210
  %227 = vst.msk [vmem:[%s5 + $0x4] sm:$0xf] %vm140, %v211
  %228 = vst.msk [vmem:[%s5 + $0x8] sm:$0xf] %vm140, %v212
  %229 = vst.msk [vmem:[%s5 + $0xc] sm:$0xf] %vm140, %v213
  %230 = vst.msk [vmem:[%s5 + $0x10] sm:$0xf] %vm140, %v214
  %231 = vst.msk [vmem:[%s5 + $0x14] sm:$0xf] %vm140, %v215
  %232 = vst.msk [vmem:[%s5 + $0x18] sm:$0xf] %vm140, %v216
  %233 = vst.msk [vmem:[%s5 + $0x1c] sm:$0xf] %vm140, %v217
  %234 = vst.msk [vmem:[%s5 + $0x20] sm:$0xf] %vm140, %v218
  %235 = vst.msk [vmem:[%s5 + $0x24] sm:$0xf] %vm140, %v219
  %236 = vst.msk [vmem:[%s5 + $0x28] sm:$0xf] %vm140, %v220
  %237 = vst.msk [vmem:[%s5 + $0x2c] sm:$0xf] %vm140, %v221
  %238 = vst.msk [vmem:[%s5 + $0x30] sm:$0xf] %vm140, %v222
  %239 = vst.msk [vmem:[%s5 + $0x34] sm:$0xf] %vm140, %v223
  %240 = vst.msk [vmem:[%s5 + $0x38] sm:$0xf] %vm140, %v224
  %241 = vst.msk [vmem:[%s5 + $0x3c] sm:$0xf] %vm140, %v225
  %v242 = vld [vmem:[%s3] sm:$0xf]
  %v244 = vsel %vm71, %v242, 0
  %246 = vmatpush.bf16.msra.mxu0 0
  %247 = vmatpush.bf16.msra.mxu0 0
  %248 = vmatpush.bf16.msra.mxu0 0
  %249 = vmatpush.bf16.msra.mxu0 0
  %250 = vmatpush.bf16.msra.mxu0 0
  %251 = vmatpush.bf16.msra.mxu0 0
  %252 = vmatpush.bf16.msra.mxu0 0
  %253 = vmatpush.bf16.msra.mxu0 %v244
  %254 = vmatmul.bf16.gmra.mxu0 %v48
  %v255 = vpop.f32.mrf.mxu0
  %v256 = vadd.f32 0.0, %v255
  %v257 = vpop.f32.mrf.mxu0
  %v258 = vadd.f32 0.0, %v257
  %259 = vmatmul.bf16.gmra.mxu0 %v51
  %v260 = vpop.f32.mrf.mxu0
  %v261 = vadd.f32 0.0, %v260
  %v262 = vpop.f32.mrf.mxu0
  %v263 = vadd.f32 0.0, %v262
  %264 = vmatmul.bf16.gmra.mxu0 %v54
  %v265 = vpop.f32.mrf.mxu0
  %v266 = vadd.f32 0.0, %v265
  %v267 = vpop.f32.mrf.mxu0
  %v268 = vadd.f32 0.0, %v267
  %269 = vmatmul.bf16.gmra.mxu0 %v57
  %v270 = vpop.f32.mrf.mxu0
  %v271 = vadd.f32 0.0, %v270
  %v272 = vpop.f32.mrf.mxu0
  %v273 = vadd.f32 0.0, %v272
  %274 = vmatmul.bf16.gmra.mxu0 %v60
  %v275 = vpop.f32.mrf.mxu0
  %v276 = vadd.f32 0.0, %v275
  %v277 = vpop.f32.mrf.mxu0
  %v278 = vadd.f32 0.0, %v277
  %279 = vmatmul.bf16.gmra.mxu0 %v63
  %v280 = vpop.f32.mrf.mxu0
  %v281 = vadd.f32 0.0, %v280
  %v282 = vpop.f32.mrf.mxu0
  %v283 = vadd.f32 0.0, %v282
  %284 = vmatmul.bf16.gmra.mxu0 %v66
  %v285 = vpop.f32.mrf.mxu0
  %v286 = vadd.f32 0.0, %v285
  %v287 = vpop.f32.mrf.mxu0
  %v288 = vadd.f32 0.0, %v287
  %289 = vmatmul.bf16.gmra.mxu0 %v69
  %v290 = vpop.f32.mrf.mxu0
  %v291 = vadd.f32 0.0, %v290
  %v292 = vpop.f32.mrf.mxu0
  %v293 = vadd.f32 0.0, %v292
  %294 = vdwg.mxu0
  %v295 = vpack.c.bf16 %v256, %v256
  %v296 = vpack.c.bf16 %v258, %v258
  %v297 = vpack.c.bf16 %v261, %v261
  %v298 = vpack.c.bf16 %v263, %v263
  %v299 = vpack.c.bf16 %v266, %v266
  %v300 = vpack.c.bf16 %v268, %v268
  %v301 = vpack.c.bf16 %v271, %v271
  %v302 = vpack.c.bf16 %v273, %v273
  %v303 = vpack.c.bf16 %v276, %v276
  %v304 = vpack.c.bf16 %v278, %v278
  %v305 = vpack.c.bf16 %v281, %v281
  %v306 = vpack.c.bf16 %v283, %v283
  %v307 = vpack.c.bf16 %v286, %v286
  %v308 = vpack.c.bf16 %v288, %v288
  %v309 = vpack.c.bf16 %v291, %v291
  %v310 = vpack.c.bf16 %v293, %v293
  %vm311 = vcmask 60416
  %312 = vst.msk [vmem:[%s6] sm:$0xf] %vm311, %v295
  %313 = vst.msk [vmem:[%s6 + $0x4] sm:$0xf] %vm311, %v296
  %314 = vst.msk [vmem:[%s6 + $0x8] sm:$0xf] %vm311, %v297
  %315 = vst.msk [vmem:[%s6 + $0xc] sm:$0xf] %vm311, %v298
  %316 = vst.msk [vmem:[%s6 + $0x10] sm:$0xf] %vm311, %v299
  %317 = vst.msk [vmem:[%s6 + $0x14] sm:$0xf] %vm311, %v300
  %318 = vst.msk [vmem:[%s6 + $0x18] sm:$0xf] %vm311, %v301
  %319 = vst.msk [vmem:[%s6 + $0x1c] sm:$0xf] %vm311, %v302
  %320 = vst.msk [vmem:[%s6 + $0x20] sm:$0xf] %vm311, %v303
  %321 = vst.msk [vmem:[%s6 + $0x24] sm:$0xf] %vm311, %v304
  %322 = vst.msk [vmem:[%s6 + $0x28] sm:$0xf] %vm311, %v305
  %323 = vst.msk [vmem:[%s6 + $0x2c] sm:$0xf] %vm311, %v306
  %324 = vst.msk [vmem:[%s6 + $0x30] sm:$0xf] %vm311, %v307
  %325 = vst.msk [vmem:[%s6 + $0x34] sm:$0xf] %vm311, %v308
  %326 = vst.msk [vmem:[%s6 + $0x38] sm:$0xf] %vm311, %v309
  %327 = vst.msk [vmem:[%s6 + $0x3c] sm:$0xf] %vm311, %v310
  // Predicated region
  $region18: #{bottleneck_ir_sram_forward.12} parent=0 // pred_check
    _
  $region19: #{bottleneck_ir_sram_forward.12} parent=0 // pred_check_branch
    %329 = sbr.rel (0) target = $region21
  $region20: #{bottleneck_ir_sram_forward.12} parent=0 // pred_region
    _
  $region21: #{bottleneck_ir_sram_forward.12} parent=0 // pred_fallthru
    _
  // Predicated region
  $region22: #{bottleneck_ir_sram_forward.12} parent=0 // pred_check
    _
  $region23: #{bottleneck_ir_sram_forward.12} parent=0 // pred_check_branch
    %331 = sbr.rel (0) target = $region25
  $region24: #{bottleneck_ir_sram_forward.12} parent=0 // pred_region
    _
  $region25: #{bottleneck_ir_sram_forward.12} parent=0 // pred_fallthru
    _
  // Predicated region
  $region26: #{bottleneck_ir_sram_forward.12} parent=0 // pred_check
    _
  $region27: #{bottleneck_ir_sram_forward.12} parent=0 // pred_check_branch
    %333 = sbr.rel (0) target = $region29
  $region28: #{bottleneck_ir_sram_forward.12} parent=0 // pred_region
    _
  $region29: #{bottleneck_ir_sram_forward.12} parent=0 // pred_fallthru
    _
  // Predicated region
  $region30: #{bottleneck_ir_sram_forward.12} parent=0 // pred_check
    _
  $region31: #{bottleneck_ir_sram_forward.12} parent=0 // pred_check_branch
    %335 = sbr.rel (0) target = $region33
  $region32: #{bottleneck_ir_sram_forward.12} parent=0 // pred_region
    _
  $region33: #{bottleneck_ir_sram_forward.12} parent=0 // pred_fallthru
    _
  // Predicated region
  $region34: #{bottleneck_ir_sram_forward.12} parent=0 // pred_check
    _
  $region35: #{bottleneck_ir_sram_forward.12} parent=0 // pred_check_branch
    %337 = sbr.rel (0) target = $region37
  $region36: #{bottleneck_ir_sram_forward.12} parent=0 // pred_region
    _
  $region37: #{bottleneck_ir_sram_forward.12} parent=0 // pred_fallthru
    _
  // Predicated region
  $region38: #{bottleneck_ir_sram_forward.12} parent=0 // pred_check
    _
  $region39: #{bottleneck_ir_sram_forward.12} parent=0 // pred_check_branch
    %339 = sbr.rel (0) target = $region41
  $region40: #{bottleneck_ir_sram_forward.12} parent=0 // pred_region
    _
  $region41: #{bottleneck_ir_sram_forward.12} parent=0 // pred_fallthru
    _

// kernel: bottleneck_ir_sram_forward.13
$region0: #{bottleneck_ir_sram_forward.13}
  #allocation0 [shape = 'u32[]', space=smem, size = 0x4, offset = 0x4, fixed_abs, tag = 'smem constant byte address 0x4 - core index']
  #allocation1 [shape = 'u32[72,128]{1,0:T(1,128)}', space=vmem, size = 0x9000, scoped, tag = 'internal scratch']
  %s0 = inlined_call_operand.vmem [shape: bf16[2,64,4], index: 0, kind: input, shape index: {}]
  %s1 = inlined_call_operand.vmem [shape: bf16[2,4,16], index: 1, kind: input, shape index: {}]
  %s2 = inlined_call_operand.vmem [shape: bf16[2,16,8], index: 2, kind: input, shape index: {}]
  %s3 = inlined_call_operand.vmem [shape: f32[2,64,8], index: 3, kind: input, shape index: {}]
  %s4 = inlined_call_operand.vmem [shape: bf16[2,64,4], index: 4, kind: input, shape index: {}]
  %s5 = inlined_call_operand.vmem [shape: bf16[4,8], index: 5, kind: input, shape index: {}]
  %s6 = inlined_call_operand.vmem [shape: f32[1,8], index: 6, kind: input, shape index: {}]
  %s7 = inlined_call_operand.vmem [shape: f32[1,8], index: 7, kind: input, shape index: {}]
  %s8 = inlined_call_operand.vmem [shape: f32[2,64,8], index: 8, kind: output, shape index: {}]
  %s9 = sld [smem:[#allocation0]]
  $region65: #{bottleneck_ir_sram_forward.13} parent=0
    _
  %s11 = ssub.s32 1, %s9
  %s12 = scalar_select 0, %s11, %s9
  loop: start=0, step=1, limit=4
  $region2: #{bottleneck_ir_sram_forward.13} parent=0 // loop_pre_header
    _
  $region3: #{bottleneck_ir_sram_forward.13} parent=0 // loop_header
    %s14 = sphi 0, %s18
    %p15 = scmp.ge.s32.totalorder %s14, 4
    %s21 = sphi 0, %s33
    %s22 = sphi 0, %s29
    %s23 = sphi 0, %s21
    %s24 = sphi 0, %s22
    %s25 = sphi 0, %s23
    %s26 = sphi 0, %s24
    %s38 = sphi 0, %s40
    %s41 = sphi 0, %s38
    %s42 = sphi 0, %s41
    %s58 = sphi 0, %s42
    %s64 = sphi 0, %s66
    %s67 = sphi 0, %s64
    %s68 = sphi 0, %s67
    %s84 = sphi 0, %s68
    %s90 = sphi 0, %s92
    %s93 = sphi 0, %s90
    %s94 = sphi 0, %s93
    %s110 = sphi 0, %s94
    %s118 = sphi 0, %s120
    %s121 = sphi 0, %s118
    %s122 = sphi 0, %s121
    %s138 = sphi 0, %s122
    %s146 = sphi 0, %s148
    %s149 = sphi 0, %s146
    %s150 = sphi 0, %s149
    %s166 = sphi 0, %s150
    %s170 = sphi 0, %s170
    %s172 = sphi 0, %s170
    %s173 = sphi 0, %s172
    %s187 = sphi 0, %s173
    %s191 = sphi 0, %s191
    %s193 = sphi 0, %s191
    %s194 = sphi 0, %s193
    %s208 = sphi 0, %s194
    %s212 = sphi 0, %s212
    %s214 = sphi 0, %s212
    %s215 = sphi 0, %s214
    %s229 = sphi 0, %s215
    %s237 = sphi 0, %s239
    %s240 = sphi 0, %s237
    %s241 = sphi 0, %s240
    %s257 = sphi 0, %s241
  $region4: #{bottleneck_ir_sram_forward.13} parent=0 // loop_header_branch
    %17 = sbr.rel (%p15) target = $region8
  $region5: #{bottleneck_ir_sram_forward.13} parent=0 // loop_body
    %s19 = ssub.s32 %s14, 1
    %s20 = ssub.s32 %s14, 2
    %s27 = sadd.s32 1, %s22
    %p28 = scmp.ge.s32.totalorder %s27, 1
    %s29 = scalar_select %p28, 0, %s27
    %s30 = sadd.s32 1, %s21
    %s31 = scalar_select %p28, %s30, %s21
    %p32 = scmp.ge.s32.totalorder %s31, 2
    %s33 = scalar_select %p32, 0, %s31
    %s34 = ssub.s32 %s21, %s33
    %s35 = ssub.s32 %s22, %s29
    %s36 = sor.u32 %s34, %s35
    %p37 = scmp.eq.s32.totalorder %s36, 0
    %s39 = sadd.s32 %s38, 1
    %s40 = scalar_select %p37, %s38, %s39
    %p43 = pneg %p37
    %p44 = scmp.eq.s32.totalorder %s14, 1
    %p45 = por %p43, %p44
    %p46 = scmp.ne.s32.totalorder %s38, %s41
    %p47 = scmp.eq.s32.totalorder %s14, 0
    %p48 = por %p46, %p47
    %p49 = scmp.ne.s32.totalorder %s38, %s41
    %p50 = scmp.eq.s32.totalorder %s19, 1
    %p51 = por %p49, %p50
    %p52 = scmp.ne.s32.totalorder %s41, %s42
    %p53 = scmp.eq.s32.totalorder %s19, 0
    %p54 = por %p52, %p53
    %p55 = scmp.ne.s32.totalorder %s41, %s42
    %p56 = scmp.eq.s32.totalorder %s20, 1
    %p57 = por %p55, %p56
    %p59 = scmp.ne.s32.totalorder %s42, %s58
    %p60 = scmp.eq.s32.totalorder %s20, 0
    %p61 = por %p59, %p60
    %s62 = ssub.s32 %s21, %s33
    %p63 = scmp.eq.s32.totalorder %s62, 0
    %s65 = sadd.s32 %s64, 1
    %s66 = scalar_select %p63, %s64, %s65
    %p69 = pneg %p63
    %p70 = scmp.eq.s32.totalorder %s14, 1
    %p71 = por %p69, %p70
    %p72 = scmp.ne.s32.totalorder %s64, %s67
    %p73 = scmp.eq.s32.totalorder %s14, 0
    %p74 = por %p72, %p73
    %p75 = scmp.ne.s32.totalorder %s64, %s67
    %p76 = scmp.eq.s32.totalorder %s19, 1
    %p77 = por %p75, %p76
    %p78 = scmp.ne.s32.totalorder %s67, %s68
    %p79 = scmp.eq.s32.totalorder %s19, 0
    %p80 = por %p78, %p79
    %p81 = scmp.ne.s32.totalorder %s67, %s68
    %p82 = scmp.eq.s32.totalorder %s20, 1
    %p83 = por %p81, %p82
    %p85 = scmp.ne.s32.totalorder %s68, %s84
    %p86 = scmp.eq.s32.totalorder %s20, 0
    %p87 = por %p85, %p86
    %s88 = ssub.s32 %s21, %s33
    %p89 = scmp.eq.s32.totalorder %s88, 0
    %s91 = sadd.s32 %s90, 1
    %s92 = scalar_select %p89, %s90, %s91
    %p95 = pneg %p89
    %p96 = scmp.eq.s32.totalorder %s14, 1
    %p97 = por %p95, %p96
    %p98 = scmp.ne.s32.totalorder %s90, %s93
    %p99 = scmp.eq.s32.totalorder %s14, 0
    %p100 = por %p98, %p99
    %p101 = scmp.ne.s32.totalorder %s90, %s93
    %p102 = scmp.eq.s32.totalorder %s19, 1
    %p103 = por %p101, %p102
    %p104 = scmp.ne.s32.totalorder %s93, %s94
    %p105 = scmp.eq.s32.totalorder %s19, 0
    %p106 = por %p104, %p105
    %p107 = scmp.ne.s32.totalorder %s93, %s94
    %p108 = scmp.eq.s32.totalorder %s20, 1
    %p109 = por %p107, %p108
    %p111 = scmp.ne.s32.totalorder %s94, %s110
    %p112 = scmp.eq.s32.totalorder %s20, 0
    %p113 = por %p111, %p112
    %s114 = ssub.s32 %s21, %s33
    %s115 = ssub.s32 %s22, %s29
    %s116 = sor.u32 %s114, %s115
    %p117 = scmp.eq.s32.totalorder %s116, 0
    %s119 = sadd.s32 %s118, 1
    %s120 = scalar_select %p117, %s118, %s119
    %p123 = pneg %p117
    %p124 = scmp.eq.s32.totalorder %s14, 1
    %p125 = por %p123, %p124
    %p126 = scmp.ne.s32.totalorder %s118, %s121
    %p127 = scmp.eq.s32.totalorder %s14, 0
    %p128 = por %p126, %p127
    %p129 = scmp.ne.s32.totalorder %s118, %s121
    %p130 = scmp.eq.s32.totalorder %s19, 1
    %p131 = por %p129, %p130
    %p132 = scmp.ne.s32.totalorder %s121, %s122
    %p133 = scmp.eq.s32.totalorder %s19, 0
    %p134 = por %p132, %p133
    %p135 = scmp.ne.s32.totalorder %s121, %s122
    %p136 = scmp.eq.s32.totalorder %s20, 1
    %p137 = por %p135, %p136
    %p139 = scmp.ne.s32.totalorder %s122, %s138
    %p140 = scmp.eq.s32.totalorder %s20, 0
    %p141 = por %p139, %p140
    %s142 = ssub.s32 %s21, %s33
    %s143 = ssub.s32 %s22, %s29
    %s144 = sor.u32 %s142, %s143
    %p145 = scmp.eq.s32.totalorder %s144, 0
    %s147 = sadd.s32 %s146, 1
    %s148 = scalar_select %p145, %s146, %s147
    %p151 = pneg %p145
    %p152 = scmp.eq.s32.totalorder %s14, 1
    %p153 = por %p151, %p152
    %p154 = scmp.ne.s32.totalorder %s146, %s149
    %p155 = scmp.eq.s32.totalorder %s14, 0
    %p156 = por %p154, %p155
    %p157 = scmp.ne.s32.totalorder %s146, %s149
    %p158 = scmp.eq.s32.totalorder %s19, 1
    %p159 = por %p157, %p158
    %p160 = scmp.ne.s32.totalorder %s149, %s150
    %p161 = scmp.eq.s32.totalorder %s19, 0
    %p162 = por %p160, %p161
    %p163 = scmp.ne.s32.totalorder %s149, %s150
    %p164 = scmp.eq.s32.totalorder %s20, 1
    %p165 = por %p163, %p164
    %p167 = scmp.ne.s32.totalorder %s150, %s166
    %p168 = scmp.eq.s32.totalorder %s20, 0
    %p169 = por %p167, %p168
    %s171 = sadd.s32 %s170, 1
    %p174 = scmp.eq.s32.totalorder %s14, 1
    %p175 = scmp.ne.s32.totalorder %s170, %s172
    %p176 = scmp.eq.s32.totalorder %s14, 0
    %p177 = por %p175, %p176
    %p178 = scmp.ne.s32.totalorder %s170, %s172
    %p179 = scmp.eq.s32.totalorder %s19, 1
    %p180 = por %p178, %p179
    %p181 = scmp.ne.s32.totalorder %s172, %s173
    %p182 = scmp.eq.s32.totalorder %s19, 0
    %p183 = por %p181, %p182
    %p184 = scmp.ne.s32.totalorder %s172, %s173
    %p185 = scmp.eq.s32.totalorder %s20, 1
    %p186 = por %p184, %p185
    %p188 = scmp.ne.s32.totalorder %s173, %s187
    %p189 = scmp.eq.s32.totalorder %s20, 0
    %p190 = por %p188, %p189
    %s192 = sadd.s32 %s191, 1
    %p195 = scmp.eq.s32.totalorder %s14, 1
    %p196 = scmp.ne.s32.totalorder %s191, %s193
    %p197 = scmp.eq.s32.totalorder %s14, 0
    %p198 = por %p196, %p197
    %p199 = scmp.ne.s32.totalorder %s191, %s193
    %p200 = scmp.eq.s32.totalorder %s19, 1
    %p201 = por %p199, %p200
    %p202 = scmp.ne.s32.totalorder %s193, %s194
    %p203 = scmp.eq.s32.totalorder %s19, 0
    %p204 = por %p202, %p203
    %p205 = scmp.ne.s32.totalorder %s193, %s194
    %p206 = scmp.eq.s32.totalorder %s20, 1
    %p207 = por %p205, %p206
    %p209 = scmp.ne.s32.totalorder %s194, %s208
    %p210 = scmp.eq.s32.totalorder %s20, 0
    %p211 = por %p209, %p210
    %s213 = sadd.s32 %s212, 1
    %p216 = scmp.eq.s32.totalorder %s14, 1
    %p217 = scmp.ne.s32.totalorder %s212, %s214
    %p218 = scmp.eq.s32.totalorder %s14, 0
    %p219 = por %p217, %p218
    %p220 = scmp.ne.s32.totalorder %s212, %s214
    %p221 = scmp.eq.s32.totalorder %s19, 1
    %p222 = por %p220, %p221
    %p223 = scmp.ne.s32.totalorder %s214, %s215
    %p224 = scmp.eq.s32.totalorder %s19, 0
    %p225 = por %p223, %p224
    %p226 = scmp.ne.s32.totalorder %s214, %s215
    %p227 = scmp.eq.s32.totalorder %s20, 1
    %p228 = por %p226, %p227
    %p230 = scmp.ne.s32.totalorder %s215, %s229
    %p231 = scmp.eq.s32.totalorder %s20, 0
    %p232 = por %p230, %p231
    %s233 = ssub.s32 %s21, %s33
    %s234 = ssub.s32 %s22, %s29
    %s235 = sor.u32 %s233, %s234
    %p236 = scmp.eq.s32.totalorder %s235, 0
    %s238 = sadd.s32 %s237, 1
    %s239 = scalar_select %p236, %s237, %s238
    %p242 = pneg %p236
    %p243 = scmp.eq.s32.totalorder %s14, 1
    %p244 = por %p242, %p243
    %p245 = scmp.ne.s32.totalorder %s237, %s240
    %p246 = scmp.eq.s32.totalorder %s14, 0
    %p247 = por %p245, %p246
    %p248 = scmp.ne.s32.totalorder %s237, %s240
    %p249 = scmp.eq.s32.totalorder %s19, 1
    %p250 = por %p248, %p249
    %p251 = scmp.ne.s32.totalorder %s240, %s241
    %p252 = scmp.eq.s32.totalorder %s19, 0
    %p253 = por %p251, %p252
    %p254 = scmp.ne.s32.totalorder %s240, %s241
    %p255 = scmp.eq.s32.totalorder %s20, 1
    %p256 = por %p254, %p255
    %p258 = scmp.ne.s32.totalorder %s241, %s257
    %p259 = scmp.eq.s32.totalorder %s20, 0
    %p260 = por %p258, %p259
    %p261 = scmp.le.s32.totalorder 1, %s14
    %p262 = scmp.lt.s32.totalorder %s14, 3
    %p263 = pnand %p261, %p262
    %p264 = pneg %p263
    // Predicated region
    $region9: #{bottleneck_ir_sram_forward.13} parent=5 // pred_check
      _
    $region10: #{bottleneck_ir_sram_forward.13} parent=5 // pred_check_branch
      %266 = sbr.rel (%p263) target = $region12
    $region11: #{bottleneck_ir_sram_forward.13} parent=5 // pred_region
      %s267 = ssub.s32 %s14, 1
      // Predicated region
      $region13: #{bottleneck_ir_sram_forward.13} parent=11 // pred_check
        %p268 = pneg %p183
      $region14: #{bottleneck_ir_sram_forward.13} parent=11 // pred_check_branch
        %270 = sbr.rel (%p268) target = $region16
      $region15: #{bottleneck_ir_sram_forward.13} parent=11 // pred_region
        _
      $region16: #{bottleneck_ir_sram_forward.13} parent=11 // pred_fallthru
        _
      // Predicated region
      $region17: #{bottleneck_ir_sram_forward.13} parent=11 // pred_check
        %p271 = pneg %p204
      $region18: #{bottleneck_ir_sram_forward.13} parent=11 // pred_check_branch
        %273 = sbr.rel (%p271) target = $region20
      $region19: #{bottleneck_ir_sram_forward.13} parent=11 // pred_region
        _
      $region20: #{bottleneck_ir_sram_forward.13} parent=11 // pred_fallthru
        _
      // Predicated region
      $region21: #{bottleneck_ir_sram_forward.13} parent=11 // pred_check
        %p274 = pneg %p225
      $region22: #{bottleneck_ir_sram_forward.13} parent=11 // pred_check_branch
        %276 = sbr.rel (%p274) target = $region24
      $region23: #{bottleneck_ir_sram_forward.13} parent=11 // pred_region
        _
      $region24: #{bottleneck_ir_sram_forward.13} parent=11 // pred_fallthru
        _
    $region12: #{bottleneck_ir_sram_forward.13} parent=5 // pred_fallthru
      _
    %p277 = scmp.lt.s32.totalorder %s14, 2
    // Predicated region
    $region25: #{bottleneck_ir_sram_forward.13} parent=5 // pred_check
      %p278 = pneg %p277
    $region26: #{bottleneck_ir_sram_forward.13} parent=5 // pred_check_branch
      %280 = sbr.rel (%p278) target = $region28
    $region27: #{bottleneck_ir_sram_forward.13} parent=5 // pred_region
      // Predicated region
      $region29: #{bottleneck_ir_sram_forward.13} parent=27 // pred_check
        %p281 = pneg %p48
      $region30: #{bottleneck_ir_sram_forward.13} parent=27 // pred_check_branch
        %283 = sbr.rel (%p281) target = $region32
      $region31: #{bottleneck_ir_sram_forward.13} parent=27 // pred_region
        %s284 = smul.u32 8, %s22
        %p285 = scmp.lt.s32.totalorder %s21, 1
        %s286 = scalar_select %p285, %s21, 1
        %p287 = scmp.lt.s32.totalorder %s284, 7
        %s288 = scalar_select %p287, %s284, 7
        %s289 = smul.addr %s286, 8
        %s290 = sadd.s32 %s288, %s289
        %s291 = smul.addr %s290, 4
        %s292 = scalar_lea.vmem %s0, %s291
        %s293 = smul.u32 8, %s22
      $region32: #{bottleneck_ir_sram_forward.13} parent=27 // pred_fallthru
        _
      // Predicated region
      $region33: #{bottleneck_ir_sram_forward.13} parent=27 // pred_check
        %p294 = pneg %p74
      $region34: #{bottleneck_ir_sram_forward.13} parent=27 // pred_check_branch
        %296 = sbr.rel (%p294) target = $region36
      $region35: #{bottleneck_ir_sram_forward.13} parent=27 // pred_region
        %p297 = scmp.lt.s32.totalorder %s21, 1
        %s298 = scalar_select %p297, %s21, 1
        %s299 = smul.addr %s298, 2
        %s300 = scalar_lea.vmem %s1, %s299
      $region36: #{bottleneck_ir_sram_forward.13} parent=27 // pred_fallthru
        _
      // Predicated region
      $region37: #{bottleneck_ir_sram_forward.13} parent=27 // pred_check
        %p301 = pneg %p100
      $region38: #{bottleneck_ir_sram_forward.13} parent=27 // pred_check_branch
        %303 = sbr.rel (%p301) target = $region40
      $region39: #{bottleneck_ir_sram_forward.13} parent=27 // pred_region
        %p304 = scmp.lt.s32.totalorder %s21, 1
        %s305 = scalar_select %p304, %s21, 1
        %s306 = smul.addr %s305, 2
        %s307 = smul.addr %s306, 4
        %s308 = scalar_lea.vmem %s2, %s307
      $region40: #{bottleneck_ir_sram_forward.13} parent=27 // pred_fallthru
        _
      // Predicated region
      $region41: #{bottleneck_ir_sram_forward.13} parent=27 // pred_check
        %p309 = pneg %p128
      $region42: #{bottleneck_ir_sram_forward.13} parent=27 // pred_check_branch
        %311 = sbr.rel (%p309) target = $region44
      $region43: #{bottleneck_ir_sram_forward.13} parent=27 // pred_region
        %s312 = smul.u32 8, %s22
        %p313 = scmp.lt.s32.totalorder %s21, 1
        %s314 = scalar_select %p313, %s21, 1
        %p315 = scmp.lt.s32.totalorder %s312, 7
        %s316 = scalar_select %p315, %s312, 7
        %s317 = smul.addr %s314, 8
        %s318 = sadd.s32 %s316, %s317
        %s319 = smul.addr %s318, 8
        %s320 = scalar_lea.vmem %s3, %s319
        %s321 = smul.u32 8, %s22
      $region44: #{bottleneck_ir_sram_forward.13} parent=27 // pred_fallthru
        _
      // Predicated region
      $region45: #{bottleneck_ir_sram_forward.13} parent=27 // pred_check
        %p322 = pneg %p156
      $region46: #{bottleneck_ir_sram_forward.13} parent=27 // pred_check_branch
        %324 = sbr.rel (%p322) target = $region48
      $region47: #{bottleneck_ir_sram_forward.13} parent=27 // pred_region
        %s325 = smul.u32 8, %s22
        %p326 = scmp.lt.s32.totalorder %s21, 1
        %s327 = scalar_select %p326, %s21, 1
        %p328 = scmp.lt.s32.totalorder %s325, 7
        %s329 = scalar_select %p328, %s325, 7
        %s330 = smul.addr %s327, 8
        %s331 = sadd.s32 %s329, %s330
        %s332 = smul.addr %s331, 4
        %s333 = scalar_lea.vmem %s4, %s332
        %s334 = smul.u32 8, %s22
      $region48: #{bottleneck_ir_sram_forward.13} parent=27 // pred_fallthru
        _
    $region28: #{bottleneck_ir_sram_forward.13} parent=5 // pred_fallthru
      _
    %p335 = scmp.le.s32.totalorder 1, %s14
    %p336 = scmp.lt.s32.totalorder %s14, 3
    %p337 = pnand %p335, %p336
    %p338 = pneg %p337
    // Predicated region
    $region49: #{bottleneck_ir_sram_forward.13} parent=5 // pred_check
      _
    $region50: #{bottleneck_ir_sram_forward.13} parent=5 // pred_check_branch
      %340 = sbr.rel (%p337) target = $region52
    $region51: #{bottleneck_ir_sram_forward.13} parent=5 // pred_region
      %s341 = ssub.s32 %s14, 1
      %s342 = smul.u32 8, %s24
      %p343 = scmp.lt.s32.totalorder %s23, 1
      %s344 = scalar_select %p343, %s23, 1
      %p345 = scmp.lt.s32.totalorder %s342, 7
      %s346 = scalar_select %p345, %s342, 7
      %s347 = smul.addr %s344, 8
      %s348 = sadd.s32 %s346, %s347
      %s349 = smul.addr %s348, 4
      %s350 = scalar_lea.vmem %s0, %s349
      %p351 = pneg %p54
      %p352 = pneg %p51
      %p353 = scmp.lt.s32.totalorder %s23, 1
      %s354 = scalar_select %p353, %s23, 1
      %s355 = smul.addr %s354, 2
      %s356 = scalar_lea.vmem %s1, %s355
      %p357 = pneg %p80
      %p358 = pneg %p77
      %p359 = scmp.lt.s32.totalorder %s23, 1
      %s360 = scalar_select %p359, %s23, 1
      %s361 = smul.addr %s360, 2
      %s362 = smul.addr %s361, 4
      %s363 = scalar_lea.vmem %s2, %s362
      %p364 = pneg %p106
      %p365 = pneg %p103
      %s366 = smul.u32 8, %s24
      %p367 = scmp.lt.s32.totalorder %s23, 1
      %s368 = scalar_select %p367, %s23, 1
      %p369 = scmp.lt.s32.totalorder %s366, 7
      %s370 = scalar_select %p369, %s366, 7
      %s371 = smul.addr %s368, 8
      %s372 = sadd.s32 %s370, %s371
      %s373 = smul.addr %s372, 8
      %s374 = scalar_lea.vmem %s3, %s373
      %p375 = pneg %p134
      %p376 = pneg %p131
      %s377 = smul.u32 8, %s24
      %p378 = scmp.lt.s32.totalorder %s23, 1
      %s379 = scalar_select %p378, %s23, 1
      %p380 = scmp.lt.s32.totalorder %s377, 7
      %s381 = scalar_select %p380, %s377, 7
      %s382 = smul.addr %s379, 8
      %s383 = sadd.s32 %s381, %s382
      %s384 = smul.addr %s383, 4
      %s385 = scalar_lea.vmem %s4, %s384
      %p386 = pneg %p162
      %p387 = pneg %p159
      %p388 = pneg %p183
      %p389 = pneg %p180
      %p390 = pneg %p204
      %p391 = pneg %p201
      %p392 = pneg %p225
      %p393 = pneg %p222
      %p394 = pneg %p253
      %p395 = pneg %p250
      %s396 = smul.u32 8, %s24
      %p397 = scmp.lt.s32.totalorder %s23, 1
      %s398 = scalar_select %p397, %s23, 1
      %p399 = scmp.lt.s32.totalorder %s396, 7
      %s400 = scalar_select %p399, %s396, 7
      %s401 = smul.addr %s398, 8
      %s402 = sadd.s32 %s400, %s401
      %s403 = smul.addr %s402, 8
      %s404 = scalar_lea.vmem %s8, %s403
      %s405 = smul.u32 8, %s24
      %p406 = scmp.lt.s32.totalorder %s23, 1
      %s407 = scalar_select %p406, %s23, 1
      %p408 = scmp.lt.s32.totalorder %s405, 7
      %s409 = scalar_select %p408, %s405, 7
      %s410 = smul.addr %s407, 8
      %s411 = sadd.s32 %s409, %s410
      %s412 = smul.addr %s411, 4
      %s413 = scalar_lea.vmem %s0, %s412
      %s414 = smul.u32 8, %s24
      %p415 = scmp.lt.s32.totalorder %s23, 1
      %s416 = scalar_select %p415, %s23, 1
      %s417 = smul.addr %s416, 2
      %s418 = scalar_lea.vmem %s1, %s417
      %p419 = scmp.lt.s32.totalorder %s23, 1
      %s420 = scalar_select %p419, %s23, 1
      %s421 = smul.addr %s420, 2
      %s422 = smul.addr %s421, 4
      %s423 = scalar_lea.vmem %s2, %s422
      %s424 = smul.u32 8, %s24
      %p425 = scmp.lt.s32.totalorder %s23, 1
      %s426 = scalar_select %p425, %s23, 1
      %p427 = scmp.lt.s32.totalorder %s424, 7
      %s428 = scalar_select %p427, %s424, 7
      %s429 = smul.addr %s426, 8
      %s430 = sadd.s32 %s428, %s429
      %s431 = smul.addr %s430, 8
      %s432 = scalar_lea.vmem %s3, %s431
      %s433 = smul.u32 8, %s24
      %s434 = smul.u32 8, %s24
      %p435 = scmp.lt.s32.totalorder %s23, 1
      %s436 = scalar_select %p435, %s23, 1
      %p437 = scmp.lt.s32.totalorder %s434, 7
      %s438 = scalar_select %p437, %s434, 7
      %s439 = smul.addr %s436, 8
      %s440 = sadd.s32 %s438, %s439
      %s441 = smul.addr %s440, 4
      %s442 = scalar_lea.vmem %s4, %s441
      %s443 = smul.u32 8, %s24
      %s444 = smul.u32 8, %s24
      %p445 = scmp.lt.s32.totalorder %s23, 1
      %s446 = scalar_select %p445, %s23, 1
      %p447 = scmp.lt.s32.totalorder %s444, 7
      %s448 = scalar_select %p447, %s444, 7
      %s449 = smul.addr %s446, 8
      %s450 = sadd.s32 %s448, %s449
      %s451 = smul.addr %s450, 8
      %s452 = scalar_lea.vmem %s8, %s451
      %s453 = smul.u32 8, %s24
      %v455 = vld [vmem:[%s413] sm:$0xf]
      %v456 = vld [vmem:[%s413 + $0x4] sm:$0xf]
      %v457 = vld [vmem:[%s413 + $0x8] sm:$0xf]
      %v458 = vld [vmem:[%s413 + $0xc] sm:$0xf]
      %v459 = vld [vmem:[%s413 + $0x10] sm:$0xf]
      %v460 = vld [vmem:[%s413 + $0x14] sm:$0xf]
      %v461 = vld [vmem:[%s413 + $0x18] sm:$0xf]
      %v462 = vld [vmem:[%s413 + $0x1c] sm:$0xf]
      %v463 = vld [vmem:[%s418] sm:$0x3]
      %v472 = vunpack.c.l.b16 %v455
      %v473 = vunpack.c.l.b16 %v456
      %v474 = vunpack.c.l.b16 %v457
      %v475 = vunpack.c.l.b16 %v458
      %v476 = vunpack.c.l.b16 %v459
      %v477 = vunpack.c.l.b16 %v460
      %v478 = vunpack.c.l.b16 %v461
      %v479 = vunpack.c.l.b16 %v462
      %v480 = vpack.c.b16 %v473, %v472
      %v481 = vpack.c.b16 %v475, %v474
      %v482 = vpack.c.b16 %v477, %v476
      %v483 = vpack.c.b16 %v479, %v478
      %vm484 = vcmask 31744
      %v486 = vsel %vm484, %v480, 0
      %v489 = vsel %vm484, %v481, 0
      %v492 = vsel %vm484, %v482, 0
      %v495 = vsel %vm484, %v483, 0
      %vm497 = vcmask 1041408
      %v499 = vsel %vm497, %v463, 0
      %501 = vmatpush.bf16.msra.mxu0 0
      %502 = vmatpush.bf16.msra.mxu0 0
      %503 = vmatpush.bf16.msra.mxu0 0
      %504 = vmatpush.bf16.msra.mxu0 0
      %505 = vmatpush.bf16.msra.mxu0 0
      %506 = vmatpush.bf16.msra.mxu0 0
      %507 = vmatpush.bf16.msra.mxu0 0
      %508 = vmatpush.bf16.msra.mxu0 %v499
      %509 = vmatmul.bf16.gmra.mxu0 %v486
      %v510 = vpop.f32.mrf.mxu0
      %v511 = vadd.f32 0.0, %v510
      %v512 = vpop.f32.mrf.mxu0
      %v513 = vadd.f32 0.0, %v512
      %514 = vmatmul.bf16.gmra.mxu0 %v489
      %v515 = vpop.f32.mrf.mxu0
      %v516 = vadd.f32 0.0, %v515
      %v517 = vpop.f32.mrf.mxu0
      %v518 = vadd.f32 0.0, %v517
      %519 = vmatmul.bf16.gmra.mxu0 %v492
      %v520 = vpop.f32.mrf.mxu0
      %v521 = vadd.f32 0.0, %v520
      %v522 = vpop.f32.mrf.mxu0
      %v523 = vadd.f32 0.0, %v522
      %524 = vmatmul.bf16.gmra.mxu0 %v495
      %v525 = vpop.f32.mrf.mxu0
      %v526 = vadd.f32 0.0, %v525
      %v527 = vpop.f32.mrf.mxu0
      %v528 = vadd.f32 0.0, %v527
      %529 = vdwg.mxu0
      %vm530 = vcmask 130048
      %v531 = vsel %vm530, %v511, -inf
      %532 = vmax.xlane.f32.xlu0 %v531
      %v533 = vpop.xlane.xlu0 %532
      %v534 = vsel %vm530, %v513, -inf
      %535 = vmax.xlane.f32.xlu0 %v534
      %v536 = vpop.xlane.xlu0 %535
      %v537 = vsel %vm530, %v516, -inf
      %538 = vmax.xlane.f32.xlu0 %v537
      %v539 = vpop.xlane.xlu0 %538
      %v540 = vsel %vm530, %v518, -inf
      %541 = vmax.xlane.f32.xlu0 %v540
      %v542 = vpop.xlane.xlu0 %541
      %v543 = vsel %vm530, %v521, -inf
      %544 = vmax.xlane.f32.xlu0 %v543
      %v545 = vpop.xlane.xlu0 %544
      %v546 = vsel %vm530, %v523, -inf
      %547 = vmax.xlane.f32.xlu0 %v546
      %v548 = vpop.xlane.xlu0 %547
      %v549 = vsel %vm530, %v526, -inf
      %550 = vmax.xlane.f32.xlu0 %v549
      %v551 = vpop.xlane.xlu0 %550
      %v552 = vsel %vm530, %v528, -inf
      %553 = vmax.xlane.f32.xlu0 %v552
      %v554 = vpop.xlane.xlu0 %553
      %v555 = vsub.f32 %v511, %v533
      %v556 = vsub.f32 %v513, %v536
      %v557 = vsub.f32 %v516, %v539
      %v558 = vsub.f32 %v518, %v542
      %v559 = vsub.f32 %v521, %v545
      %v560 = vsub.f32 %v523, %v548
      %v561 = vsub.f32 %v526, %v551
      %v562 = vsub.f32 %v528, %v554
      %v563 = vmul.f32 %v555, 1.442695
      %v564 = vpow.pop %v563
      %v565 = vmul.f32 %v556, 1.442695
      %v566 = vpow.pop %v565
      %v567 = vmul.f32 %v557, 1.442695
      %v568 = vpow.pop %v567
      %v569 = vmul.f32 %v558, 1.442695
      %v570 = vpow.pop %v569
      %v571 = vmul.f32 %v559, 1.442695
      %v572 = vpow.pop %v571
      %v573 = vmul.f32 %v560, 1.442695
      %v574 = vpow.pop %v573
      %v575 = vmul.f32 %v561, 1.442695
      %v576 = vpow.pop %v575
      %v577 = vmul.f32 %v562, 1.442695
      %v578 = vpow.pop %v577
      %v579 = vsel %vm530, %v564, 0.0
      %580 = vadd.xlane.f32.xlu0 %v579
      %v581 = vpop.xlane.xlu0 %580
      %v582 = vsel %vm530, %v566, 0.0
      %583 = vadd.xlane.f32.xlu0 %v582
      %v584 = vpop.xlane.xlu0 %583
      %v585 = vsel %vm530, %v568, 0.0
      %586 = vadd.xlane.f32.xlu0 %v585
      %v587 = vpop.xlane.xlu0 %586
      %v588 = vsel %vm530, %v570, 0.0
      %589 = vadd.xlane.f32.xlu0 %v588
      %v590 = vpop.xlane.xlu0 %589
      %v591 = vsel %vm530, %v572, 0.0
      %592 = vadd.xlane.f32.xlu0 %v591
      %v593 = vpop.xlane.xlu0 %592
      %v594 = vsel %vm530, %v574, 0.0
      %595 = vadd.xlane.f32.xlu0 %v594
      %v596 = vpop.xlane.xlu0 %595
      %v597 = vsel %vm530, %v576, 0.0
      %598 = vadd.xlane.f32.xlu0 %v597
      %v599 = vpop.xlane.xlu0 %598
      %v600 = vsel %vm530, %v578, 0.0
      %601 = vadd.xlane.f32.xlu0 %v600
      %v602 = vpop.xlane.xlu0 %601
      %v603 = vrcp.pop %v581
      %v604 = vrcp.pop %v584
      %v605 = vrcp.pop %v587
      %v606 = vrcp.pop %v590
      %v607 = vrcp.pop %v593
      %v608 = vrcp.pop %v596
      %v609 = vrcp.pop %v599
      %v610 = vrcp.pop %v602
      %v611 = vmul.f32 %v564, %v603
      %v612 = vmul.f32 %v566, %v604
      %v613 = vmul.f32 %v568, %v605
      %v614 = vmul.f32 %v570, %v606
      %v615 = vmul.f32 %v572, %v607
      %v616 = vmul.f32 %v574, %v608
      %v617 = vmul.f32 %v576, %v609
      %v618 = vmul.f32 %v578, %v610
      %v619 = vpack.c.bf16 %v612, %v611
      %v620 = vpack.c.bf16 %v614, %v613
      %v621 = vpack.c.bf16 %v616, %v615
      %v622 = vpack.c.bf16 %v618, %v617
      %v623 = vld [vmem:[%s423] sm:$0xf]
      %v624 = vld [vmem:[%s423 + $0x4] sm:$0xf]
      %v625 = vld [vmem:[%s442] sm:$0xf]
      %v626 = vld [vmem:[%s442 + $0x4] sm:$0xf]
      %v627 = vld [vmem:[%s442 + $0x8] sm:$0xf]
      %v628 = vld [vmem:[%s442 + $0xc] sm:$0xf]
      %v629 = vld [vmem:[%s442 + $0x10] sm:$0xf]
      %v630 = vld [vmem:[%s442 + $0x14] sm:$0xf]
      %v631 = vld [vmem:[%s442 + $0x18] sm:$0xf]
      %v632 = vld [vmem:[%s442 + $0x1c] sm:$0xf]
      %v633 = vld [vmem:[%s5] sm:$0x3]
      %v642 = vunpack.c.l.b16 %v625
      %v643 = vunpack.c.l.b16 %v626
      %v644 = vunpack.c.l.b16 %v627
      %v645 = vunpack.c.l.b16 %v628
      %v646 = vunpack.c.l.b16 %v629
      %v647 = vunpack.c.l.b16 %v630
      %v648 = vunpack.c.l.b16 %v631
      %v649 = vunpack.c.l.b16 %v632
      %v650 = vpack.c.b16 %v643, %v642
      %v651 = vpack.c.b16 %v645, %v644
      %v652 = vpack.c.b16 %v647, %v646
      %v653 = vpack.c.b16 %v649, %v648
      %v655 = vsel %vm484, %v650, 0
      %v658 = vsel %vm484, %v651, 0
      %v661 = vsel %vm484, %v652, 0
      %v664 = vsel %vm484, %v653, 0
      %v667 = vsel %vm497, %v633, 0
      %669 = vmatpush.bf16.msra.mxu0 0
      %670 = vmatpush.bf16.msra.mxu0 0
      %671 = vmatpush.bf16.msra.mxu0 0
      %672 = vmatpush.bf16.msra.mxu0 0
      %673 = vmatpush.bf16.msra.mxu0 0
      %674 = vmatpush.bf16.msra.mxu0 0
      %675 = vmatpush.bf16.msra.mxu0 0
      %676 = vmatpush.bf16.msra.mxu0 %v667
      %677 = vmatmul.bf16.gmra.mxu0 %v655
      %v678 = vpop.f32.mrf.mxu0
      %v679 = vadd.f32 0.0, %v678
      %v680 = vpop.f32.mrf.mxu0
      %v681 = vadd.f32 0.0, %v680
      %682 = vmatmul.bf16.gmra.mxu0 %v658
      %v683 = vpop.f32.mrf.mxu0
      %v684 = vadd.f32 0.0, %v683
      %v685 = vpop.f32.mrf.mxu0
      %v686 = vadd.f32 0.0, %v685
      %687 = vmatmul.bf16.gmra.mxu0 %v661
      %v688 = vpop.f32.mrf.mxu0
      %v689 = vadd.f32 0.0, %v688
      %v690 = vpop.f32.mrf.mxu0
      %v691 = vadd.f32 0.0, %v690
      %692 = vmatmul.bf16.gmra.mxu0 %v664
      %v693 = vpop.f32.mrf.mxu0
      %v694 = vadd.f32 0.0, %v693
      %v695 = vpop.f32.mrf.mxu0
      %v696 = vadd.f32 0.0, %v695
      %697 = vdwg.mxu0
      %v698 = vld [vmem:[%s6] sm:$0x1]
      %v700 = vperm.slane %v698, 0
      %v702 = vmul.f32 %v679, %v700
      %v703 = vmul.f32 %v681, %v700
      %v704 = vmul.f32 %v684, %v700
      %v705 = vmul.f32 %v686, %v700
      %v706 = vmul.f32 %v689, %v700
      %v707 = vmul.f32 %v691, %v700
      %v708 = vmul.f32 %v694, %v700
      %v709 = vmul.f32 %v696, %v700
      %v710 = vld [vmem:[%s7] sm:$0x1]
      %v712 = vperm.slane %v710, 0
      %v714 = vadd.f32 %v702, %v712
      %v715 = vadd.f32 %v703, %v712
      %v716 = vadd.f32 %v704, %v712
      %v717 = vadd.f32 %v705, %v712
      %v718 = vadd.f32 %v706, %v712
      %v719 = vadd.f32 %v707, %v712
      %v720 = vadd.f32 %v708, %v712
      %v721 = vadd.f32 %v709, %v712
      %v722 = vld [vmem:[%s432] sm:$0xff]
      %v723 = vld [vmem:[%s432 + $0x8] sm:$0xff]
      %v724 = vld [vmem:[%s432 + $0x10] sm:$0xff]
      %v725 = vld [vmem:[%s432 + $0x18] sm:$0xff]
      %v726 = vld [vmem:[%s432 + $0x20] sm:$0xff]
      %v727 = vld [vmem:[%s432 + $0x28] sm:$0xff]
      %v728 = vld [vmem:[%s432 + $0x30] sm:$0xff]
      %v729 = vld [vmem:[%s432 + $0x38] sm:$0xff]
      %v732 = vunpack.c.l.b16 %v623
      %v733 = vunpack.c.l.b16 %v624
      %v734 = vpack.c.b16 %v733, %v732
      %v737 = vsel %vm530, %v619, 0
      %v740 = vsel %vm530, %v620, 0
      %v743 = vsel %vm530, %v621, 0
      %v746 = vsel %vm530, %v622, 0
      %748 = vmatpush.bf16.msra.mxu0 0
      %749 = vmatpush.bf16.msra.mxu0 0
      %750 = vmatpush.bf16.msra.mxu0 0
      %751 = vmatpush.bf16.msra.mxu0 0
      %752 = vmatpush.bf16.msra.mxu0 0
      %753 = vmatpush.bf16.msra.mxu0 0
      %754 = vmatpush.bf16.msra.mxu0 0
      %755 = vmatpush.bf16.msra.mxu0 %v734
      %756 = vmatmul.bf16.gmra.mxu0 %v737
      %v757 = vpop.f32.mrf.mxu0
      %v758 = vadd.f32 %v722, %v757
      %v759 = vpop.f32.mrf.mxu0
      %v760 = vadd.f32 %v723, %v759
      %761 = vmatmul.bf16.gmra.mxu0 %v740
      %v762 = vpop.f32.mrf.mxu0
      %v763 = vadd.f32 %v724, %v762
      %v764 = vpop.f32.mrf.mxu0
      %v765 = vadd.f32 %v725, %v764
      %766 = vmatmul.bf16.gmra.mxu0 %v743
      %v767 = vpop.f32.mrf.mxu0
      %v768 = vadd.f32 %v726, %v767
      %v769 = vpop.f32.mrf.mxu0
      %v770 = vadd.f32 %v727, %v769
      %771 = vmatmul.bf16.gmra.mxu0 %v746
      %v772 = vpop.f32.mrf.mxu0
      %v773 = vadd.f32 %v728, %v772
      %v774 = vpop.f32.mrf.mxu0
      %v775 = vadd.f32 %v729, %v774
      %776 = vdwg.mxu0
      %v777 = vadd.f32 %v758, %v714
      %v778 = vadd.f32 %v760, %v715
      %v779 = vadd.f32 %v763, %v716
      %v780 = vadd.f32 %v765, %v717
      %v781 = vadd.f32 %v768, %v718
      %v782 = vadd.f32 %v770, %v719
      %v783 = vadd.f32 %v773, %v720
      %v784 = vadd.f32 %v775, %v721
      %vm785 = vcmask 64512
      %786 = vst.msk [vmem:[%s452] sm:$0xff] %vm785, %v777
      %787 = vst.msk [vmem:[%s452 + $0x8] sm:$0xff] %vm785, %v778
      %788 = vst.msk [vmem:[%s452 + $0x10] sm:$0xff] %vm785, %v779
      %789 = vst.msk [vmem:[%s452 + $0x18] sm:$0xff] %vm785, %v780
      %790 = vst.msk [vmem:[%s452 + $0x20] sm:$0xff] %vm785, %v781
      %791 = vst.msk [vmem:[%s452 + $0x28] sm:$0xff] %vm785, %v782
      %792 = vst.msk [vmem:[%s452 + $0x30] sm:$0xff] %vm785, %v783
      %793 = vst.msk [vmem:[%s452 + $0x38] sm:$0xff] %vm785, %v784
      %s794 = smul.u32 8, %s24
      %p795 = scmp.lt.s32.totalorder %s23, 1
      %s796 = scalar_select %p795, %s23, 1
      %p797 = scmp.lt.s32.totalorder %s794, 7
      %s798 = scalar_select %p797, %s794, 7
      %s799 = smul.addr %s796, 8
      %s800 = sadd.s32 %s798, %s799
      %s801 = smul.addr %s800, 8
      %s802 = scalar_lea.vmem %s8, %s801
      // Predicated region
      $region53: #{bottleneck_ir_sram_forward.13} parent=51 // pred_check
        %p803 = pneg %p250
      $region54: #{bottleneck_ir_sram_forward.13} parent=51 // pred_check_branch
        %805 = sbr.rel (%p803) target = $region56
      $region55: #{bottleneck_ir_sram_forward.13} parent=51 // pred_region
        %s806 = smul.u32 8, %s24
      $region56: #{bottleneck_ir_sram_forward.13} parent=51 // pred_fallthru
        _
    $region52: #{bottleneck_ir_sram_forward.13} parent=5 // pred_fallthru
      _
    %p807 = scmp.le.s32.totalorder 2, %s14
    // Predicated region
    $region57: #{bottleneck_ir_sram_forward.13} parent=5 // pred_check
      %p808 = pneg %p807
    $region58: #{bottleneck_ir_sram_forward.13} parent=5 // pred_check_branch
      %810 = sbr.rel (%p808) target = $region60
    $region59: #{bottleneck_ir_sram_forward.13} parent=5 // pred_region
      %s811 = ssub.s32 %s14, 2
      // Predicated region
      $region61: #{bottleneck_ir_sram_forward.13} parent=59 // pred_check
        %p812 = pneg %p256
      $region62: #{bottleneck_ir_sram_forward.13} parent=59 // pred_check_branch
        %814 = sbr.rel (%p812) target = $region64
      $region63: #{bottleneck_ir_sram_forward.13} parent=59 // pred_region
        %s815 = smul.u32 8, %s26
        %p816 = scmp.lt.s32.totalorder %s25, 1
        %s817 = scalar_select %p816, %s25, 1
        %p818 = scmp.lt.s32.totalorder %s815, 7
        %s819 = scalar_select %p818, %s815, 7
        %s820 = smul.addr %s817, 8
        %s821 = sadd.s32 %s819, %s820
        %s822 = smul.addr %s821, 8
        %s823 = scalar_lea.vmem %s8, %s822
      $region64: #{bottleneck_ir_sram_forward.13} parent=59 // pred_fallthru
        _
    $region60: #{bottleneck_ir_sram_forward.13} parent=5 // pred_fallthru
      _
  $region6: #{bottleneck_ir_sram_forward.13} parent=0 // loop_footer
    %s18 = sadd.s32 1, %s14
  $region7: #{bottleneck_ir_sram_forward.13} parent=0 // loop_footer_branch
    %13 = sbr.rel target = $region3
  $region8: #{bottleneck_ir_sram_forward.13} parent=0 // loop_exit
    _

// kernel: bottleneck_ir_sram_forward.7
$region0: #{bottleneck_ir_sram_forward.7}
  #allocation0 [shape = 'u32[]', space=smem, size = 0x4, offset = 0x4, fixed_abs, tag = 'smem constant byte address 0x4 - core index']
  #allocation1 [shape = 'u32[72,128]{1,0:T(1,128)}', space=vmem, size = 0x9000, scoped, tag = 'internal scratch']
  #allocation2 [shape = 'bf16[256,36]{1,0:T(8,128)(2,1)}', space=vmem, size = 0x10000, scoped, tag = 'scratch operand']
  %s0 = inlined_call_operand.vmem [shape: bf16[2,1,18,18,4], index: 0, kind: input, shape index: {}]
  %s1 = inlined_call_operand.vmem [shape: bf16[36,8], index: 1, kind: input, shape index: {}]
  %s2 = inlined_call_operand.vmem [shape: f32[1,8], index: 2, kind: input, shape index: {}]
  %s3 = inlined_call_operand.vmem [shape: f32[1,8], index: 3, kind: input, shape index: {}]
  %s4 = inlined_call_operand.vmem [shape: f32[1,8], index: 4, kind: input, shape index: {}]
  %s5 = inlined_call_operand.vmem [shape: bf16[2,256,8], index: 5, kind: output, shape index: {}]
  %s6 = sld [smem:[#allocation0]]
  $region53: #{bottleneck_ir_sram_forward.7} parent=0
    _
  %s8 = ssub.s32 1, %s6
  %s9 = scalar_select 0, %s8, %s6
  loop: start=0, step=1, limit=4
  $region2: #{bottleneck_ir_sram_forward.7} parent=0 // loop_pre_header
    _
  $region3: #{bottleneck_ir_sram_forward.7} parent=0 // loop_header
    %s11 = sphi 0, %s15
    %p12 = scmp.ge.s32.totalorder %s11, 4
    %s18 = sphi 0, %s30
    %s19 = sphi 0, %s26
    %s20 = sphi 0, %s18
    %s21 = sphi 0, %s19
    %s22 = sphi 0, %s20
    %s23 = sphi 0, %s21
    %s35 = sphi 0, %s37
    %s38 = sphi 0, %s35
    %s39 = sphi 0, %s38
    %s55 = sphi 0, %s39
    %s59 = sphi 0, %s59
    %s61 = sphi 0, %s59
    %s62 = sphi 0, %s61
    %s76 = sphi 0, %s62
    %s80 = sphi 0, %s80
    %s82 = sphi 0, %s80
    %s83 = sphi 0, %s82
    %s97 = sphi 0, %s83
    %s101 = sphi 0, %s101
    %s103 = sphi 0, %s101
    %s104 = sphi 0, %s103
    %s118 = sphi 0, %s104
    %s122 = sphi 0, %s122
    %s124 = sphi 0, %s122
    %s125 = sphi 0, %s124
    %s139 = sphi 0, %s125
    %s147 = sphi 0, %s149
    %s150 = sphi 0, %s147
    %s151 = sphi 0, %s150
    %s167 = sphi 0, %s151
  $region4: #{bottleneck_ir_sram_forward.7} parent=0 // loop_header_branch
    %14 = sbr.rel (%p12) target = $region8
  $region5: #{bottleneck_ir_sram_forward.7} parent=0 // loop_body
    %s16 = ssub.s32 %s11, 1
    %s17 = ssub.s32 %s11, 2
    %s24 = sadd.s32 1, %s19
    %p25 = scmp.ge.s32.totalorder %s24, 1
    %s26 = scalar_select %p25, 0, %s24
    %s27 = sadd.s32 1, %s18
    %s28 = scalar_select %p25, %s27, %s18
    %p29 = scmp.ge.s32.totalorder %s28, 2
    %s30 = scalar_select %p29, 0, %s28
    %s31 = sadd.s32 %s18, %s19
    %s32 = sadd.s32 %s30, %s26
    %s33 = ssub.s32 %s31, %s32
    %p34 = scmp.eq.s32.totalorder %s33, 0
    %s36 = sadd.s32 %s35, 1
    %s37 = scalar_select %p34, %s35, %s36
    %p40 = pneg %p34
    %p41 = scmp.eq.s32.totalorder %s11, 1
    %p42 = por %p40, %p41
    %p43 = scmp.ne.s32.totalorder %s35, %s38
    %p44 = scmp.eq.s32.totalorder %s11, 0
    %p45 = por %p43, %p44
    %p46 = scmp.ne.s32.totalorder %s35, %s38
    %p47 = scmp.eq.s32.totalorder %s16, 1
    %p48 = por %p46, %p47
    %p49 = scmp.ne.s32.totalorder %s38, %s39
    %p50 = scmp.eq.s32.totalorder %s16, 0
    %p51 = por %p49, %p50
    %p52 = scmp.ne.s32.totalorder %s38, %s39
    %p53 = scmp.eq.s32.totalorder %s17, 1
    %p54 = por %p52, %p53
    %p56 = scmp.ne.s32.totalorder %s39, %s55
    %p57 = scmp.eq.s32.totalorder %s17, 0
    %p58 = por %p56, %p57
    %s60 = sadd.s32 %s59, 1
    %p63 = scmp.eq.s32.totalorder %s11, 1
    %p64 = scmp.ne.s32.totalorder %s59, %s61
    %p65 = scmp.eq.s32.totalorder %s11, 0
    %p66 = por %p64, %p65
    %p67 = scmp.ne.s32.totalorder %s59, %s61
    %p68 = scmp.eq.s32.totalorder %s16, 1
    %p69 = por %p67, %p68
    %p70 = scmp.ne.s32.totalorder %s61, %s62
    %p71 = scmp.eq.s32.totalorder %s16, 0
    %p72 = por %p70, %p71
    %p73 = scmp.ne.s32.totalorder %s61, %s62
    %p74 = scmp.eq.s32.totalorder %s17, 1
    %p75 = por %p73, %p74
    %p77 = scmp.ne.s32.totalorder %s62, %s76
    %p78 = scmp.eq.s32.totalorder %s17, 0
    %p79 = por %p77, %p78
    %s81 = sadd.s32 %s80, 1
    %p84 = scmp.eq.s32.totalorder %s11, 1
    %p85 = scmp.ne.s32.totalorder %s80, %s82
    %p86 = scmp.eq.s32.totalorder %s11, 0
    %p87 = por %p85, %p86
    %p88 = scmp.ne.s32.totalorder %s80, %s82
    %p89 = scmp.eq.s32.totalorder %s16, 1
    %p90 = por %p88, %p89
    %p91 = scmp.ne.s32.totalorder %s82, %s83
    %p92 = scmp.eq.s32.totalorder %s16, 0
    %p93 = por %p91, %p92
    %p94 = scmp.ne.s32.totalorder %s82, %s83
    %p95 = scmp.eq.s32.totalorder %s17, 1
    %p96 = por %p94, %p95
    %p98 = scmp.ne.s32.totalorder %s83, %s97
    %p99 = scmp.eq.s32.totalorder %s17, 0
    %p100 = por %p98, %p99
    %s102 = sadd.s32 %s101, 1
    %p105 = scmp.eq.s32.totalorder %s11, 1
    %p106 = scmp.ne.s32.totalorder %s101, %s103
    %p107 = scmp.eq.s32.totalorder %s11, 0
    %p108 = por %p106, %p107
    %p109 = scmp.ne.s32.totalorder %s101, %s103
    %p110 = scmp.eq.s32.totalorder %s16, 1
    %p111 = por %p109, %p110
    %p112 = scmp.ne.s32.totalorder %s103, %s104
    %p113 = scmp.eq.s32.totalorder %s16, 0
    %p114 = por %p112, %p113
    %p115 = scmp.ne.s32.totalorder %s103, %s104
    %p116 = scmp.eq.s32.totalorder %s17, 1
    %p117 = por %p115, %p116
    %p119 = scmp.ne.s32.totalorder %s104, %s118
    %p120 = scmp.eq.s32.totalorder %s17, 0
    %p121 = por %p119, %p120
    %s123 = sadd.s32 %s122, 1
    %p126 = scmp.eq.s32.totalorder %s11, 1
    %p127 = scmp.ne.s32.totalorder %s122, %s124
    %p128 = scmp.eq.s32.totalorder %s11, 0
    %p129 = por %p127, %p128
    %p130 = scmp.ne.s32.totalorder %s122, %s124
    %p131 = scmp.eq.s32.totalorder %s16, 1
    %p132 = por %p130, %p131
    %p133 = scmp.ne.s32.totalorder %s124, %s125
    %p134 = scmp.eq.s32.totalorder %s16, 0
    %p135 = por %p133, %p134
    %p136 = scmp.ne.s32.totalorder %s124, %s125
    %p137 = scmp.eq.s32.totalorder %s17, 1
    %p138 = por %p136, %p137
    %p140 = scmp.ne.s32.totalorder %s125, %s139
    %p141 = scmp.eq.s32.totalorder %s17, 0
    %p142 = por %p140, %p141
    %s143 = ssub.s32 %s18, %s30
    %s144 = ssub.s32 %s19, %s26
    %s145 = sor.u32 %s143, %s144
    %p146 = scmp.eq.s32.totalorder %s145, 0
    %s148 = sadd.s32 %s147, 1
    %s149 = scalar_select %p146, %s147, %s148
    %p152 = pneg %p146
    %p153 = scmp.eq.s32.totalorder %s11, 1
    %p154 = por %p152, %p153
    %p155 = scmp.ne.s32.totalorder %s147, %s150
    %p156 = scmp.eq.s32.totalorder %s11, 0
    %p157 = por %p155, %p156
    %p158 = scmp.ne.s32.totalorder %s147, %s150
    %p159 = scmp.eq.s32.totalorder %s16, 1
    %p160 = por %p158, %p159
    %p161 = scmp.ne.s32.totalorder %s150, %s151
    %p162 = scmp.eq.s32.totalorder %s16, 0
    %p163 = por %p161, %p162
    %p164 = scmp.ne.s32.totalorder %s150, %s151
    %p165 = scmp.eq.s32.totalorder %s17, 1
    %p166 = por %p164, %p165
    %p168 = scmp.ne.s32.totalorder %s151, %s167
    %p169 = scmp.eq.s32.totalorder %s17, 0
    %p170 = por %p168, %p169
    %p171 = scmp.le.s32.totalorder 1, %s11
    %p172 = scmp.lt.s32.totalorder %s11, 3
    %p173 = pnand %p171, %p172
    %p174 = pneg %p173
    // Predicated region
    $region9: #{bottleneck_ir_sram_forward.7} parent=5 // pred_check
      _
    $region10: #{bottleneck_ir_sram_forward.7} parent=5 // pred_check_branch
      %176 = sbr.rel (%p173) target = $region12
    $region11: #{bottleneck_ir_sram_forward.7} parent=5 // pred_region
      %s177 = ssub.s32 %s11, 1
      // Predicated region
      $region13: #{bottleneck_ir_sram_forward.7} parent=11 // pred_check
        %p178 = pneg %p72
      $region14: #{bottleneck_ir_sram_forward.7} parent=11 // pred_check_branch
        %180 = sbr.rel (%p178) target = $region16
      $region15: #{bottleneck_ir_sram_forward.7} parent=11 // pred_region
        _
      $region16: #{bottleneck_ir_sram_forward.7} parent=11 // pred_fallthru
        _
      // Predicated region
      $region17: #{bottleneck_ir_sram_forward.7} parent=11 // pred_check
        %p181 = pneg %p93
      $region18: #{bottleneck_ir_sram_forward.7} parent=11 // pred_check_branch
        %183 = sbr.rel (%p181) target = $region20
      $region19: #{bottleneck_ir_sram_forward.7} parent=11 // pred_region
        _
      $region20: #{bottleneck_ir_sram_forward.7} parent=11 // pred_fallthru
        _
      // Predicated region
      $region21: #{bottleneck_ir_sram_forward.7} parent=11 // pred_check
        %p184 = pneg %p114
      $region22: #{bottleneck_ir_sram_forward.7} parent=11 // pred_check_branch
        %186 = sbr.rel (%p184) target = $region24
      $region23: #{bottleneck_ir_sram_forward.7} parent=11 // pred_region
        _
      $region24: #{bottleneck_ir_sram_forward.7} parent=11 // pred_fallthru
        _
      // Predicated region
      $region25: #{bottleneck_ir_sram_forward.7} parent=11 // pred_check
        %p187 = pneg %p135
      $region26: #{bottleneck_ir_sram_forward.7} parent=11 // pred_check_branch
        %189 = sbr.rel (%p187) target = $region28
      $region27: #{bottleneck_ir_sram_forward.7} parent=11 // pred_region
        _
      $region28: #{bottleneck_ir_sram_forward.7} parent=11 // pred_fallthru
        _
    $region12: #{bottleneck_ir_sram_forward.7} parent=5 // pred_fallthru
      _
    %p190 = scmp.lt.s32.totalorder %s11, 2
    // Predicated region
    $region29: #{bottleneck_ir_sram_forward.7} parent=5 // pred_check
      %p191 = pneg %p190
    $region30: #{bottleneck_ir_sram_forward.7} parent=5 // pred_check_branch
      %193 = sbr.rel (%p191) target = $region32
    $region31: #{bottleneck_ir_sram_forward.7} parent=5 // pred_region
      // Predicated region
      $region33: #{bottleneck_ir_sram_forward.7} parent=31 // pred_check
        %p194 = pneg %p45
      $region34: #{bottleneck_ir_sram_forward.7} parent=31 // pred_check_branch
        %196 = sbr.rel (%p194) target = $region36
      $region35: #{bottleneck_ir_sram_forward.7} parent=31 // pred_region
        %s197 = sadd.s32 %s18, %s19
        %p198 = scmp.lt.s32.totalorder %s197, 1
        %s199 = scalar_select %p198, %s197, 1
        %s200 = smul.addr %s199, 54
        %s201 = smul.addr %s200, 4
        %s202 = scalar_lea.vmem %s0, %s201
        %s203 = sadd.s32 %s18, %s19
      $region36: #{bottleneck_ir_sram_forward.7} parent=31 // pred_fallthru
        _
    $region32: #{bottleneck_ir_sram_forward.7} parent=5 // pred_fallthru
      _
    %p204 = scmp.le.s32.totalorder 1, %s11
    %p205 = scmp.lt.s32.totalorder %s11, 3
    %p206 = pnand %p204, %p205
    %p207 = pneg %p206
    // Predicated region
    $region37: #{bottleneck_ir_sram_forward.7} parent=5 // pred_check
      _
    $region38: #{bottleneck_ir_sram_forward.7} parent=5 // pred_check_branch
      %209 = sbr.rel (%p206) target = $region40
    $region39: #{bottleneck_ir_sram_forward.7} parent=5 // pred_region
      %s210 = ssub.s32 %s11, 1
      %s211 = sadd.s32 %s20, %s21
      %p212 = scmp.lt.s32.totalorder %s211, 1
      %s213 = scalar_select %p212, %s211, 1
      %s214 = smul.addr %s213, 54
      %s215 = smul.addr %s214, 4
      %s216 = scalar_lea.vmem %s0, %s215
      %p217 = pneg %p51
      %p218 = pneg %p48
      %p219 = pneg %p72
      %p220 = pneg %p69
      %p221 = pneg %p93
      %p222 = pneg %p90
      %p223 = pneg %p114
      %p224 = pneg %p111
      %p225 = pneg %p135
      %p226 = pneg %p132
      %p227 = pneg %p163
      %p228 = pneg %p160
      %s229 = smul.u32 32, %s21
      %p230 = scmp.lt.s32.totalorder %s20, 1
      %s231 = scalar_select %p230, %s20, 1
      %p232 = scmp.lt.s32.totalorder %s229, 31
      %s233 = scalar_select %p232, %s229, 31
      %s234 = smul.addr %s231, 32
      %s235 = sadd.s32 %s233, %s234
      %s236 = smul.addr %s235, 4
      %s237 = scalar_lea.vmem %s5, %s236
      %s238 = sadd.s32 %s20, %s21
      %p239 = scmp.lt.s32.totalorder %s238, 1
      %s240 = scalar_select %p239, %s238, 1
      %s241 = smul.addr %s240, 54
      %s242 = smul.addr %s241, 4
      %s243 = scalar_lea.vmem %s0, %s242
      %s244 = sadd.s32 %s20, %s21
      %s245 = smul.u32 32, %s21
      %p246 = scmp.lt.s32.totalorder %s20, 1
      %s247 = scalar_select %p246, %s20, 1
      %p248 = scmp.lt.s32.totalorder %s245, 31
      %s249 = scalar_select %p248, %s245, 31
      %s250 = smul.addr %s247, 32
      %s251 = sadd.s32 %s249, %s250
      %s252 = smul.addr %s251, 4
      %s253 = scalar_lea.vmem %s5, %s252
      %s254 = smul.u32 32, %s21
      %v256 = vld [vmem:[%s243] sm:$0xf]
      %v257 = vld [vmem:[%s243 + $0x4] sm:$0xf]
      %v258 = vld [vmem:[%s243 + $0xc] sm:$0xf]
      %v259 = vld [vmem:[%s243 + $0x10] sm:$0xf]
      %v260 = vld [vmem:[%s243 + $0x18] sm:$0xf]
      %v261 = vld [vmem:[%s243 + $0x1c] sm:$0xf]
      %v262 = vld [vmem:[%s243 + $0x24] sm:$0xf]
      %v263 = vld [vmem:[%s243 + $0x28] sm:$0xf]
      %v264 = vld [vmem:[%s243 + $0x30] sm:$0xf]
      %v265 = vld [vmem:[%s243 + $0x34] sm:$0xf]
      %v266 = vld [vmem:[%s243 + $0x3c] sm:$0xf]
      %v267 = vld [vmem:[%s243 + $0x40] sm:$0xf]
      %v268 = vld [vmem:[%s243 + $0x48] sm:$0xf]
      %v269 = vld [vmem:[%s243 + $0x4c] sm:$0xf]
      %v270 = vld [vmem:[%s243 + $0x54] sm:$0xf]
      %v271 = vld [vmem:[%s243 + $0x58] sm:$0xf]
      %v272 = vld [vmem:[%s243 + $0x60] sm:$0xf]
      %v273 = vld [vmem:[%s243 + $0x64] sm:$0xf]
      %v274 = vld [vmem:[%s243 + $0x6c] sm:$0xf]
      %v275 = vld [vmem:[%s243 + $0x70] sm:$0xf]
      %v276 = vld [vmem:[%s243 + $0x78] sm:$0xf]
      %v277 = vld [vmem:[%s243 + $0x7c] sm:$0xf]
      %v278 = vld [vmem:[%s243 + $0x84] sm:$0xf]
      %v279 = vld [vmem:[%s243 + $0x88] sm:$0xf]
      %v280 = vld [vmem:[%s243 + $0x90] sm:$0xf]
      %v281 = vld [vmem:[%s243 + $0x94] sm:$0xf]
      %v282 = vld [vmem:[%s243 + $0x9c] sm:$0xf]
      %v283 = vld [vmem:[%s243 + $0xa0] sm:$0xf]
      %v284 = vld [vmem:[%s243 + $0xa8] sm:$0xf]
      %v285 = vld [vmem:[%s243 + $0xac] sm:$0xf]
      %v286 = vld [vmem:[%s243 + $0xb4] sm:$0xf]
      %v287 = vld [vmem:[%s243 + $0xb8] sm:$0xf]
      %vm288 = vcmask 27648
      %289 = vst.msk [vmem:[#allocation2] sm:$0xf] %vm288, %v256
      %290 = vst.msk [vmem:[#allocation2 + $0x4] sm:$0xf] %vm288, %v257
      %291 = vst.msk [vmem:[#allocation2 + $0x8] sm:$0xf] %vm288, %v258
      %292 = vst.msk [vmem:[#allocation2 + $0xc] sm:$0xf] %vm288, %v259
      %293 = vst.msk [vmem:[#allocation2 + $0x10] sm:$0xf] %vm288, %v260
      %294 = vst.msk [vmem:[#allocation2 + $0x14] sm:$0xf] %vm288, %v261
      %295 = vst.msk [vmem:[#allocation2 + $0x18] sm:$0xf] %vm288, %v262
      %296 = vst.msk [vmem:[#allocation2 + $0x1c] sm:$0xf] %vm288, %v263
      %297 = vst.msk [vmem:[#allocation2 + $0x20] sm:$0xf] %vm288, %v264
      %298 = vst.msk [vmem:[#allocation2 + $0x24] sm:$0xf] %vm288, %v265
      %299 = vst.msk [vmem:[#allocation2 + $0x28] sm:$0xf] %vm288, %v266
      %300 = vst.msk [vmem:[#allocation2 + $0x2c] sm:$0xf] %vm288, %v267
      %301 = vst.msk [vmem:[#allocation2 + $0x30] sm:$0xf] %vm288, %v268
      %302 = vst.msk [vmem:[#allocation2 + $0x34] sm:$0xf] %vm288, %v269
      %303 = vst.msk [vmem:[#allocation2 + $0x38] sm:$0xf] %vm288, %v270
      %304 = vst.msk [vmem:[#allocation2 + $0x3c] sm:$0xf] %vm288, %v271
      %305 = vst.msk [vmem:[#allocation2 + $0x40] sm:$0xf] %vm288, %v272
      %306 = vst.msk [vmem:[#allocation2 + $0x44] sm:$0xf] %vm288, %v273
      %307 = vst.msk [vmem:[#allocation2 + $0x48] sm:$0xf] %vm288, %v274
      %308 = vst.msk [vmem:[#allocation2 + $0x4c] sm:$0xf] %vm288, %v275
      %309 = vst.msk [vmem:[#allocation2 + $0x50] sm:$0xf] %vm288, %v276
      %310 = vst.msk [vmem:[#allocation2 + $0x54] sm:$0xf] %vm288, %v277
      %311 = vst.msk [vmem:[#allocation2 + $0x58] sm:$0xf] %vm288, %v278
      %312 = vst.msk [vmem:[#allocation2 + $0x5c] sm:$0xf] %vm288, %v279
      %313 = vst.msk [vmem:[#allocation2 + $0x60] sm:$0xf] %vm288, %v280
      %314 = vst.msk [vmem:[#allocation2 + $0x64] sm:$0xf] %vm288, %v281
      %315 = vst.msk [vmem:[#allocation2 + $0x68] sm:$0xf] %vm288, %v282
      %316 = vst.msk [vmem:[#allocation2 + $0x6c] sm:$0xf] %vm288, %v283
      %317 = vst.msk [vmem:[#allocation2 + $0x70] sm:$0xf] %vm288, %v284
      %318 = vst.msk [vmem:[#allocation2 + $0x74] sm:$0xf] %vm288, %v285
      %319 = vst.msk [vmem:[#allocation2 + $0x78] sm:$0xf] %vm288, %v286
      %320 = vst.msk [vmem:[#allocation2 + $0x7c] sm:$0xf] %vm288, %v287
      %v321 = vld [vmem:[%s243] sm:$0xf]
      %v322 = vld [vmem:[%s243 + $0x4] sm:$0xf]
      %v323 = vld [vmem:[%s243 + $0x8] sm:$0x1]
      %v324 = vld [vmem:[%s243 + $0xc] sm:$0xf]
      %v325 = vld [vmem:[%s243 + $0x10] sm:$0xf]
      %v326 = vld [vmem:[%s243 + $0x14] sm:$0x1]
      %v327 = vld [vmem:[%s243 + $0x18] sm:$0xf]
      %v328 = vld [vmem:[%s243 + $0x1c] sm:$0xf]
      %v329 = vld [vmem:[%s243 + $0x20] sm:$0x1]
      %v330 = vld [vmem:[%s243 + $0x24] sm:$0xf]
      %v331 = vld [vmem:[%s243 + $0x28] sm:$0xf]
      %v332 = vld [vmem:[%s243 + $0x2c] sm:$0x1]
      %v333 = vld [vmem:[%s243 + $0x30] sm:$0xf]
      %v334 = vld [vmem:[%s243 + $0x34] sm:$0xf]
      %v335 = vld [vmem:[%s243 + $0x38] sm:$0x1]
      %v336 = vld [vmem:[%s243 + $0x3c] sm:$0xf]
      %v337 = vld [vmem:[%s243 + $0x40] sm:$0xf]
      %v338 = vld [vmem:[%s243 + $0x44] sm:$0x1]
      %v339 = vld [vmem:[%s243 + $0x48] sm:$0xf]
      %v340 = vld [vmem:[%s243 + $0x4c] sm:$0xf]
      %v341 = vld [vmem:[%s243 + $0x50] sm:$0x1]
      %v342 = vld [vmem:[%s243 + $0x54] sm:$0xf]
      %v343 = vld [vmem:[%s243 + $0x58] sm:$0xf]
      %v344 = vld [vmem:[%s243 + $0x5c] sm:$0x1]
      %v345 = vld [vmem:[%s243 + $0x60] sm:$0xf]
      %v346 = vld [vmem:[%s243 + $0x64] sm:$0xf]
      %v347 = vld [vmem:[%s243 + $0x68] sm:$0x1]
      %v348 = vld [vmem:[%s243 + $0x6c] sm:$0xf]
      %v349 = vld [vmem:[%s243 + $0x70] sm:$0xf]
      %v350 = vld [vmem:[%s243 + $0x74] sm:$0x1]
      %v351 = vld [vmem:[%s243 + $0x78] sm:$0xf]
      %v352 = vld [vmem:[%s243 + $0x7c] sm:$0xf]
      %v353 = vld [vmem:[%s243 + $0x80] sm:$0x1]
      %v354 = vld [vmem:[%s243 + $0x84] sm:$0xf]
      %v355 = vld [vmem:[%s243 + $0x88] sm:$0xf]
      %v356 = vld [vmem:[%s243 + $0x8c] sm:$0x1]
      %v357 = vld [vmem:[%s243 + $0x90] sm:$0xf]
      %v358 = vld [vmem:[%s243 + $0x94] sm:$0xf]
      %v359 = vld [vmem:[%s243 + $0x98] sm:$0x1]
      %v360 = vld [vmem:[%s243 + $0x9c] sm:$0xf]
      %v361 = vld [vmem:[%s243 + $0xa0] sm:$0xf]
      %v362 = vld [vmem:[%s243 + $0xa4] sm:$0x1]
      %v363 = vld [vmem:[%s243 + $0xa8] sm:$0xf]
      %v364 = vld [vmem:[%s243 + $0xac] sm:$0xf]
      %v365 = vld [vmem:[%s243 + $0xb0] sm:$0x1]
      %v366 = vld [vmem:[%s243 + $0xb4] sm:$0xf]
      %v367 = vld [vmem:[%s243 + $0xb8] sm:$0xf]
      %v368 = vld [vmem:[%s243 + $0xbc] sm:$0x1]
      %vm369 = vsmask.f32 3328
      %vm370 = vsmask.f32 7440
      %vm371 = vmor %vm369, %vm370
      %v373 = vshrl.u32 %v321, 16
      %v375 = vrot.slane %v373, 4
      %v376 = vshll.u32 %v321, 16
      %v378 = vrot.slane %v376, 5
      %v379 = vor.u32 %v375, %v378
      %v380 = vrot.slane %v379, 4
      %v382 = vshll.u32 %v322, 16
      %v384 = vrot.slane %v382, 5
      %v385 = vsel %vm371, %v380, %v384
      %v386 = vshrl.u32 %v322, 16
      %v388 = vrot.slane %v386, 4
      %v389 = vor.u32 %v388, %v384
      %v390 = vrot.slane %v389, 4
      %v392 = vshll.u32 %v323, 16
      %v394 = vrot.slane %v392, 5
      %v395 = vsel %vm371, %v390, %v394
      %v397 = vshrl.u32 %v324, 16
      %v399 = vrot.slane %v397, 4
      %v400 = vshll.u32 %v324, 16
      %v402 = vrot.slane %v400, 5
      %v403 = vor.u32 %v399, %v402
      %v404 = vrot.slane %v403, 4
      %v406 = vshll.u32 %v325, 16
      %v408 = vrot.slane %v406, 5
      %v409 = vsel %vm371, %v404, %v408
      %v410 = vshrl.u32 %v325, 16
      %v412 = vrot.slane %v410, 4
      %v413 = vor.u32 %v412, %v408
      %v414 = vrot.slane %v413, 4
      %v416 = vshll.u32 %v326, 16
      %v418 = vrot.slane %v416, 5
      %v419 = vsel %vm371, %v414, %v418
      %v421 = vshrl.u32 %v327, 16
      %v423 = vrot.slane %v421, 4
      %v424 = vshll.u32 %v327, 16
      %v426 = vrot.slane %v424, 5
      %v427 = vor.u32 %v423, %v426
      %v428 = vrot.slane %v427, 4
      %v430 = vshll.u32 %v328, 16
      %v432 = vrot.slane %v430, 5
      %v433 = vsel %vm371, %v428, %v432
      %v434 = vshrl.u32 %v328, 16
      %v436 = vrot.slane %v434, 4
      %v437 = vor.u32 %v436, %v432
      %v438 = vrot.slane %v437, 4
      %v440 = vshll.u32 %v329, 16
      %v442 = vrot.slane %v440, 5
      %v443 = vsel %vm371, %v438, %v442
      %v445 = vshrl.u32 %v330, 16
      %v447 = vrot.slane %v445, 4
      %v448 = vshll.u32 %v330, 16
      %v450 = vrot.slane %v448, 5
      %v451 = vor.u32 %v447, %v450
      %v452 = vrot.slane %v451, 4
      %v454 = vshll.u32 %v331, 16
      %v456 = vrot.slane %v454, 5
      %v457 = vsel %vm371, %v452, %v456
      %v458 = vshrl.u32 %v331, 16
      %v460 = vrot.slane %v458, 4
      %v461 = vor.u32 %v460, %v456
      %v462 = vrot.slane %v461, 4
      %v464 = vshll.u32 %v332, 16
      %v466 = vrot.slane %v464, 5
      %v467 = vsel %vm371, %v462, %v466
      %v469 = vshrl.u32 %v333, 16
      %v471 = vrot.slane %v469, 4
      %v472 = vshll.u32 %v333, 16
      %v474 = vrot.slane %v472, 5
      %v475 = vor.u32 %v471, %v474
      %v476 = vrot.slane %v475, 4
      %v478 = vshll.u32 %v334, 16
      %v480 = vrot.slane %v478, 5
      %v481 = vsel %vm371, %v476, %v480
      %v482 = vshrl.u32 %v334, 16
      %v484 = vrot.slane %v482, 4
      %v485 = vor.u32 %v484, %v480
      %v486 = vrot.slane %v485, 4
      %v488 = vshll.u32 %v335, 16
      %v490 = vrot.slane %v488, 5
      %v491 = vsel %vm371, %v486, %v490
      %v493 = vshrl.u32 %v336, 16
      %v495 = vrot.slane %v493, 4
      %v496 = vshll.u32 %v336, 16
      %v498 = vrot.slane %v496, 5
      %v499 = vor.u32 %v495, %v498
      %v500 = vrot.slane %v499, 4
      %v502 = vshll.u32 %v337, 16
      %v504 = vrot.slane %v502, 5
      %v505 = vsel %vm371, %v500, %v504
      %v506 = vshrl.u32 %v337, 16
      %v508 = vrot.slane %v506, 4
      %v509 = vor.u32 %v508, %v504
      %v510 = vrot.slane %v509, 4
      %v512 = vshll.u32 %v338, 16
      %v514 = vrot.slane %v512, 5
      %v515 = vsel %vm371, %v510, %v514
      %v517 = vshrl.u32 %v339, 16
      %v519 = vrot.slane %v517, 4
      %v520 = vshll.u32 %v339, 16
      %v522 = vrot.slane %v520, 5
      %v523 = vor.u32 %v519, %v522
      %v524 = vrot.slane %v523, 4
      %v526 = vshll.u32 %v340, 16
      %v528 = vrot.slane %v526, 5
      %v529 = vsel %vm371, %v524, %v528
      %v530 = vshrl.u32 %v340, 16
      %v532 = vrot.slane %v530, 4
      %v533 = vor.u32 %v532, %v528
      %v534 = vrot.slane %v533, 4
      %v536 = vshll.u32 %v341, 16
      %v538 = vrot.slane %v536, 5
      %v539 = vsel %vm371, %v534, %v538
      %v541 = vshrl.u32 %v342, 16
      %v543 = vrot.slane %v541, 4
      %v544 = vshll.u32 %v342, 16
      %v546 = vrot.slane %v544, 5
      %v547 = vor.u32 %v543, %v546
      %v548 = vrot.slane %v547, 4
      %v550 = vshll.u32 %v343, 16
      %v552 = vrot.slane %v550, 5
      %v553 = vsel %vm371, %v548, %v552
      %v554 = vshrl.u32 %v343, 16
      %v556 = vrot.slane %v554, 4
      %v557 = vor.u32 %v556, %v552
      %v558 = vrot.slane %v557, 4
      %v560 = vshll.u32 %v344, 16
      %v562 = vrot.slane %v560, 5
      %v563 = vsel %vm371, %v558, %v562
      %v565 = vshrl.u32 %v345, 16
      %v567 = vrot.slane %v565, 4
      %v568 = vshll.u32 %v345, 16
      %v570 = vrot.slane %v568, 5
      %v571 = vor.u32 %v567, %v570
      %v572 = vrot.slane %v571, 4
      %v574 = vshll.u32 %v346, 16
      %v576 = vrot.slane %v574, 5
      %v577 = vsel %vm371, %v572, %v576
      %v578 = vshrl.u32 %v346, 16
      %v580 = vrot.slane %v578, 4
      %v581 = vor.u32 %v580, %v576
      %v582 = vrot.slane %v581, 4
      %v584 = vshll.u32 %v347, 16
      %v586 = vrot.slane %v584, 5
      %v587 = vsel %vm371, %v582, %v586
      %v589 = vshrl.u32 %v348, 16
      %v591 = vrot.slane %v589, 4
      %v592 = vshll.u32 %v348, 16
      %v594 = vrot.slane %v592, 5
      %v595 = vor.u32 %v591, %v594
      %v596 = vrot.slane %v595, 4
      %v598 = vshll.u32 %v349, 16
      %v600 = vrot.slane %v598, 5
      %v601 = vsel %vm371, %v596, %v600
      %v602 = vshrl.u32 %v349, 16
      %v604 = vrot.slane %v602, 4
      %v605 = vor.u32 %v604, %v600
      %v606 = vrot.slane %v605, 4
      %v608 = vshll.u32 %v350, 16
      %v610 = vrot.slane %v608, 5
      %v611 = vsel %vm371, %v606, %v610
      %v613 = vshrl.u32 %v351, 16
      %v615 = vrot.slane %v613, 4
      %v616 = vshll.u32 %v351, 16
      %v618 = vrot.slane %v616, 5
      %v619 = vor.u32 %v615, %v618
      %v620 = vrot.slane %v619, 4
      %v622 = vshll.u32 %v352, 16
      %v624 = vrot.slane %v622, 5
      %v625 = vsel %vm371, %v620, %v624
      %v626 = vshrl.u32 %v352, 16
      %v628 = vrot.slane %v626, 4
      %v629 = vor.u32 %v628, %v624
      %v630 = vrot.slane %v629, 4
      %v632 = vshll.u32 %v353, 16
      %v634 = vrot.slane %v632, 5
      %v635 = vsel %vm371, %v630, %v634
      %v637 = vshrl.u32 %v354, 16
      %v639 = vrot.slane %v637, 4
      %v640 = vshll.u32 %v354, 16
      %v642 = vrot.slane %v640, 5
      %v643 = vor.u32 %v639, %v642
      %v644 = vrot.slane %v643, 4
      %v646 = vshll.u32 %v355, 16
      %v648 = vrot.slane %v646, 5
      %v649 = vsel %vm371, %v644, %v648
      %v650 = vshrl.u32 %v355, 16
      %v652 = vrot.slane %v650, 4
      %v653 = vor.u32 %v652, %v648
      %v654 = vrot.slane %v653, 4
      %v656 = vshll.u32 %v356, 16
      %v658 = vrot.slane %v656, 5
      %v659 = vsel %vm371, %v654, %v658
      %v661 = vshrl.u32 %v357, 16
      %v663 = vrot.slane %v661, 4
      %v664 = vshll.u32 %v357, 16
      %v666 = vrot.slane %v664, 5
      %v667 = vor.u32 %v663, %v666
      %v668 = vrot.slane %v667, 4
      %v670 = vshll.u32 %v358, 16
      %v672 = vrot.slane %v670, 5
      %v673 = vsel %vm371, %v668, %v672
      %v674 = vshrl.u32 %v358, 16
      %v676 = vrot.slane %v674, 4
      %v677 = vor.u32 %v676, %v672
      %v678 = vrot.slane %v677, 4
      %v680 = vshll.u32 %v359, 16
      %v682 = vrot.slane %v680, 5
      %v683 = vsel %vm371, %v678, %v682
      %v685 = vshrl.u32 %v360, 16
      %v687 = vrot.slane %v685, 4
      %v688 = vshll.u32 %v360, 16
      %v690 = vrot.slane %v688, 5
      %v691 = vor.u32 %v687, %v690
      %v692 = vrot.slane %v691, 4
      %v694 = vshll.u32 %v361, 16
      %v696 = vrot.slane %v694, 5
      %v697 = vsel %vm371, %v692, %v696
      %v698 = vshrl.u32 %v361, 16
      %v700 = vrot.slane %v698, 4
      %v701 = vor.u32 %v700, %v696
      %v702 = vrot.slane %v701, 4
      %v704 = vshll.u32 %v362, 16
      %v706 = vrot.slane %v704, 5
      %v707 = vsel %vm371, %v702, %v706
      %v709 = vshrl.u32 %v363, 16
      %v711 = vrot.slane %v709, 4
      %v712 = vshll.u32 %v363, 16
      %v714 = vrot.slane %v712, 5
      %v715 = vor.u32 %v711, %v714
      %v716 = vrot.slane %v715, 4
      %v718 = vshll.u32 %v364, 16
      %v720 = vrot.slane %v718, 5
      %v721 = vsel %vm371, %v716, %v720
      %v722 = vshrl.u32 %v364, 16
      %v724 = vrot.slane %v722, 4
      %v725 = vor.u32 %v724, %v720
      %v726 = vrot.slane %v725, 4
      %v728 = vshll.u32 %v365, 16
      %v730 = vrot.slane %v728, 5
      %v731 = vsel %vm371, %v726, %v730
      %v733 = vshrl.u32 %v366, 16
      %v735 = vrot.slane %v733, 4
      %v736 = vshll.u32 %v366, 16
      %v738 = vrot.slane %v736, 5
      %v739 = vor.u32 %v735, %v738
      %v740 = vrot.slane %v739, 4
      %v742 = vshll.u32 %v367, 16
      %v744 = vrot.slane %v742, 5
      %v745 = vsel %vm371, %v740, %v744
      %v746 = vshrl.u32 %v367, 16
      %v748 = vrot.slane %v746, 4
      %v749 = vor.u32 %v748, %v744
      %v750 = vrot.slane %v749, 4
      %v752 = vshll.u32 %v368, 16
      %v754 = vrot.slane %v752, 5
      %v755 = vsel %vm371, %v750, %v754
      %756 = vrot.lane.b32.xlu0 %v385, 4
      %v757 = vpop.permute.xlu0 %756
      %758 = vrot.lane.b32.xlu0 %v395, 4
      %v759 = vpop.permute.xlu0 %758
      %760 = vrot.lane.b32.xlu0 %v409, 4
      %v761 = vpop.permute.xlu0 %760
      %762 = vrot.lane.b32.xlu0 %v419, 4
      %v763 = vpop.permute.xlu0 %762
      %764 = vrot.lane.b32.xlu0 %v433, 4
      %v765 = vpop.permute.xlu0 %764
      %766 = vrot.lane.b32.xlu0 %v443, 4
      %v767 = vpop.permute.xlu0 %766
      %768 = vrot.lane.b32.xlu0 %v457, 4
      %v769 = vpop.permute.xlu0 %768
      %770 = vrot.lane.b32.xlu0 %v467, 4
      %v771 = vpop.permute.xlu0 %770
      %772 = vrot.lane.b32.xlu0 %v481, 4
      %v773 = vpop.permute.xlu0 %772
      %774 = vrot.lane.b32.xlu0 %v491, 4
      %v775 = vpop.permute.xlu0 %774
      %776 = vrot.lane.b32.xlu0 %v505, 4
      %v777 = vpop.permute.xlu0 %776
      %778 = vrot.lane.b32.xlu0 %v515, 4
      %v779 = vpop.permute.xlu0 %778
      %780 = vrot.lane.b32.xlu0 %v529, 4
      %v781 = vpop.permute.xlu0 %780
      %782 = vrot.lane.b32.xlu0 %v539, 4
      %v783 = vpop.permute.xlu0 %782
      %784 = vrot.lane.b32.xlu0 %v553, 4
      %v785 = vpop.permute.xlu0 %784
      %786 = vrot.lane.b32.xlu0 %v563, 4
      %v787 = vpop.permute.xlu0 %786
      %788 = vrot.lane.b32.xlu0 %v577, 4
      %v789 = vpop.permute.xlu0 %788
      %790 = vrot.lane.b32.xlu0 %v587, 4
      %v791 = vpop.permute.xlu0 %790
      %792 = vrot.lane.b32.xlu0 %v601, 4
      %v793 = vpop.permute.xlu0 %792
      %794 = vrot.lane.b32.xlu0 %v611, 4
      %v795 = vpop.permute.xlu0 %794
      %796 = vrot.lane.b32.xlu0 %v625, 4
      %v797 = vpop.permute.xlu0 %796
      %798 = vrot.lane.b32.xlu0 %v635, 4
      %v799 = vpop.permute.xlu0 %798
      %800 = vrot.lane.b32.xlu0 %v649, 4
      %v801 = vpop.permute.xlu0 %800
      %802 = vrot.lane.b32.xlu0 %v659, 4
      %v803 = vpop.permute.xlu0 %802
      %804 = vrot.lane.b32.xlu0 %v673, 4
      %v805 = vpop.permute.xlu0 %804
      %806 = vrot.lane.b32.xlu0 %v683, 4
      %v807 = vpop.permute.xlu0 %806
      %808 = vrot.lane.b32.xlu0 %v697, 4
      %v809 = vpop.permute.xlu0 %808
      %810 = vrot.lane.b32.xlu0 %v707, 4
      %v811 = vpop.permute.xlu0 %810
      %812 = vrot.lane.b32.xlu0 %v721, 4
      %v813 = vpop.permute.xlu0 %812
      %814 = vrot.lane.b32.xlu0 %v731, 4
      %v815 = vpop.permute.xlu0 %814
      %816 = vrot.lane.b32.xlu0 %v745, 4
      %v817 = vpop.permute.xlu0 %816
      %818 = vrot.lane.b32.xlu0 %v755, 4
      %v819 = vpop.permute.xlu0 %818
      %vm852 = vcmask 60448
      %853 = vst.msk [vmem:[#allocation2] sm:$0xf] %vm852, %v757
      %854 = vst.msk [vmem:[#allocation2 + $0x4] sm:$0xf] %vm852, %v759
      %855 = vst.msk [vmem:[#allocation2 + $0x8] sm:$0xf] %vm852, %v761
      %856 = vst.msk [vmem:[#allocation2 + $0xc] sm:$0xf] %vm852, %v763
      %857 = vst.msk [vmem:[#allocation2 + $0x10] sm:$0xf] %vm852, %v765
      %858 = vst.msk [vmem:[#allocation2 + $0x14] sm:$0xf] %vm852, %v767
      %859 = vst.msk [vmem:[#allocation2 + $0x18] sm:$0xf] %vm852, %v769
      %860 = vst.msk [vmem:[#allocation2 + $0x1c] sm:$0xf] %vm852, %v771
      %861 = vst.msk [vmem:[#allocation2 + $0x20] sm:$0xf] %vm852, %v773
      %862 = vst.msk [vmem:[#allocation2 + $0x24] sm:$0xf] %vm852, %v775
      %863 = vst.msk [vmem:[#allocation2 + $0x28] sm:$0xf] %vm852, %v777
      %864 = vst.msk [vmem:[#allocation2 + $0x2c] sm:$0xf] %vm852, %v779
      %865 = vst.msk [vmem:[#allocation2 + $0x30] sm:$0xf] %vm852, %v781
      %866 = vst.msk [vmem:[#allocation2 + $0x34] sm:$0xf] %vm852, %v783
      %867 = vst.msk [vmem:[#allocation2 + $0x38] sm:$0xf] %vm852, %v785
      %868 = vst.msk [vmem:[#allocation2 + $0x3c] sm:$0xf] %vm852, %v787
      %869 = vst.msk [vmem:[#allocation2 + $0x40] sm:$0xf] %vm852, %v789
      %870 = vst.msk [vmem:[#allocation2 + $0x44] sm:$0xf] %vm852, %v791
      %871 = vst.msk [vmem:[#allocation2 + $0x48] sm:$0xf] %vm852, %v793
      %872 = vst.msk [vmem:[#allocation2 + $0x4c] sm:$0xf] %vm852, %v795
      %873 = vst.msk [vmem:[#allocation2 + $0x50] sm:$0xf] %vm852, %v797
      %874 = vst.msk [vmem:[#allocation2 + $0x54] sm:$0xf] %vm852, %v799
      %875 = vst.msk [vmem:[#allocation2 + $0x58] sm:$0xf] %vm852, %v801
      %876 = vst.msk [vmem:[#allocation2 + $0x5c] sm:$0xf] %vm852, %v803
      %877 = vst.msk [vmem:[#allocation2 + $0x60] sm:$0xf] %vm852, %v805
      %878 = vst.msk [vmem:[#allocation2 + $0x64] sm:$0xf] %vm852, %v807
      %879 = vst.msk [vmem:[#allocation2 + $0x68] sm:$0xf] %vm852, %v809
      %880 = vst.msk [vmem:[#allocation2 + $0x6c] sm:$0xf] %vm852, %v811
      %881 = vst.msk [vmem:[#allocation2 + $0x70] sm:$0xf] %vm852, %v813
      %882 = vst.msk [vmem:[#allocation2 + $0x74] sm:$0xf] %vm852, %v815
      %883 = vst.msk [vmem:[#allocation2 + $0x78] sm:$0xf] %vm852, %v817
      %884 = vst.msk [vmem:[#allocation2 + $0x7c] sm:$0xf] %vm852, %v819
      %v885 = vld [vmem:[%s243] sm:$0xe]
      %v886 = vld [vmem:[%s243 + $0x4] sm:$0xf]
      %v887 = vld [vmem:[%s243 + $0x8] sm:$0x1]
      %v888 = vld [vmem:[%s243 + $0xc] sm:$0xe]
      %v889 = vld [vmem:[%s243 + $0x10] sm:$0xf]
      %v890 = vld [vmem:[%s243 + $0x14] sm:$0x1]
      %v891 = vld [vmem:[%s243 + $0x18] sm:$0xe]
      %v892 = vld [vmem:[%s243 + $0x1c] sm:$0xf]
      %v893 = vld [vmem:[%s243 + $0x20] sm:$0x1]
      %v894 = vld [vmem:[%s243 + $0x24] sm:$0xe]
      %v895 = vld [vmem:[%s243 + $0x28] sm:$0xf]
      %v896 = vld [vmem:[%s243 + $0x2c] sm:$0x1]
      %v897 = vld [vmem:[%s243 + $0x30] sm:$0xe]
      %v898 = vld [vmem:[%s243 + $0x34] sm:$0xf]
      %v899 = vld [vmem:[%s243 + $0x38] sm:$0x1]
      %v900 = vld [vmem:[%s243 + $0x3c] sm:$0xe]
      %v901 = vld [vmem:[%s243 + $0x40] sm:$0xf]
      %v902 = vld [vmem:[%s243 + $0x44] sm:$0x1]
      %v903 = vld [vmem:[%s243 + $0x48] sm:$0xe]
      %v904 = vld [vmem:[%s243 + $0x4c] sm:$0xf]
      %v905 = vld [vmem:[%s243 + $0x50] sm:$0x1]
      %v906 = vld [vmem:[%s243 + $0x54] sm:$0xe]
      %v907 = vld [vmem:[%s243 + $0x58] sm:$0xf]
      %v908 = vld [vmem:[%s243 + $0x5c] sm:$0x1]
      %v909 = vld [vmem:[%s243 + $0x60] sm:$0xe]
      %v910 = vld [vmem:[%s243 + $0x64] sm:$0xf]
      %v911 = vld [vmem:[%s243 + $0x68] sm:$0x1]
      %v912 = vld [vmem:[%s243 + $0x6c] sm:$0xe]
      %v913 = vld [vmem:[%s243 + $0x70] sm:$0xf]
      %v914 = vld [vmem:[%s243 + $0x74] sm:$0x1]
      %v915 = vld [vmem:[%s243 + $0x78] sm:$0xe]
      %v916 = vld [vmem:[%s243 + $0x7c] sm:$0xf]
      %v917 = vld [vmem:[%s243 + $0x80] sm:$0x1]
      %v918 = vld [vmem:[%s243 + $0x84] sm:$0xe]
      %v919 = vld [vmem:[%s243 + $0x88] sm:$0xf]
      %v920 = vld [vmem:[%s243 + $0x8c] sm:$0x1]
      %v921 = vld [vmem:[%s243 + $0x90] sm:$0xe]
      %v922 = vld [vmem:[%s243 + $0x94] sm:$0xf]
      %v923 = vld [vmem:[%s243 + $0x98] sm:$0x1]
      %v924 = vld [vmem:[%s243 + $0x9c] sm:$0xe]
      %v925 = vld [vmem:[%s243 + $0xa0] sm:$0xf]
      %v926 = vld [vmem:[%s243 + $0xa4] sm:$0x1]
      %v927 = vld [vmem:[%s243 + $0xa8] sm:$0xe]
      %v928 = vld [vmem:[%s243 + $0xac] sm:$0xf]
      %v929 = vld [vmem:[%s243 + $0xb0] sm:$0x1]
      %v930 = vld [vmem:[%s243 + $0xb4] sm:$0xe]
      %v931 = vld [vmem:[%s243 + $0xb8] sm:$0xf]
      %v932 = vld [vmem:[%s243 + $0xbc] sm:$0x1]
      %vm981 = vcmask 1042432
      %vm982 = vcmask 1046532
      %vm983 = vmor %vm981, %vm982
      %v984 = vrot.slane %v885, 5
      %v985 = vrot.slane %v984, 4
      %v986 = vrot.slane %v886, 5
      %v987 = vsel %vm983, %v985, %v986
      %v988 = vrot.slane %v986, 4
      %v989 = vrot.slane %v887, 5
      %v990 = vsel %vm983, %v988, %v989
      %v991 = vrot.slane %v888, 5
      %v992 = vrot.slane %v991, 4
      %v993 = vrot.slane %v889, 5
      %v994 = vsel %vm983, %v992, %v993
      %v995 = vrot.slane %v993, 4
      %v996 = vrot.slane %v890, 5
      %v997 = vsel %vm983, %v995, %v996
      %v998 = vrot.slane %v891, 5
      %v999 = vrot.slane %v998, 4
      %v1000 = vrot.slane %v892, 5
      %v1001 = vsel %vm983, %v999, %v1000
      %v1002 = vrot.slane %v1000, 4
      %v1003 = vrot.slane %v893, 5
      %v1004 = vsel %vm983, %v1002, %v1003
      %v1005 = vrot.slane %v894, 5
      %v1006 = vrot.slane %v1005, 4
      %v1007 = vrot.slane %v895, 5
      %v1008 = vsel %vm983, %v1006, %v1007
      %v1009 = vrot.slane %v1007, 4
      %v1010 = vrot.slane %v896, 5
      %v1011 = vsel %vm983, %v1009, %v1010
      %v1012 = vrot.slane %v897, 5
      %v1013 = vrot.slane %v1012, 4
      %v1014 = vrot.slane %v898, 5
      %v1015 = vsel %vm983, %v1013, %v1014
      %v1016 = vrot.slane %v1014, 4
      %v1017 = vrot.slane %v899, 5
      %v1018 = vsel %vm983, %v1016, %v1017
      %v1019 = vrot.slane %v900, 5
      %v1020 = vrot.slane %v1019, 4
      %v1021 = vrot.slane %v901, 5
      %v1022 = vsel %vm983, %v1020, %v1021
      %v1023 = vrot.slane %v1021, 4
      %v1024 = vrot.slane %v902, 5
      %v1025 = vsel %vm983, %v1023, %v1024
      %v1026 = vrot.slane %v903, 5
      %v1027 = vrot.slane %v1026, 4
      %v1028 = vrot.slane %v904, 5
      %v1029 = vsel %vm983, %v1027, %v1028
      %v1030 = vrot.slane %v1028, 4
      %v1031 = vrot.slane %v905, 5
      %v1032 = vsel %vm983, %v1030, %v1031
      %v1033 = vrot.slane %v906, 5
      %v1034 = vrot.slane %v1033, 4
      %v1035 = vrot.slane %v907, 5
      %v1036 = vsel %vm983, %v1034, %v1035
      %v1037 = vrot.slane %v1035, 4
      %v1038 = vrot.slane %v908, 5
      %v1039 = vsel %vm983, %v1037, %v1038
      %v1040 = vrot.slane %v909, 5
      %v1041 = vrot.slane %v1040, 4
      %v1042 = vrot.slane %v910, 5
      %v1043 = vsel %vm983, %v1041, %v1042
      %v1044 = vrot.slane %v1042, 4
      %v1045 = vrot.slane %v911, 5
      %v1046 = vsel %vm983, %v1044, %v1045
      %v1047 = vrot.slane %v912, 5
      %v1048 = vrot.slane %v1047, 4
      %v1049 = vrot.slane %v913, 5
      %v1050 = vsel %vm983, %v1048, %v1049
      %v1051 = vrot.slane %v1049, 4
      %v1052 = vrot.slane %v914, 5
      %v1053 = vsel %vm983, %v1051, %v1052
      %v1054 = vrot.slane %v915, 5
      %v1055 = vrot.slane %v1054, 4
      %v1056 = vrot.slane %v916, 5
      %v1057 = vsel %vm983, %v1055, %v1056
      %v1058 = vrot.slane %v1056, 4
      %v1059 = vrot.slane %v917, 5
      %v1060 = vsel %vm983, %v1058, %v1059
      %v1061 = vrot.slane %v918, 5
      %v1062 = vrot.slane %v1061, 4
      %v1063 = vrot.slane %v919, 5
      %v1064 = vsel %vm983, %v1062, %v1063
      %v1065 = vrot.slane %v1063, 4
      %v1066 = vrot.slane %v920, 5
      %v1067 = vsel %vm983, %v1065, %v1066
      %v1068 = vrot.slane %v921, 5
      %v1069 = vrot.slane %v1068, 4
      %v1070 = vrot.slane %v922, 5
      %v1071 = vsel %vm983, %v1069, %v1070
      %v1072 = vrot.slane %v1070, 4
      %v1073 = vrot.slane %v923, 5
      %v1074 = vsel %vm983, %v1072, %v1073
      %v1075 = vrot.slane %v924, 5
      %v1076 = vrot.slane %v1075, 4
      %v1077 = vrot.slane %v925, 5
      %v1078 = vsel %vm983, %v1076, %v1077
      %v1079 = vrot.slane %v1077, 4
      %v1080 = vrot.slane %v926, 5
      %v1081 = vsel %vm983, %v1079, %v1080
      %v1082 = vrot.slane %v927, 5
      %v1083 = vrot.slane %v1082, 4
      %v1084 = vrot.slane %v928, 5
      %v1085 = vsel %vm983, %v1083, %v1084
      %v1086 = vrot.slane %v1084, 4
      %v1087 = vrot.slane %v929, 5
      %v1088 = vsel %vm983, %v1086, %v1087
      %v1089 = vrot.slane %v930, 5
      %v1090 = vrot.slane %v1089, 4
      %v1091 = vrot.slane %v931, 5
      %v1092 = vsel %vm983, %v1090, %v1091
      %v1093 = vrot.slane %v1091, 4
      %v1094 = vrot.slane %v932, 5
      %v1095 = vsel %vm983, %v1093, %v1094
      %1096 = vrot.lane.b32.xlu0 %v987, 8
      %v1097 = vpop.permute.xlu0 %1096
      %1098 = vrot.lane.b32.xlu0 %v990, 8
      %v1099 = vpop.permute.xlu0 %1098
      %1100 = vrot.lane.b32.xlu0 %v994, 8
      %v1101 = vpop.permute.xlu0 %1100
      %1102 = vrot.lane.b32.xlu0 %v997, 8
      %v1103 = vpop.permute.xlu0 %1102
      %1104 = vrot.lane.b32.xlu0 %v1001, 8
      %v1105 = vpop.permute.xlu0 %1104
      %1106 = vrot.lane.b32.xlu0 %v1004, 8
      %v1107 = vpop.permute.xlu0 %1106
      %1108 = vrot.lane.b32.xlu0 %v1008, 8
      %v1109 = vpop.permute.xlu0 %1108
      %1110 = vrot.lane.b32.xlu0 %v1011, 8
      %v1111 = vpop.permute.xlu0 %1110
      %1112 = vrot.lane.b32.xlu0 %v1015, 8
      %v1113 = vpop.permute.xlu0 %1112
      %1114 = vrot.lane.b32.xlu0 %v1018, 8
      %v1115 = vpop.permute.xlu0 %1114
      %1116 = vrot.lane.b32.xlu0 %v1022, 8
      %v1117 = vpop.permute.xlu0 %1116
      %1118 = vrot.lane.b32.xlu0 %v1025, 8
      %v1119 = vpop.permute.xlu0 %1118
      %1120 = vrot.lane.b32.xlu0 %v1029, 8
      %v1121 = vpop.permute.xlu0 %1120
      %1122 = vrot.lane.b32.xlu0 %v1032, 8
      %v1123 = vpop.permute.xlu0 %1122
      %1124 = vrot.lane.b32.xlu0 %v1036, 8
      %v1125 = vpop.permute.xlu0 %1124
      %1126 = vrot.lane.b32.xlu0 %v1039, 8
      %v1127 = vpop.permute.xlu0 %1126
      %1128 = vrot.lane.b32.xlu0 %v1043, 8
      %v1129 = vpop.permute.xlu0 %1128
      %1130 = vrot.lane.b32.xlu0 %v1046, 8
      %v1131 = vpop.permute.xlu0 %1130
      %1132 = vrot.lane.b32.xlu0 %v1050, 8
      %v1133 = vpop.permute.xlu0 %1132
      %1134 = vrot.lane.b32.xlu0 %v1053, 8
      %v1135 = vpop.permute.xlu0 %1134
      %1136 = vrot.lane.b32.xlu0 %v1057, 8
      %v1137 = vpop.permute.xlu0 %1136
      %1138 = vrot.lane.b32.xlu0 %v1060, 8
      %v1139 = vpop.permute.xlu0 %1138
      %1140 = vrot.lane.b32.xlu0 %v1064, 8
      %v1141 = vpop.permute.xlu0 %1140
      %1142 = vrot.lane.b32.xlu0 %v1067, 8
      %v1143 = vpop.permute.xlu0 %1142
      %1144 = vrot.lane.b32.xlu0 %v1071, 8
      %v1145 = vpop.permute.xlu0 %1144
      %1146 = vrot.lane.b32.xlu0 %v1074, 8
      %v1147 = vpop.permute.xlu0 %1146
      %1148 = vrot.lane.b32.xlu0 %v1078, 8
      %v1149 = vpop.permute.xlu0 %1148
      %1150 = vrot.lane.b32.xlu0 %v1081, 8
      %v1151 = vpop.permute.xlu0 %1150
      %1152 = vrot.lane.b32.xlu0 %v1085, 8
      %v1153 = vpop.permute.xlu0 %1152
      %1154 = vrot.lane.b32.xlu0 %v1088, 8
      %v1155 = vpop.permute.xlu0 %1154
      %1156 = vrot.lane.b32.xlu0 %v1092, 8
      %v1157 = vpop.permute.xlu0 %1156
      %1158 = vrot.lane.b32.xlu0 %v1095, 8
      %v1159 = vpop.permute.xlu0 %1158
      %vm1192 = vcmask 93248
      %1193 = vst.msk [vmem:[#allocation2] sm:$0xf] %vm1192, %v1097
      %1194 = vst.msk [vmem:[#allocation2 + $0x4] sm:$0xf] %vm1192, %v1099
      %1195 = vst.msk [vmem:[#allocation2 + $0x8] sm:$0xf] %vm1192, %v1101
      %1196 = vst.msk [vmem:[#allocation2 + $0xc] sm:$0xf] %vm1192, %v1103
      %1197 = vst.msk [vmem:[#allocation2 + $0x10] sm:$0xf] %vm1192, %v1105
      %1198 = vst.msk [vmem:[#allocation2 + $0x14] sm:$0xf] %vm1192, %v1107
      %1199 = vst.msk [vmem:[#allocation2 + $0x18] sm:$0xf] %vm1192, %v1109
      %1200 = vst.msk [vmem:[#allocation2 + $0x1c] sm:$0xf] %vm1192, %v1111
      %1201 = vst.msk [vmem:[#allocation2 + $0x20] sm:$0xf] %vm1192, %v1113
      %1202 = vst.msk [vmem:[#allocation2 + $0x24] sm:$0xf] %vm1192, %v1115
      %1203 = vst.msk [vmem:[#allocation2 + $0x28] sm:$0xf] %vm1192, %v1117
      %1204 = vst.msk [vmem:[#allocation2 + $0x2c] sm:$0xf] %vm1192, %v1119
      %1205 = vst.msk [vmem:[#allocation2 + $0x30] sm:$0xf] %vm1192, %v1121
      %1206 = vst.msk [vmem:[#allocation2 + $0x34] sm:$0xf] %vm1192, %v1123
      %1207 = vst.msk [vmem:[#allocation2 + $0x38] sm:$0xf] %vm1192, %v1125
      %1208 = vst.msk [vmem:[#allocation2 + $0x3c] sm:$0xf] %vm1192, %v1127
      %1209 = vst.msk [vmem:[#allocation2 + $0x40] sm:$0xf] %vm1192, %v1129
      %1210 = vst.msk [vmem:[#allocation2 + $0x44] sm:$0xf] %vm1192, %v1131
      %1211 = vst.msk [vmem:[#allocation2 + $0x48] sm:$0xf] %vm1192, %v1133
      %1212 = vst.msk [vmem:[#allocation2 + $0x4c] sm:$0xf] %vm1192, %v1135
      %1213 = vst.msk [vmem:[#allocation2 + $0x50] sm:$0xf] %vm1192, %v1137
      %1214 = vst.msk [vmem:[#allocation2 + $0x54] sm:$0xf] %vm1192, %v1139
      %1215 = vst.msk [vmem:[#allocation2 + $0x58] sm:$0xf] %vm1192, %v1141
      %1216 = vst.msk [vmem:[#allocation2 + $0x5c] sm:$0xf] %vm1192, %v1143
      %1217 = vst.msk [vmem:[#allocation2 + $0x60] sm:$0xf] %vm1192, %v1145
      %1218 = vst.msk [vmem:[#allocation2 + $0x64] sm:$0xf] %vm1192, %v1147
      %1219 = vst.msk [vmem:[#allocation2 + $0x68] sm:$0xf] %vm1192, %v1149
      %1220 = vst.msk [vmem:[#allocation2 + $0x6c] sm:$0xf] %vm1192, %v1151
      %1221 = vst.msk [vmem:[#allocation2 + $0x70] sm:$0xf] %vm1192, %v1153
      %1222 = vst.msk [vmem:[#allocation2 + $0x74] sm:$0xf] %vm1192, %v1155
      %1223 = vst.msk [vmem:[#allocation2 + $0x78] sm:$0xf] %vm1192, %v1157
      %1224 = vst.msk [vmem:[#allocation2 + $0x7c] sm:$0xf] %vm1192, %v1159
      %s1225 = scalar_lea.vmem %s243, 12
      %v1226 = vld [vmem:[%s1225] sm:$0xf]
      %v1227 = vld [vmem:[%s1225 + $0x4] sm:$0xf]
      %v1228 = vld [vmem:[%s1225 + $0xc] sm:$0xf]
      %v1229 = vld [vmem:[%s1225 + $0x10] sm:$0xf]
      %v1230 = vld [vmem:[%s1225 + $0x18] sm:$0xf]
      %v1231 = vld [vmem:[%s1225 + $0x1c] sm:$0xf]
      %v1232 = vld [vmem:[%s1225 + $0x24] sm:$0xf]
      %v1233 = vld [vmem:[%s1225 + $0x28] sm:$0xf]
      %v1234 = vld [vmem:[%s1225 + $0x30] sm:$0xf]
      %v1235 = vld [vmem:[%s1225 + $0x34] sm:$0xf]
      %v1236 = vld [vmem:[%s1225 + $0x3c] sm:$0xf]
      %v1237 = vld [vmem:[%s1225 + $0x40] sm:$0xf]
      %v1238 = vld [vmem:[%s1225 + $0x48] sm:$0xf]
      %v1239 = vld [vmem:[%s1225 + $0x4c] sm:$0xf]
      %v1240 = vld [vmem:[%s1225 + $0x54] sm:$0xf]
      %v1241 = vld [vmem:[%s1225 + $0x58] sm:$0xf]
      %v1242 = vld [vmem:[%s1225 + $0x60] sm:$0xf]
      %v1243 = vld [vmem:[%s1225 + $0x64] sm:$0xf]
      %v1244 = vld [vmem:[%s1225 + $0x6c] sm:$0xf]
      %v1245 = vld [vmem:[%s1225 + $0x70] sm:$0xf]
      %v1246 = vld [vmem:[%s1225 + $0x78] sm:$0xf]
      %v1247 = vld [vmem:[%s1225 + $0x7c] sm:$0xf]
      %v1248 = vld [vmem:[%s1225 + $0x84] sm:$0xf]
      %v1249 = vld [vmem:[%s1225 + $0x88] sm:$0xf]
      %v1250 = vld [vmem:[%s1225 + $0x90] sm:$0xf]
      %v1251 = vld [vmem:[%s1225 + $0x94] sm:$0xf]
      %v1252 = vld [vmem:[%s1225 + $0x9c] sm:$0xf]
      %v1253 = vld [vmem:[%s1225 + $0xa0] sm:$0xf]
      %v1254 = vld [vmem:[%s1225 + $0xa8] sm:$0xf]
      %v1255 = vld [vmem:[%s1225 + $0xac] sm:$0xf]
      %v1256 = vld [vmem:[%s1225 + $0xb4] sm:$0xf]
      %v1257 = vld [vmem:[%s1225 + $0xb8] sm:$0xf]
      %1290 = vrot.lane.b32.xlu0 %v1226, 12
      %v1291 = vpop.permute.xlu0 %1290
      %1292 = vrot.lane.b32.xlu0 %v1227, 12
      %v1293 = vpop.permute.xlu0 %1292
      %1294 = vrot.lane.b32.xlu0 %v1228, 12
      %v1295 = vpop.permute.xlu0 %1294
      %1296 = vrot.lane.b32.xlu0 %v1229, 12
      %v1297 = vpop.permute.xlu0 %1296
      %1298 = vrot.lane.b32.xlu0 %v1230, 12
      %v1299 = vpop.permute.xlu0 %1298
      %1300 = vrot.lane.b32.xlu0 %v1231, 12
      %v1301 = vpop.permute.xlu0 %1300
      %1302 = vrot.lane.b32.xlu0 %v1232, 12
      %v1303 = vpop.permute.xlu0 %1302
      %1304 = vrot.lane.b32.xlu0 %v1233, 12
      %v1305 = vpop.permute.xlu0 %1304
      %1306 = vrot.lane.b32.xlu0 %v1234, 12
      %v1307 = vpop.permute.xlu0 %1306
      %1308 = vrot.lane.b32.xlu0 %v1235, 12
      %v1309 = vpop.permute.xlu0 %1308
      %1310 = vrot.lane.b32.xlu0 %v1236, 12
      %v1311 = vpop.permute.xlu0 %1310
      %1312 = vrot.lane.b32.xlu0 %v1237, 12
      %v1313 = vpop.permute.xlu0 %1312
      %1314 = vrot.lane.b32.xlu0 %v1238, 12
      %v1315 = vpop.permute.xlu0 %1314
      %1316 = vrot.lane.b32.xlu0 %v1239, 12
      %v1317 = vpop.permute.xlu0 %1316
      %1318 = vrot.lane.b32.xlu0 %v1240, 12
      %v1319 = vpop.permute.xlu0 %1318
      %1320 = vrot.lane.b32.xlu0 %v1241, 12
      %v1321 = vpop.permute.xlu0 %1320
      %1322 = vrot.lane.b32.xlu0 %v1242, 12
      %v1323 = vpop.permute.xlu0 %1322
      %1324 = vrot.lane.b32.xlu0 %v1243, 12
      %v1325 = vpop.permute.xlu0 %1324
      %1326 = vrot.lane.b32.xlu0 %v1244, 12
      %v1327 = vpop.permute.xlu0 %1326
      %1328 = vrot.lane.b32.xlu0 %v1245, 12
      %v1329 = vpop.permute.xlu0 %1328
      %1330 = vrot.lane.b32.xlu0 %v1246, 12
      %v1331 = vpop.permute.xlu0 %1330
      %1332 = vrot.lane.b32.xlu0 %v1247, 12
      %v1333 = vpop.permute.xlu0 %1332
      %1334 = vrot.lane.b32.xlu0 %v1248, 12
      %v1335 = vpop.permute.xlu0 %1334
      %1336 = vrot.lane.b32.xlu0 %v1249, 12
      %v1337 = vpop.permute.xlu0 %1336
      %1338 = vrot.lane.b32.xlu0 %v1250, 12
      %v1339 = vpop.permute.xlu0 %1338
      %1340 = vrot.lane.b32.xlu0 %v1251, 12
      %v1341 = vpop.permute.xlu0 %1340
      %1342 = vrot.lane.b32.xlu0 %v1252, 12
      %v1343 = vpop.permute.xlu0 %1342
      %1344 = vrot.lane.b32.xlu0 %v1253, 12
      %v1345 = vpop.permute.xlu0 %1344
      %1346 = vrot.lane.b32.xlu0 %v1254, 12
      %v1347 = vpop.permute.xlu0 %1346
      %1348 = vrot.lane.b32.xlu0 %v1255, 12
      %v1349 = vpop.permute.xlu0 %1348
      %1350 = vrot.lane.b32.xlu0 %v1256, 12
      %v1351 = vpop.permute.xlu0 %1350
      %1352 = vrot.lane.b32.xlu0 %v1257, 12
      %v1353 = vpop.permute.xlu0 %1352
      %vm1386 = vcmask 126048
      %1387 = vst.msk [vmem:[#allocation2] sm:$0xf] %vm1386, %v1291
      %1388 = vst.msk [vmem:[#allocation2 + $0x4] sm:$0xf] %vm1386, %v1293
      %1389 = vst.msk [vmem:[#allocation2 + $0x8] sm:$0xf] %vm1386, %v1295
      %1390 = vst.msk [vmem:[#allocation2 + $0xc] sm:$0xf] %vm1386, %v1297
      %1391 = vst.msk [vmem:[#allocation2 + $0x10] sm:$0xf] %vm1386, %v1299
      %1392 = vst.msk [vmem:[#allocation2 + $0x14] sm:$0xf] %vm1386, %v1301
      %1393 = vst.msk [vmem:[#allocation2 + $0x18] sm:$0xf] %vm1386, %v1303
      %1394 = vst.msk [vmem:[#allocation2 + $0x1c] sm:$0xf] %vm1386, %v1305
      %1395 = vst.msk [vmem:[#allocation2 + $0x20] sm:$0xf] %vm1386, %v1307
      %1396 = vst.msk [vmem:[#allocation2 + $0x24] sm:$0xf] %vm1386, %v1309
      %1397 = vst.msk [vmem:[#allocation2 + $0x28] sm:$0xf] %vm1386, %v1311
      %1398 = vst.msk [vmem:[#allocation2 + $0x2c] sm:$0xf] %vm1386, %v1313
      %1399 = vst.msk [vmem:[#allocation2 + $0x30] sm:$0xf] %vm1386, %v1315
      %1400 = vst.msk [vmem:[#allocation2 + $0x34] sm:$0xf] %vm1386, %v1317
      %1401 = vst.msk [vmem:[#allocation2 + $0x38] sm:$0xf] %vm1386, %v1319
      %1402 = vst.msk [vmem:[#allocation2 + $0x3c] sm:$0xf] %vm1386, %v1321
      %1403 = vst.msk [vmem:[#allocation2 + $0x40] sm:$0xf] %vm1386, %v1323
      %1404 = vst.msk [vmem:[#allocation2 + $0x44] sm:$0xf] %vm1386, %v1325
      %1405 = vst.msk [vmem:[#allocation2 + $0x48] sm:$0xf] %vm1386, %v1327
      %1406 = vst.msk [vmem:[#allocation2 + $0x4c] sm:$0xf] %vm1386, %v1329
      %1407 = vst.msk [vmem:[#allocation2 + $0x50] sm:$0xf] %vm1386, %v1331
      %1408 = vst.msk [vmem:[#allocation2 + $0x54] sm:$0xf] %vm1386, %v1333
      %1409 = vst.msk [vmem:[#allocation2 + $0x58] sm:$0xf] %vm1386, %v1335
      %1410 = vst.msk [vmem:[#allocation2 + $0x5c] sm:$0xf] %vm1386, %v1337
      %1411 = vst.msk [vmem:[#allocation2 + $0x60] sm:$0xf] %vm1386, %v1339
      %1412 = vst.msk [vmem:[#allocation2 + $0x64] sm:$0xf] %vm1386, %v1341
      %1413 = vst.msk [vmem:[#allocation2 + $0x68] sm:$0xf] %vm1386, %v1343
      %1414 = vst.msk [vmem:[#allocation2 + $0x6c] sm:$0xf] %vm1386, %v1345
      %1415 = vst.msk [vmem:[#allocation2 + $0x70] sm:$0xf] %vm1386, %v1347
      %1416 = vst.msk [vmem:[#allocation2 + $0x74] sm:$0xf] %vm1386, %v1349
      %1417 = vst.msk [vmem:[#allocation2 + $0x78] sm:$0xf] %vm1386, %v1351
      %1418 = vst.msk [vmem:[#allocation2 + $0x7c] sm:$0xf] %vm1386, %v1353
      %v1419 = vld [vmem:[%s1225] sm:$0xf]
      %v1420 = vld [vmem:[%s1225 + $0x4] sm:$0xf]
      %v1421 = vld [vmem:[%s1225 + $0x8] sm:$0x1]
      %v1422 = vld [vmem:[%s1225 + $0xc] sm:$0xf]
      %v1423 = vld [vmem:[%s1225 + $0x10] sm:$0xf]
      %v1424 = vld [vmem:[%s1225 + $0x14] sm:$0x1]
      %v1425 = vld [vmem:[%s1225 + $0x18] sm:$0xf]
      %v1426 = vld [vmem:[%s1225 + $0x1c] sm:$0xf]
      %v1427 = vld [vmem:[%s1225 + $0x20] sm:$0x1]
      %v1428 = vld [vmem:[%s1225 + $0x24] sm:$0xf]
      %v1429 = vld [vmem:[%s1225 + $0x28] sm:$0xf]
      %v1430 = vld [vmem:[%s1225 + $0x2c] sm:$0x1]
      %v1431 = vld [vmem:[%s1225 + $0x30] sm:$0xf]
      %v1432 = vld [vmem:[%s1225 + $0x34] sm:$0xf]
      %v1433 = vld [vmem:[%s1225 + $0x38] sm:$0x1]
      %v1434 = vld [vmem:[%s1225 + $0x3c] sm:$0xf]
      %v1435 = vld [vmem:[%s1225 + $0x40] sm:$0xf]
      %v1436 = vld [vmem:[%s1225 + $0x44] sm:$0x1]
      %v1437 = vld [vmem:[%s1225 + $0x48] sm:$0xf]
      %v1438 = vld [vmem:[%s1225 + $0x4c] sm:$0xf]
      %v1439 = vld [vmem:[%s1225 + $0x50] sm:$0x1]
      %v1440 = vld [vmem:[%s1225 + $0x54] sm:$0xf]
      %v1441 = vld [vmem:[%s1225 + $0x58] sm:$0xf]
      %v1442 = vld [vmem:[%s1225 + $0x5c] sm:$0x1]
      %v1443 = vld [vmem:[%s1225 + $0x60] sm:$0xf]
      %v1444 = vld [vmem:[%s1225 + $0x64] sm:$0xf]
      %v1445 = vld [vmem:[%s1225 + $0x68] sm:$0x1]
      %v1446 = vld [vmem:[%s1225 + $0x6c] sm:$0xf]
      %v1447 = vld [vmem:[%s1225 + $0x70] sm:$0xf]
      %v1448 = vld [vmem:[%s1225 + $0x74] sm:$0x1]
      %v1449 = vld [vmem:[%s1225 + $0x78] sm:$0xf]
      %v1450 = vld [vmem:[%s1225 + $0x7c] sm:$0xf]
      %v1451 = vld [vmem:[%s1225 + $0x80] sm:$0x1]
      %v1452 = vld [vmem:[%s1225 + $0x84] sm:$0xf]
      %v1453 = vld [vmem:[%s1225 + $0x88] sm:$0xf]
      %v1454 = vld [vmem:[%s1225 + $0x8c] sm:$0x1]
      %v1455 = vld [vmem:[%s1225 + $0x90] sm:$0xf]
      %v1456 = vld [vmem:[%s1225 + $0x94] sm:$0xf]
      %v1457 = vld [vmem:[%s1225 + $0x98] sm:$0x1]
      %v1458 = vld [vmem:[%s1225 + $0x9c] sm:$0xf]
      %v1459 = vld [vmem:[%s1225 + $0xa0] sm:$0xf]
      %v1460 = vld [vmem:[%s1225 + $0xa4] sm:$0x1]
      %v1461 = vld [vmem:[%s1225 + $0xa8] sm:$0xf]
      %v1462 = vld [vmem:[%s1225 + $0xac] sm:$0xf]
      %v1463 = vld [vmem:[%s1225 + $0xb0] sm:$0x1]
      %v1464 = vld [vmem:[%s1225 + $0xb4] sm:$0xf]
      %v1465 = vld [vmem:[%s1225 + $0xb8] sm:$0xf]
      %v1466 = vld [vmem:[%s1225 + $0xbc] sm:$0x1]
      %v1468 = vshrl.u32 %v1419, 16
      %v1470 = vrot.slane %v1468, 4
      %v1471 = vshll.u32 %v1419, 16
      %v1473 = vrot.slane %v1471, 5
      %v1474 = vor.u32 %v1470, %v1473
      %v1475 = vrot.slane %v1474, 4
      %v1477 = vshll.u32 %v1420, 16
      %v1479 = vrot.slane %v1477, 5
      %v1480 = vsel %vm371, %v1475, %v1479
      %v1481 = vshrl.u32 %v1420, 16
      %v1483 = vrot.slane %v1481, 4
      %v1484 = vor.u32 %v1483, %v1479
      %v1485 = vrot.slane %v1484, 4
      %v1487 = vshll.u32 %v1421, 16
      %v1489 = vrot.slane %v1487, 5
      %v1490 = vsel %vm371, %v1485, %v1489
      %v1492 = vshrl.u32 %v1422, 16
      %v1494 = vrot.slane %v1492, 4
      %v1495 = vshll.u32 %v1422, 16
      %v1497 = vrot.slane %v1495, 5
      %v1498 = vor.u32 %v1494, %v1497
      %v1499 = vrot.slane %v1498, 4
      %v1501 = vshll.u32 %v1423, 16
      %v1503 = vrot.slane %v1501, 5
      %v1504 = vsel %vm371, %v1499, %v1503
      %v1505 = vshrl.u32 %v1423, 16
      %v1507 = vrot.slane %v1505, 4
      %v1508 = vor.u32 %v1507, %v1503
      %v1509 = vrot.slane %v1508, 4
      %v1511 = vshll.u32 %v1424, 16
      %v1513 = vrot.slane %v1511, 5
      %v1514 = vsel %vm371, %v1509, %v1513
      %v1516 = vshrl.u32 %v1425, 16
      %v1518 = vrot.slane %v1516, 4
      %v1519 = vshll.u32 %v1425, 16
      %v1521 = vrot.slane %v1519, 5
      %v1522 = vor.u32 %v1518, %v1521
      %v1523 = vrot.slane %v1522, 4
      %v1525 = vshll.u32 %v1426, 16
      %v1527 = vrot.slane %v1525, 5
      %v1528 = vsel %vm371, %v1523, %v1527
      %v1529 = vshrl.u32 %v1426, 16
      %v1531 = vrot.slane %v1529, 4
      %v1532 = vor.u32 %v1531, %v1527
      %v1533 = vrot.slane %v1532, 4
      %v1535 = vshll.u32 %v1427, 16
      %v1537 = vrot.slane %v1535, 5
      %v1538 = vsel %vm371, %v1533, %v1537
      %v1540 = vshrl.u32 %v1428, 16
      %v1542 = vrot.slane %v1540, 4
      %v1543 = vshll.u32 %v1428, 16
      %v1545 = vrot.slane %v1543, 5
      %v1546 = vor.u32 %v1542, %v1545
      %v1547 = vrot.slane %v1546, 4
      %v1549 = vshll.u32 %v1429, 16
      %v1551 = vrot.slane %v1549, 5
      %v1552 = vsel %vm371, %v1547, %v1551
      %v1553 = vshrl.u32 %v1429, 16
      %v1555 = vrot.slane %v1553, 4
      %v1556 = vor.u32 %v1555, %v1551
      %v1557 = vrot.slane %v1556, 4
      %v1559 = vshll.u32 %v1430, 16
      %v1561 = vrot.slane %v1559, 5
      %v1562 = vsel %vm371, %v1557, %v1561
      %v1564 = vshrl.u32 %v1431, 16
      %v1566 = vrot.slane %v1564, 4
      %v1567 = vshll.u32 %v1431, 16
      %v1569 = vrot.slane %v1567, 5
      %v1570 = vor.u32 %v1566, %v1569
      %v1571 = vrot.slane %v1570, 4
      %v1573 = vshll.u32 %v1432, 16
      %v1575 = vrot.slane %v1573, 5
      %v1576 = vsel %vm371, %v1571, %v1575
      %v1577 = vshrl.u32 %v1432, 16
      %v1579 = vrot.slane %v1577, 4
      %v1580 = vor.u32 %v1579, %v1575
      %v1581 = vrot.slane %v1580, 4
      %v1583 = vshll.u32 %v1433, 16
      %v1585 = vrot.slane %v1583, 5
      %v1586 = vsel %vm371, %v1581, %v1585
      %v1588 = vshrl.u32 %v1434, 16
      %v1590 = vrot.slane %v1588, 4
      %v1591 = vshll.u32 %v1434, 16
      %v1593 = vrot.slane %v1591, 5
      %v1594 = vor.u32 %v1590, %v1593
      %v1595 = vrot.slane %v1594, 4
      %v1597 = vshll.u32 %v1435, 16
      %v1599 = vrot.slane %v1597, 5
      %v1600 = vsel %vm371, %v1595, %v1599
      %v1601 = vshrl.u32 %v1435, 16
      %v1603 = vrot.slane %v1601, 4
      %v1604 = vor.u32 %v1603, %v1599
      %v1605 = vrot.slane %v1604, 4
      %v1607 = vshll.u32 %v1436, 16
      %v1609 = vrot.slane %v1607, 5
      %v1610 = vsel %vm371, %v1605, %v1609
      %v1612 = vshrl.u32 %v1437, 16
      %v1614 = vrot.slane %v1612, 4
      %v1615 = vshll.u32 %v1437, 16
      %v1617 = vrot.slane %v1615, 5
      %v1618 = vor.u32 %v1614, %v1617
      %v1619 = vrot.slane %v1618, 4
      %v1621 = vshll.u32 %v1438, 16
      %v1623 = vrot.slane %v1621, 5
      %v1624 = vsel %vm371, %v1619, %v1623
      %v1625 = vshrl.u32 %v1438, 16
      %v1627 = vrot.slane %v1625, 4
      %v1628 = vor.u32 %v1627, %v1623
      %v1629 = vrot.slane %v1628, 4
      %v1631 = vshll.u32 %v1439, 16
      %v1633 = vrot.slane %v1631, 5
      %v1634 = vsel %vm371, %v1629, %v1633
      %v1636 = vshrl.u32 %v1440, 16
      %v1638 = vrot.slane %v1636, 4
      %v1639 = vshll.u32 %v1440, 16
      %v1641 = vrot.slane %v1639, 5
      %v1642 = vor.u32 %v1638, %v1641
      %v1643 = vrot.slane %v1642, 4
      %v1645 = vshll.u32 %v1441, 16
      %v1647 = vrot.slane %v1645, 5
      %v1648 = vsel %vm371, %v1643, %v1647
      %v1649 = vshrl.u32 %v1441, 16
      %v1651 = vrot.slane %v1649, 4
      %v1652 = vor.u32 %v1651, %v1647
      %v1653 = vrot.slane %v1652, 4
      %v1655 = vshll.u32 %v1442, 16
      %v1657 = vrot.slane %v1655, 5
      %v1658 = vsel %vm371, %v1653, %v1657
      %v1660 = vshrl.u32 %v1443, 16
      %v1662 = vrot.slane %v1660, 4
      %v1663 = vshll.u32 %v1443, 16
      %v1665 = vrot.slane %v1663, 5
      %v1666 = vor.u32 %v1662, %v1665
      %v1667 = vrot.slane %v1666, 4
      %v1669 = vshll.u32 %v1444, 16
      %v1671 = vrot.slane %v1669, 5
      %v1672 = vsel %vm371, %v1667, %v1671
      %v1673 = vshrl.u32 %v1444, 16
      %v1675 = vrot.slane %v1673, 4
      %v1676 = vor.u32 %v1675, %v1671
      %v1677 = vrot.slane %v1676, 4
      %v1679 = vshll.u32 %v1445, 16
      %v1681 = vrot.slane %v1679, 5
      %v1682 = vsel %vm371, %v1677, %v1681
      %v1684 = vshrl.u32 %v1446, 16
      %v1686 = vrot.slane %v1684, 4
      %v1687 = vshll.u32 %v1446, 16
      %v1689 = vrot.slane %v1687, 5
      %v1690 = vor.u32 %v1686, %v1689
      %v1691 = vrot.slane %v1690, 4
      %v1693 = vshll.u32 %v1447, 16
      %v1695 = vrot.slane %v1693, 5
      %v1696 = vsel %vm371, %v1691, %v1695
      %v1697 = vshrl.u32 %v1447, 16
      %v1699 = vrot.slane %v1697, 4
      %v1700 = vor.u32 %v1699, %v1695
      %v1701 = vrot.slane %v1700, 4
      %v1703 = vshll.u32 %v1448, 16
      %v1705 = vrot.slane %v1703, 5
      %v1706 = vsel %vm371, %v1701, %v1705
      %v1708 = vshrl.u32 %v1449, 16
      %v1710 = vrot.slane %v1708, 4
      %v1711 = vshll.u32 %v1449, 16
      %v1713 = vrot.slane %v1711, 5
      %v1714 = vor.u32 %v1710, %v1713
      %v1715 = vrot.slane %v1714, 4
      %v1717 = vshll.u32 %v1450, 16
      %v1719 = vrot.slane %v1717, 5
      %v1720 = vsel %vm371, %v1715, %v1719
      %v1721 = vshrl.u32 %v1450, 16
      %v1723 = vrot.slane %v1721, 4
      %v1724 = vor.u32 %v1723, %v1719
      %v1725 = vrot.slane %v1724, 4
      %v1727 = vshll.u32 %v1451, 16
      %v1729 = vrot.slane %v1727, 5
      %v1730 = vsel %vm371, %v1725, %v1729
      %v1732 = vshrl.u32 %v1452, 16
      %v1734 = vrot.slane %v1732, 4
      %v1735 = vshll.u32 %v1452, 16
      %v1737 = vrot.slane %v1735, 5
      %v1738 = vor.u32 %v1734, %v1737
      %v1739 = vrot.slane %v1738, 4
      %v1741 = vshll.u32 %v1453, 16
      %v1743 = vrot.slane %v1741, 5
      %v1744 = vsel %vm371, %v1739, %v1743
      %v1745 = vshrl.u32 %v1453, 16
      %v1747 = vrot.slane %v1745, 4
      %v1748 = vor.u32 %v1747, %v1743
      %v1749 = vrot.slane %v1748, 4
      %v1751 = vshll.u32 %v1454, 16
      %v1753 = vrot.slane %v1751, 5
      %v1754 = vsel %vm371, %v1749, %v1753
      %v1756 = vshrl.u32 %v1455, 16
      %v1758 = vrot.slane %v1756, 4
      %v1759 = vshll.u32 %v1455, 16
      %v1761 = vrot.slane %v1759, 5
      %v1762 = vor.u32 %v1758, %v1761
      %v1763 = vrot.slane %v1762, 4
      %v1765 = vshll.u32 %v1456, 16
      %v1767 = vrot.slane %v1765, 5
      %v1768 = vsel %vm371, %v1763, %v1767
      %v1769 = vshrl.u32 %v1456, 16
      %v1771 = vrot.slane %v1769, 4
      %v1772 = vor.u32 %v1771, %v1767
      %v1773 = vrot.slane %v1772, 4
      %v1775 = vshll.u32 %v1457, 16
      %v1777 = vrot.slane %v1775, 5
      %v1778 = vsel %vm371, %v1773, %v1777
      %v1780 = vshrl.u32 %v1458, 16
      %v1782 = vrot.slane %v1780, 4
      %v1783 = vshll.u32 %v1458, 16
      %v1785 = vrot.slane %v1783, 5
      %v1786 = vor.u32 %v1782, %v1785
      %v1787 = vrot.slane %v1786, 4
      %v1789 = vshll.u32 %v1459, 16
      %v1791 = vrot.slane %v1789, 5
      %v1792 = vsel %vm371, %v1787, %v1791
      %v1793 = vshrl.u32 %v1459, 16
      %v1795 = vrot.slane %v1793, 4
      %v1796 = vor.u32 %v1795, %v1791
      %v1797 = vrot.slane %v1796, 4
      %v1799 = vshll.u32 %v1460, 16
      %v1801 = vrot.slane %v1799, 5
      %v1802 = vsel %vm371, %v1797, %v1801
      %v1804 = vshrl.u32 %v1461, 16
      %v1806 = vrot.slane %v1804, 4
      %v1807 = vshll.u32 %v1461, 16
      %v1809 = vrot.slane %v1807, 5
      %v1810 = vor.u32 %v1806, %v1809
      %v1811 = vrot.slane %v1810, 4
      %v1813 = vshll.u32 %v1462, 16
      %v1815 = vrot.slane %v1813, 5
      %v1816 = vsel %vm371, %v1811, %v1815
      %v1817 = vshrl.u32 %v1462, 16
      %v1819 = vrot.slane %v1817, 4
      %v1820 = vor.u32 %v1819, %v1815
      %v1821 = vrot.slane %v1820, 4
      %v1823 = vshll.u32 %v1463, 16
      %v1825 = vrot.slane %v1823, 5
      %v1826 = vsel %vm371, %v1821, %v1825
      %v1828 = vshrl.u32 %v1464, 16
      %v1830 = vrot.slane %v1828, 4
      %v1831 = vshll.u32 %v1464, 16
      %v1833 = vrot.slane %v1831, 5
      %v1834 = vor.u32 %v1830, %v1833
      %v1835 = vrot.slane %v1834, 4
      %v1837 = vshll.u32 %v1465, 16
      %v1839 = vrot.slane %v1837, 5
      %v1840 = vsel %vm371, %v1835, %v1839
      %v1841 = vshrl.u32 %v1465, 16
      %v1843 = vrot.slane %v1841, 4
      %v1844 = vor.u32 %v1843, %v1839
      %v1845 = vrot.slane %v1844, 4
      %v1847 = vshll.u32 %v1466, 16
      %v1849 = vrot.slane %v1847, 5
      %v1850 = vsel %vm371, %v1845, %v1849
      %1851 = vrot.lane.b32.xlu0 %v1480, 16
      %v1852 = vpop.permute.xlu0 %1851
      %1853 = vrot.lane.b32.xlu0 %v1490, 16
      %v1854 = vpop.permute.xlu0 %1853
      %1855 = vrot.lane.b32.xlu0 %v1504, 16
      %v1856 = vpop.permute.xlu0 %1855
      %1857 = vrot.lane.b32.xlu0 %v1514, 16
      %v1858 = vpop.permute.xlu0 %1857
      %1859 = vrot.lane.b32.xlu0 %v1528, 16
      %v1860 = vpop.permute.xlu0 %1859
      %1861 = vrot.lane.b32.xlu0 %v1538, 16
      %v1862 = vpop.permute.xlu0 %1861
      %1863 = vrot.lane.b32.xlu0 %v1552, 16
      %v1864 = vpop.permute.xlu0 %1863
      %1865 = vrot.lane.b32.xlu0 %v1562, 16
      %v1866 = vpop.permute.xlu0 %1865
      %1867 = vrot.lane.b32.xlu0 %v1576, 16
      %v1868 = vpop.permute.xlu0 %1867
      %1869 = vrot.lane.b32.xlu0 %v1586, 16
      %v1870 = vpop.permute.xlu0 %1869
      %1871 = vrot.lane.b32.xlu0 %v1600, 16
      %v1872 = vpop.permute.xlu0 %1871
      %1873 = vrot.lane.b32.xlu0 %v1610, 16
      %v1874 = vpop.permute.xlu0 %1873
      %1875 = vrot.lane.b32.xlu0 %v1624, 16
      %v1876 = vpop.permute.xlu0 %1875
      %1877 = vrot.lane.b32.xlu0 %v1634, 16
      %v1878 = vpop.permute.xlu0 %1877
      %1879 = vrot.lane.b32.xlu0 %v1648, 16
      %v1880 = vpop.permute.xlu0 %1879
      %1881 = vrot.lane.b32.xlu0 %v1658, 16
      %v1882 = vpop.permute.xlu0 %1881
      %1883 = vrot.lane.b32.xlu0 %v1672, 16
      %v1884 = vpop.permute.xlu0 %1883
      %1885 = vrot.lane.b32.xlu0 %v1682, 16
      %v1886 = vpop.permute.xlu0 %1885
      %1887 = vrot.lane.b32.xlu0 %v1696, 16
      %v1888 = vpop.permute.xlu0 %1887
      %1889 = vrot.lane.b32.xlu0 %v1706, 16
      %v1890 = vpop.permute.xlu0 %1889
      %1891 = vrot.lane.b32.xlu0 %v1720, 16
      %v1892 = vpop.permute.xlu0 %1891
      %1893 = vrot.lane.b32.xlu0 %v1730, 16
      %v1894 = vpop.permute.xlu0 %1893
      %1895 = vrot.lane.b32.xlu0 %v1744, 16
      %v1896 = vpop.permute.xlu0 %1895
      %1897 = vrot.lane.b32.xlu0 %v1754, 16
      %v1898 = vpop.permute.xlu0 %1897
      %1899 = vrot.lane.b32.xlu0 %v1768, 16
      %v1900 = vpop.permute.xlu0 %1899
      %1901 = vrot.lane.b32.xlu0 %v1778, 16
      %v1902 = vpop.permute.xlu0 %1901
      %1903 = vrot.lane.b32.xlu0 %v1792, 16
      %v1904 = vpop.permute.xlu0 %1903
      %1905 = vrot.lane.b32.xlu0 %v1802, 16
      %v1906 = vpop.permute.xlu0 %1905
      %1907 = vrot.lane.b32.xlu0 %v1816, 16
      %v1908 = vpop.permute.xlu0 %1907
      %1909 = vrot.lane.b32.xlu0 %v1826, 16
      %v1910 = vpop.permute.xlu0 %1909
      %1911 = vrot.lane.b32.xlu0 %v1840, 16
      %v1912 = vpop.permute.xlu0 %1911
      %1913 = vrot.lane.b32.xlu0 %v1850, 16
      %v1914 = vpop.permute.xlu0 %1913
      %vm1947 = vcmask 158848
      %1948 = vst.msk [vmem:[#allocation2] sm:$0xf] %vm1947, %v1852
      %1949 = vst.msk [vmem:[#allocation2 + $0x4] sm:$0xf] %vm1947, %v1854
      %1950 = vst.msk [vmem:[#allocation2 + $0x8] sm:$0xf] %vm1947, %v1856
      %1951 = vst.msk [vmem:[#allocation2 + $0xc] sm:$0xf] %vm1947, %v1858
      %1952 = vst.msk [vmem:[#allocation2 + $0x10] sm:$0xf] %vm1947, %v1860
      %1953 = vst.msk [vmem:[#allocation2 + $0x14] sm:$0xf] %vm1947, %v1862
      %1954 = vst.msk [vmem:[#allocation2 + $0x18] sm:$0xf] %vm1947, %v1864
      %1955 = vst.msk [vmem:[#allocation2 + $0x1c] sm:$0xf] %vm1947, %v1866
      %1956 = vst.msk [vmem:[#allocation2 + $0x20] sm:$0xf] %vm1947, %v1868
      %1957 = vst.msk [vmem:[#allocation2 + $0x24] sm:$0xf] %vm1947, %v1870
      %1958 = vst.msk [vmem:[#allocation2 + $0x28] sm:$0xf] %vm1947, %v1872
      %1959 = vst.msk [vmem:[#allocation2 + $0x2c] sm:$0xf] %vm1947, %v1874
      %1960 = vst.msk [vmem:[#allocation2 + $0x30] sm:$0xf] %vm1947, %v1876
      %1961 = vst.msk [vmem:[#allocation2 + $0x34] sm:$0xf] %vm1947, %v1878
      %1962 = vst.msk [vmem:[#allocation2 + $0x38] sm:$0xf] %vm1947, %v1880
      %1963 = vst.msk [vmem:[#allocation2 + $0x3c] sm:$0xf] %vm1947, %v1882
      %1964 = vst.msk [vmem:[#allocation2 + $0x40] sm:$0xf] %vm1947, %v1884
      %1965 = vst.msk [vmem:[#allocation2 + $0x44] sm:$0xf] %vm1947, %v1886
      %1966 = vst.msk [vmem:[#allocation2 + $0x48] sm:$0xf] %vm1947, %v1888
      %1967 = vst.msk [vmem:[#allocation2 + $0x4c] sm:$0xf] %vm1947, %v1890
      %1968 = vst.msk [vmem:[#allocation2 + $0x50] sm:$0xf] %vm1947, %v1892
      %1969 = vst.msk [vmem:[#allocation2 + $0x54] sm:$0xf] %vm1947, %v1894
      %1970 = vst.msk [vmem:[#allocation2 + $0x58] sm:$0xf] %vm1947, %v1896
      %1971 = vst.msk [vmem:[#allocation2 + $0x5c] sm:$0xf] %vm1947, %v1898
      %1972 = vst.msk [vmem:[#allocation2 + $0x60] sm:$0xf] %vm1947, %v1900
      %1973 = vst.msk [vmem:[#allocation2 + $0x64] sm:$0xf] %vm1947, %v1902
      %1974 = vst.msk [vmem:[#allocation2 + $0x68] sm:$0xf] %vm1947, %v1904
      %1975 = vst.msk [vmem:[#allocation2 + $0x6c] sm:$0xf] %vm1947, %v1906
      %1976 = vst.msk [vmem:[#allocation2 + $0x70] sm:$0xf] %vm1947, %v1908
      %1977 = vst.msk [vmem:[#allocation2 + $0x74] sm:$0xf] %vm1947, %v1910
      %1978 = vst.msk [vmem:[#allocation2 + $0x78] sm:$0xf] %vm1947, %v1912
      %1979 = vst.msk [vmem:[#allocation2 + $0x7c] sm:$0xf] %vm1947, %v1914
      %v1980 = vld [vmem:[%s1225] sm:$0xe]
      %v1981 = vld [vmem:[%s1225 + $0x4] sm:$0xf]
      %v1982 = vld [vmem:[%s1225 + $0x8] sm:$0x1]
      %v1983 = vld [vmem:[%s1225 + $0xc] sm:$0xe]
      %v1984 = vld [vmem:[%s1225 + $0x10] sm:$0xf]
      %v1985 = vld [vmem:[%s1225 + $0x14] sm:$0x1]
      %v1986 = vld [vmem:[%s1225 + $0x18] sm:$0xe]
      %v1987 = vld [vmem:[%s1225 + $0x1c] sm:$0xf]
      %v1988 = vld [vmem:[%s1225 + $0x20] sm:$0x1]
      %v1989 = vld [vmem:[%s1225 + $0x24] sm:$0xe]
      %v1990 = vld [vmem:[%s1225 + $0x28] sm:$0xf]
      %v1991 = vld [vmem:[%s1225 + $0x2c] sm:$0x1]
      %v1992 = vld [vmem:[%s1225 + $0x30] sm:$0xe]
      %v1993 = vld [vmem:[%s1225 + $0x34] sm:$0xf]
      %v1994 = vld [vmem:[%s1225 + $0x38] sm:$0x1]
      %v1995 = vld [vmem:[%s1225 + $0x3c] sm:$0xe]
      %v1996 = vld [vmem:[%s1225 + $0x40] sm:$0xf]
      %v1997 = vld [vmem:[%s1225 + $0x44] sm:$0x1]
      %v1998 = vld [vmem:[%s1225 + $0x48] sm:$0xe]
      %v1999 = vld [vmem:[%s1225 + $0x4c] sm:$0xf]
      %v2000 = vld [vmem:[%s1225 + $0x50] sm:$0x1]
      %v2001 = vld [vmem:[%s1225 + $0x54] sm:$0xe]
      %v2002 = vld [vmem:[%s1225 + $0x58] sm:$0xf]
      %v2003 = vld [vmem:[%s1225 + $0x5c] sm:$0x1]
      %v2004 = vld [vmem:[%s1225 + $0x60] sm:$0xe]
      %v2005 = vld [vmem:[%s1225 + $0x64] sm:$0xf]
      %v2006 = vld [vmem:[%s1225 + $0x68] sm:$0x1]
      %v2007 = vld [vmem:[%s1225 + $0x6c] sm:$0xe]
      %v2008 = vld [vmem:[%s1225 + $0x70] sm:$0xf]
      %v2009 = vld [vmem:[%s1225 + $0x74] sm:$0x1]
      %v2010 = vld [vmem:[%s1225 + $0x78] sm:$0xe]
      %v2011 = vld [vmem:[%s1225 + $0x7c] sm:$0xf]
      %v2012 = vld [vmem:[%s1225 + $0x80] sm:$0x1]
      %v2013 = vld [vmem:[%s1225 + $0x84] sm:$0xe]
      %v2014 = vld [vmem:[%s1225 + $0x88] sm:$0xf]
      %v2015 = vld [vmem:[%s1225 + $0x8c] sm:$0x1]
      %v2016 = vld [vmem:[%s1225 + $0x90] sm:$0xe]
      %v2017 = vld [vmem:[%s1225 + $0x94] sm:$0xf]
      %v2018 = vld [vmem:[%s1225 + $0x98] sm:$0x1]
      %v2019 = vld [vmem:[%s1225 + $0x9c] sm:$0xe]
      %v2020 = vld [vmem:[%s1225 + $0xa0] sm:$0xf]
      %v2021 = vld [vmem:[%s1225 + $0xa4] sm:$0x1]
      %v2022 = vld [vmem:[%s1225 + $0xa8] sm:$0xe]
      %v2023 = vld [vmem:[%s1225 + $0xac] sm:$0xf]
      %v2024 = vld [vmem:[%s1225 + $0xb0] sm:$0x1]
      %v2025 = vld [vmem:[%s1225 + $0xb4] sm:$0xe]
      %v2026 = vld [vmem:[%s1225 + $0xb8] sm:$0xf]
      %v2027 = vld [vmem:[%s1225 + $0xbc] sm:$0x1]
      %v2076 = vrot.slane %v1980, 5
      %v2077 = vrot.slane %v2076, 4
      %v2078 = vrot.slane %v1981, 5
      %v2079 = vsel %vm983, %v2077, %v2078
      %v2080 = vrot.slane %v2078, 4
      %v2081 = vrot.slane %v1982, 5
      %v2082 = vsel %vm983, %v2080, %v2081
      %v2083 = vrot.slane %v1983, 5
      %v2084 = vrot.slane %v2083, 4
      %v2085 = vrot.slane %v1984, 5
      %v2086 = vsel %vm983, %v2084, %v2085
      %v2087 = vrot.slane %v2085, 4
      %v2088 = vrot.slane %v1985, 5
      %v2089 = vsel %vm983, %v2087, %v2088
      %v2090 = vrot.slane %v1986, 5
      %v2091 = vrot.slane %v2090, 4
      %v2092 = vrot.slane %v1987, 5
      %v2093 = vsel %vm983, %v2091, %v2092
      %v2094 = vrot.slane %v2092, 4
      %v2095 = vrot.slane %v1988, 5
      %v2096 = vsel %vm983, %v2094, %v2095
      %v2097 = vrot.slane %v1989, 5
      %v2098 = vrot.slane %v2097, 4
      %v2099 = vrot.slane %v1990, 5
      %v2100 = vsel %vm983, %v2098, %v2099
      %v2101 = vrot.slane %v2099, 4
      %v2102 = vrot.slane %v1991, 5
      %v2103 = vsel %vm983, %v2101, %v2102
      %v2104 = vrot.slane %v1992, 5
      %v2105 = vrot.slane %v2104, 4
      %v2106 = vrot.slane %v1993, 5
      %v2107 = vsel %vm983, %v2105, %v2106
      %v2108 = vrot.slane %v2106, 4
      %v2109 = vrot.slane %v1994, 5
      %v2110 = vsel %vm983, %v2108, %v2109
      %v2111 = vrot.slane %v1995, 5
      %v2112 = vrot.slane %v2111, 4
      %v2113 = vrot.slane %v1996, 5
      %v2114 = vsel %vm983, %v2112, %v2113
      %v2115 = vrot.slane %v2113, 4
      %v2116 = vrot.slane %v1997, 5
      %v2117 = vsel %vm983, %v2115, %v2116
      %v2118 = vrot.slane %v1998, 5
      %v2119 = vrot.slane %v2118, 4
      %v2120 = vrot.slane %v1999, 5
      %v2121 = vsel %vm983, %v2119, %v2120
      %v2122 = vrot.slane %v2120, 4
      %v2123 = vrot.slane %v2000, 5
      %v2124 = vsel %vm983, %v2122, %v2123
      %v2125 = vrot.slane %v2001, 5
      %v2126 = vrot.slane %v2125, 4
      %v2127 = vrot.slane %v2002, 5
      %v2128 = vsel %vm983, %v2126, %v2127
      %v2129 = vrot.slane %v2127, 4
      %v2130 = vrot.slane %v2003, 5
      %v2131 = vsel %vm983, %v2129, %v2130
      %v2132 = vrot.slane %v2004, 5
      %v2133 = vrot.slane %v2132, 4
      %v2134 = vrot.slane %v2005, 5
      %v2135 = vsel %vm983, %v2133, %v2134
      %v2136 = vrot.slane %v2134, 4
      %v2137 = vrot.slane %v2006, 5
      %v2138 = vsel %vm983, %v2136, %v2137
      %v2139 = vrot.slane %v2007, 5
      %v2140 = vrot.slane %v2139, 4
      %v2141 = vrot.slane %v2008, 5
      %v2142 = vsel %vm983, %v2140, %v2141
      %v2143 = vrot.slane %v2141, 4
      %v2144 = vrot.slane %v2009, 5
      %v2145 = vsel %vm983, %v2143, %v2144
      %v2146 = vrot.slane %v2010, 5
      %v2147 = vrot.slane %v2146, 4
      %v2148 = vrot.slane %v2011, 5
      %v2149 = vsel %vm983, %v2147, %v2148
      %v2150 = vrot.slane %v2148, 4
      %v2151 = vrot.slane %v2012, 5
      %v2152 = vsel %vm983, %v2150, %v2151
      %v2153 = vrot.slane %v2013, 5
      %v2154 = vrot.slane %v2153, 4
      %v2155 = vrot.slane %v2014, 5
      %v2156 = vsel %vm983, %v2154, %v2155
      %v2157 = vrot.slane %v2155, 4
      %v2158 = vrot.slane %v2015, 5
      %v2159 = vsel %vm983, %v2157, %v2158
      %v2160 = vrot.slane %v2016, 5
      %v2161 = vrot.slane %v2160, 4
      %v2162 = vrot.slane %v2017, 5
      %v2163 = vsel %vm983, %v2161, %v2162
      %v2164 = vrot.slane %v2162, 4
      %v2165 = vrot.slane %v2018, 5
      %v2166 = vsel %vm983, %v2164, %v2165
      %v2167 = vrot.slane %v2019, 5
      %v2168 = vrot.slane %v2167, 4
      %v2169 = vrot.slane %v2020, 5
      %v2170 = vsel %vm983, %v2168, %v2169
      %v2171 = vrot.slane %v2169, 4
      %v2172 = vrot.slane %v2021, 5
      %v2173 = vsel %vm983, %v2171, %v2172
      %v2174 = vrot.slane %v2022, 5
      %v2175 = vrot.slane %v2174, 4
      %v2176 = vrot.slane %v2023, 5
      %v2177 = vsel %vm983, %v2175, %v2176
      %v2178 = vrot.slane %v2176, 4
      %v2179 = vrot.slane %v2024, 5
      %v2180 = vsel %vm983, %v2178, %v2179
      %v2181 = vrot.slane %v2025, 5
      %v2182 = vrot.slane %v2181, 4
      %v2183 = vrot.slane %v2026, 5
      %v2184 = vsel %vm983, %v2182, %v2183
      %v2185 = vrot.slane %v2183, 4
      %v2186 = vrot.slane %v2027, 5
      %v2187 = vsel %vm983, %v2185, %v2186
      %2188 = vrot.lane.b32.xlu0 %v2079, 20
      %v2189 = vpop.permute.xlu0 %2188
      %2190 = vrot.lane.b32.xlu0 %v2082, 20
      %v2191 = vpop.permute.xlu0 %2190
      %2192 = vrot.lane.b32.xlu0 %v2086, 20
      %v2193 = vpop.permute.xlu0 %2192
      %2194 = vrot.lane.b32.xlu0 %v2089, 20
      %v2195 = vpop.permute.xlu0 %2194
      %2196 = vrot.lane.b32.xlu0 %v2093, 20
      %v2197 = vpop.permute.xlu0 %2196
      %2198 = vrot.lane.b32.xlu0 %v2096, 20
      %v2199 = vpop.permute.xlu0 %2198
      %2200 = vrot.lane.b32.xlu0 %v2100, 20
      %v2201 = vpop.permute.xlu0 %2200
      %2202 = vrot.lane.b32.xlu0 %v2103, 20
      %v2203 = vpop.permute.xlu0 %2202
      %2204 = vrot.lane.b32.xlu0 %v2107, 20
      %v2205 = vpop.permute.xlu0 %2204
      %2206 = vrot.lane.b32.xlu0 %v2110, 20
      %v2207 = vpop.permute.xlu0 %2206
      %2208 = vrot.lane.b32.xlu0 %v2114, 20
      %v2209 = vpop.permute.xlu0 %2208
      %2210 = vrot.lane.b32.xlu0 %v2117, 20
      %v2211 = vpop.permute.xlu0 %2210
      %2212 = vrot.lane.b32.xlu0 %v2121, 20
      %v2213 = vpop.permute.xlu0 %2212
      %2214 = vrot.lane.b32.xlu0 %v2124, 20
      %v2215 = vpop.permute.xlu0 %2214
      %2216 = vrot.lane.b32.xlu0 %v2128, 20
      %v2217 = vpop.permute.xlu0 %2216
      %2218 = vrot.lane.b32.xlu0 %v2131, 20
      %v2219 = vpop.permute.xlu0 %2218
      %2220 = vrot.lane.b32.xlu0 %v2135, 20
      %v2221 = vpop.permute.xlu0 %2220
      %2222 = vrot.lane.b32.xlu0 %v2138, 20
      %v2223 = vpop.permute.xlu0 %2222
      %2224 = vrot.lane.b32.xlu0 %v2142, 20
      %v2225 = vpop.permute.xlu0 %2224
      %2226 = vrot.lane.b32.xlu0 %v2145, 20
      %v2227 = vpop.permute.xlu0 %2226
      %2228 = vrot.lane.b32.xlu0 %v2149, 20
      %v2229 = vpop.permute.xlu0 %2228
      %2230 = vrot.lane.b32.xlu0 %v2152, 20
      %v2231 = vpop.permute.xlu0 %2230
      %2232 = vrot.lane.b32.xlu0 %v2156, 20
      %v2233 = vpop.permute.xlu0 %2232
      %2234 = vrot.lane.b32.xlu0 %v2159, 20
      %v2235 = vpop.permute.xlu0 %2234
      %2236 = vrot.lane.b32.xlu0 %v2163, 20
      %v2237 = vpop.permute.xlu0 %2236
      %2238 = vrot.lane.b32.xlu0 %v2166, 20
      %v2239 = vpop.permute.xlu0 %2238
      %2240 = vrot.lane.b32.xlu0 %v2170, 20
      %v2241 = vpop.permute.xlu0 %2240
      %2242 = vrot.lane.b32.xlu0 %v2173, 20
      %v2243 = vpop.permute.xlu0 %2242
      %2244 = vrot.lane.b32.xlu0 %v2177, 20
      %v2245 = vpop.permute.xlu0 %2244
      %2246 = vrot.lane.b32.xlu0 %v2180, 20
      %v2247 = vpop.permute.xlu0 %2246
      %2248 = vrot.lane.b32.xlu0 %v2184, 20
      %v2249 = vpop.permute.xlu0 %2248
      %2250 = vrot.lane.b32.xlu0 %v2187, 20
      %v2251 = vpop.permute.xlu0 %2250
      %vm2284 = vcmask 191648
      %2285 = vst.msk [vmem:[#allocation2] sm:$0xf] %vm2284, %v2189
      %2286 = vst.msk [vmem:[#allocation2 + $0x4] sm:$0xf] %vm2284, %v2191
      %2287 = vst.msk [vmem:[#allocation2 + $0x8] sm:$0xf] %vm2284, %v2193
      %2288 = vst.msk [vmem:[#allocation2 + $0xc] sm:$0xf] %vm2284, %v2195
      %2289 = vst.msk [vmem:[#allocation2 + $0x10] sm:$0xf] %vm2284, %v2197
      %2290 = vst.msk [vmem:[#allocation2 + $0x14] sm:$0xf] %vm2284, %v2199
      %2291 = vst.msk [vmem:[#allocation2 + $0x18] sm:$0xf] %vm2284, %v2201
      %2292 = vst.msk [vmem:[#allocation2 + $0x1c] sm:$0xf] %vm2284, %v2203
      %2293 = vst.msk [vmem:[#allocation2 + $0x20] sm:$0xf] %vm2284, %v2205
      %2294 = vst.msk [vmem:[#allocation2 + $0x24] sm:$0xf] %vm2284, %v2207
      %2295 = vst.msk [vmem:[#allocation2 + $0x28] sm:$0xf] %vm2284, %v2209
      %2296 = vst.msk [vmem:[#allocation2 + $0x2c] sm:$0xf] %vm2284, %v2211
      %2297 = vst.msk [vmem:[#allocation2 + $0x30] sm:$0xf] %vm2284, %v2213
      %2298 = vst.msk [vmem:[#allocation2 + $0x34] sm:$0xf] %vm2284, %v2215
      %2299 = vst.msk [vmem:[#allocation2 + $0x38] sm:$0xf] %vm2284, %v2217
      %2300 = vst.msk [vmem:[#allocation2 + $0x3c] sm:$0xf] %vm2284, %v2219
      %2301 = vst.msk [vmem:[#allocation2 + $0x40] sm:$0xf] %vm2284, %v2221
      %2302 = vst.msk [vmem:[#allocation2 + $0x44] sm:$0xf] %vm2284, %v2223
      %2303 = vst.msk [vmem:[#allocation2 + $0x48] sm:$0xf] %vm2284, %v2225
      %2304 = vst.msk [vmem:[#allocation2 + $0x4c] sm:$0xf] %vm2284, %v2227
      %2305 = vst.msk [vmem:[#allocation2 + $0x50] sm:$0xf] %vm2284, %v2229
      %2306 = vst.msk [vmem:[#allocation2 + $0x54] sm:$0xf] %vm2284, %v2231
      %2307 = vst.msk [vmem:[#allocation2 + $0x58] sm:$0xf] %vm2284, %v2233
      %2308 = vst.msk [vmem:[#allocation2 + $0x5c] sm:$0xf] %vm2284, %v2235
      %2309 = vst.msk [vmem:[#allocation2 + $0x60] sm:$0xf] %vm2284, %v2237
      %2310 = vst.msk [vmem:[#allocation2 + $0x64] sm:$0xf] %vm2284, %v2239
      %2311 = vst.msk [vmem:[#allocation2 + $0x68] sm:$0xf] %vm2284, %v2241
      %2312 = vst.msk [vmem:[#allocation2 + $0x6c] sm:$0xf] %vm2284, %v2243
      %2313 = vst.msk [vmem:[#allocation2 + $0x70] sm:$0xf] %vm2284, %v2245
      %2314 = vst.msk [vmem:[#allocation2 + $0x74] sm:$0xf] %vm2284, %v2247
      %2315 = vst.msk [vmem:[#allocation2 + $0x78] sm:$0xf] %vm2284, %v2249
      %2316 = vst.msk [vmem:[#allocation2 + $0x7c] sm:$0xf] %vm2284, %v2251
      %s2317 = scalar_lea.vmem %s243, 24
      %v2318 = vld [vmem:[%s2317] sm:$0xf]
      %v2319 = vld [vmem:[%s2317 + $0x4] sm:$0xf]
      %v2320 = vld [vmem:[%s2317 + $0xc] sm:$0xf]
      %v2321 = vld [vmem:[%s2317 + $0x10] sm:$0xf]
      %v2322 = vld [vmem:[%s2317 + $0x18] sm:$0xf]
      %v2323 = vld [vmem:[%s2317 + $0x1c] sm:$0xf]
      %v2324 = vld [vmem:[%s2317 + $0x24] sm:$0xf]
      %v2325 = vld [vmem:[%s2317 + $0x28] sm:$0xf]
      %v2326 = vld [vmem:[%s2317 + $0x30] sm:$0xf]
      %v2327 = vld [vmem:[%s2317 + $0x34] sm:$0xf]
      %v2328 = vld [vmem:[%s2317 + $0x3c] sm:$0xf]
      %v2329 = vld [vmem:[%s2317 + $0x40] sm:$0xf]
      %v2330 = vld [vmem:[%s2317 + $0x48] sm:$0xf]
      %v2331 = vld [vmem:[%s2317 + $0x4c] sm:$0xf]
      %v2332 = vld [vmem:[%s2317 + $0x54] sm:$0xf]
      %v2333 = vld [vmem:[%s2317 + $0x58] sm:$0xf]
      %v2334 = vld [vmem:[%s2317 + $0x60] sm:$0xf]
      %v2335 = vld [vmem:[%s2317 + $0x64] sm:$0xf]
      %v2336 = vld [vmem:[%s2317 + $0x6c] sm:$0xf]
      %v2337 = vld [vmem:[%s2317 + $0x70] sm:$0xf]
      %v2338 = vld [vmem:[%s2317 + $0x78] sm:$0xf]
      %v2339 = vld [vmem:[%s2317 + $0x7c] sm:$0xf]
      %v2340 = vld [vmem:[%s2317 + $0x84] sm:$0xf]
      %v2341 = vld [vmem:[%s2317 + $0x88] sm:$0xf]
      %v2342 = vld [vmem:[%s2317 + $0x90] sm:$0xf]
      %v2343 = vld [vmem:[%s2317 + $0x94] sm:$0xf]
      %v2344 = vld [vmem:[%s2317 + $0x9c] sm:$0xf]
      %v2345 = vld [vmem:[%s2317 + $0xa0] sm:$0xf]
      %v2346 = vld [vmem:[%s2317 + $0xa8] sm:$0xf]
      %v2347 = vld [vmem:[%s2317 + $0xac] sm:$0xf]
      %v2348 = vld [vmem:[%s2317 + $0xb4] sm:$0xf]
      %v2349 = vld [vmem:[%s2317 + $0xb8] sm:$0xf]
      %2382 = vrot.lane.b32.xlu0 %v2318, 24
      %v2383 = vpop.permute.xlu0 %2382
      %2384 = vrot.lane.b32.xlu0 %v2319, 24
      %v2385 = vpop.permute.xlu0 %2384
      %2386 = vrot.lane.b32.xlu0 %v2320, 24
      %v2387 = vpop.permute.xlu0 %2386
      %2388 = vrot.lane.b32.xlu0 %v2321, 24
      %v2389 = vpop.permute.xlu0 %2388
      %2390 = vrot.lane.b32.xlu0 %v2322, 24
      %v2391 = vpop.permute.xlu0 %2390
      %2392 = vrot.lane.b32.xlu0 %v2323, 24
      %v2393 = vpop.permute.xlu0 %2392
      %2394 = vrot.lane.b32.xlu0 %v2324, 24
      %v2395 = vpop.permute.xlu0 %2394
      %2396 = vrot.lane.b32.xlu0 %v2325, 24
      %v2397 = vpop.permute.xlu0 %2396
      %2398 = vrot.lane.b32.xlu0 %v2326, 24
      %v2399 = vpop.permute.xlu0 %2398
      %2400 = vrot.lane.b32.xlu0 %v2327, 24
      %v2401 = vpop.permute.xlu0 %2400
      %2402 = vrot.lane.b32.xlu0 %v2328, 24
      %v2403 = vpop.permute.xlu0 %2402
      %2404 = vrot.lane.b32.xlu0 %v2329, 24
      %v2405 = vpop.permute.xlu0 %2404
      %2406 = vrot.lane.b32.xlu0 %v2330, 24
      %v2407 = vpop.permute.xlu0 %2406
      %2408 = vrot.lane.b32.xlu0 %v2331, 24
      %v2409 = vpop.permute.xlu0 %2408
      %2410 = vrot.lane.b32.xlu0 %v2332, 24
      %v2411 = vpop.permute.xlu0 %2410
      %2412 = vrot.lane.b32.xlu0 %v2333, 24
      %v2413 = vpop.permute.xlu0 %2412
      %2414 = vrot.lane.b32.xlu0 %v2334, 24
      %v2415 = vpop.permute.xlu0 %2414
      %2416 = vrot.lane.b32.xlu0 %v2335, 24
      %v2417 = vpop.permute.xlu0 %2416
      %2418 = vrot.lane.b32.xlu0 %v2336, 24
      %v2419 = vpop.permute.xlu0 %2418
      %2420 = vrot.lane.b32.xlu0 %v2337, 24
      %v2421 = vpop.permute.xlu0 %2420
      %2422 = vrot.lane.b32.xlu0 %v2338, 24
      %v2423 = vpop.permute.xlu0 %2422
      %2424 = vrot.lane.b32.xlu0 %v2339, 24
      %v2425 = vpop.permute.xlu0 %2424
      %2426 = vrot.lane.b32.xlu0 %v2340, 24
      %v2427 = vpop.permute.xlu0 %2426
      %2428 = vrot.lane.b32.xlu0 %v2341, 24
      %v2429 = vpop.permute.xlu0 %2428
      %2430 = vrot.lane.b32.xlu0 %v2342, 24
      %v2431 = vpop.permute.xlu0 %2430
      %2432 = vrot.lane.b32.xlu0 %v2343, 24
      %v2433 = vpop.permute.xlu0 %2432
      %2434 = vrot.lane.b32.xlu0 %v2344, 24
      %v2435 = vpop.permute.xlu0 %2434
      %2436 = vrot.lane.b32.xlu0 %v2345, 24
      %v2437 = vpop.permute.xlu0 %2436
      %2438 = vrot.lane.b32.xlu0 %v2346, 24
      %v2439 = vpop.permute.xlu0 %2438
      %2440 = vrot.lane.b32.xlu0 %v2347, 24
      %v2441 = vpop.permute.xlu0 %2440
      %2442 = vrot.lane.b32.xlu0 %v2348, 24
      %v2443 = vpop.permute.xlu0 %2442
      %2444 = vrot.lane.b32.xlu0 %v2349, 24
      %v2445 = vpop.permute.xlu0 %2444
      %vm2478 = vcmask 224448
      %2479 = vst.msk [vmem:[#allocation2] sm:$0xf] %vm2478, %v2383
      %2480 = vst.msk [vmem:[#allocation2 + $0x4] sm:$0xf] %vm2478, %v2385
      %2481 = vst.msk [vmem:[#allocation2 + $0x8] sm:$0xf] %vm2478, %v2387
      %2482 = vst.msk [vmem:[#allocation2 + $0xc] sm:$0xf] %vm2478, %v2389
      %2483 = vst.msk [vmem:[#allocation2 + $0x10] sm:$0xf] %vm2478, %v2391
      %2484 = vst.msk [vmem:[#allocation2 + $0x14] sm:$0xf] %vm2478, %v2393
      %2485 = vst.msk [vmem:[#allocation2 + $0x18] sm:$0xf] %vm2478, %v2395
      %2486 = vst.msk [vmem:[#allocation2 + $0x1c] sm:$0xf] %vm2478, %v2397
      %2487 = vst.msk [vmem:[#allocation2 + $0x20] sm:$0xf] %vm2478, %v2399
      %2488 = vst.msk [vmem:[#allocation2 + $0x24] sm:$0xf] %vm2478, %v2401
      %2489 = vst.msk [vmem:[#allocation2 + $0x28] sm:$0xf] %vm2478, %v2403
      %2490 = vst.msk [vmem:[#allocation2 + $0x2c] sm:$0xf] %vm2478, %v2405
      %2491 = vst.msk [vmem:[#allocation2 + $0x30] sm:$0xf] %vm2478, %v2407
      %2492 = vst.msk [vmem:[#allocation2 + $0x34] sm:$0xf] %vm2478, %v2409
      %2493 = vst.msk [vmem:[#allocation2 + $0x38] sm:$0xf] %vm2478, %v2411
      %2494 = vst.msk [vmem:[#allocation2 + $0x3c] sm:$0xf] %vm2478, %v2413
      %2495 = vst.msk [vmem:[#allocation2 + $0x40] sm:$0xf] %vm2478, %v2415
      %2496 = vst.msk [vmem:[#allocation2 + $0x44] sm:$0xf] %vm2478, %v2417
      %2497 = vst.msk [vmem:[#allocation2 + $0x48] sm:$0xf] %vm2478, %v2419
      %2498 = vst.msk [vmem:[#allocation2 + $0x4c] sm:$0xf] %vm2478, %v2421
      %2499 = vst.msk [vmem:[#allocation2 + $0x50] sm:$0xf] %vm2478, %v2423
      %2500 = vst.msk [vmem:[#allocation2 + $0x54] sm:$0xf] %vm2478, %v2425
      %2501 = vst.msk [vmem:[#allocation2 + $0x58] sm:$0xf] %vm2478, %v2427
      %2502 = vst.msk [vmem:[#allocation2 + $0x5c] sm:$0xf] %vm2478, %v2429
      %2503 = vst.msk [vmem:[#allocation2 + $0x60] sm:$0xf] %vm2478, %v2431
      %2504 = vst.msk [vmem:[#allocation2 + $0x64] sm:$0xf] %vm2478, %v2433
      %2505 = vst.msk [vmem:[#allocation2 + $0x68] sm:$0xf] %vm2478, %v2435
      %2506 = vst.msk [vmem:[#allocation2 + $0x6c] sm:$0xf] %vm2478, %v2437
      %2507 = vst.msk [vmem:[#allocation2 + $0x70] sm:$0xf] %vm2478, %v2439
      %2508 = vst.msk [vmem:[#allocation2 + $0x74] sm:$0xf] %vm2478, %v2441
      %2509 = vst.msk [vmem:[#allocation2 + $0x78] sm:$0xf] %vm2478, %v2443
      %2510 = vst.msk [vmem:[#allocation2 + $0x7c] sm:$0xf] %vm2478, %v2445
      %v2511 = vld [vmem:[%s2317] sm:$0xf]
      %v2512 = vld [vmem:[%s2317 + $0x4] sm:$0xf]
      %v2513 = vld [vmem:[%s2317 + $0x8] sm:$0x1]
      %v2514 = vld [vmem:[%s2317 + $0xc] sm:$0xf]
      %v2515 = vld [vmem:[%s2317 + $0x10] sm:$0xf]
      %v2516 = vld [vmem:[%s2317 + $0x14] sm:$0x1]
      %v2517 = vld [vmem:[%s2317 + $0x18] sm:$0xf]
      %v2518 = vld [vmem:[%s2317 + $0x1c] sm:$0xf]
      %v2519 = vld [vmem:[%s2317 + $0x20] sm:$0x1]
      %v2520 = vld [vmem:[%s2317 + $0x24] sm:$0xf]
      %v2521 = vld [vmem:[%s2317 + $0x28] sm:$0xf]
      %v2522 = vld [vmem:[%s2317 + $0x2c] sm:$0x1]
      %v2523 = vld [vmem:[%s2317 + $0x30] sm:$0xf]
      %v2524 = vld [vmem:[%s2317 + $0x34] sm:$0xf]
      %v2525 = vld [vmem:[%s2317 + $0x38] sm:$0x1]
      %v2526 = vld [vmem:[%s2317 + $0x3c] sm:$0xf]
      %v2527 = vld [vmem:[%s2317 + $0x40] sm:$0xf]
      %v2528 = vld [vmem:[%s2317 + $0x44] sm:$0x1]
      %v2529 = vld [vmem:[%s2317 + $0x48] sm:$0xf]
      %v2530 = vld [vmem:[%s2317 + $0x4c] sm:$0xf]
      %v2531 = vld [vmem:[%s2317 + $0x50] sm:$0x1]
      %v2532 = vld [vmem:[%s2317 + $0x54] sm:$0xf]
      %v2533 = vld [vmem:[%s2317 + $0x58] sm:$0xf]
      %v2534 = vld [vmem:[%s2317 + $0x5c] sm:$0x1]
      %v2535 = vld [vmem:[%s2317 + $0x60] sm:$0xf]
      %v2536 = vld [vmem:[%s2317 + $0x64] sm:$0xf]
      %v2537 = vld [vmem:[%s2317 + $0x68] sm:$0x1]
      %v2538 = vld [vmem:[%s2317 + $0x6c] sm:$0xf]
      %v2539 = vld [vmem:[%s2317 + $0x70] sm:$0xf]
      %v2540 = vld [vmem:[%s2317 + $0x74] sm:$0x1]
      %v2541 = vld [vmem:[%s2317 + $0x78] sm:$0xf]
      %v2542 = vld [vmem:[%s2317 + $0x7c] sm:$0xf]
      %v2543 = vld [vmem:[%s2317 + $0x80] sm:$0x1]
      %v2544 = vld [vmem:[%s2317 + $0x84] sm:$0xf]
      %v2545 = vld [vmem:[%s2317 + $0x88] sm:$0xf]
      %v2546 = vld [vmem:[%s2317 + $0x8c] sm:$0x1]
      %v2547 = vld [vmem:[%s2317 + $0x90] sm:$0xf]
      %v2548 = vld [vmem:[%s2317 + $0x94] sm:$0xf]
      %v2549 = vld [vmem:[%s2317 + $0x98] sm:$0x1]
      %v2550 = vld [vmem:[%s2317 + $0x9c] sm:$0xf]
      %v2551 = vld [vmem:[%s2317 + $0xa0] sm:$0xf]
      %v2552 = vld [vmem:[%s2317 + $0xa4] sm:$0x1]
      %v2553 = vld [vmem:[%s2317 + $0xa8] sm:$0xf]
      %v2554 = vld [vmem:[%s2317 + $0xac] sm:$0xf]
      %v2555 = vld [vmem:[%s2317 + $0xb0] sm:$0x1]
      %v2556 = vld [vmem:[%s2317 + $0xb4] sm:$0xf]
      %v2557 = vld [vmem:[%s2317 + $0xb8] sm:$0xf]
      %v2558 = vld [vmem:[%s2317 + $0xbc] sm:$0x1]
      %v2560 = vshrl.u32 %v2511, 16
      %v2562 = vrot.slane %v2560, 4
      %v2563 = vshll.u32 %v2511, 16
      %v2565 = vrot.slane %v2563, 5
      %v2566 = vor.u32 %v2562, %v2565
      %v2567 = vrot.slane %v2566, 4
      %v2569 = vshll.u32 %v2512, 16
      %v2571 = vrot.slane %v2569, 5
      %v2572 = vsel %vm371, %v2567, %v2571
      %v2573 = vshrl.u32 %v2512, 16
      %v2575 = vrot.slane %v2573, 4
      %v2576 = vor.u32 %v2575, %v2571
      %v2577 = vrot.slane %v2576, 4
      %v2579 = vshll.u32 %v2513, 16
      %v2581 = vrot.slane %v2579, 5
      %v2582 = vsel %vm371, %v2577, %v2581
      %v2584 = vshrl.u32 %v2514, 16
      %v2586 = vrot.slane %v2584, 4
      %v2587 = vshll.u32 %v2514, 16
      %v2589 = vrot.slane %v2587, 5
      %v2590 = vor.u32 %v2586, %v2589
      %v2591 = vrot.slane %v2590, 4
      %v2593 = vshll.u32 %v2515, 16
      %v2595 = vrot.slane %v2593, 5
      %v2596 = vsel %vm371, %v2591, %v2595
      %v2597 = vshrl.u32 %v2515, 16
      %v2599 = vrot.slane %v2597, 4
      %v2600 = vor.u32 %v2599, %v2595
      %v2601 = vrot.slane %v2600, 4
      %v2603 = vshll.u32 %v2516, 16
      %v2605 = vrot.slane %v2603, 5
      %v2606 = vsel %vm371, %v2601, %v2605
      %v2608 = vshrl.u32 %v2517, 16
      %v2610 = vrot.slane %v2608, 4
      %v2611 = vshll.u32 %v2517, 16
      %v2613 = vrot.slane %v2611, 5
      %v2614 = vor.u32 %v2610, %v2613
      %v2615 = vrot.slane %v2614, 4
      %v2617 = vshll.u32 %v2518, 16
      %v2619 = vrot.slane %v2617, 5
      %v2620 = vsel %vm371, %v2615, %v2619
      %v2621 = vshrl.u32 %v2518, 16
      %v2623 = vrot.slane %v2621, 4
      %v2624 = vor.u32 %v2623, %v2619
      %v2625 = vrot.slane %v2624, 4
      %v2627 = vshll.u32 %v2519, 16
      %v2629 = vrot.slane %v2627, 5
      %v2630 = vsel %vm371, %v2625, %v2629
      %v2632 = vshrl.u32 %v2520, 16
      %v2634 = vrot.slane %v2632, 4
      %v2635 = vshll.u32 %v2520, 16
      %v2637 = vrot.slane %v2635, 5
      %v2638 = vor.u32 %v2634, %v2637
      %v2639 = vrot.slane %v2638, 4
      %v2641 = vshll.u32 %v2521, 16
      %v2643 = vrot.slane %v2641, 5
      %v2644 = vsel %vm371, %v2639, %v2643
      %v2645 = vshrl.u32 %v2521, 16
      %v2647 = vrot.slane %v2645, 4
      %v2648 = vor.u32 %v2647, %v2643
      %v2649 = vrot.slane %v2648, 4
      %v2651 = vshll.u32 %v2522, 16
      %v2653 = vrot.slane %v2651, 5
      %v2654 = vsel %vm371, %v2649, %v2653
      %v2656 = vshrl.u32 %v2523, 16
      %v2658 = vrot.slane %v2656, 4
      %v2659 = vshll.u32 %v2523, 16
      %v2661 = vrot.slane %v2659, 5
      %v2662 = vor.u32 %v2658, %v2661
      %v2663 = vrot.slane %v2662, 4
      %v2665 = vshll.u32 %v2524, 16
      %v2667 = vrot.slane %v2665, 5
      %v2668 = vsel %vm371, %v2663, %v2667
      %v2669 = vshrl.u32 %v2524, 16
      %v2671 = vrot.slane %v2669, 4
      %v2672 = vor.u32 %v2671, %v2667
      %v2673 = vrot.slane %v2672, 4
      %v2675 = vshll.u32 %v2525, 16
      %v2677 = vrot.slane %v2675, 5
      %v2678 = vsel %vm371, %v2673, %v2677
      %v2680 = vshrl.u32 %v2526, 16
      %v2682 = vrot.slane %v2680, 4
      %v2683 = vshll.u32 %v2526, 16
      %v2685 = vrot.slane %v2683, 5
      %v2686 = vor.u32 %v2682, %v2685
      %v2687 = vrot.slane %v2686, 4
      %v2689 = vshll.u32 %v2527, 16
      %v2691 = vrot.slane %v2689, 5
      %v2692 = vsel %vm371, %v2687, %v2691
      %v2693 = vshrl.u32 %v2527, 16
      %v2695 = vrot.slane %v2693, 4
      %v2696 = vor.u32 %v2695, %v2691
      %v2697 = vrot.slane %v2696, 4
      %v2699 = vshll.u32 %v2528, 16
      %v2701 = vrot.slane %v2699, 5
      %v2702 = vsel %vm371, %v2697, %v2701
      %v2704 = vshrl.u32 %v2529, 16
      %v2706 = vrot.slane %v2704, 4
      %v2707 = vshll.u32 %v2529, 16
      %v2709 = vrot.slane %v2707, 5
      %v2710 = vor.u32 %v2706, %v2709
      %v2711 = vrot.slane %v2710, 4
      %v2713 = vshll.u32 %v2530, 16
      %v2715 = vrot.slane %v2713, 5
      %v2716 = vsel %vm371, %v2711, %v2715
      %v2717 = vshrl.u32 %v2530, 16
      %v2719 = vrot.slane %v2717, 4
      %v2720 = vor.u32 %v2719, %v2715
      %v2721 = vrot.slane %v2720, 4
      %v2723 = vshll.u32 %v2531, 16
      %v2725 = vrot.slane %v2723, 5
      %v2726 = vsel %vm371, %v2721, %v2725
      %v2728 = vshrl.u32 %v2532, 16
      %v2730 = vrot.slane %v2728, 4
      %v2731 = vshll.u32 %v2532, 16
      %v2733 = vrot.slane %v2731, 5
      %v2734 = vor.u32 %v2730, %v2733
      %v2735 = vrot.slane %v2734, 4
      %v2737 = vshll.u32 %v2533, 16
      %v2739 = vrot.slane %v2737, 5
      %v2740 = vsel %vm371, %v2735, %v2739
      %v2741 = vshrl.u32 %v2533, 16
      %v2743 = vrot.slane %v2741, 4
      %v2744 = vor.u32 %v2743, %v2739
      %v2745 = vrot.slane %v2744, 4
      %v2747 = vshll.u32 %v2534, 16
      %v2749 = vrot.slane %v2747, 5
      %v2750 = vsel %vm371, %v2745, %v2749
      %v2752 = vshrl.u32 %v2535, 16
      %v2754 = vrot.slane %v2752, 4
      %v2755 = vshll.u32 %v2535, 16
      %v2757 = vrot.slane %v2755, 5
      %v2758 = vor.u32 %v2754, %v2757
      %v2759 = vrot.slane %v2758, 4
      %v2761 = vshll.u32 %v2536, 16
      %v2763 = vrot.slane %v2761, 5
      %v2764 = vsel %vm371, %v2759, %v2763
      %v2765 = vshrl.u32 %v2536, 16
      %v2767 = vrot.slane %v2765, 4
      %v2768 = vor.u32 %v2767, %v2763
      %v2769 = vrot.slane %v2768, 4
      %v2771 = vshll.u32 %v2537, 16
      %v2773 = vrot.slane %v2771, 5
      %v2774 = vsel %vm371, %v2769, %v2773
      %v2776 = vshrl.u32 %v2538, 16
      %v2778 = vrot.slane %v2776, 4
      %v2779 = vshll.u32 %v2538, 16
      %v2781 = vrot.slane %v2779, 5
      %v2782 = vor.u32 %v2778, %v2781
      %v2783 = vrot.slane %v2782, 4
      %v2785 = vshll.u32 %v2539, 16
      %v2787 = vrot.slane %v2785, 5
      %v2788 = vsel %vm371, %v2783, %v2787
      %v2789 = vshrl.u32 %v2539, 16
      %v2791 = vrot.slane %v2789, 4
      %v2792 = vor.u32 %v2791, %v2787
      %v2793 = vrot.slane %v2792, 4
      %v2795 = vshll.u32 %v2540, 16
      %v2797 = vrot.slane %v2795, 5
      %v2798 = vsel %vm371, %v2793, %v2797
      %v2800 = vshrl.u32 %v2541, 16
      %v2802 = vrot.slane %v2800, 4
      %v2803 = vshll.u32 %v2541, 16
      %v2805 = vrot.slane %v2803, 5
      %v2806 = vor.u32 %v2802, %v2805
      %v2807 = vrot.slane %v2806, 4
      %v2809 = vshll.u32 %v2542, 16
      %v2811 = vrot.slane %v2809, 5
      %v2812 = vsel %vm371, %v2807, %v2811
      %v2813 = vshrl.u32 %v2542, 16
      %v2815 = vrot.slane %v2813, 4
      %v2816 = vor.u32 %v2815, %v2811
      %v2817 = vrot.slane %v2816, 4
      %v2819 = vshll.u32 %v2543, 16
      %v2821 = vrot.slane %v2819, 5
      %v2822 = vsel %vm371, %v2817, %v2821
      %v2824 = vshrl.u32 %v2544, 16
      %v2826 = vrot.slane %v2824, 4
      %v2827 = vshll.u32 %v2544, 16
      %v2829 = vrot.slane %v2827, 5
      %v2830 = vor.u32 %v2826, %v2829
      %v2831 = vrot.slane %v2830, 4
      %v2833 = vshll.u32 %v2545, 16
      %v2835 = vrot.slane %v2833, 5
      %v2836 = vsel %vm371, %v2831, %v2835
      %v2837 = vshrl.u32 %v2545, 16
      %v2839 = vrot.slane %v2837, 4
      %v2840 = vor.u32 %v2839, %v2835
      %v2841 = vrot.slane %v2840, 4
      %v2843 = vshll.u32 %v2546, 16
      %v2845 = vrot.slane %v2843, 5
      %v2846 = vsel %vm371, %v2841, %v2845
      %v2848 = vshrl.u32 %v2547, 16
      %v2850 = vrot.slane %v2848, 4
      %v2851 = vshll.u32 %v2547, 16
      %v2853 = vrot.slane %v2851, 5
      %v2854 = vor.u32 %v2850, %v2853
      %v2855 = vrot.slane %v2854, 4
      %v2857 = vshll.u32 %v2548, 16
      %v2859 = vrot.slane %v2857, 5
      %v2860 = vsel %vm371, %v2855, %v2859
      %v2861 = vshrl.u32 %v2548, 16
      %v2863 = vrot.slane %v2861, 4
      %v2864 = vor.u32 %v2863, %v2859
      %v2865 = vrot.slane %v2864, 4
      %v2867 = vshll.u32 %v2549, 16
      %v2869 = vrot.slane %v2867, 5
      %v2870 = vsel %vm371, %v2865, %v2869
      %v2872 = vshrl.u32 %v2550, 16
      %v2874 = vrot.slane %v2872, 4
      %v2875 = vshll.u32 %v2550, 16
      %v2877 = vrot.slane %v2875, 5
      %v2878 = vor.u32 %v2874, %v2877
      %v2879 = vrot.slane %v2878, 4
      %v2881 = vshll.u32 %v2551, 16
      %v2883 = vrot.slane %v2881, 5
      %v2884 = vsel %vm371, %v2879, %v2883
      %v2885 = vshrl.u32 %v2551, 16
      %v2887 = vrot.slane %v2885, 4
      %v2888 = vor.u32 %v2887, %v2883
      %v2889 = vrot.slane %v2888, 4
      %v2891 = vshll.u32 %v2552, 16
      %v2893 = vrot.slane %v2891, 5
      %v2894 = vsel %vm371, %v2889, %v2893
      %v2896 = vshrl.u32 %v2553, 16
      %v2898 = vrot.slane %v2896, 4
      %v2899 = vshll.u32 %v2553, 16
      %v2901 = vrot.slane %v2899, 5
      %v2902 = vor.u32 %v2898, %v2901
      %v2903 = vrot.slane %v2902, 4
      %v2905 = vshll.u32 %v2554, 16
      %v2907 = vrot.slane %v2905, 5
      %v2908 = vsel %vm371, %v2903, %v2907
      %v2909 = vshrl.u32 %v2554, 16
      %v2911 = vrot.slane %v2909, 4
      %v2912 = vor.u32 %v2911, %v2907
      %v2913 = vrot.slane %v2912, 4
      %v2915 = vshll.u32 %v2555, 16
      %v2917 = vrot.slane %v2915, 5
      %v2918 = vsel %vm371, %v2913, %v2917
      %v2920 = vshrl.u32 %v2556, 16
      %v2922 = vrot.slane %v2920, 4
      %v2923 = vshll.u32 %v2556, 16
      %v2925 = vrot.slane %v2923, 5
      %v2926 = vor.u32 %v2922, %v2925
      %v2927 = vrot.slane %v2926, 4
      %v2929 = vshll.u32 %v2557, 16
      %v2931 = vrot.slane %v2929, 5
      %v2932 = vsel %vm371, %v2927, %v2931
      %v2933 = vshrl.u32 %v2557, 16
      %v2935 = vrot.slane %v2933, 4
      %v2936 = vor.u32 %v2935, %v2931
      %v2937 = vrot.slane %v2936, 4
      %v2939 = vshll.u32 %v2558, 16
      %v2941 = vrot.slane %v2939, 5
      %v2942 = vsel %vm371, %v2937, %v2941
      %2943 = vrot.lane.b32.xlu0 %v2572, 28
      %v2944 = vpop.permute.xlu0 %2943
      %2945 = vrot.lane.b32.xlu0 %v2582, 28
      %v2946 = vpop.permute.xlu0 %2945
      %2947 = vrot.lane.b32.xlu0 %v2596, 28
      %v2948 = vpop.permute.xlu0 %2947
      %2949 = vrot.lane.b32.xlu0 %v2606, 28
      %v2950 = vpop.permute.xlu0 %2949
      %2951 = vrot.lane.b32.xlu0 %v2620, 28
      %v2952 = vpop.permute.xlu0 %2951
      %2953 = vrot.lane.b32.xlu0 %v2630, 28
      %v2954 = vpop.permute.xlu0 %2953
      %2955 = vrot.lane.b32.xlu0 %v2644, 28
      %v2956 = vpop.permute.xlu0 %2955
      %2957 = vrot.lane.b32.xlu0 %v2654, 28
      %v2958 = vpop.permute.xlu0 %2957
      %2959 = vrot.lane.b32.xlu0 %v2668, 28
      %v2960 = vpop.permute.xlu0 %2959
      %2961 = vrot.lane.b32.xlu0 %v2678, 28
      %v2962 = vpop.permute.xlu0 %2961
      %2963 = vrot.lane.b32.xlu0 %v2692, 28
      %v2964 = vpop.permute.xlu0 %2963
      %2965 = vrot.lane.b32.xlu0 %v2702, 28
      %v2966 = vpop.permute.xlu0 %2965
      %2967 = vrot.lane.b32.xlu0 %v2716, 28
      %v2968 = vpop.permute.xlu0 %2967
      %2969 = vrot.lane.b32.xlu0 %v2726, 28
      %v2970 = vpop.permute.xlu0 %2969
      %2971 = vrot.lane.b32.xlu0 %v2740, 28
      %v2972 = vpop.permute.xlu0 %2971
      %2973 = vrot.lane.b32.xlu0 %v2750, 28
      %v2974 = vpop.permute.xlu0 %2973
      %2975 = vrot.lane.b32.xlu0 %v2764, 28
      %v2976 = vpop.permute.xlu0 %2975
      %2977 = vrot.lane.b32.xlu0 %v2774, 28
      %v2978 = vpop.permute.xlu0 %2977
      %2979 = vrot.lane.b32.xlu0 %v2788, 28
      %v2980 = vpop.permute.xlu0 %2979
      %2981 = vrot.lane.b32.xlu0 %v2798, 28
      %v2982 = vpop.permute.xlu0 %2981
      %2983 = vrot.lane.b32.xlu0 %v2812, 28
      %v2984 = vpop.permute.xlu0 %2983
      %2985 = vrot.lane.b32.xlu0 %v2822, 28
      %v2986 = vpop.permute.xlu0 %2985
      %2987 = vrot.lane.b32.xlu0 %v2836, 28
      %v2988 = vpop.permute.xlu0 %2987
      %2989 = vrot.lane.b32.xlu0 %v2846, 28
      %v2990 = vpop.permute.xlu0 %2989
      %2991 = vrot.lane.b32.xlu0 %v2860, 28
      %v2992 = vpop.permute.xlu0 %2991
      %2993 = vrot.lane.b32.xlu0 %v2870, 28
      %v2994 = vpop.permute.xlu0 %2993
      %2995 = vrot.lane.b32.xlu0 %v2884, 28
      %v2996 = vpop.permute.xlu0 %2995
      %2997 = vrot.lane.b32.xlu0 %v2894, 28
      %v2998 = vpop.permute.xlu0 %2997
      %2999 = vrot.lane.b32.xlu0 %v2908, 28
      %v3000 = vpop.permute.xlu0 %2999
      %3001 = vrot.lane.b32.xlu0 %v2918, 28
      %v3002 = vpop.permute.xlu0 %3001
      %3003 = vrot.lane.b32.xlu0 %v2932, 28
      %v3004 = vpop.permute.xlu0 %3003
      %3005 = vrot.lane.b32.xlu0 %v2942, 28
      %v3006 = vpop.permute.xlu0 %3005
      %vm3039 = vcmask 257248
      %3040 = vst.msk [vmem:[#allocation2] sm:$0xf] %vm3039, %v2944
      %3041 = vst.msk [vmem:[#allocation2 + $0x4] sm:$0xf] %vm3039, %v2946
      %3042 = vst.msk [vmem:[#allocation2 + $0x8] sm:$0xf] %vm3039, %v2948
      %3043 = vst.msk [vmem:[#allocation2 + $0xc] sm:$0xf] %vm3039, %v2950
      %3044 = vst.msk [vmem:[#allocation2 + $0x10] sm:$0xf] %vm3039, %v2952
      %3045 = vst.msk [vmem:[#allocation2 + $0x14] sm:$0xf] %vm3039, %v2954
      %3046 = vst.msk [vmem:[#allocation2 + $0x18] sm:$0xf] %vm3039, %v2956
      %3047 = vst.msk [vmem:[#allocation2 + $0x1c] sm:$0xf] %vm3039, %v2958
      %3048 = vst.msk [vmem:[#allocation2 + $0x20] sm:$0xf] %vm3039, %v2960
      %3049 = vst.msk [vmem:[#allocation2 + $0x24] sm:$0xf] %vm3039, %v2962
      %3050 = vst.msk [vmem:[#allocation2 + $0x28] sm:$0xf] %vm3039, %v2964
      %3051 = vst.msk [vmem:[#allocation2 + $0x2c] sm:$0xf] %vm3039, %v2966
      %3052 = vst.msk [vmem:[#allocation2 + $0x30] sm:$0xf] %vm3039, %v2968
      %3053 = vst.msk [vmem:[#allocation2 + $0x34] sm:$0xf] %vm3039, %v2970
      %3054 = vst.msk [vmem:[#allocation2 + $0x38] sm:$0xf] %vm3039, %v2972
      %3055 = vst.msk [vmem:[#allocation2 + $0x3c] sm:$0xf] %vm3039, %v2974
      %3056 = vst.msk [vmem:[#allocation2 + $0x40] sm:$0xf] %vm3039, %v2976
      %3057 = vst.msk [vmem:[#allocation2 + $0x44] sm:$0xf] %vm3039, %v2978
      %3058 = vst.msk [vmem:[#allocation2 + $0x48] sm:$0xf] %vm3039, %v2980
      %3059 = vst.msk [vmem:[#allocation2 + $0x4c] sm:$0xf] %vm3039, %v2982
      %3060 = vst.msk [vmem:[#allocation2 + $0x50] sm:$0xf] %vm3039, %v2984
      %3061 = vst.msk [vmem:[#allocation2 + $0x54] sm:$0xf] %vm3039, %v2986
      %3062 = vst.msk [vmem:[#allocation2 + $0x58] sm:$0xf] %vm3039, %v2988
      %3063 = vst.msk [vmem:[#allocation2 + $0x5c] sm:$0xf] %vm3039, %v2990
      %3064 = vst.msk [vmem:[#allocation2 + $0x60] sm:$0xf] %vm3039, %v2992
      %3065 = vst.msk [vmem:[#allocation2 + $0x64] sm:$0xf] %vm3039, %v2994
      %3066 = vst.msk [vmem:[#allocation2 + $0x68] sm:$0xf] %vm3039, %v2996
      %3067 = vst.msk [vmem:[#allocation2 + $0x6c] sm:$0xf] %vm3039, %v2998
      %3068 = vst.msk [vmem:[#allocation2 + $0x70] sm:$0xf] %vm3039, %v3000
      %3069 = vst.msk [vmem:[#allocation2 + $0x74] sm:$0xf] %vm3039, %v3002
      %3070 = vst.msk [vmem:[#allocation2 + $0x78] sm:$0xf] %vm3039, %v3004
      %3071 = vst.msk [vmem:[#allocation2 + $0x7c] sm:$0xf] %vm3039, %v3006
      %v3072 = vld [vmem:[%s2317] sm:$0xe]
      %v3073 = vld [vmem:[%s2317 + $0x4] sm:$0xf]
      %v3074 = vld [vmem:[%s2317 + $0x8] sm:$0x1]
      %v3075 = vld [vmem:[%s2317 + $0xc] sm:$0xe]
      %v3076 = vld [vmem:[%s2317 + $0x10] sm:$0xf]
      %v3077 = vld [vmem:[%s2317 + $0x14] sm:$0x1]
      %v3078 = vld [vmem:[%s2317 + $0x18] sm:$0xe]
      %v3079 = vld [vmem:[%s2317 + $0x1c] sm:$0xf]
      %v3080 = vld [vmem:[%s2317 + $0x20] sm:$0x1]
      %v3081 = vld [vmem:[%s2317 + $0x24] sm:$0xe]
      %v3082 = vld [vmem:[%s2317 + $0x28] sm:$0xf]
      %v3083 = vld [vmem:[%s2317 + $0x2c] sm:$0x1]
      %v3084 = vld [vmem:[%s2317 + $0x30] sm:$0xe]
      %v3085 = vld [vmem:[%s2317 + $0x34] sm:$0xf]
      %v3086 = vld [vmem:[%s2317 + $0x38] sm:$0x1]
      %v3087 = vld [vmem:[%s2317 + $0x3c] sm:$0xe]
      %v3088 = vld [vmem:[%s2317 + $0x40] sm:$0xf]
      %v3089 = vld [vmem:[%s2317 + $0x44] sm:$0x1]
      %v3090 = vld [vmem:[%s2317 + $0x48] sm:$0xe]
      %v3091 = vld [vmem:[%s2317 + $0x4c] sm:$0xf]
      %v3092 = vld [vmem:[%s2317 + $0x50] sm:$0x1]
      %v3093 = vld [vmem:[%s2317 + $0x54] sm:$0xe]
      %v3094 = vld [vmem:[%s2317 + $0x58] sm:$0xf]
      %v3095 = vld [vmem:[%s2317 + $0x5c] sm:$0x1]
      %v3096 = vld [vmem:[%s2317 + $0x60] sm:$0xe]
      %v3097 = vld [vmem:[%s2317 + $0x64] sm:$0xf]
      %v3098 = vld [vmem:[%s2317 + $0x68] sm:$0x1]
      %v3099 = vld [vmem:[%s2317 + $0x6c] sm:$0xe]
      %v3100 = vld [vmem:[%s2317 + $0x70] sm:$0xf]
      %v3101 = vld [vmem:[%s2317 + $0x74] sm:$0x1]
      %v3102 = vld [vmem:[%s2317 + $0x78] sm:$0xe]
      %v3103 = vld [vmem:[%s2317 + $0x7c] sm:$0xf]
      %v3104 = vld [vmem:[%s2317 + $0x80] sm:$0x1]
      %v3105 = vld [vmem:[%s2317 + $0x84] sm:$0xe]
      %v3106 = vld [vmem:[%s2317 + $0x88] sm:$0xf]
      %v3107 = vld [vmem:[%s2317 + $0x8c] sm:$0x1]
      %v3108 = vld [vmem:[%s2317 + $0x90] sm:$0xe]
      %v3109 = vld [vmem:[%s2317 + $0x94] sm:$0xf]
      %v3110 = vld [vmem:[%s2317 + $0x98] sm:$0x1]
      %v3111 = vld [vmem:[%s2317 + $0x9c] sm:$0xe]
      %v3112 = vld [vmem:[%s2317 + $0xa0] sm:$0xf]
      %v3113 = vld [vmem:[%s2317 + $0xa4] sm:$0x1]
      %v3114 = vld [vmem:[%s2317 + $0xa8] sm:$0xe]
      %v3115 = vld [vmem:[%s2317 + $0xac] sm:$0xf]
      %v3116 = vld [vmem:[%s2317 + $0xb0] sm:$0x1]
      %v3117 = vld [vmem:[%s2317 + $0xb4] sm:$0xe]
      %v3118 = vld [vmem:[%s2317 + $0xb8] sm:$0xf]
      %v3119 = vld [vmem:[%s2317 + $0xbc] sm:$0x1]
      %v3168 = vrot.slane %v3072, 5
      %v3169 = vrot.slane %v3168, 4
      %v3170 = vrot.slane %v3073, 5
      %v3171 = vsel %vm983, %v3169, %v3170
      %v3172 = vrot.slane %v3170, 4
      %v3173 = vrot.slane %v3074, 5
      %v3174 = vsel %vm983, %v3172, %v3173
      %v3175 = vrot.slane %v3075, 5
      %v3176 = vrot.slane %v3175, 4
      %v3177 = vrot.slane %v3076, 5
      %v3178 = vsel %vm983, %v3176, %v3177
      %v3179 = vrot.slane %v3177, 4
      %v3180 = vrot.slane %v3077, 5
      %v3181 = vsel %vm983, %v3179, %v3180
      %v3182 = vrot.slane %v3078, 5
      %v3183 = vrot.slane %v3182, 4
      %v3184 = vrot.slane %v3079, 5
      %v3185 = vsel %vm983, %v3183, %v3184
      %v3186 = vrot.slane %v3184, 4
      %v3187 = vrot.slane %v3080, 5
      %v3188 = vsel %vm983, %v3186, %v3187
      %v3189 = vrot.slane %v3081, 5
      %v3190 = vrot.slane %v3189, 4
      %v3191 = vrot.slane %v3082, 5
      %v3192 = vsel %vm983, %v3190, %v3191
      %v3193 = vrot.slane %v3191, 4
      %v3194 = vrot.slane %v3083, 5
      %v3195 = vsel %vm983, %v3193, %v3194
      %v3196 = vrot.slane %v3084, 5
      %v3197 = vrot.slane %v3196, 4
      %v3198 = vrot.slane %v3085, 5
      %v3199 = vsel %vm983, %v3197, %v3198
      %v3200 = vrot.slane %v3198, 4
      %v3201 = vrot.slane %v3086, 5
      %v3202 = vsel %vm983, %v3200, %v3201
      %v3203 = vrot.slane %v3087, 5
      %v3204 = vrot.slane %v3203, 4
      %v3205 = vrot.slane %v3088, 5
      %v3206 = vsel %vm983, %v3204, %v3205
      %v3207 = vrot.slane %v3205, 4
      %v3208 = vrot.slane %v3089, 5
      %v3209 = vsel %vm983, %v3207, %v3208
      %v3210 = vrot.slane %v3090, 5
      %v3211 = vrot.slane %v3210, 4
      %v3212 = vrot.slane %v3091, 5
      %v3213 = vsel %vm983, %v3211, %v3212
      %v3214 = vrot.slane %v3212, 4
      %v3215 = vrot.slane %v3092, 5
      %v3216 = vsel %vm983, %v3214, %v3215
      %v3217 = vrot.slane %v3093, 5
      %v3218 = vrot.slane %v3217, 4
      %v3219 = vrot.slane %v3094, 5
      %v3220 = vsel %vm983, %v3218, %v3219
      %v3221 = vrot.slane %v3219, 4
      %v3222 = vrot.slane %v3095, 5
      %v3223 = vsel %vm983, %v3221, %v3222
      %v3224 = vrot.slane %v3096, 5
      %v3225 = vrot.slane %v3224, 4
      %v3226 = vrot.slane %v3097, 5
      %v3227 = vsel %vm983, %v3225, %v3226
      %v3228 = vrot.slane %v3226, 4
      %v3229 = vrot.slane %v3098, 5
      %v3230 = vsel %vm983, %v3228, %v3229
      %v3231 = vrot.slane %v3099, 5
      %v3232 = vrot.slane %v3231, 4
      %v3233 = vrot.slane %v3100, 5
      %v3234 = vsel %vm983, %v3232, %v3233
      %v3235 = vrot.slane %v3233, 4
      %v3236 = vrot.slane %v3101, 5
      %v3237 = vsel %vm983, %v3235, %v3236
      %v3238 = vrot.slane %v3102, 5
      %v3239 = vrot.slane %v3238, 4
      %v3240 = vrot.slane %v3103, 5
      %v3241 = vsel %vm983, %v3239, %v3240
      %v3242 = vrot.slane %v3240, 4
      %v3243 = vrot.slane %v3104, 5
      %v3244 = vsel %vm983, %v3242, %v3243
      %v3245 = vrot.slane %v3105, 5
      %v3246 = vrot.slane %v3245, 4
      %v3247 = vrot.slane %v3106, 5
      %v3248 = vsel %vm983, %v3246, %v3247
      %v3249 = vrot.slane %v3247, 4
      %v3250 = vrot.slane %v3107, 5
      %v3251 = vsel %vm983, %v3249, %v3250
      %v3252 = vrot.slane %v3108, 5
      %v3253 = vrot.slane %v3252, 4
      %v3254 = vrot.slane %v3109, 5
      %v3255 = vsel %vm983, %v3253, %v3254
      %v3256 = vrot.slane %v3254, 4
      %v3257 = vrot.slane %v3110, 5
      %v3258 = vsel %vm983, %v3256, %v3257
      %v3259 = vrot.slane %v3111, 5
      %v3260 = vrot.slane %v3259, 4
      %v3261 = vrot.slane %v3112, 5
      %v3262 = vsel %vm983, %v3260, %v3261
      %v3263 = vrot.slane %v3261, 4
      %v3264 = vrot.slane %v3113, 5
      %v3265 = vsel %vm983, %v3263, %v3264
      %v3266 = vrot.slane %v3114, 5
      %v3267 = vrot.slane %v3266, 4
      %v3268 = vrot.slane %v3115, 5
      %v3269 = vsel %vm983, %v3267, %v3268
      %v3270 = vrot.slane %v3268, 4
      %v3271 = vrot.slane %v3116, 5
      %v3272 = vsel %vm983, %v3270, %v3271
      %v3273 = vrot.slane %v3117, 5
      %v3274 = vrot.slane %v3273, 4
      %v3275 = vrot.slane %v3118, 5
      %v3276 = vsel %vm983, %v3274, %v3275
      %v3277 = vrot.slane %v3275, 4
      %v3278 = vrot.slane %v3119, 5
      %v3279 = vsel %vm983, %v3277, %v3278
      %3280 = vrot.lane.b32.xlu0 %v3171, 32
      %v3281 = vpop.permute.xlu0 %3280
      %3282 = vrot.lane.b32.xlu0 %v3174, 32
      %v3283 = vpop.permute.xlu0 %3282
      %3284 = vrot.lane.b32.xlu0 %v3178, 32
      %v3285 = vpop.permute.xlu0 %3284
      %3286 = vrot.lane.b32.xlu0 %v3181, 32
      %v3287 = vpop.permute.xlu0 %3286
      %3288 = vrot.lane.b32.xlu0 %v3185, 32
      %v3289 = vpop.permute.xlu0 %3288
      %3290 = vrot.lane.b32.xlu0 %v3188, 32
      %v3291 = vpop.permute.xlu0 %3290
      %3292 = vrot.lane.b32.xlu0 %v3192, 32
      %v3293 = vpop.permute.xlu0 %3292
      %3294 = vrot.lane.b32.xlu0 %v3195, 32
      %v3295 = vpop.permute.xlu0 %3294
      %3296 = vrot.lane.b32.xlu0 %v3199, 32
      %v3297 = vpop.permute.xlu0 %3296
      %3298 = vrot.lane.b32.xlu0 %v3202, 32
      %v3299 = vpop.permute.xlu0 %3298
      %3300 = vrot.lane.b32.xlu0 %v3206, 32
      %v3301 = vpop.permute.xlu0 %3300
      %3302 = vrot.lane.b32.xlu0 %v3209, 32
      %v3303 = vpop.permute.xlu0 %3302
      %3304 = vrot.lane.b32.xlu0 %v3213, 32
      %v3305 = vpop.permute.xlu0 %3304
      %3306 = vrot.lane.b32.xlu0 %v3216, 32
      %v3307 = vpop.permute.xlu0 %3306
      %3308 = vrot.lane.b32.xlu0 %v3220, 32
      %v3309 = vpop.permute.xlu0 %3308
      %3310 = vrot.lane.b32.xlu0 %v3223, 32
      %v3311 = vpop.permute.xlu0 %3310
      %3312 = vrot.lane.b32.xlu0 %v3227, 32
      %v3313 = vpop.permute.xlu0 %3312
      %3314 = vrot.lane.b32.xlu0 %v3230, 32
      %v3315 = vpop.permute.xlu0 %3314
      %3316 = vrot.lane.b32.xlu0 %v3234, 32
      %v3317 = vpop.permute.xlu0 %3316
      %3318 = vrot.lane.b32.xlu0 %v3237, 32
      %v3319 = vpop.permute.xlu0 %3318
      %3320 = vrot.lane.b32.xlu0 %v3241, 32
      %v3321 = vpop.permute.xlu0 %3320
      %3322 = vrot.lane.b32.xlu0 %v3244, 32
      %v3323 = vpop.permute.xlu0 %3322
      %3324 = vrot.lane.b32.xlu0 %v3248, 32
      %v3325 = vpop.permute.xlu0 %3324
      %3326 = vrot.lane.b32.xlu0 %v3251, 32
      %v3327 = vpop.permute.xlu0 %3326
      %3328 = vrot.lane.b32.xlu0 %v3255, 32
      %v3329 = vpop.permute.xlu0 %3328
      %3330 = vrot.lane.b32.xlu0 %v3258, 32
      %v3331 = vpop.permute.xlu0 %3330
      %3332 = vrot.lane.b32.xlu0 %v3262, 32
      %v3333 = vpop.permute.xlu0 %3332
      %3334 = vrot.lane.b32.xlu0 %v3265, 32
      %v3335 = vpop.permute.xlu0 %3334
      %3336 = vrot.lane.b32.xlu0 %v3269, 32
      %v3337 = vpop.permute.xlu0 %3336
      %3338 = vrot.lane.b32.xlu0 %v3272, 32
      %v3339 = vpop.permute.xlu0 %3338
      %3340 = vrot.lane.b32.xlu0 %v3276, 32
      %v3341 = vpop.permute.xlu0 %3340
      %3342 = vrot.lane.b32.xlu0 %v3279, 32
      %v3343 = vpop.permute.xlu0 %3342
      %vm3376 = vcmask 290048
      %3377 = vst.msk [vmem:[#allocation2] sm:$0xf] %vm3376, %v3281
      %3378 = vst.msk [vmem:[#allocation2 + $0x4] sm:$0xf] %vm3376, %v3283
      %3379 = vst.msk [vmem:[#allocation2 + $0x8] sm:$0xf] %vm3376, %v3285
      %3380 = vst.msk [vmem:[#allocation2 + $0xc] sm:$0xf] %vm3376, %v3287
      %3381 = vst.msk [vmem:[#allocation2 + $0x10] sm:$0xf] %vm3376, %v3289
      %3382 = vst.msk [vmem:[#allocation2 + $0x14] sm:$0xf] %vm3376, %v3291
      %3383 = vst.msk [vmem:[#allocation2 + $0x18] sm:$0xf] %vm3376, %v3293
      %3384 = vst.msk [vmem:[#allocation2 + $0x1c] sm:$0xf] %vm3376, %v3295
      %3385 = vst.msk [vmem:[#allocation2 + $0x20] sm:$0xf] %vm3376, %v3297
      %3386 = vst.msk [vmem:[#allocation2 + $0x24] sm:$0xf] %vm3376, %v3299
      %3387 = vst.msk [vmem:[#allocation2 + $0x28] sm:$0xf] %vm3376, %v3301
      %3388 = vst.msk [vmem:[#allocation2 + $0x2c] sm:$0xf] %vm3376, %v3303
      %3389 = vst.msk [vmem:[#allocation2 + $0x30] sm:$0xf] %vm3376, %v3305
      %3390 = vst.msk [vmem:[#allocation2 + $0x34] sm:$0xf] %vm3376, %v3307
      %3391 = vst.msk [vmem:[#allocation2 + $0x38] sm:$0xf] %vm3376, %v3309
      %3392 = vst.msk [vmem:[#allocation2 + $0x3c] sm:$0xf] %vm3376, %v3311
      %3393 = vst.msk [vmem:[#allocation2 + $0x40] sm:$0xf] %vm3376, %v3313
      %3394 = vst.msk [vmem:[#allocation2 + $0x44] sm:$0xf] %vm3376, %v3315
      %3395 = vst.msk [vmem:[#allocation2 + $0x48] sm:$0xf] %vm3376, %v3317
      %3396 = vst.msk [vmem:[#allocation2 + $0x4c] sm:$0xf] %vm3376, %v3319
      %3397 = vst.msk [vmem:[#allocation2 + $0x50] sm:$0xf] %vm3376, %v3321
      %3398 = vst.msk [vmem:[#allocation2 + $0x54] sm:$0xf] %vm3376, %v3323
      %3399 = vst.msk [vmem:[#allocation2 + $0x58] sm:$0xf] %vm3376, %v3325
      %3400 = vst.msk [vmem:[#allocation2 + $0x5c] sm:$0xf] %vm3376, %v3327
      %3401 = vst.msk [vmem:[#allocation2 + $0x60] sm:$0xf] %vm3376, %v3329
      %3402 = vst.msk [vmem:[#allocation2 + $0x64] sm:$0xf] %vm3376, %v3331
      %3403 = vst.msk [vmem:[#allocation2 + $0x68] sm:$0xf] %vm3376, %v3333
      %3404 = vst.msk [vmem:[#allocation2 + $0x6c] sm:$0xf] %vm3376, %v3335
      %3405 = vst.msk [vmem:[#allocation2 + $0x70] sm:$0xf] %vm3376, %v3337
      %3406 = vst.msk [vmem:[#allocation2 + $0x74] sm:$0xf] %vm3376, %v3339
      %3407 = vst.msk [vmem:[#allocation2 + $0x78] sm:$0xf] %vm3376, %v3341
      %3408 = vst.msk [vmem:[#allocation2 + $0x7c] sm:$0xf] %vm3376, %v3343
      %v3409 = vld [vmem:[#allocation2] sm:$0xf]
      %v3410 = vld [vmem:[#allocation2 + $0x4] sm:$0xf]
      %v3411 = vld [vmem:[#allocation2 + $0x8] sm:$0xf]
      %v3412 = vld [vmem:[#allocation2 + $0xc] sm:$0xf]
      %v3413 = vld [vmem:[#allocation2 + $0x10] sm:$0xf]
      %v3414 = vld [vmem:[#allocation2 + $0x14] sm:$0xf]
      %v3415 = vld [vmem:[#allocation2 + $0x18] sm:$0xf]
      %v3416 = vld [vmem:[#allocation2 + $0x1c] sm:$0xf]
      %v3417 = vld [vmem:[#allocation2 + $0x20] sm:$0xf]
      %v3418 = vld [vmem:[#allocation2 + $0x24] sm:$0xf]
      %v3419 = vld [vmem:[#allocation2 + $0x28] sm:$0xf]
      %v3420 = vld [vmem:[#allocation2 + $0x2c] sm:$0xf]
      %v3421 = vld [vmem:[#allocation2 + $0x30] sm:$0xf]
      %v3422 = vld [vmem:[#allocation2 + $0x34] sm:$0xf]
      %v3423 = vld [vmem:[#allocation2 + $0x38] sm:$0xf]
      %v3424 = vld [vmem:[#allocation2 + $0x3c] sm:$0xf]
      %v3425 = vld [vmem:[#allocation2 + $0x40] sm:$0xf]
      %v3426 = vld [vmem:[#allocation2 + $0x44] sm:$0xf]
      %v3427 = vld [vmem:[#allocation2 + $0x48] sm:$0xf]
      %v3428 = vld [vmem:[#allocation2 + $0x4c] sm:$0xf]
      %v3429 = vld [vmem:[#allocation2 + $0x50] sm:$0xf]
      %v3430 = vld [vmem:[#allocation2 + $0x54] sm:$0xf]
      %v3431 = vld [vmem:[#allocation2 + $0x58] sm:$0xf]
      %v3432 = vld [vmem:[#allocation2 + $0x5c] sm:$0xf]
      %v3433 = vld [vmem:[#allocation2 + $0x60] sm:$0xf]
      %v3434 = vld [vmem:[#allocation2 + $0x64] sm:$0xf]
      %v3435 = vld [vmem:[#allocation2 + $0x68] sm:$0xf]
      %v3436 = vld [vmem:[#allocation2 + $0x6c] sm:$0xf]
      %v3437 = vld [vmem:[#allocation2 + $0x70] sm:$0xf]
      %v3438 = vld [vmem:[#allocation2 + $0x74] sm:$0xf]
      %v3439 = vld [vmem:[#allocation2 + $0x78] sm:$0xf]
      %v3440 = vld [vmem:[#allocation2 + $0x7c] sm:$0xf]
      %v3441 = vld [vmem:[%s1] sm:$0xf]
      %v3442 = vld [vmem:[%s1 + $0x4] sm:$0xf]
      %v3443 = vld [vmem:[%s1 + $0x8] sm:$0xf]
      %v3444 = vld [vmem:[%s1 + $0xc] sm:$0xf]
      %v3445 = vld [vmem:[%s1 + $0x10] sm:$0x3]
      %v3478 = vunpack.c.l.b16 %v3409
      %v3479 = vunpack.c.l.b16 %v3410
      %v3480 = vunpack.c.l.b16 %v3411
      %v3481 = vunpack.c.l.b16 %v3412
      %v3482 = vunpack.c.l.b16 %v3413
      %v3483 = vunpack.c.l.b16 %v3414
      %v3484 = vunpack.c.l.b16 %v3415
      %v3485 = vunpack.c.l.b16 %v3416
      %v3486 = vunpack.c.l.b16 %v3417
      %v3487 = vunpack.c.l.b16 %v3418
      %v3488 = vunpack.c.l.b16 %v3419
      %v3489 = vunpack.c.l.b16 %v3420
      %v3490 = vunpack.c.l.b16 %v3421
      %v3491 = vunpack.c.l.b16 %v3422
      %v3492 = vunpack.c.l.b16 %v3423
      %v3493 = vunpack.c.l.b16 %v3424
      %v3494 = vunpack.c.l.b16 %v3425
      %v3495 = vunpack.c.l.b16 %v3426
      %v3496 = vunpack.c.l.b16 %v3427
      %v3497 = vunpack.c.l.b16 %v3428
      %v3498 = vunpack.c.l.b16 %v3429
      %v3499 = vunpack.c.l.b16 %v3430
      %v3500 = vunpack.c.l.b16 %v3431
      %v3501 = vunpack.c.l.b16 %v3432
      %v3502 = vunpack.c.l.b16 %v3433
      %v3503 = vunpack.c.l.b16 %v3434
      %v3504 = vunpack.c.l.b16 %v3435
      %v3505 = vunpack.c.l.b16 %v3436
      %v3506 = vunpack.c.l.b16 %v3437
      %v3507 = vunpack.c.l.b16 %v3438
      %v3508 = vunpack.c.l.b16 %v3439
      %v3509 = vunpack.c.l.b16 %v3440
      %v3510 = vpack.c.b16 %v3479, %v3478
      %v3511 = vpack.c.b16 %v3481, %v3480
      %v3512 = vpack.c.b16 %v3483, %v3482
      %v3513 = vpack.c.b16 %v3485, %v3484
      %v3514 = vpack.c.b16 %v3487, %v3486
      %v3515 = vpack.c.b16 %v3489, %v3488
      %v3516 = vpack.c.b16 %v3491, %v3490
      %v3517 = vpack.c.b16 %v3493, %v3492
      %v3518 = vpack.c.b16 %v3495, %v3494
      %v3519 = vpack.c.b16 %v3497, %v3496
      %v3520 = vpack.c.b16 %v3499, %v3498
      %v3521 = vpack.c.b16 %v3501, %v3500
      %v3522 = vpack.c.b16 %v3503, %v3502
      %v3523 = vpack.c.b16 %v3505, %v3504
      %v3524 = vpack.c.b16 %v3507, %v3506
      %v3525 = vpack.c.b16 %v3509, %v3508
      %v3531 = vunpack.c.l.b16 %v3441
      %v3532 = vunpack.c.l.b16 %v3442
      %v3533 = vunpack.c.l.b16 %v3443
      %v3534 = vunpack.c.l.b16 %v3444
      %v3535 = vunpack.c.l.b16 %v3445
      %v3536 = vpack.c.b16 %v3532, %v3531
      %v3537 = vpack.c.b16 %v3534, %v3533
      %v3538 = vpack.c.b16 %v3535, %v3535
      %vm3541 = vcmask 293888
      %v3543 = vsel %vm3541, %v3510, 0
      %v3546 = vsel %vm3541, %v3511, 0
      %v3549 = vsel %vm3541, %v3512, 0
      %v3552 = vsel %vm3541, %v3513, 0
      %v3555 = vsel %vm3541, %v3514, 0
      %v3558 = vsel %vm3541, %v3515, 0
      %v3561 = vsel %vm3541, %v3516, 0
      %v3564 = vsel %vm3541, %v3517, 0
      %v3567 = vsel %vm3541, %v3518, 0
      %v3570 = vsel %vm3541, %v3519, 0
      %v3573 = vsel %vm3541, %v3520, 0
      %v3576 = vsel %vm3541, %v3521, 0
      %v3579 = vsel %vm3541, %v3522, 0
      %v3582 = vsel %vm3541, %v3523, 0
      %v3585 = vsel %vm3541, %v3524, 0
      %v3588 = vsel %vm3541, %v3525, 0
      %vm3590 = vcmask 1041408
      %v3592 = vsel %vm3590, %v3538, 0
      %3594 = vmatpush.bf16.msra.mxu0 0
      %3595 = vmatpush.bf16.msra.mxu0 0
      %3596 = vmatpush.bf16.msra.mxu0 0
      %3597 = vmatpush.bf16.msra.mxu0 0
      %3598 = vmatpush.bf16.msra.mxu0 0
      %3599 = vmatpush.bf16.msra.mxu0 %v3592
      %3600 = vmatpush.bf16.msra.mxu0 %v3537
      %3601 = vmatpush.bf16.msra.mxu0 %v3536
      %3602 = vmatmul.bf16.gmra.mxu0 %v3543
      %v3603 = vpop.f32.mrf.mxu0
      %v3604 = vadd.f32 0.0, %v3603
      %v3605 = vpop.f32.mrf.mxu0
      %v3606 = vadd.f32 0.0, %v3605
      %3607 = vmatmul.bf16.gmra.mxu0 %v3546
      %v3608 = vpop.f32.mrf.mxu0
      %v3609 = vadd.f32 0.0, %v3608
      %v3610 = vpop.f32.mrf.mxu0
      %v3611 = vadd.f32 0.0, %v3610
      %3612 = vmatmul.bf16.gmra.mxu0 %v3549
      %v3613 = vpop.f32.mrf.mxu0
      %v3614 = vadd.f32 0.0, %v3613
      %v3615 = vpop.f32.mrf.mxu0
      %v3616 = vadd.f32 0.0, %v3615
      %3617 = vmatmul.bf16.gmra.mxu0 %v3552
      %v3618 = vpop.f32.mrf.mxu0
      %v3619 = vadd.f32 0.0, %v3618
      %v3620 = vpop.f32.mrf.mxu0
      %v3621 = vadd.f32 0.0, %v3620
      %3622 = vmatmul.bf16.gmra.mxu0 %v3555
      %v3623 = vpop.f32.mrf.mxu0
      %v3624 = vadd.f32 0.0, %v3623
      %v3625 = vpop.f32.mrf.mxu0
      %v3626 = vadd.f32 0.0, %v3625
      %3627 = vmatmul.bf16.gmra.mxu0 %v3558
      %v3628 = vpop.f32.mrf.mxu0
      %v3629 = vadd.f32 0.0, %v3628
      %v3630 = vpop.f32.mrf.mxu0
      %v3631 = vadd.f32 0.0, %v3630
      %3632 = vmatmul.bf16.gmra.mxu0 %v3561
      %v3633 = vpop.f32.mrf.mxu0
      %v3634 = vadd.f32 0.0, %v3633
      %v3635 = vpop.f32.mrf.mxu0
      %v3636 = vadd.f32 0.0, %v3635
      %3637 = vmatmul.bf16.gmra.mxu0 %v3564
      %v3638 = vpop.f32.mrf.mxu0
      %v3639 = vadd.f32 0.0, %v3638
      %v3640 = vpop.f32.mrf.mxu0
      %v3641 = vadd.f32 0.0, %v3640
      %3642 = vmatmul.bf16.gmra.mxu0 %v3567
      %v3643 = vpop.f32.mrf.mxu0
      %v3644 = vadd.f32 0.0, %v3643
      %v3645 = vpop.f32.mrf.mxu0
      %v3646 = vadd.f32 0.0, %v3645
      %3647 = vmatmul.bf16.gmra.mxu0 %v3570
      %v3648 = vpop.f32.mrf.mxu0
      %v3649 = vadd.f32 0.0, %v3648
      %v3650 = vpop.f32.mrf.mxu0
      %v3651 = vadd.f32 0.0, %v3650
      %3652 = vmatmul.bf16.gmra.mxu0 %v3573
      %v3653 = vpop.f32.mrf.mxu0
      %v3654 = vadd.f32 0.0, %v3653
      %v3655 = vpop.f32.mrf.mxu0
      %v3656 = vadd.f32 0.0, %v3655
      %3657 = vmatmul.bf16.gmra.mxu0 %v3576
      %v3658 = vpop.f32.mrf.mxu0
      %v3659 = vadd.f32 0.0, %v3658
      %v3660 = vpop.f32.mrf.mxu0
      %v3661 = vadd.f32 0.0, %v3660
      %3662 = vmatmul.bf16.gmra.mxu0 %v3579
      %v3663 = vpop.f32.mrf.mxu0
      %v3664 = vadd.f32 0.0, %v3663
      %v3665 = vpop.f32.mrf.mxu0
      %v3666 = vadd.f32 0.0, %v3665
      %3667 = vmatmul.bf16.gmra.mxu0 %v3582
      %v3668 = vpop.f32.mrf.mxu0
      %v3669 = vadd.f32 0.0, %v3668
      %v3670 = vpop.f32.mrf.mxu0
      %v3671 = vadd.f32 0.0, %v3670
      %3672 = vmatmul.bf16.gmra.mxu0 %v3585
      %v3673 = vpop.f32.mrf.mxu0
      %v3674 = vadd.f32 0.0, %v3673
      %v3675 = vpop.f32.mrf.mxu0
      %v3676 = vadd.f32 0.0, %v3675
      %3677 = vmatmul.bf16.gmra.mxu0 %v3588
      %v3678 = vpop.f32.mrf.mxu0
      %v3679 = vadd.f32 0.0, %v3678
      %v3680 = vpop.f32.mrf.mxu0
      %v3681 = vadd.f32 0.0, %v3680
      %3682 = vdwg.mxu0
      %v3683 = vld [vmem:[%s2] sm:$0x1]
      %v3685 = vperm.slane %v3683, 0
      %v3687 = vmul.f32 %v3604, %v3685
      %v3688 = vmul.f32 %v3606, %v3685
      %v3689 = vmul.f32 %v3609, %v3685
      %v3690 = vmul.f32 %v3611, %v3685
      %v3691 = vmul.f32 %v3614, %v3685
      %v3692 = vmul.f32 %v3616, %v3685
      %v3693 = vmul.f32 %v3619, %v3685
      %v3694 = vmul.f32 %v3621, %v3685
      %v3695 = vmul.f32 %v3624, %v3685
      %v3696 = vmul.f32 %v3626, %v3685
      %v3697 = vmul.f32 %v3629, %v3685
      %v3698 = vmul.f32 %v3631, %v3685
      %v3699 = vmul.f32 %v3634, %v3685
      %v3700 = vmul.f32 %v3636, %v3685
      %v3701 = vmul.f32 %v3639, %v3685
      %v3702 = vmul.f32 %v3641, %v3685
      %v3703 = vmul.f32 %v3644, %v3685
      %v3704 = vmul.f32 %v3646, %v3685
      %v3705 = vmul.f32 %v3649, %v3685
      %v3706 = vmul.f32 %v3651, %v3685
      %v3707 = vmul.f32 %v3654, %v3685
      %v3708 = vmul.f32 %v3656, %v3685
      %v3709 = vmul.f32 %v3659, %v3685
      %v3710 = vmul.f32 %v3661, %v3685
      %v3711 = vmul.f32 %v3664, %v3685
      %v3712 = vmul.f32 %v3666, %v3685
      %v3713 = vmul.f32 %v3669, %v3685
      %v3714 = vmul.f32 %v3671, %v3685
      %v3715 = vmul.f32 %v3674, %v3685
      %v3716 = vmul.f32 %v3676, %v3685
      %v3717 = vmul.f32 %v3679, %v3685
      %v3718 = vmul.f32 %v3681, %v3685
      %v3719 = vld [vmem:[%s3] sm:$0x1]
      %v3721 = vperm.slane %v3719, 0
      %v3723 = vadd.f32 %v3687, %v3721
      %v3724 = vadd.f32 %v3688, %v3721
      %v3725 = vadd.f32 %v3689, %v3721
      %v3726 = vadd.f32 %v3690, %v3721
      %v3727 = vadd.f32 %v3691, %v3721
      %v3728 = vadd.f32 %v3692, %v3721
      %v3729 = vadd.f32 %v3693, %v3721
      %v3730 = vadd.f32 %v3694, %v3721
      %v3731 = vadd.f32 %v3695, %v3721
      %v3732 = vadd.f32 %v3696, %v3721
      %v3733 = vadd.f32 %v3697, %v3721
      %v3734 = vadd.f32 %v3698, %v3721
      %v3735 = vadd.f32 %v3699, %v3721
      %v3736 = vadd.f32 %v3700, %v3721
      %v3737 = vadd.f32 %v3701, %v3721
      %v3738 = vadd.f32 %v3702, %v3721
      %v3739 = vadd.f32 %v3703, %v3721
      %v3740 = vadd.f32 %v3704, %v3721
      %v3741 = vadd.f32 %v3705, %v3721
      %v3742 = vadd.f32 %v3706, %v3721
      %v3743 = vadd.f32 %v3707, %v3721
      %v3744 = vadd.f32 %v3708, %v3721
      %v3745 = vadd.f32 %v3709, %v3721
      %v3746 = vadd.f32 %v3710, %v3721
      %v3747 = vadd.f32 %v3711, %v3721
      %v3748 = vadd.f32 %v3712, %v3721
      %v3749 = vadd.f32 %v3713, %v3721
      %v3750 = vadd.f32 %v3714, %v3721
      %v3751 = vadd.f32 %v3715, %v3721
      %v3752 = vadd.f32 %v3716, %v3721
      %v3753 = vadd.f32 %v3717, %v3721
      %v3754 = vadd.f32 %v3718, %v3721
      %vm3755 = vcmp.ge.f32.partialorder %v3723, 0.0
      %vm3756 = vcmp.ge.f32.partialorder %v3724, 0.0
      %vm3757 = vcmp.ge.f32.partialorder %v3725, 0.0
      %vm3758 = vcmp.ge.f32.partialorder %v3726, 0.0
      %vm3759 = vcmp.ge.f32.partialorder %v3727, 0.0
      %vm3760 = vcmp.ge.f32.partialorder %v3728, 0.0
      %vm3761 = vcmp.ge.f32.partialorder %v3729, 0.0
      %vm3762 = vcmp.ge.f32.partialorder %v3730, 0.0
      %vm3763 = vcmp.ge.f32.partialorder %v3731, 0.0
      %vm3764 = vcmp.ge.f32.partialorder %v3732, 0.0
      %vm3765 = vcmp.ge.f32.partialorder %v3733, 0.0
      %vm3766 = vcmp.ge.f32.partialorder %v3734, 0.0
      %vm3767 = vcmp.ge.f32.partialorder %v3735, 0.0
      %vm3768 = vcmp.ge.f32.partialorder %v3736, 0.0
      %vm3769 = vcmp.ge.f32.partialorder %v3737, 0.0
      %vm3770 = vcmp.ge.f32.partialorder %v3738, 0.0
      %vm3771 = vcmp.ge.f32.partialorder %v3739, 0.0
      %vm3772 = vcmp.ge.f32.partialorder %v3740, 0.0
      %vm3773 = vcmp.ge.f32.partialorder %v3741, 0.0
      %vm3774 = vcmp.ge.f32.partialorder %v3742, 0.0
      %vm3775 = vcmp.ge.f32.partialorder %v3743, 0.0
      %vm3776 = vcmp.ge.f32.partialorder %v3744, 0.0
      %vm3777 = vcmp.ge.f32.partialorder %v3745, 0.0
      %vm3778 = vcmp.ge.f32.partialorder %v3746, 0.0
      %vm3779 = vcmp.ge.f32.partialorder %v3747, 0.0
      %vm3780 = vcmp.ge.f32.partialorder %v3748, 0.0
      %vm3781 = vcmp.ge.f32.partialorder %v3749, 0.0
      %vm3782 = vcmp.ge.f32.partialorder %v3750, 0.0
      %vm3783 = vcmp.ge.f32.partialorder %v3751, 0.0
      %vm3784 = vcmp.ge.f32.partialorder %v3752, 0.0
      %vm3785 = vcmp.ge.f32.partialorder %v3753, 0.0
      %vm3786 = vcmp.ge.f32.partialorder %v3754, 0.0
      %v3787 = vld [vmem:[%s4] sm:$0x1]
      %v3789 = vperm.slane %v3787, 0
      %v3791 = vmul.f32 %v3789, %v3723
      %v3792 = vmul.f32 %v3789, %v3724
      %v3793 = vmul.f32 %v3789, %v3725
      %v3794 = vmul.f32 %v3789, %v3726
      %v3795 = vmul.f32 %v3789, %v3727
      %v3796 = vmul.f32 %v3789, %v3728
      %v3797 = vmul.f32 %v3789, %v3729
      %v3798 = vmul.f32 %v3789, %v3730
      %v3799 = vmul.f32 %v3789, %v3731
      %v3800 = vmul.f32 %v3789, %v3732
      %v3801 = vmul.f32 %v3789, %v3733
      %v3802 = vmul.f32 %v3789, %v3734
      %v3803 = vmul.f32 %v3789, %v3735
      %v3804 = vmul.f32 %v3789, %v3736
      %v3805 = vmul.f32 %v3789, %v3737
      %v3806 = vmul.f32 %v3789, %v3738
      %v3807 = vmul.f32 %v3789, %v3739
      %v3808 = vmul.f32 %v3789, %v3740
      %v3809 = vmul.f32 %v3789, %v3741
      %v3810 = vmul.f32 %v3789, %v3742
      %v3811 = vmul.f32 %v3789, %v3743
      %v3812 = vmul.f32 %v3789, %v3744
      %v3813 = vmul.f32 %v3789, %v3745
      %v3814 = vmul.f32 %v3789, %v3746
      %v3815 = vmul.f32 %v3789, %v3747
      %v3816 = vmul.f32 %v3789, %v3748
      %v3817 = vmul.f32 %v3789, %v3749
      %v3818 = vmul.f32 %v3789, %v3750
      %v3819 = vmul.f32 %v3789, %v3751
      %v3820 = vmul.f32 %v3789, %v3752
      %v3821 = vmul.f32 %v3789, %v3753
      %v3822 = vmul.f32 %v3789, %v3754
      %v3823 = vsel %vm3755, %v3723, %v3791
      %v3824 = vsel %vm3756, %v3724, %v3792
      %v3825 = vsel %vm3757, %v3725, %v3793
      %v3826 = vsel %vm3758, %v3726, %v3794
      %v3827 = vsel %vm3759, %v3727, %v3795
      %v3828 = vsel %vm3760, %v3728, %v3796
      %v3829 = vsel %vm3761, %v3729, %v3797
      %v3830 = vsel %vm3762, %v3730, %v3798
      %v3831 = vsel %vm3763, %v3731, %v3799
      %v3832 = vsel %vm3764, %v3732, %v3800
      %v3833 = vsel %vm3765, %v3733, %v3801
      %v3834 = vsel %vm3766, %v3734, %v3802
      %v3835 = vsel %vm3767, %v3735, %v3803
      %v3836 = vsel %vm3768, %v3736, %v3804
      %v3837 = vsel %vm3769, %v3737, %v3805
      %v3838 = vsel %vm3770, %v3738, %v3806
      %v3839 = vsel %vm3771, %v3739, %v3807
      %v3840 = vsel %vm3772, %v3740, %v3808
      %v3841 = vsel %vm3773, %v3741, %v3809
      %v3842 = vsel %vm3774, %v3742, %v3810
      %v3843 = vsel %vm3775, %v3743, %v3811
      %v3844 = vsel %vm3776, %v3744, %v3812
      %v3845 = vsel %vm3777, %v3745, %v3813
      %v3846 = vsel %vm3778, %v3746, %v3814
      %v3847 = vsel %vm3779, %v3747, %v3815
      %v3848 = vsel %vm3780, %v3748, %v3816
      %v3849 = vsel %vm3781, %v3749, %v3817
      %v3850 = vsel %vm3782, %v3750, %v3818
      %v3851 = vsel %vm3783, %v3751, %v3819
      %v3852 = vsel %vm3784, %v3752, %v3820
      %v3853 = vsel %vm3785, %v3753, %v3821
      %v3854 = vsel %vm3786, %v3754, %v3822
      %v3855 = vpack.c.bf16 %v3823, %v3823
      %v3856 = vpack.c.bf16 %v3824, %v3824
      %v3857 = vpack.c.bf16 %v3825, %v3825
      %v3858 = vpack.c.bf16 %v3826, %v3826
      %v3859 = vpack.c.bf16 %v3827, %v3827
      %v3860 = vpack.c.bf16 %v3828, %v3828
      %v3861 = vpack.c.bf16 %v3829, %v3829
      %v3862 = vpack.c.bf16 %v3830, %v3830
      %v3863 = vpack.c.bf16 %v3831, %v3831
      %v3864 = vpack.c.bf16 %v3832, %v3832
      %v3865 = vpack.c.bf16 %v3833, %v3833
      %v3866 = vpack.c.bf16 %v3834, %v3834
      %v3867 = vpack.c.bf16 %v3835, %v3835
      %v3868 = vpack.c.bf16 %v3836, %v3836
      %v3869 = vpack.c.bf16 %v3837, %v3837
      %v3870 = vpack.c.bf16 %v3838, %v3838
      %v3871 = vpack.c.bf16 %v3839, %v3839
      %v3872 = vpack.c.bf16 %v3840, %v3840
      %v3873 = vpack.c.bf16 %v3841, %v3841
      %v3874 = vpack.c.bf16 %v3842, %v3842
      %v3875 = vpack.c.bf16 %v3843, %v3843
      %v3876 = vpack.c.bf16 %v3844, %v3844
      %v3877 = vpack.c.bf16 %v3845, %v3845
      %v3878 = vpack.c.bf16 %v3846, %v3846
      %v3879 = vpack.c.bf16 %v3847, %v3847
      %v3880 = vpack.c.bf16 %v3848, %v3848
      %v3881 = vpack.c.bf16 %v3849, %v3849
      %v3882 = vpack.c.bf16 %v3850, %v3850
      %v3883 = vpack.c.bf16 %v3851, %v3851
      %v3884 = vpack.c.bf16 %v3852, %v3852
      %v3885 = vpack.c.bf16 %v3853, %v3853
      %v3886 = vpack.c.bf16 %v3854, %v3854
      %vm3887 = vcmask 60416
      %3888 = vst.msk [vmem:[%s253] sm:$0xf] %vm3887, %v3855
      %3889 = vst.msk [vmem:[%s253 + $0x4] sm:$0xf] %vm3887, %v3856
      %3890 = vst.msk [vmem:[%s253 + $0x8] sm:$0xf] %vm3887, %v3857
      %3891 = vst.msk [vmem:[%s253 + $0xc] sm:$0xf] %vm3887, %v3858
      %3892 = vst.msk [vmem:[%s253 + $0x10] sm:$0xf] %vm3887, %v3859
      %3893 = vst.msk [vmem:[%s253 + $0x14] sm:$0xf] %vm3887, %v3860
      %3894 = vst.msk [vmem:[%s253 + $0x18] sm:$0xf] %vm3887, %v3861
      %3895 = vst.msk [vmem:[%s253 + $0x1c] sm:$0xf] %vm3887, %v3862
      %3896 = vst.msk [vmem:[%s253 + $0x20] sm:$0xf] %vm3887, %v3863
      %3897 = vst.msk [vmem:[%s253 + $0x24] sm:$0xf] %vm3887, %v3864
      %3898 = vst.msk [vmem:[%s253 + $0x28] sm:$0xf] %vm3887, %v3865
      %3899 = vst.msk [vmem:[%s253 + $0x2c] sm:$0xf] %vm3887, %v3866
      %3900 = vst.msk [vmem:[%s253 + $0x30] sm:$0xf] %vm3887, %v3867
      %3901 = vst.msk [vmem:[%s253 + $0x34] sm:$0xf] %vm3887, %v3868
      %3902 = vst.msk [vmem:[%s253 + $0x38] sm:$0xf] %vm3887, %v3869
      %3903 = vst.msk [vmem:[%s253 + $0x3c] sm:$0xf] %vm3887, %v3870
      %3904 = vst.msk [vmem:[%s253 + $0x40] sm:$0xf] %vm3887, %v3871
      %3905 = vst.msk [vmem:[%s253 + $0x44] sm:$0xf] %vm3887, %v3872
      %3906 = vst.msk [vmem:[%s253 + $0x48] sm:$0xf] %vm3887, %v3873
      %3907 = vst.msk [vmem:[%s253 + $0x4c] sm:$0xf] %vm3887, %v3874
      %3908 = vst.msk [vmem:[%s253 + $0x50] sm:$0xf] %vm3887, %v3875
      %3909 = vst.msk [vmem:[%s253 + $0x54] sm:$0xf] %vm3887, %v3876
      %3910 = vst.msk [vmem:[%s253 + $0x58] sm:$0xf] %vm3887, %v3877
      %3911 = vst.msk [vmem:[%s253 + $0x5c] sm:$0xf] %vm3887, %v3878
      %3912 = vst.msk [vmem:[%s253 + $0x60] sm:$0xf] %vm3887, %v3879
      %3913 = vst.msk [vmem:[%s253 + $0x64] sm:$0xf] %vm3887, %v3880
      %3914 = vst.msk [vmem:[%s253 + $0x68] sm:$0xf] %vm3887, %v3881
      %3915 = vst.msk [vmem:[%s253 + $0x6c] sm:$0xf] %vm3887, %v3882
      %3916 = vst.msk [vmem:[%s253 + $0x70] sm:$0xf] %vm3887, %v3883
      %3917 = vst.msk [vmem:[%s253 + $0x74] sm:$0xf] %vm3887, %v3884
      %3918 = vst.msk [vmem:[%s253 + $0x78] sm:$0xf] %vm3887, %v3885
      %3919 = vst.msk [vmem:[%s253 + $0x7c] sm:$0xf] %vm3887, %v3886
      %s3920 = smul.u32 32, %s21
      %p3921 = scmp.lt.s32.totalorder %s20, 1
      %s3922 = scalar_select %p3921, %s20, 1
      %p3923 = scmp.lt.s32.totalorder %s3920, 31
      %s3924 = scalar_select %p3923, %s3920, 31
      %s3925 = smul.addr %s3922, 32
      %s3926 = sadd.s32 %s3924, %s3925
      %s3927 = smul.addr %s3926, 4
      %s3928 = scalar_lea.vmem %s5, %s3927
      // Predicated region
      $region41: #{bottleneck_ir_sram_forward.7} parent=39 // pred_check
        %p3929 = pneg %p160
      $region42: #{bottleneck_ir_sram_forward.7} parent=39 // pred_check_branch
        %3931 = sbr.rel (%p3929) target = $region44
      $region43: #{bottleneck_ir_sram_forward.7} parent=39 // pred_region
        %s3932 = smul.u32 32, %s21
      $region44: #{bottleneck_ir_sram_forward.7} parent=39 // pred_fallthru
        _
    $region40: #{bottleneck_ir_sram_forward.7} parent=5 // pred_fallthru
      _
    %p3933 = scmp.le.s32.totalorder 2, %s11
    // Predicated region
    $region45: #{bottleneck_ir_sram_forward.7} parent=5 // pred_check
      %p3934 = pneg %p3933
    $region46: #{bottleneck_ir_sram_forward.7} parent=5 // pred_check_branch
      %3936 = sbr.rel (%p3934) target = $region48
    $region47: #{bottleneck_ir_sram_forward.7} parent=5 // pred_region
      %s3937 = ssub.s32 %s11, 2
      // Predicated region
      $region49: #{bottleneck_ir_sram_forward.7} parent=47 // pred_check
        %p3938 = pneg %p166
      $region50: #{bottleneck_ir_sram_forward.7} parent=47 // pred_check_branch
        %3940 = sbr.rel (%p3938) target = $region52
      $region51: #{bottleneck_ir_sram_forward.7} parent=47 // pred_region
        %s3941 = smul.u32 32, %s23
        %p3942 = scmp.lt.s32.totalorder %s22, 1
        %s3943 = scalar_select %p3942, %s22, 1
        %p3944 = scmp.lt.s32.totalorder %s3941, 31
        %s3945 = scalar_select %p3944, %s3941, 31
        %s3946 = smul.addr %s3943, 32
        %s3947 = sadd.s32 %s3945, %s3946
        %s3948 = smul.addr %s3947, 4
        %s3949 = scalar_lea.vmem %s5, %s3948
      $region52: #{bottleneck_ir_sram_forward.7} parent=47 // pred_fallthru
        _
    $region48: #{bottleneck_ir_sram_forward.7} parent=5 // pred_fallthru
      _
  $region6: #{bottleneck_ir_sram_forward.7} parent=0 // loop_footer
    %s15 = sadd.s32 1, %s11
  $region7: #{bottleneck_ir_sram_forward.7} parent=0 // loop_footer_branch
    %10 = sbr.rel target = $region3
  $region8: #{bottleneck_ir_sram_forward.7} parent=0 // loop_exit
    _

</llo_original>
